<compile_context>
chip_gen: v7x
topology: tpu7x:2x2x1
jax: 0.10.0
libtpu: 0.0.40
codegen_flags: <defaults>
</compile_context>

<pallas_src>
import functools
import math

import jax
import jax.numpy as jnp
from jax import lax
from jax.experimental import pallas as pl
from jax.experimental.pallas import tpu as pltpu  # noqa: F401  (TPU backend)

BN_EPS = 1e-5


# ----------------------------- Pallas kernels -----------------------------

def _bn_cols(x, gamma, beta, eps):
    """Batch-stat BatchNorm over the lane (flattened N*H*W) axis of (C, M)."""
    mean = jnp.mean(x, axis=-1, keepdims=True)
    var = jnp.mean(jnp.square(x - mean), axis=-1, keepdims=True)   # biased var
    return (x - mean) * lax.rsqrt(var + eps) * gamma + beta


def fused_conv_bn_kernel(*refs, relu, res_mode, eps):
    """conv(as matmul) + BN (+ residual) (+ ReLU) in a single VMEM block.

    res_mode:
      "none"     refs = (patches, w, gamma, beta, out)
      "identity" refs = (patches, w, gamma, beta, residual, out)
      "conv"     refs = (patches, w, gamma, beta, xs, ws, gs, bs, out)

    patches: (9*Cin, M) bf16   w: (Cout, 9*Cin) bf16
    gamma/beta: (Cout, 1) f32  residual: (Cout, M) f32
    xs: (Cin, M) bf16          ws: (Cout, Cin) bf16   out: (Cout, M) f32
    """
    if res_mode == "none":
        p_ref, w_ref, g_ref, b_ref, o_ref = refs
    elif res_mode == "identity":
        p_ref, w_ref, g_ref, b_ref, r_ref, o_ref = refs
    else:  # "conv": downsample block -> fused 1x1-conv + BN shortcut
        p_ref, w_ref, g_ref, b_ref, xs_ref, ws_ref, gs_ref, bs_ref, o_ref = refs

    conv = jnp.dot(w_ref[...], p_ref[...], preferred_element_type=jnp.float32)
    y = _bn_cols(conv, g_ref[...], b_ref[...], eps)
    if res_mode == "identity":
        y = y + r_ref[...]
    elif res_mode == "conv":
        sc = jnp.dot(ws_ref[...], xs_ref[...], preferred_element_type=jnp.float32)
        y = y + _bn_cols(sc, gs_ref[...], bs_ref[...], eps)
    if relu:
        y = jnp.maximum(y, 0.0)
    o_ref[...] = y


def pool_linear_kernel(x_ref, w_ref, b_ref, o_ref):
    # x_ref: (C, N, HW) f32; global spatial mean then Linear, transposed output.
    pooled = jnp.mean(x_ref[...], axis=-1)                          # (C, N)
    o_ref[...] = (
        jnp.dot(w_ref[...], pooled, preferred_element_type=jnp.float32)
        + b_ref[...]
    )                                                               # (K, N)


# ------------------------------- wrappers ---------------------------------

def fused_conv_bn(patches, wmat, gamma, beta, *, relu=True,
                  residual=None, shortcut=None):
    """One conv layer: matmul + BN (+ residual/shortcut) (+ ReLU), one call."""
    cout = wmat.shape[0]
    m = patches.shape[1]
    args = [patches, wmat, gamma, beta]
    if shortcut is not None:
        res_mode = "conv"
        args.extend(shortcut)              # (xs, wsT, gs, bs)
    elif residual is not None:
        res_mode = "identity"
        args.append(residual)
    else:
        res_mode = "none"
    kern = functools.partial(fused_conv_bn_kernel, relu=relu,
                             res_mode=res_mode, eps=BN_EPS)
    # Gridless whole-array blocks: every operand fits in VMEM at these shapes.
    return pl.pallas_call(
        kern,
        out_shape=jax.ShapeDtypeStruct((cout, m), jnp.float32),
    )(*args)


def im2col_3x3_cm(x, stride):
    """x: (C, N, H, W) -> patches (9*C, N*Ho*Wo), rows tap-major / chan-minor."""
    C, N, H, W = x.shape
    Ho = (H + 2 - 3) // stride + 1
    Wo = (W + 2 - 3) // stride + 1
    xp = jnp.pad(x, ((0, 0), (0, 0), (1, 1), (1, 1)))
    taps = []
    for dy in range(3):
        for dx in range(3):
            taps.append(
                xp[:, :, dy:dy + (Ho - 1) * stride + 1:stride,
                         dx:dx + (Wo - 1) * stride + 1:stride]
            )
    patches = jnp.concatenate(taps, axis=0)            # (9C, N, Ho, Wo)
    return patches.reshape(9 * C, N * Ho * Wo), Ho, Wo


def pool_linear(act, dims, w_t, b):
    """F.avg_pool2d(., 8) (global mean at 8x8) + view + Linear, fused."""
    n, h, w = dims
    c = act.shape[0]
    k = w_t.shape[0]
    out_t = pl.pallas_call(
        pool_linear_kernel,
        out_shape=jax.ShapeDtypeStruct((k, n), jnp.float32),
    )(act.reshape(c, n, h * w), w_t, b)
    return out_t.T                                      # (N, K)


# ---------------------------- parameter init -------------------------------

def _conv3x3_wmat(key, cin, cout):
    w = jax.random.normal(key, (3, 3, cin, cout), jnp.float32) / math.sqrt(9 * cin)
    # -> (Cout, 9*Cin), tap-major / cin-minor, matching im2col_3x3_cm rows.
    return jnp.transpose(w, (3, 0, 1, 2)).reshape(cout, 9 * cin).astype(jnp.bfloat16)


def _conv1x1_wmat(key, cin, cout):
    w = jax.random.normal(key, (cin, cout), jnp.float32) / math.sqrt(cin)
    return jnp.transpose(w).astype(jnp.bfloat16)        # (Cout, Cin)


def _bn_params(key, c):
    k1, k2 = jax.random.split(key)
    gamma = 1.0 + 0.1 * jax.random.normal(k1, (c, 1), jnp.float32)
    beta = 0.1 * jax.random.normal(k2, (c, 1), jnp.float32)
    return gamma, beta


def init_basic_block(key, in_planes, planes, stride):
    ks = jax.random.split(key, 6)
    p = {"stride": stride}
    p["w1"] = _conv3x3_wmat(ks[0], in_planes, planes)
    p["g1"], p["be1"] = _bn_params(ks[1], planes)
    p["w2"] = _conv3x3_wmat(ks[2], planes, planes)
    p["g2"], p["be2"] = _bn_params(ks[3], planes)
    if stride != 1 or in_planes != planes:   # BasicBlock.expansion == 1
        p["ws"] = _conv1x1_wmat(ks[4], in_planes, planes)
        p["gs"], p["bes"] = _bn_params(ks[5], planes)
    return p


def init_resnet18(key, num_classes=10):
    keys = jax.random.split(key, 16)
    params = {}
    params["w1"] = _conv3x3_wmat(keys[0], 3, 16)
    params["g1"], params["be1"] = _bn_params(keys[1], 16)
    in_planes, ki, layers = 16, 2, []
    for planes, num, stride in ((16, 2, 1), (32, 2, 2), (64, 2, 2)):
        layer = []
        for s in [stride] + [1] * (num - 1):
            layer.append(init_basic_block(keys[ki], in_planes, planes, s))
            in_planes = planes
            ki += 1
        layers.append(layer)
    params["layers"] = layers
    kw, kb = jax.random.split(keys[ki])
    lin_w = jax.random.normal(kw, (64, num_classes), jnp.float32) / math.sqrt(64)
    params["lin_wt"] = jnp.transpose(lin_w)                              # (K, 64)
    params["lin_b"] = 0.01 * jax.random.normal(kb, (num_classes, 1), jnp.float32)
    return params


# ------------------------------- forward -----------------------------------

def basic_block_forward(act, dims, p):
    # act: (Cin, N*H*W) f32; conv biases omitted (cancel under train-mode BN).
    n, h, w = dims
    cin = act.shape[0]
    stride = p["stride"]
    x4 = act.astype(jnp.bfloat16).reshape(cin, n, h, w)
    patches1, ho, wo = im2col_3x3_cm(x4, stride)
    out1 = fused_conv_bn(patches1, p["w1"], p["g1"], p["be1"], relu=True)
    cout = p["w1"].shape[0]
    patches2, _, _ = im2col_3x3_cm(
        out1.astype(jnp.bfloat16).reshape(cout, n, ho, wo), 1)
    if "ws" in p:
        xs = x4[:, :, ::stride, ::stride].reshape(cin, n * ho * wo)
        out2 = fused_conv_bn(patches2, p["w2"], p["g2"], p["be2"], relu=True,
                             shortcut=(xs, p["ws"], p["gs"], p["bes"]))
    else:
        # out = relu(bn2(conv2(out)) + x)
        out2 = fused_conv_bn(patches2, p["w2"], p["g2"], p["be2"], relu=True,
                             residual=act)
    return out2, (n, ho, wo)


def resnet_forward(params, x_nchw):
    # TODO(synk): the PyTorch module's debug prints to 'output-resnet-size.txt'
    # are file-I/O side effects with no compute equivalent and are omitted.
    n = x_nchw.shape[0]
    x = jnp.transpose(x_nchw, (1, 0, 2, 3)).astype(jnp.bfloat16)  # (C, N, H, W)
    patches, ho, wo = im2col_3x3_cm(x, 1)
    act = fused_conv_bn(patches, params["w1"], params["g1"], params["be1"],
                        relu=True)
    dims = (n, ho, wo)
    for layer in params["layers"]:
        for blk in layer:
            act, dims = basic_block_forward(act, dims, blk)
    # act: (64, N*8*8) -> avg_pool2d(8) + view + linear (fused).
    return pool_linear(act, dims, params["lin_wt"], params["lin_b"])


if __name__ == "__main__":
    key = jax.random.PRNGKey(0)
    kp, kx = jax.random.split(key)
    params = init_resnet18(kp, num_classes=10)
    # PyTorch-style NCHW input; spatial 32 so that avg_pool2d(., 8) is valid.
    x = jax.random.normal(kx, (2, 3, 32, 32), jnp.float32)
    forward = jax.jit(functools.partial(resnet_forward, params))
    out = forward(x)
    out = jax.block_until_ready(out)
    assert out.shape == (2, 10), out.shape
    assert bool(jnp.all(jnp.isfinite(out)))
    print("KERNEL_OK")
</pallas_src>

<mosaic_0001>
module attributes {stable_mosaic.version = 11 : i64} {
  func.func @fused_conv_bn_kernel(%arg0: memref<27x2048xbf16, #tpu.memory_space<vmem>>, %arg1: memref<16x27xbf16, #tpu.memory_space<vmem>>, %arg2: memref<16x1xf32, #tpu.memory_space<vmem>>, %arg3: memref<16x1xf32, #tpu.memory_space<vmem>>, %arg4: memref<16x2048xf32, #tpu.memory_space<vmem>>) attributes {dimension_semantics = [], scalar_prefetch = 0 : i64, scratch_operands = 0 : i64, tpu.core_type = #tpu.core_type<tc>} {
    %c0 = arith.constant 0 : index
    %c0_0 = arith.constant 0 : index
    %0 = vector.load %arg1[%c0, %c0_0] : memref<16x27xbf16, #tpu.memory_space<vmem>>, vector<16x27xbf16>
    %c0_1 = arith.constant 0 : index
    %c0_2 = arith.constant 0 : index
    %1 = vector.load %arg0[%c0_1, %c0_2] : memref<27x2048xbf16, #tpu.memory_space<vmem>>, vector<27x2048xbf16>
    %cst = arith.constant dense<0.000000e+00> : vector<16x2048xf32>
    %2 = tpu.matmul %0, %1, %cst {dimension_numbers = #tpu.dot_dimension_numbers<[1], [0], [0], [1], [0, 0, 1, 1], [], []>} : vector<16x27xbf16>, vector<27x2048xbf16>, vector<16x2048xf32> -> vector<16x2048xf32>
    %c0_3 = arith.constant 0 : index
    %c0_4 = arith.constant 0 : index
    %3 = vector.load %arg2[%c0_3, %c0_4] : memref<16x1xf32, #tpu.memory_space<vmem>>, vector<16x1xf32>
    %c0_5 = arith.constant 0 : index
    %c0_6 = arith.constant 0 : index
    %4 = vector.load %arg3[%c0_5, %c0_6] : memref<16x1xf32, #tpu.memory_space<vmem>>, vector<16x1xf32>
    %cst_7 = arith.constant dense<0.000000e+00> : vector<16xf32>
    %5 = vector.multi_reduction <add>, %2, %cst_7 [1] : vector<16x2048xf32> to vector<16xf32>
    %6 = vector.shape_cast %5 : vector<16xf32> to vector<16x1xf32>
    %cst_8 = arith.constant 2.048000e+03 : f32
    %7 = vector.broadcast %cst_8 : f32 to vector<16x1xf32>
    %8 = arith.divf %6, %7 : vector<16x1xf32>
    %9 = vector.broadcast %8 : vector<16x1xf32> to vector<16x2048xf32>
    %10 = arith.subf %2, %9 : vector<16x2048xf32>
    %11 = arith.mulf %10, %10 : vector<16x2048xf32>
    %cst_9 = arith.constant dense<0.000000e+00> : vector<16xf32>
    %12 = vector.multi_reduction <add>, %11, %cst_9 [1] : vector<16x2048xf32> to vector<16xf32>
    %13 = vector.shape_cast %12 : vector<16xf32> to vector<16x1xf32>
    %cst_10 = arith.constant 2.048000e+03 : f32
    %14 = vector.broadcast %cst_10 : f32 to vector<16x1xf32>
    %15 = arith.divf %13, %14 : vector<16x1xf32>
    %16 = vector.broadcast %8 : vector<16x1xf32> to vector<16x2048xf32>
    %17 = arith.subf %2, %16 : vector<16x2048xf32>
    %cst_11 = arith.constant 9.99999974E-6 : f32
    %18 = vector.broadcast %cst_11 : f32 to vector<16x1xf32>
    %19 = arith.addf %15, %18 : vector<16x1xf32>
    %20 = math.rsqrt %19 : vector<16x1xf32>
    %21 = vector.broadcast %20 : vector<16x1xf32> to vector<16x2048xf32>
    %22 = arith.mulf %17, %21 : vector<16x2048xf32>
    %23 = vector.broadcast %3 : vector<16x1xf32> to vector<16x2048xf32>
    %24 = arith.mulf %22, %23 : vector<16x2048xf32>
    %25 = vector.broadcast %4 : vector<16x1xf32> to vector<16x2048xf32>
    %26 = arith.addf %24, %25 : vector<16x2048xf32>
    %cst_12 = arith.constant 0.000000e+00 : f32
    %27 = vector.broadcast %cst_12 : f32 to vector<16x2048xf32>
    %28 = arith.maximumf %26, %27 : vector<16x2048xf32>
    %c0_13 = arith.constant 0 : index
    %c0_14 = arith.constant 0 : index
    %29 = vector.load %arg4[%c0_13, %c0_14] : memref<16x2048xf32, #tpu.memory_space<vmem>>, vector<16x2048xf32>
    tpu.vector_store %arg4[%c0_13, %c0_14], %28 {strides = array<i32>} : memref<16x2048xf32, #tpu.memory_space<vmem>>, vector<16x2048xf32>,
    return
  }
}

module attributes {stable_mosaic.version = 11 : i64} {
  func.func @fused_conv_bn_kernel(%arg0: memref<144x2048xbf16, #tpu.memory_space<vmem>>, %arg1: memref<16x144xbf16, #tpu.memory_space<vmem>>, %arg2: memref<16x1xf32, #tpu.memory_space<vmem>>, %arg3: memref<16x1xf32, #tpu.memory_space<vmem>>, %arg4: memref<16x2048xf32, #tpu.memory_space<vmem>>) attributes {dimension_semantics = [], scalar_prefetch = 0 : i64, scratch_operands = 0 : i64, tpu.core_type = #tpu.core_type<tc>} {
    %c0 = arith.constant 0 : index
    %c0_0 = arith.constant 0 : index
    %0 = vector.load %arg1[%c0, %c0_0] : memref<16x144xbf16, #tpu.memory_space<vmem>>, vector<16x144xbf16>
    %c0_1 = arith.constant 0 : index
    %c0_2 = arith.constant 0 : index
    %1 = vector.load %arg0[%c0_1, %c0_2] : memref<144x2048xbf16, #tpu.memory_space<vmem>>, vector<144x2048xbf16>
    %cst = arith.constant dense<0.000000e+00> : vector<16x2048xf32>
    %2 = tpu.matmul %0, %1, %cst {dimension_numbers = #tpu.dot_dimension_numbers<[1], [0], [0], [1], [0, 0, 1, 1], [], []>} : vector<16x144xbf16>, vector<144x2048xbf16>, vector<16x2048xf32> -> vector<16x2048xf32>
    %c0_3 = arith.constant 0 : index
    %c0_4 = arith.constant 0 : index
    %3 = vector.load %arg2[%c0_3, %c0_4] : memref<16x1xf32, #tpu.memory_space<vmem>>, vector<16x1xf32>
    %c0_5 = arith.constant 0 : index
    %c0_6 = arith.constant 0 : index
    %4 = vector.load %arg3[%c0_5, %c0_6] : memref<16x1xf32, #tpu.memory_space<vmem>>, vector<16x1xf32>
    %cst_7 = arith.constant dense<0.000000e+00> : vector<16xf32>
    %5 = vector.multi_reduction <add>, %2, %cst_7 [1] : vector<16x2048xf32> to vector<16xf32>
    %6 = vector.shape_cast %5 : vector<16xf32> to vector<16x1xf32>
    %cst_8 = arith.constant 2.048000e+03 : f32
    %7 = vector.broadcast %cst_8 : f32 to vector<16x1xf32>
    %8 = arith.divf %6, %7 : vector<16x1xf32>
    %9 = vector.broadcast %8 : vector<16x1xf32> to vector<16x2048xf32>
    %10 = arith.subf %2, %9 : vector<16x2048xf32>
    %11 = arith.mulf %10, %10 : vector<16x2048xf32>
    %cst_9 = arith.constant dense<0.000000e+00> : vector<16xf32>
    %12 = vector.multi_reduction <add>, %11, %cst_9 [1] : vector<16x2048xf32> to vector<16xf32>
    %13 = vector.shape_cast %12 : vector<16xf32> to vector<16x1xf32>
    %cst_10 = arith.constant 2.048000e+03 : f32
    %14 = vector.broadcast %cst_10 : f32 to vector<16x1xf32>
    %15 = arith.divf %13, %14 : vector<16x1xf32>
    %16 = vector.broadcast %8 : vector<16x1xf32> to vector<16x2048xf32>
    %17 = arith.subf %2, %16 : vector<16x2048xf32>
    %cst_11 = arith.constant 9.99999974E-6 : f32
    %18 = vector.broadcast %cst_11 : f32 to vector<16x1xf32>
    %19 = arith.addf %15, %18 : vector<16x1xf32>
    %20 = math.rsqrt %19 : vector<16x1xf32>
    %21 = vector.broadcast %20 : vector<16x1xf32> to vector<16x2048xf32>
    %22 = arith.mulf %17, %21 : vector<16x2048xf32>
    %23 = vector.broadcast %3 : vector<16x1xf32> to vector<16x2048xf32>
    %24 = arith.mulf %22, %23 : vector<16x2048xf32>
    %25 = vector.broadcast %4 : vector<16x1xf32> to vector<16x2048xf32>
    %26 = arith.addf %24, %25 : vector<16x2048xf32>
    %cst_12 = arith.constant 0.000000e+00 : f32
    %27 = vector.broadcast %cst_12 : f32 to vector<16x2048xf32>
    %28 = arith.maximumf %26, %27 : vector<16x2048xf32>
    %c0_13 = arith.constant 0 : index
    %c0_14 = arith.constant 0 : index
    %29 = vector.load %arg4[%c0_13, %c0_14] : memref<16x2048xf32, #tpu.memory_space<vmem>>, vector<16x2048xf32>
    tpu.vector_store %arg4[%c0_13, %c0_14], %28 {strides = array<i32>} : memref<16x2048xf32, #tpu.memory_space<vmem>>, vector<16x2048xf32>,
    return
  }
}

module attributes {stable_mosaic.version = 11 : i64} {
  func.func @fused_conv_bn_kernel(%arg0: memref<144x2048xbf16, #tpu.memory_space<vmem>>, %arg1: memref<16x144xbf16, #tpu.memory_space<vmem>>, %arg2: memref<16x1xf32, #tpu.memory_space<vmem>>, %arg3: memref<16x1xf32, #tpu.memory_space<vmem>>, %arg4: memref<16x2048xf32, #tpu.memory_space<vmem>>, %arg5: memref<16x2048xf32, #tpu.memory_space<vmem>>) attributes {dimension_semantics = [], scalar_prefetch = 0 : i64, scratch_operands = 0 : i64, tpu.core_type = #tpu.core_type<tc>} {
    %c0 = arith.constant 0 : index
    %c0_0 = arith.constant 0 : index
    %0 = vector.load %arg1[%c0, %c0_0] : memref<16x144xbf16, #tpu.memory_space<vmem>>, vector<16x144xbf16>
    %c0_1 = arith.constant 0 : index
    %c0_2 = arith.constant 0 : index
    %1 = vector.load %arg0[%c0_1, %c0_2] : memref<144x2048xbf16, #tpu.memory_space<vmem>>, vector<144x2048xbf16>
    %cst = arith.constant dense<0.000000e+00> : vector<16x2048xf32>
    %2 = tpu.matmul %0, %1, %cst {dimension_numbers = #tpu.dot_dimension_numbers<[1], [0], [0], [1], [0, 0, 1, 1], [], []>} : vector<16x144xbf16>, vector<144x2048xbf16>, vector<16x2048xf32> -> vector<16x2048xf32>
    %c0_3 = arith.constant 0 : index
    %c0_4 = arith.constant 0 : index
    %3 = vector.load %arg2[%c0_3, %c0_4] : memref<16x1xf32, #tpu.memory_space<vmem>>, vector<16x1xf32>
    %c0_5 = arith.constant 0 : index
    %c0_6 = arith.constant 0 : index
    %4 = vector.load %arg3[%c0_5, %c0_6] : memref<16x1xf32, #tpu.memory_space<vmem>>, vector<16x1xf32>
    %cst_7 = arith.constant dense<0.000000e+00> : vector<16xf32>
    %5 = vector.multi_reduction <add>, %2, %cst_7 [1] : vector<16x2048xf32> to vector<16xf32>
    %6 = vector.shape_cast %5 : vector<16xf32> to vector<16x1xf32>
    %cst_8 = arith.constant 2.048000e+03 : f32
    %7 = vector.broadcast %cst_8 : f32 to vector<16x1xf32>
    %8 = arith.divf %6, %7 : vector<16x1xf32>
    %9 = vector.broadcast %8 : vector<16x1xf32> to vector<16x2048xf32>
    %10 = arith.subf %2, %9 : vector<16x2048xf32>
    %11 = arith.mulf %10, %10 : vector<16x2048xf32>
    %cst_9 = arith.constant dense<0.000000e+00> : vector<16xf32>
    %12 = vector.multi_reduction <add>, %11, %cst_9 [1] : vector<16x2048xf32> to vector<16xf32>
    %13 = vector.shape_cast %12 : vector<16xf32> to vector<16x1xf32>
    %cst_10 = arith.constant 2.048000e+03 : f32
    %14 = vector.broadcast %cst_10 : f32 to vector<16x1xf32>
    %15 = arith.divf %13, %14 : vector<16x1xf32>
    %16 = vector.broadcast %8 : vector<16x1xf32> to vector<16x2048xf32>
    %17 = arith.subf %2, %16 : vector<16x2048xf32>
    %cst_11 = arith.constant 9.99999974E-6 : f32
    %18 = vector.broadcast %cst_11 : f32 to vector<16x1xf32>
    %19 = arith.addf %15, %18 : vector<16x1xf32>
    %20 = math.rsqrt %19 : vector<16x1xf32>
    %21 = vector.broadcast %20 : vector<16x1xf32> to vector<16x2048xf32>
    %22 = arith.mulf %17, %21 : vector<16x2048xf32>
    %23 = vector.broadcast %3 : vector<16x1xf32> to vector<16x2048xf32>
    %24 = arith.mulf %22, %23 : vector<16x2048xf32>
    %25 = vector.broadcast %4 : vector<16x1xf32> to vector<16x2048xf32>
    %26 = arith.addf %24, %25 : vector<16x2048xf32>
    %c0_12 = arith.constant 0 : index
    %c0_13 = arith.constant 0 : index
    %27 = vector.load %arg4[%c0_12, %c0_13] : memref<16x2048xf32, #tpu.memory_space<vmem>>, vector<16x2048xf32>
    %28 = arith.addf %26, %27 : vector<16x2048xf32>
    %cst_14 = arith.constant 0.000000e+00 : f32
    %29 = vector.broadcast %cst_14 : f32 to vector<16x2048xf32>
    %30 = arith.maximumf %28, %29 : vector<16x2048xf32>
    %c0_15 = arith.constant 0 : index
    %c0_16 = arith.constant 0 : index
    %31 = vector.load %arg5[%c0_15, %c0_16] : memref<16x2048xf32, #tpu.memory_space<vmem>>, vector<16x2048xf32>
    tpu.vector_store %arg5[%c0_15, %c0_16], %30 {strides = array<i32>} : memref<16x2048xf32, #tpu.memory_space<vmem>>, vector<16x2048xf32>,
    return
  }
}

module attributes {stable_mosaic.version = 11 : i64} {
  func.func @fused_conv_bn_kernel(%arg0: memref<144x512xbf16, #tpu.memory_space<vmem>>, %arg1: memref<32x144xbf16, #tpu.memory_space<vmem>>, %arg2: memref<32x1xf32, #tpu.memory_space<vmem>>, %arg3: memref<32x1xf32, #tpu.memory_space<vmem>>, %arg4: memref<32x512xf32, #tpu.memory_space<vmem>>) attributes {dimension_semantics = [], scalar_prefetch = 0 : i64, scratch_operands = 0 : i64, tpu.core_type = #tpu.core_type<tc>} {
    %c0 = arith.constant 0 : index
    %c0_0 = arith.constant 0 : index
    %0 = vector.load %arg1[%c0, %c0_0] : memref<32x144xbf16, #tpu.memory_space<vmem>>, vector<32x144xbf16>
    %c0_1 = arith.constant 0 : index
    %c0_2 = arith.constant 0 : index
    %1 = vector.load %arg0[%c0_1, %c0_2] : memref<144x512xbf16, #tpu.memory_space<vmem>>, vector<144x512xbf16>
    %cst = arith.constant dense<0.000000e+00> : vector<32x512xf32>
    %2 = tpu.matmul %0, %1, %cst {dimension_numbers = #tpu.dot_dimension_numbers<[1], [0], [0], [1], [0, 0, 1, 1], [], []>} : vector<32x144xbf16>, vector<144x512xbf16>, vector<32x512xf32> -> vector<32x512xf32>
    %c0_3 = arith.constant 0 : index
    %c0_4 = arith.constant 0 : index
    %3 = vector.load %arg2[%c0_3, %c0_4] : memref<32x1xf32, #tpu.memory_space<vmem>>, vector<32x1xf32>
    %c0_5 = arith.constant 0 : index
    %c0_6 = arith.constant 0 : index
    %4 = vector.load %arg3[%c0_5, %c0_6] : memref<32x1xf32, #tpu.memory_space<vmem>>, vector<32x1xf32>
    %cst_7 = arith.constant dense<0.000000e+00> : vector<32xf32>
    %5 = vector.multi_reduction <add>, %2, %cst_7 [1] : vector<32x512xf32> to vector<32xf32>
    %6 = vector.shape_cast %5 : vector<32xf32> to vector<32x1xf32>
    %cst_8 = arith.constant 5.120000e+02 : f32
    %7 = vector.broadcast %cst_8 : f32 to vector<32x1xf32>
    %8 = arith.divf %6, %7 : vector<32x1xf32>
    %9 = vector.broadcast %8 : vector<32x1xf32> to vector<32x512xf32>
    %10 = arith.subf %2, %9 : vector<32x512xf32>
    %11 = arith.mulf %10, %10 : vector<32x512xf32>
    %cst_9 = arith.constant dense<0.000000e+00> : vector<32xf32>
    %12 = vector.multi_reduction <add>, %11, %cst_9 [1] : vector<32x512xf32> to vector<32xf32>
    %13 = vector.shape_cast %12 : vector<32xf32> to vector<32x1xf32>
    %cst_10 = arith.constant 5.120000e+02 : f32
    %14 = vector.broadcast %cst_10 : f32 to vector<32x1xf32>
    %15 = arith.divf %13, %14 : vector<32x1xf32>
    %16 = vector.broadcast %8 : vector<32x1xf32> to vector<32x512xf32>
    %17 = arith.subf %2, %16 : vector<32x512xf32>
    %cst_11 = arith.constant 9.99999974E-6 : f32
    %18 = vector.broadcast %cst_11 : f32 to vector<32x1xf32>
    %19 = arith.addf %15, %18 : vector<32x1xf32>
    %20 = math.rsqrt %19 : vector<32x1xf32>
    %21 = vector.broadcast %20 : vector<32x1xf32> to vector<32x512xf32>
    %22 = arith.mulf %17, %21 : vector<32x512xf32>
    %23 = vector.broadcast %3 : vector<32x1xf32> to vector<32x512xf32>
    %24 = arith.mulf %22, %23 : vector<32x512xf32>
    %25 = vector.broadcast %4 : vector<32x1xf32> to vector<32x512xf32>
    %26 = arith.addf %24, %25 : vector<32x512xf32>
    %cst_12 = arith.constant 0.000000e+00 : f32
    %27 = vector.broadcast %cst_12 : f32 to vector<32x512xf32>
    %28 = arith.maximumf %26, %27 : vector<32x512xf32>
    %c0_13 = arith.constant 0 : index
    %c0_14 = arith.constant 0 : index
    %29 = vector.load %arg4[%c0_13, %c0_14] : memref<32x512xf32, #tpu.memory_space<vmem>>, vector<32x512xf32>
    tpu.vector_store %arg4[%c0_13, %c0_14], %28 {strides = array<i32>} : memref<32x512xf32, #tpu.memory_space<vmem>>, vector<32x512xf32>,
    return
  }
}

module attributes {stable_mosaic.version = 11 : i64} {
  func.func @fused_conv_bn_kernel(%arg0: memref<288x512xbf16, #tpu.memory_space<vmem>>, %arg1: memref<32x288xbf16, #tpu.memory_space<vmem>>, %arg2: memref<32x1xf32, #tpu.memory_space<vmem>>, %arg3: memref<32x1xf32, #tpu.memory_space<vmem>>, %arg4: memref<32x512xf32, #tpu.memory_space<vmem>>) attributes {dimension_semantics = [], scalar_prefetch = 0 : i64, scratch_operands = 0 : i64, tpu.core_type = #tpu.core_type<tc>} {
    %c0 = arith.constant 0 : index
    %c0_0 = arith.constant 0 : index
    %0 = vector.load %arg1[%c0, %c0_0] : memref<32x288xbf16, #tpu.memory_space<vmem>>, vector<32x288xbf16>
    %c0_1 = arith.constant 0 : index
    %c0_2 = arith.constant 0 : index
    %1 = vector.load %arg0[%c0_1, %c0_2] : memref<288x512xbf16, #tpu.memory_space<vmem>>, vector<288x512xbf16>
    %cst = arith.constant dense<0.000000e+00> : vector<32x512xf32>
    %2 = tpu.matmul %0, %1, %cst {dimension_numbers = #tpu.dot_dimension_numbers<[1], [0], [0], [1], [0, 0, 1, 1], [], []>} : vector<32x288xbf16>, vector<288x512xbf16>, vector<32x512xf32> -> vector<32x512xf32>
    %c0_3 = arith.constant 0 : index
    %c0_4 = arith.constant 0 : index
    %3 = vector.load %arg2[%c0_3, %c0_4] : memref<32x1xf32, #tpu.memory_space<vmem>>, vector<32x1xf32>
    %c0_5 = arith.constant 0 : index
    %c0_6 = arith.constant 0 : index
    %4 = vector.load %arg3[%c0_5, %c0_6] : memref<32x1xf32, #tpu.memory_space<vmem>>, vector<32x1xf32>
    %cst_7 = arith.constant dense<0.000000e+00> : vector<32xf32>
    %5 = vector.multi_reduction <add>, %2, %cst_7 [1] : vector<32x512xf32> to vector<32xf32>
    %6 = vector.shape_cast %5 : vector<32xf32> to vector<32x1xf32>
    %cst_8 = arith.constant 5.120000e+02 : f32
    %7 = vector.broadcast %cst_8 : f32 to vector<32x1xf32>
    %8 = arith.divf %6, %7 : vector<32x1xf32>
    %9 = vector.broadcast %8 : vector<32x1xf32> to vector<32x512xf32>
    %10 = arith.subf %2, %9 : vector<32x512xf32>
    %11 = arith.mulf %10, %10 : vector<32x512xf32>
    %cst_9 = arith.constant dense<0.000000e+00> : vector<32xf32>
    %12 = vector.multi_reduction <add>, %11, %cst_9 [1] : vector<32x512xf32> to vector<32xf32>
    %13 = vector.shape_cast %12 : vector<32xf32> to vector<32x1xf32>
    %cst_10 = arith.constant 5.120000e+02 : f32
    %14 = vector.broadcast %cst_10 : f32 to vector<32x1xf32>
    %15 = arith.divf %13, %14 : vector<32x1xf32>
    %16 = vector.broadcast %8 : vector<32x1xf32> to vector<32x512xf32>
    %17 = arith.subf %2, %16 : vector<32x512xf32>
    %cst_11 = arith.constant 9.99999974E-6 : f32
    %18 = vector.broadcast %cst_11 : f32 to vector<32x1xf32>
    %19 = arith.addf %15, %18 : vector<32x1xf32>
    %20 = math.rsqrt %19 : vector<32x1xf32>
    %21 = vector.broadcast %20 : vector<32x1xf32> to vector<32x512xf32>
    %22 = arith.mulf %17, %21 : vector<32x512xf32>
    %23 = vector.broadcast %3 : vector<32x1xf32> to vector<32x512xf32>
    %24 = arith.mulf %22, %23 : vector<32x512xf32>
    %25 = vector.broadcast %4 : vector<32x1xf32> to vector<32x512xf32>
    %26 = arith.addf %24, %25 : vector<32x512xf32>
    %cst_12 = arith.constant 0.000000e+00 : f32
    %27 = vector.broadcast %cst_12 : f32 to vector<32x512xf32>
    %28 = arith.maximumf %26, %27 : vector<32x512xf32>
    %c0_13 = arith.constant 0 : index
    %c0_14 = arith.constant 0 : index
    %29 = vector.load %arg4[%c0_13, %c0_14] : memref<32x512xf32, #tpu.memory_space<vmem>>, vector<32x512xf32>
    tpu.vector_store %arg4[%c0_13, %c0_14], %28 {strides = array<i32>} : memref<32x512xf32, #tpu.memory_space<vmem>>, vector<32x512xf32>,
    return
  }
}

module attributes {stable_mosaic.version = 11 : i64} {
  func.func @fused_conv_bn_kernel(%arg0: memref<288x512xbf16, #tpu.memory_space<vmem>>, %arg1: memref<32x288xbf16, #tpu.memory_space<vmem>>, %arg2: memref<32x1xf32, #tpu.memory_space<vmem>>, %arg3: memref<32x1xf32, #tpu.memory_space<vmem>>, %arg4: memref<16x512xbf16, #tpu.memory_space<vmem>>, %arg5: memref<32x16xbf16, #tpu.memory_space<vmem>>, %arg6: memref<32x1xf32, #tpu.memory_space<vmem>>, %arg7: memref<32x1xf32, #tpu.memory_space<vmem>>, %arg8: memref<32x512xf32, #tpu.memory_space<vmem>>) attributes {dimension_semantics = [], scalar_prefetch = 0 : i64, scratch_operands = 0 : i64, tpu.core_type = #tpu.core_type<tc>} {
    %c0 = arith.constant 0 : index
    %c0_0 = arith.constant 0 : index
    %0 = vector.load %arg1[%c0, %c0_0] : memref<32x288xbf16, #tpu.memory_space<vmem>>, vector<32x288xbf16>
    %c0_1 = arith.constant 0 : index
    %c0_2 = arith.constant 0 : index
    %1 = vector.load %arg0[%c0_1, %c0_2] : memref<288x512xbf16, #tpu.memory_space<vmem>>, vector<288x512xbf16>
    %cst = arith.constant dense<0.000000e+00> : vector<32x512xf32>
    %2 = tpu.matmul %0, %1, %cst {dimension_numbers = #tpu.dot_dimension_numbers<[1], [0], [0], [1], [0, 0, 1, 1], [], []>} : vector<32x288xbf16>, vector<288x512xbf16>, vector<32x512xf32> -> vector<32x512xf32>
    %c0_3 = arith.constant 0 : index
    %c0_4 = arith.constant 0 : index
    %3 = vector.load %arg2[%c0_3, %c0_4] : memref<32x1xf32, #tpu.memory_space<vmem>>, vector<32x1xf32>
    %c0_5 = arith.constant 0 : index
    %c0_6 = arith.constant 0 : index
    %4 = vector.load %arg3[%c0_5, %c0_6] : memref<32x1xf32, #tpu.memory_space<vmem>>, vector<32x1xf32>
    %cst_7 = arith.constant dense<0.000000e+00> : vector<32xf32>
    %5 = vector.multi_reduction <add>, %2, %cst_7 [1] : vector<32x512xf32> to vector<32xf32>
    %6 = vector.shape_cast %5 : vector<32xf32> to vector<32x1xf32>
    %cst_8 = arith.constant 5.120000e+02 : f32
    %7 = vector.broadcast %cst_8 : f32 to vector<32x1xf32>
    %8 = arith.divf %6, %7 : vector<32x1xf32>
    %9 = vector.broadcast %8 : vector<32x1xf32> to vector<32x512xf32>
    %10 = arith.subf %2, %9 : vector<32x512xf32>
    %11 = arith.mulf %10, %10 : vector<32x512xf32>
    %cst_9 = arith.constant dense<0.000000e+00> : vector<32xf32>
    %12 = vector.multi_reduction <add>, %11, %cst_9 [1] : vector<32x512xf32> to vector<32xf32>
    %13 = vector.shape_cast %12 : vector<32xf32> to vector<32x1xf32>
    %cst_10 = arith.constant 5.120000e+02 : f32
    %14 = vector.broadcast %cst_10 : f32 to vector<32x1xf32>
    %15 = arith.divf %13, %14 : vector<32x1xf32>
    %16 = vector.broadcast %8 : vector<32x1xf32> to vector<32x512xf32>
    %17 = arith.subf %2, %16 : vector<32x512xf32>
    %cst_11 = arith.constant 9.99999974E-6 : f32
    %18 = vector.broadcast %cst_11 : f32 to vector<32x1xf32>
    %19 = arith.addf %15, %18 : vector<32x1xf32>
    %20 = math.rsqrt %19 : vector<32x1xf32>
    %21 = vector.broadcast %20 : vector<32x1xf32> to vector<32x512xf32>
    %22 = arith.mulf %17, %21 : vector<32x512xf32>
    %23 = vector.broadcast %3 : vector<32x1xf32> to vector<32x512xf32>
    %24 = arith.mulf %22, %23 : vector<32x512xf32>
    %25 = vector.broadcast %4 : vector<32x1xf32> to vector<32x512xf32>
    %26 = arith.addf %24, %25 : vector<32x512xf32>
    %c0_12 = arith.constant 0 : index
    %c0_13 = arith.constant 0 : index
    %27 = vector.load %arg5[%c0_12, %c0_13] : memref<32x16xbf16, #tpu.memory_space<vmem>>, vector<32x16xbf16>
    %c0_14 = arith.constant 0 : index
    %c0_15 = arith.constant 0 : index
    %28 = vector.load %arg4[%c0_14, %c0_15] : memref<16x512xbf16, #tpu.memory_space<vmem>>, vector<16x512xbf16>
    %cst_16 = arith.constant dense<0.000000e+00> : vector<32x512xf32>
    %29 = tpu.matmul %27, %28, %cst_16 {dimension_numbers = #tpu.dot_dimension_numbers<[1], [0], [0], [1], [0, 0, 1, 1], [], []>} : vector<32x16xbf16>, vector<16x512xbf16>, vector<32x512xf32> -> vector<32x512xf32>
    %c0_17 = arith.constant 0 : index
    %c0_18 = arith.constant 0 : index
    %30 = vector.load %arg6[%c0_17, %c0_18] : memref<32x1xf32, #tpu.memory_space<vmem>>, vector<32x1xf32>
    %c0_19 = arith.constant 0 : index
    %c0_20 = arith.constant 0 : index
    %31 = vector.load %arg7[%c0_19, %c0_20] : memref<32x1xf32, #tpu.memory_space<vmem>>, vector<32x1xf32>
    %cst_21 = arith.constant dense<0.000000e+00> : vector<32xf32>
    %32 = vector.multi_reduction <add>, %29, %cst_21 [1] : vector<32x512xf32> to vector<32xf32>
    %33 = vector.shape_cast %32 : vector<32xf32> to vector<32x1xf32>
    %cst_22 = arith.constant 5.120000e+02 : f32
    %34 = vector.broadcast %cst_22 : f32 to vector<32x1xf32>
    %35 = arith.divf %33, %34 : vector<32x1xf32>
    %36 = vector.broadcast %35 : vector<32x1xf32> to vector<32x512xf32>
    %37 = arith.subf %29, %36 : vector<32x512xf32>
    %38 = arith.mulf %37, %37 : vector<32x512xf32>
    %cst_23 = arith.constant dense<0.000000e+00> : vector<32xf32>
    %39 = vector.multi_reduction <add>, %38, %cst_23 [1] : vector<32x512xf32> to vector<32xf32>
    %40 = vector.shape_cast %39 : vector<32xf32> to vector<32x1xf32>
    %cst_24 = arith.constant 5.120000e+02 : f32
    %41 = vector.broadcast %cst_24 : f32 to vector<32x1xf32>
    %42 = arith.divf %40, %41 : vector<32x1xf32>
    %43 = vector.broadcast %35 : vector<32x1xf32> to vector<32x512xf32>
    %44 = arith.subf %29, %43 : vector<32x512xf32>
    %cst_25 = arith.constant 9.99999974E-6 : f32
    %45 = vector.broadcast %cst_25 : f32 to vector<32x1xf32>
    %46 = arith.addf %42, %45 : vector<32x1xf32>
    %47 = math.rsqrt %46 : vector<32x1xf32>
    %48 = vector.broadcast %47 : vector<32x1xf32> to vector<32x512xf32>
    %49 = arith.mulf %44, %48 : vector<32x512xf32>
    %50 = vector.broadcast %30 : vector<32x1xf32> to vector<32x512xf32>
    %51 = arith.mulf %49, %50 : vector<32x512xf32>
    %52 = vector.broadcast %31 : vector<32x1xf32> to vector<32x512xf32>
    %53 = arith.addf %51, %52 : vector<32x512xf32>
    %54 = arith.addf %26, %53 : vector<32x512xf32>
    %cst_26 = arith.constant 0.000000e+00 : f32
    %55 = vector.broadcast %cst_26 : f32 to vector<32x512xf32>
    %56 = arith.maximumf %54, %55 : vector<32x512xf32>
    %c0_27 = arith.constant 0 : index
    %c0_28 = arith.constant 0 : index
    %57 = vector.load %arg8[%c0_27, %c0_28] : memref<32x512xf32, #tpu.memory_space<vmem>>, vector<32x512xf32>
    tpu.vector_store %arg8[%c0_27, %c0_28], %56 {strides = array<i32>} : memref<32x512xf32, #tpu.memory_space<vmem>>, vector<32x512xf32>,
    return
  }
}

module attributes {stable_mosaic.version = 11 : i64} {
  func.func @fused_conv_bn_kernel(%arg0: memref<288x512xbf16, #tpu.memory_space<vmem>>, %arg1: memref<32x288xbf16, #tpu.memory_space<vmem>>, %arg2: memref<32x1xf32, #tpu.memory_space<vmem>>, %arg3: memref<32x1xf32, #tpu.memory_space<vmem>>, %arg4: memref<32x512xf32, #tpu.memory_space<vmem>>, %arg5: memref<32x512xf32, #tpu.memory_space<vmem>>) attributes {dimension_semantics = [], scalar_prefetch = 0 : i64, scratch_operands = 0 : i64, tpu.core_type = #tpu.core_type<tc>} {
    %c0 = arith.constant 0 : index
    %c0_0 = arith.constant 0 : index
    %0 = vector.load %arg1[%c0, %c0_0] : memref<32x288xbf16, #tpu.memory_space<vmem>>, vector<32x288xbf16>
    %c0_1 = arith.constant 0 : index
    %c0_2 = arith.constant 0 : index
    %1 = vector.load %arg0[%c0_1, %c0_2] : memref<288x512xbf16, #tpu.memory_space<vmem>>, vector<288x512xbf16>
    %cst = arith.constant dense<0.000000e+00> : vector<32x512xf32>
    %2 = tpu.matmul %0, %1, %cst {dimension_numbers = #tpu.dot_dimension_numbers<[1], [0], [0], [1], [0, 0, 1, 1], [], []>} : vector<32x288xbf16>, vector<288x512xbf16>, vector<32x512xf32> -> vector<32x512xf32>
    %c0_3 = arith.constant 0 : index
    %c0_4 = arith.constant 0 : index
    %3 = vector.load %arg2[%c0_3, %c0_4] : memref<32x1xf32, #tpu.memory_space<vmem>>, vector<32x1xf32>
    %c0_5 = arith.constant 0 : index
    %c0_6 = arith.constant 0 : index
    %4 = vector.load %arg3[%c0_5, %c0_6] : memref<32x1xf32, #tpu.memory_space<vmem>>, vector<32x1xf32>
    %cst_7 = arith.constant dense<0.000000e+00> : vector<32xf32>
    %5 = vector.multi_reduction <add>, %2, %cst_7 [1] : vector<32x512xf32> to vector<32xf32>
    %6 = vector.shape_cast %5 : vector<32xf32> to vector<32x1xf32>
    %cst_8 = arith.constant 5.120000e+02 : f32
    %7 = vector.broadcast %cst_8 : f32 to vector<32x1xf32>
    %8 = arith.divf %6, %7 : vector<32x1xf32>
    %9 = vector.broadcast %8 : vector<32x1xf32> to vector<32x512xf32>
    %10 = arith.subf %2, %9 : vector<32x512xf32>
    %11 = arith.mulf %10, %10 : vector<32x512xf32>
    %cst_9 = arith.constant dense<0.000000e+00> : vector<32xf32>
    %12 = vector.multi_reduction <add>, %11, %cst_9 [1] : vector<32x512xf32> to vector<32xf32>
    %13 = vector.shape_cast %12 : vector<32xf32> to vector<32x1xf32>
    %cst_10 = arith.constant 5.120000e+02 : f32
    %14 = vector.broadcast %cst_10 : f32 to vector<32x1xf32>
    %15 = arith.divf %13, %14 : vector<32x1xf32>
    %16 = vector.broadcast %8 : vector<32x1xf32> to vector<32x512xf32>
    %17 = arith.subf %2, %16 : vector<32x512xf32>
    %cst_11 = arith.constant 9.99999974E-6 : f32
    %18 = vector.broadcast %cst_11 : f32 to vector<32x1xf32>
    %19 = arith.addf %15, %18 : vector<32x1xf32>
    %20 = math.rsqrt %19 : vector<32x1xf32>
    %21 = vector.broadcast %20 : vector<32x1xf32> to vector<32x512xf32>
    %22 = arith.mulf %17, %21 : vector<32x512xf32>
    %23 = vector.broadcast %3 : vector<32x1xf32> to vector<32x512xf32>
    %24 = arith.mulf %22, %23 : vector<32x512xf32>
    %25 = vector.broadcast %4 : vector<32x1xf32> to vector<32x512xf32>
    %26 = arith.addf %24, %25 : vector<32x512xf32>
    %c0_12 = arith.constant 0 : index
    %c0_13 = arith.constant 0 : index
    %27 = vector.load %arg4[%c0_12, %c0_13] : memref<32x512xf32, #tpu.memory_space<vmem>>, vector<32x512xf32>
    %28 = arith.addf %26, %27 : vector<32x512xf32>
    %cst_14 = arith.constant 0.000000e+00 : f32
    %29 = vector.broadcast %cst_14 : f32 to vector<32x512xf32>
    %30 = arith.maximumf %28, %29 : vector<32x512xf32>
    %c0_15 = arith.constant 0 : index
    %c0_16 = arith.constant 0 : index
    %31 = vector.load %arg5[%c0_15, %c0_16] : memref<32x512xf32, #tpu.memory_space<vmem>>, vector<32x512xf32>
    tpu.vector_store %arg5[%c0_15, %c0_16], %30 {strides = array<i32>} : memref<32x512xf32, #tpu.memory_space<vmem>>, vector<32x512xf32>,
    return
  }
}

module attributes {stable_mosaic.version = 11 : i64} {
  func.func @fused_conv_bn_kernel(%arg0: memref<288x128xbf16, #tpu.memory_space<vmem>>, %arg1: memref<64x288xbf16, #tpu.memory_space<vmem>>, %arg2: memref<64x1xf32, #tpu.memory_space<vmem>>, %arg3: memref<64x1xf32, #tpu.memory_space<vmem>>, %arg4: memref<64x128xf32, #tpu.memory_space<vmem>>) attributes {dimension_semantics = [], scalar_prefetch = 0 : i64, scratch_operands = 0 : i64, tpu.core_type = #tpu.core_type<tc>} {
    %c0 = arith.constant 0 : index
    %c0_0 = arith.constant 0 : index
    %0 = vector.load %arg1[%c0, %c0_0] : memref<64x288xbf16, #tpu.memory_space<vmem>>, vector<64x288xbf16>
    %c0_1 = arith.constant 0 : index
    %c0_2 = arith.constant 0 : index
    %1 = vector.load %arg0[%c0_1, %c0_2] : memref<288x128xbf16, #tpu.memory_space<vmem>>, vector<288x128xbf16>
    %cst = arith.constant dense<0.000000e+00> : vector<64x128xf32>
    %2 = tpu.matmul %0, %1, %cst {dimension_numbers = #tpu.dot_dimension_numbers<[1], [0], [0], [1], [0, 0, 1, 1], [], []>} : vector<64x288xbf16>, vector<288x128xbf16>, vector<64x128xf32> -> vector<64x128xf32>
    %c0_3 = arith.constant 0 : index
    %c0_4 = arith.constant 0 : index
    %3 = vector.load %arg2[%c0_3, %c0_4] : memref<64x1xf32, #tpu.memory_space<vmem>>, vector<64x1xf32>
    %c0_5 = arith.constant 0 : index
    %c0_6 = arith.constant 0 : index
    %4 = vector.load %arg3[%c0_5, %c0_6] : memref<64x1xf32, #tpu.memory_space<vmem>>, vector<64x1xf32>
    %cst_7 = arith.constant dense<0.000000e+00> : vector<64xf32>
    %5 = vector.multi_reduction <add>, %2, %cst_7 [1] : vector<64x128xf32> to vector<64xf32>
    %6 = vector.shape_cast %5 : vector<64xf32> to vector<64x1xf32>
    %cst_8 = arith.constant 1.280000e+02 : f32
    %7 = vector.broadcast %cst_8 : f32 to vector<64x1xf32>
    %8 = arith.divf %6, %7 : vector<64x1xf32>
    %9 = vector.broadcast %8 : vector<64x1xf32> to vector<64x128xf32>
    %10 = arith.subf %2, %9 : vector<64x128xf32>
    %11 = arith.mulf %10, %10 : vector<64x128xf32>
    %cst_9 = arith.constant dense<0.000000e+00> : vector<64xf32>
    %12 = vector.multi_reduction <add>, %11, %cst_9 [1] : vector<64x128xf32> to vector<64xf32>
    %13 = vector.shape_cast %12 : vector<64xf32> to vector<64x1xf32>
    %cst_10 = arith.constant 1.280000e+02 : f32
    %14 = vector.broadcast %cst_10 : f32 to vector<64x1xf32>
    %15 = arith.divf %13, %14 : vector<64x1xf32>
    %16 = vector.broadcast %8 : vector<64x1xf32> to vector<64x128xf32>
    %17 = arith.subf %2, %16 : vector<64x128xf32>
    %cst_11 = arith.constant 9.99999974E-6 : f32
    %18 = vector.broadcast %cst_11 : f32 to vector<64x1xf32>
    %19 = arith.addf %15, %18 : vector<64x1xf32>
    %20 = math.rsqrt %19 : vector<64x1xf32>
    %21 = vector.broadcast %20 : vector<64x1xf32> to vector<64x128xf32>
    %22 = arith.mulf %17, %21 : vector<64x128xf32>
    %23 = vector.broadcast %3 : vector<64x1xf32> to vector<64x128xf32>
    %24 = arith.mulf %22, %23 : vector<64x128xf32>
    %25 = vector.broadcast %4 : vector<64x1xf32> to vector<64x128xf32>
    %26 = arith.addf %24, %25 : vector<64x128xf32>
    %cst_12 = arith.constant 0.000000e+00 : f32
    %27 = vector.broadcast %cst_12 : f32 to vector<64x128xf32>
    %28 = arith.maximumf %26, %27 : vector<64x128xf32>
    %c0_13 = arith.constant 0 : index
    %c0_14 = arith.constant 0 : index
    %29 = vector.load %arg4[%c0_13, %c0_14] : memref<64x128xf32, #tpu.memory_space<vmem>>, vector<64x128xf32>
    tpu.vector_store %arg4[%c0_13, %c0_14], %28 {strides = array<i32>} : memref<64x128xf32, #tpu.memory_space<vmem>>, vector<64x128xf32>,
    return
  }
}

module attributes {stable_mosaic.version = 11 : i64} {
  func.func @fused_conv_bn_kernel(%arg0: memref<576x128xbf16, #tpu.memory_space<vmem>>, %arg1: memref<64x576xbf16, #tpu.memory_space<vmem>>, %arg2: memref<64x1xf32, #tpu.memory_space<vmem>>, %arg3: memref<64x1xf32, #tpu.memory_space<vmem>>, %arg4: memref<32x128xbf16, #tpu.memory_space<vmem>>, %arg5: memref<64x32xbf16, #tpu.memory_space<vmem>>, %arg6: memref<64x1xf32, #tpu.memory_space<vmem>>, %arg7: memref<64x1xf32, #tpu.memory_space<vmem>>, %arg8: memref<64x128xf32, #tpu.memory_space<vmem>>) attributes {dimension_semantics = [], scalar_prefetch = 0 : i64, scratch_operands = 0 : i64, tpu.core_type = #tpu.core_type<tc>} {
    %c0 = arith.constant 0 : index
    %c0_0 = arith.constant 0 : index
    %0 = vector.load %arg1[%c0, %c0_0] : memref<64x576xbf16, #tpu.memory_space<vmem>>, vector<64x576xbf16>
    %c0_1 = arith.constant 0 : index
    %c0_2 = arith.constant 0 : index
    %1 = vector.load %arg0[%c0_1, %c0_2] : memref<576x128xbf16, #tpu.memory_space<vmem>>, vector<576x128xbf16>
    %cst = arith.constant dense<0.000000e+00> : vector<64x128xf32>
    %2 = tpu.matmul %0, %1, %cst {dimension_numbers = #tpu.dot_dimension_numbers<[1], [0], [0], [1], [0, 0, 1, 1], [], []>} : vector<64x576xbf16>, vector<576x128xbf16>, vector<64x128xf32> -> vector<64x128xf32>
    %c0_3 = arith.constant 0 : index
    %c0_4 = arith.constant 0 : index
    %3 = vector.load %arg2[%c0_3, %c0_4] : memref<64x1xf32, #tpu.memory_space<vmem>>, vector<64x1xf32>
    %c0_5 = arith.constant 0 : index
    %c0_6 = arith.constant 0 : index
    %4 = vector.load %arg3[%c0_5, %c0_6] : memref<64x1xf32, #tpu.memory_space<vmem>>, vector<64x1xf32>
    %cst_7 = arith.constant dense<0.000000e+00> : vector<64xf32>
    %5 = vector.multi_reduction <add>, %2, %cst_7 [1] : vector<64x128xf32> to vector<64xf32>
    %6 = vector.shape_cast %5 : vector<64xf32> to vector<64x1xf32>
    %cst_8 = arith.constant 1.280000e+02 : f32
    %7 = vector.broadcast %cst_8 : f32 to vector<64x1xf32>
    %8 = arith.divf %6, %7 : vector<64x1xf32>
    %9 = vector.broadcast %8 : vector<64x1xf32> to vector<64x128xf32>
    %10 = arith.subf %2, %9 : vector<64x128xf32>
    %11 = arith.mulf %10, %10 : vector<64x128xf32>
    %cst_9 = arith.constant dense<0.000000e+00> : vector<64xf32>
    %12 = vector.multi_reduction <add>, %11, %cst_9 [1] : vector<64x128xf32> to vector<64xf32>
    %13 = vector.shape_cast %12 : vector<64xf32> to vector<64x1xf32>
    %cst_10 = arith.constant 1.280000e+02 : f32
    %14 = vector.broadcast %cst_10 : f32 to vector<64x1xf32>
    %15 = arith.divf %13, %14 : vector<64x1xf32>
    %16 = vector.broadcast %8 : vector<64x1xf32> to vector<64x128xf32>
    %17 = arith.subf %2, %16 : vector<64x128xf32>
    %cst_11 = arith.constant 9.99999974E-6 : f32
    %18 = vector.broadcast %cst_11 : f32 to vector<64x1xf32>
    %19 = arith.addf %15, %18 : vector<64x1xf32>
    %20 = math.rsqrt %19 : vector<64x1xf32>
    %21 = vector.broadcast %20 : vector<64x1xf32> to vector<64x128xf32>
    %22 = arith.mulf %17, %21 : vector<64x128xf32>
    %23 = vector.broadcast %3 : vector<64x1xf32> to vector<64x128xf32>
    %24 = arith.mulf %22, %23 : vector<64x128xf32>
    %25 = vector.broadcast %4 : vector<64x1xf32> to vector<64x128xf32>
    %26 = arith.addf %24, %25 : vector<64x128xf32>
    %c0_12 = arith.constant 0 : index
    %c0_13 = arith.constant 0 : index
    %27 = vector.load %arg5[%c0_12, %c0_13] : memref<64x32xbf16, #tpu.memory_space<vmem>>, vector<64x32xbf16>
    %c0_14 = arith.constant 0 : index
    %c0_15 = arith.constant 0 : index
    %28 = vector.load %arg4[%c0_14, %c0_15] : memref<32x128xbf16, #tpu.memory_space<vmem>>, vector<32x128xbf16>
    %cst_16 = arith.constant dense<0.000000e+00> : vector<64x128xf32>
    %29 = tpu.matmul %27, %28, %cst_16 {dimension_numbers = #tpu.dot_dimension_numbers<[1], [0], [0], [1], [0, 0, 1, 1], [], []>} : vector<64x32xbf16>, vector<32x128xbf16>, vector<64x128xf32> -> vector<64x128xf32>
    %c0_17 = arith.constant 0 : index
    %c0_18 = arith.constant 0 : index
    %30 = vector.load %arg6[%c0_17, %c0_18] : memref<64x1xf32, #tpu.memory_space<vmem>>, vector<64x1xf32>
    %c0_19 = arith.constant 0 : index
    %c0_20 = arith.constant 0 : index
    %31 = vector.load %arg7[%c0_19, %c0_20] : memref<64x1xf32, #tpu.memory_space<vmem>>, vector<64x1xf32>
    %cst_21 = arith.constant dense<0.000000e+00> : vector<64xf32>
    %32 = vector.multi_reduction <add>, %29, %cst_21 [1] : vector<64x128xf32> to vector<64xf32>
    %33 = vector.shape_cast %32 : vector<64xf32> to vector<64x1xf32>
    %cst_22 = arith.constant 1.280000e+02 : f32
    %34 = vector.broadcast %cst_22 : f32 to vector<64x1xf32>
    %35 = arith.divf %33, %34 : vector<64x1xf32>
    %36 = vector.broadcast %35 : vector<64x1xf32> to vector<64x128xf32>
    %37 = arith.subf %29, %36 : vector<64x128xf32>
    %38 = arith.mulf %37, %37 : vector<64x128xf32>
    %cst_23 = arith.constant dense<0.000000e+00> : vector<64xf32>
    %39 = vector.multi_reduction <add>, %38, %cst_23 [1] : vector<64x128xf32> to vector<64xf32>
    %40 = vector.shape_cast %39 : vector<64xf32> to vector<64x1xf32>
    %cst_24 = arith.constant 1.280000e+02 : f32
    %41 = vector.broadcast %cst_24 : f32 to vector<64x1xf32>
    %42 = arith.divf %40, %41 : vector<64x1xf32>
    %43 = vector.broadcast %35 : vector<64x1xf32> to vector<64x128xf32>
    %44 = arith.subf %29, %43 : vector<64x128xf32>
    %cst_25 = arith.constant 9.99999974E-6 : f32
    %45 = vector.broadcast %cst_25 : f32 to vector<64x1xf32>
    %46 = arith.addf %42, %45 : vector<64x1xf32>
    %47 = math.rsqrt %46 : vector<64x1xf32>
    %48 = vector.broadcast %47 : vector<64x1xf32> to vector<64x128xf32>
    %49 = arith.mulf %44, %48 : vector<64x128xf32>
    %50 = vector.broadcast %30 : vector<64x1xf32> to vector<64x128xf32>
    %51 = arith.mulf %49, %50 : vector<64x128xf32>
    %52 = vector.broadcast %31 : vector<64x1xf32> to vector<64x128xf32>
    %53 = arith.addf %51, %52 : vector<64x128xf32>
    %54 = arith.addf %26, %53 : vector<64x128xf32>
    %cst_26 = arith.constant 0.000000e+00 : f32
    %55 = vector.broadcast %cst_26 : f32 to vector<64x128xf32>
    %56 = arith.maximumf %54, %55 : vector<64x128xf32>
    %c0_27 = arith.constant 0 : index
    %c0_28 = arith.constant 0 : index
    %57 = vector.load %arg8[%c0_27, %c0_28] : memref<64x128xf32, #tpu.memory_space<vmem>>, vector<64x128xf32>
    tpu.vector_store %arg8[%c0_27, %c0_28], %56 {strides = array<i32>} : memref<64x128xf32, #tpu.memory_space<vmem>>, vector<64x128xf32>,
    return
  }
}

module attributes {stable_mosaic.version = 11 : i64} {
  func.func @fused_conv_bn_kernel(%arg0: memref<576x128xbf16, #tpu.memory_space<vmem>>, %arg1: memref<64x576xbf16, #tpu.memory_space<vmem>>, %arg2: memref<64x1xf32, #tpu.memory_space<vmem>>, %arg3: memref<64x1xf32, #tpu.memory_space<vmem>>, %arg4: memref<64x128xf32, #tpu.memory_space<vmem>>, %arg5: memref<64x128xf32, #tpu.memory_space<vmem>>) attributes {dimension_semantics = [], scalar_prefetch = 0 : i64, scratch_operands = 0 : i64, tpu.core_type = #tpu.core_type<tc>} {
    %c0 = arith.constant 0 : index
    %c0_0 = arith.constant 0 : index
    %0 = vector.load %arg1[%c0, %c0_0] : memref<64x576xbf16, #tpu.memory_space<vmem>>, vector<64x576xbf16>
    %c0_1 = arith.constant 0 : index
    %c0_2 = arith.constant 0 : index
    %1 = vector.load %arg0[%c0_1, %c0_2] : memref<576x128xbf16, #tpu.memory_space<vmem>>, vector<576x128xbf16>
    %cst = arith.constant dense<0.000000e+00> : vector<64x128xf32>
    %2 = tpu.matmul %0, %1, %cst {dimension_numbers = #tpu.dot_dimension_numbers<[1], [0], [0], [1], [0, 0, 1, 1], [], []>} : vector<64x576xbf16>, vector<576x128xbf16>, vector<64x128xf32> -> vector<64x128xf32>
    %c0_3 = arith.constant 0 : index
    %c0_4 = arith.constant 0 : index
    %3 = vector.load %arg2[%c0_3, %c0_4] : memref<64x1xf32, #tpu.memory_space<vmem>>, vector<64x1xf32>
    %c0_5 = arith.constant 0 : index
    %c0_6 = arith.constant 0 : index
    %4 = vector.load %arg3[%c0_5, %c0_6] : memref<64x1xf32, #tpu.memory_space<vmem>>, vector<64x1xf32>
    %cst_7 = arith.constant dense<0.000000e+00> : vector<64xf32>
    %5 = vector.multi_reduction <add>, %2, %cst_7 [1] : vector<64x128xf32> to vector<64xf32>
    %6 = vector.shape_cast %5 : vector<64xf32> to vector<64x1xf32>
    %cst_8 = arith.constant 1.280000e+02 : f32
    %7 = vector.broadcast %cst_8 : f32 to vector<64x1xf32>
    %8 = arith.divf %6, %7 : vector<64x1xf32>
    %9 = vector.broadcast %8 : vector<64x1xf32> to vector<64x128xf32>
    %10 = arith.subf %2, %9 : vector<64x128xf32>
    %11 = arith.mulf %10, %10 : vector<64x128xf32>
    %cst_9 = arith.constant dense<0.000000e+00> : vector<64xf32>
    %12 = vector.multi_reduction <add>, %11, %cst_9 [1] : vector<64x128xf32> to vector<64xf32>
    %13 = vector.shape_cast %12 : vector<64xf32> to vector<64x1xf32>
    %cst_10 = arith.constant 1.280000e+02 : f32
    %14 = vector.broadcast %cst_10 : f32 to vector<64x1xf32>
    %15 = arith.divf %13, %14 : vector<64x1xf32>
    %16 = vector.broadcast %8 : vector<64x1xf32> to vector<64x128xf32>
    %17 = arith.subf %2, %16 : vector<64x128xf32>
    %cst_11 = arith.constant 9.99999974E-6 : f32
    %18 = vector.broadcast %cst_11 : f32 to vector<64x1xf32>
    %19 = arith.addf %15, %18 : vector<64x1xf32>
    %20 = math.rsqrt %19 : vector<64x1xf32>
    %21 = vector.broadcast %20 : vector<64x1xf32> to vector<64x128xf32>
    %22 = arith.mulf %17, %21 : vector<64x128xf32>
    %23 = vector.broadcast %3 : vector<64x1xf32> to vector<64x128xf32>
    %24 = arith.mulf %22, %23 : vector<64x128xf32>
    %25 = vector.broadcast %4 : vector<64x1xf32> to vector<64x128xf32>
    %26 = arith.addf %24, %25 : vector<64x128xf32>
    %c0_12 = arith.constant 0 : index
    %c0_13 = arith.constant 0 : index
    %27 = vector.load %arg4[%c0_12, %c0_13] : memref<64x128xf32, #tpu.memory_space<vmem>>, vector<64x128xf32>
    %28 = arith.addf %26, %27 : vector<64x128xf32>
    %cst_14 = arith.constant 0.000000e+00 : f32
    %29 = vector.broadcast %cst_14 : f32 to vector<64x128xf32>
    %30 = arith.maximumf %28, %29 : vector<64x128xf32>
    %c0_15 = arith.constant 0 : index
    %c0_16 = arith.constant 0 : index
    %31 = vector.load %arg5[%c0_15, %c0_16] : memref<64x128xf32, #tpu.memory_space<vmem>>, vector<64x128xf32>
    tpu.vector_store %arg5[%c0_15, %c0_16], %30 {strides = array<i32>} : memref<64x128xf32, #tpu.memory_space<vmem>>, vector<64x128xf32>,
    return
  }
}

module attributes {stable_mosaic.version = 11 : i64} {
  func.func @fused_conv_bn_kernel(%arg0: memref<576x128xbf16, #tpu.memory_space<vmem>>, %arg1: memref<64x576xbf16, #tpu.memory_space<vmem>>, %arg2: memref<64x1xf32, #tpu.memory_space<vmem>>, %arg3: memref<64x1xf32, #tpu.memory_space<vmem>>, %arg4: memref<64x128xf32, #tpu.memory_space<vmem>>) attributes {dimension_semantics = [], scalar_prefetch = 0 : i64, scratch_operands = 0 : i64, tpu.core_type = #tpu.core_type<tc>} {
    %c0 = arith.constant 0 : index
    %c0_0 = arith.constant 0 : index
    %0 = vector.load %arg1[%c0, %c0_0] : memref<64x576xbf16, #tpu.memory_space<vmem>>, vector<64x576xbf16>
    %c0_1 = arith.constant 0 : index
    %c0_2 = arith.constant 0 : index
    %1 = vector.load %arg0[%c0_1, %c0_2] : memref<576x128xbf16, #tpu.memory_space<vmem>>, vector<576x128xbf16>
    %cst = arith.constant dense<0.000000e+00> : vector<64x128xf32>
    %2 = tpu.matmul %0, %1, %cst {dimension_numbers = #tpu.dot_dimension_numbers<[1], [0], [0], [1], [0, 0, 1, 1], [], []>} : vector<64x576xbf16>, vector<576x128xbf16>, vector<64x128xf32> -> vector<64x128xf32>
    %c0_3 = arith.constant 0 : index
    %c0_4 = arith.constant 0 : index
    %3 = vector.load %arg2[%c0_3, %c0_4] : memref<64x1xf32, #tpu.memory_space<vmem>>, vector<64x1xf32>
    %c0_5 = arith.constant 0 : index
    %c0_6 = arith.constant 0 : index
    %4 = vector.load %arg3[%c0_5, %c0_6] : memref<64x1xf32, #tpu.memory_space<vmem>>, vector<64x1xf32>
    %cst_7 = arith.constant dense<0.000000e+00> : vector<64xf32>
    %5 = vector.multi_reduction <add>, %2, %cst_7 [1] : vector<64x128xf32> to vector<64xf32>
    %6 = vector.shape_cast %5 : vector<64xf32> to vector<64x1xf32>
    %cst_8 = arith.constant 1.280000e+02 : f32
    %7 = vector.broadcast %cst_8 : f32 to vector<64x1xf32>
    %8 = arith.divf %6, %7 : vector<64x1xf32>
    %9 = vector.broadcast %8 : vector<64x1xf32> to vector<64x128xf32>
    %10 = arith.subf %2, %9 : vector<64x128xf32>
    %11 = arith.mulf %10, %10 : vector<64x128xf32>
    %cst_9 = arith.constant dense<0.000000e+00> : vector<64xf32>
    %12 = vector.multi_reduction <add>, %11, %cst_9 [1] : vector<64x128xf32> to vector<64xf32>
    %13 = vector.shape_cast %12 : vector<64xf32> to vector<64x1xf32>
    %cst_10 = arith.constant 1.280000e+02 : f32
    %14 = vector.broadcast %cst_10 : f32 to vector<64x1xf32>
    %15 = arith.divf %13, %14 : vector<64x1xf32>
    %16 = vector.broadcast %8 : vector<64x1xf32> to vector<64x128xf32>
    %17 = arith.subf %2, %16 : vector<64x128xf32>
    %cst_11 = arith.constant 9.99999974E-6 : f32
    %18 = vector.broadcast %cst_11 : f32 to vector<64x1xf32>
    %19 = arith.addf %15, %18 : vector<64x1xf32>
    %20 = math.rsqrt %19 : vector<64x1xf32>
    %21 = vector.broadcast %20 : vector<64x1xf32> to vector<64x128xf32>
    %22 = arith.mulf %17, %21 : vector<64x128xf32>
    %23 = vector.broadcast %3 : vector<64x1xf32> to vector<64x128xf32>
    %24 = arith.mulf %22, %23 : vector<64x128xf32>
    %25 = vector.broadcast %4 : vector<64x1xf32> to vector<64x128xf32>
    %26 = arith.addf %24, %25 : vector<64x128xf32>
    %cst_12 = arith.constant 0.000000e+00 : f32
    %27 = vector.broadcast %cst_12 : f32 to vector<64x128xf32>
    %28 = arith.maximumf %26, %27 : vector<64x128xf32>
    %c0_13 = arith.constant 0 : index
    %c0_14 = arith.constant 0 : index
    %29 = vector.load %arg4[%c0_13, %c0_14] : memref<64x128xf32, #tpu.memory_space<vmem>>, vector<64x128xf32>
    tpu.vector_store %arg4[%c0_13, %c0_14], %28 {strides = array<i32>} : memref<64x128xf32, #tpu.memory_space<vmem>>, vector<64x128xf32>,
    return
  }
}

module attributes {stable_mosaic.version = 11 : i64} {
  func.func @pool_linear_kernel(%arg0: memref<64x2x64xf32, #tpu.memory_space<vmem>>, %arg1: memref<10x64xf32, #tpu.memory_space<vmem>>, %arg2: memref<10x1xf32, #tpu.memory_space<vmem>>, %arg3: memref<10x2xf32, #tpu.memory_space<vmem>>) attributes {dimension_semantics = [], scalar_prefetch = 0 : i64, scratch_operands = 0 : i64, tpu.core_type = #tpu.core_type<tc>} {
    %c0 = arith.constant 0 : index
    %c0_0 = arith.constant 0 : index
    %c0_1 = arith.constant 0 : index
    %0 = vector.load %arg0[%c0, %c0_0, %c0_1] : memref<64x2x64xf32, #tpu.memory_space<vmem>>, vector<64x2x64xf32>
    %cst = arith.constant dense<0.000000e+00> : vector<64x2xf32>
    %1 = vector.multi_reduction <add>, %0, %cst [2] : vector<64x2x64xf32> to vector<64x2xf32>
    %cst_2 = arith.constant 6.400000e+01 : f32
    %2 = vector.broadcast %cst_2 : f32 to vector<64x2xf32>
    %3 = arith.divf %1, %2 : vector<64x2xf32>
    %c0_3 = arith.constant 0 : index
    %c0_4 = arith.constant 0 : index
    %4 = vector.load %arg1[%c0_3, %c0_4] : memref<10x64xf32, #tpu.memory_space<vmem>>, vector<10x64xf32>
    %cst_5 = arith.constant dense<0.000000e+00> : vector<10x2xf32>
    %5 = tpu.matmul %4, %3, %cst_5 {dimension_numbers = #tpu.dot_dimension_numbers<[1], [0], [0], [1], [0, 0, 1, 1], [], []>} : vector<10x64xf32>, vector<64x2xf32>, vector<10x2xf32> -> vector<10x2xf32>
    %c0_6 = arith.constant 0 : index
    %c0_7 = arith.constant 0 : index
    %6 = vector.load %arg2[%c0_6, %c0_7] : memref<10x1xf32, #tpu.memory_space<vmem>>, vector<10x1xf32>
    %7 = vector.broadcast %6 : vector<10x1xf32> to vector<10x2xf32>
    %8 = arith.addf %5, %7 : vector<10x2xf32>
    %c0_8 = arith.constant 0 : index
    %c0_9 = arith.constant 0 : index
    %9 = vector.load %arg3[%c0_8, %c0_9] : memref<10x2xf32, #tpu.memory_space<vmem>>, vector<10x2xf32>
    tpu.vector_store %arg3[%c0_8, %c0_9], %8 {strides = array<i32>} : memref<10x2xf32, #tpu.memory_space<vmem>>, vector<10x2xf32>,
    return
  }
}

</mosaic_0001>

<llo_original>
// kernel: resnet_forward.14
$region0: #{resnet_forward.14}
  #allocation0 [shape = 'u32[]', space=smem, size = 0x4, offset = 0x4, fixed_abs, tag = 'smem constant byte address 0x4 - core index']
  #allocation1 [shape = 'u32[144,128]{1,0:T(1,128)}', space=vmem, size = 0x12000, scoped, tag = 'internal scratch']
  %s0 = inlined_call_operand.vmem [shape: bf16[27,2048], index: 0, kind: input, shape index: {}]
  %s1 = inlined_call_operand.vmem [shape: bf16[16,27], index: 1, kind: input, shape index: {}]
  %s2 = inlined_call_operand.vmem [shape: f32[16,1], index: 2, kind: input, shape index: {}]
  %s3 = inlined_call_operand.vmem [shape: f32[16,1], index: 3, kind: input, shape index: {}]
  %s4 = inlined_call_operand.vmem [shape: f32[16,2048], index: 4, kind: output, shape index: {}]
  %s5 = sld [smem:[#allocation0]]
  $region26: #{resnet_forward.14} parent=0
    _
  %s7 = ssub.s32 1, %s5
  %s8 = scalar_select 0, %s7, %s5
  // Predicated region
  $region2: #{resnet_forward.14} parent=0 // pred_check
    _
  $region3: #{resnet_forward.14} parent=0 // pred_check_branch
    %10 = sbr.rel (0) target = $region5
  $region4: #{resnet_forward.14} parent=0 // pred_region
    _
  $region5: #{resnet_forward.14} parent=0 // pred_fallthru
    _
  // Predicated region
  $region6: #{resnet_forward.14} parent=0 // pred_check
    _
  $region7: #{resnet_forward.14} parent=0 // pred_check_branch
    %12 = sbr.rel (0) target = $region9
  $region8: #{resnet_forward.14} parent=0 // pred_region
    _
  $region9: #{resnet_forward.14} parent=0 // pred_fallthru
    _
  // Predicated region
  $region10: #{resnet_forward.14} parent=0 // pred_check
    _
  $region11: #{resnet_forward.14} parent=0 // pred_check_branch
    %14 = sbr.rel (0) target = $region13
  $region12: #{resnet_forward.14} parent=0 // pred_region
    _
  $region13: #{resnet_forward.14} parent=0 // pred_fallthru
    _
  // Predicated region
  $region14: #{resnet_forward.14} parent=0 // pred_check
    _
  $region15: #{resnet_forward.14} parent=0 // pred_check_branch
    %16 = sbr.rel (0) target = $region17
  $region16: #{resnet_forward.14} parent=0 // pred_region
    _
  $region17: #{resnet_forward.14} parent=0 // pred_fallthru
    _
  %v18 = vld [vmem:[%s1] sm:$0xf]
  %v19 = vld [vmem:[%s1 + $0x4] sm:$0xf]
  %v20 = vld [vmem:[%s0] sm:$0xff]
  %v21 = vld [vmem:[%s0 + $0x8] sm:$0xff]
  %v22 = vld [vmem:[%s0 + $0x10] sm:$0xff]
  %v23 = vld [vmem:[%s0 + $0x18] sm:$0xff]
  %v24 = vld [vmem:[%s0 + $0x20] sm:$0xff]
  %v25 = vld [vmem:[%s0 + $0x28] sm:$0xff]
  %v26 = vld [vmem:[%s0 + $0x30] sm:$0xff]
  %v27 = vld [vmem:[%s0 + $0x38] sm:$0xff]
  %v28 = vld [vmem:[%s0 + $0x40] sm:$0xff]
  %v29 = vld [vmem:[%s0 + $0x48] sm:$0xff]
  %v30 = vld [vmem:[%s0 + $0x50] sm:$0xff]
  %v31 = vld [vmem:[%s0 + $0x58] sm:$0xff]
  %v32 = vld [vmem:[%s0 + $0x60] sm:$0xff]
  %v33 = vld [vmem:[%s0 + $0x68] sm:$0xff]
  %v34 = vld [vmem:[%s0 + $0x70] sm:$0xff]
  %v35 = vld [vmem:[%s0 + $0x78] sm:$0xff]
  %v36 = vld [vmem:[%s0 + $0x80] sm:$0xff]
  %v37 = vld [vmem:[%s0 + $0x88] sm:$0xff]
  %v38 = vld [vmem:[%s0 + $0x90] sm:$0xff]
  %v39 = vld [vmem:[%s0 + $0x98] sm:$0xff]
  %v40 = vld [vmem:[%s0 + $0xa0] sm:$0xff]
  %v41 = vld [vmem:[%s0 + $0xa8] sm:$0xff]
  %v42 = vld [vmem:[%s0 + $0xb0] sm:$0xff]
  %v43 = vld [vmem:[%s0 + $0xb8] sm:$0xff]
  %v44 = vld [vmem:[%s0 + $0xc0] sm:$0x33]
  %v45 = vld [vmem:[%s0 + $0xc8] sm:$0x33]
  %v46 = vld [vmem:[%s0 + $0xd0] sm:$0x33]
  %v47 = vld [vmem:[%s0 + $0xd8] sm:$0x33]
  %v48 = vld [vmem:[%s0 + $0xe0] sm:$0x33]
  %v49 = vld [vmem:[%s0 + $0xe8] sm:$0x33]
  %v50 = vld [vmem:[%s0 + $0xf0] sm:$0x33]
  %v51 = vld [vmem:[%s0 + $0xf8] sm:$0x33]
  %v54 = vunpack.c.l.b16 %v18
  %v55 = vunpack.c.l.b16 %v19
  %v56 = vpack.c.b16 %v55, %v54
  %v89 = vunpack.c.l.b16 %v20
  %v90 = vunpack.c.h.b16 %v20
  %v91 = vunpack.c.l.b16 %v21
  %v92 = vunpack.c.h.b16 %v21
  %v93 = vunpack.c.l.b16 %v22
  %v94 = vunpack.c.h.b16 %v22
  %v95 = vunpack.c.l.b16 %v23
  %v96 = vunpack.c.h.b16 %v23
  %v97 = vunpack.c.l.b16 %v24
  %v98 = vunpack.c.h.b16 %v24
  %v99 = vunpack.c.l.b16 %v25
  %v100 = vunpack.c.h.b16 %v25
  %v101 = vunpack.c.l.b16 %v26
  %v102 = vunpack.c.h.b16 %v26
  %v103 = vunpack.c.l.b16 %v27
  %v104 = vunpack.c.h.b16 %v27
  %v105 = vunpack.c.l.b16 %v28
  %v106 = vunpack.c.h.b16 %v28
  %v107 = vunpack.c.l.b16 %v29
  %v108 = vunpack.c.h.b16 %v29
  %v109 = vunpack.c.l.b16 %v30
  %v110 = vunpack.c.h.b16 %v30
  %v111 = vunpack.c.l.b16 %v31
  %v112 = vunpack.c.h.b16 %v31
  %v113 = vunpack.c.l.b16 %v32
  %v114 = vunpack.c.h.b16 %v32
  %v115 = vunpack.c.l.b16 %v33
  %v116 = vunpack.c.h.b16 %v33
  %v117 = vunpack.c.l.b16 %v34
  %v118 = vunpack.c.h.b16 %v34
  %v119 = vunpack.c.l.b16 %v35
  %v120 = vunpack.c.h.b16 %v35
  %v121 = vunpack.c.l.b16 %v36
  %v122 = vunpack.c.h.b16 %v36
  %v123 = vunpack.c.l.b16 %v37
  %v124 = vunpack.c.h.b16 %v37
  %v125 = vunpack.c.l.b16 %v38
  %v126 = vunpack.c.h.b16 %v38
  %v127 = vunpack.c.l.b16 %v39
  %v128 = vunpack.c.h.b16 %v39
  %v129 = vunpack.c.l.b16 %v40
  %v130 = vunpack.c.h.b16 %v40
  %v131 = vunpack.c.l.b16 %v41
  %v132 = vunpack.c.h.b16 %v41
  %v133 = vunpack.c.l.b16 %v42
  %v134 = vunpack.c.h.b16 %v42
  %v135 = vunpack.c.l.b16 %v43
  %v136 = vunpack.c.h.b16 %v43
  %v137 = vunpack.c.l.b16 %v44
  %v138 = vunpack.c.h.b16 %v44
  %v139 = vunpack.c.l.b16 %v45
  %v140 = vunpack.c.h.b16 %v45
  %v141 = vunpack.c.l.b16 %v46
  %v142 = vunpack.c.h.b16 %v46
  %v143 = vunpack.c.l.b16 %v47
  %v144 = vunpack.c.h.b16 %v47
  %v145 = vunpack.c.l.b16 %v48
  %v146 = vunpack.c.h.b16 %v48
  %v147 = vunpack.c.l.b16 %v49
  %v148 = vunpack.c.h.b16 %v49
  %v149 = vunpack.c.l.b16 %v50
  %v150 = vunpack.c.h.b16 %v50
  %v151 = vunpack.c.l.b16 %v51
  %v152 = vunpack.c.h.b16 %v51
  %v153 = vpack.c.b16 %v105, %v89
  %v154 = vpack.c.b16 %v106, %v90
  %v155 = vpack.c.b16 %v107, %v91
  %v156 = vpack.c.b16 %v108, %v92
  %v157 = vpack.c.b16 %v109, %v93
  %v158 = vpack.c.b16 %v110, %v94
  %v159 = vpack.c.b16 %v111, %v95
  %v160 = vpack.c.b16 %v112, %v96
  %v161 = vpack.c.b16 %v113, %v97
  %v162 = vpack.c.b16 %v114, %v98
  %v163 = vpack.c.b16 %v115, %v99
  %v164 = vpack.c.b16 %v116, %v100
  %v165 = vpack.c.b16 %v117, %v101
  %v166 = vpack.c.b16 %v118, %v102
  %v167 = vpack.c.b16 %v119, %v103
  %v168 = vpack.c.b16 %v120, %v104
  %v169 = vpack.c.b16 %v137, %v121
  %v170 = vpack.c.b16 %v138, %v122
  %v171 = vpack.c.b16 %v139, %v123
  %v172 = vpack.c.b16 %v140, %v124
  %v173 = vpack.c.b16 %v141, %v125
  %v174 = vpack.c.b16 %v142, %v126
  %v175 = vpack.c.b16 %v143, %v127
  %v176 = vpack.c.b16 %v144, %v128
  %v177 = vpack.c.b16 %v145, %v129
  %v178 = vpack.c.b16 %v146, %v130
  %v179 = vpack.c.b16 %v147, %v131
  %v180 = vpack.c.b16 %v148, %v132
  %v181 = vpack.c.b16 %v149, %v133
  %v182 = vpack.c.b16 %v150, %v134
  %v183 = vpack.c.b16 %v151, %v135
  %v184 = vpack.c.b16 %v152, %v136
  %vm201 = vcmask 220160
  %v203 = vsel %vm201, %v56, 0
  %vm205 = vcmask 1044480
  %vm206 = vcmask 1045504
  %v207 = vsel %vm205, 4294967295, 65535
  %v208 = vsel %vm206, %v207, 0
  %v210 = vand.u32 %v169, %v208
  %v213 = vand.u32 %v170, %v208
  %v216 = vand.u32 %v171, %v208
  %v219 = vand.u32 %v172, %v208
  %v222 = vand.u32 %v173, %v208
  %v225 = vand.u32 %v174, %v208
  %v228 = vand.u32 %v175, %v208
  %v231 = vand.u32 %v176, %v208
  %v234 = vand.u32 %v177, %v208
  %v237 = vand.u32 %v178, %v208
  %v240 = vand.u32 %v179, %v208
  %v243 = vand.u32 %v180, %v208
  %v246 = vand.u32 %v181, %v208
  %v249 = vand.u32 %v182, %v208
  %v252 = vand.u32 %v183, %v208
  %v255 = vand.u32 %v184, %v208
  %257 = vmatprep.subr.bf16.mxu0 %v154
  %258 = vmatpush1.bf16.msra.mxu0 %v153
  %259 = vmatprep.subr.bf16.mxu0 %v213
  %260 = vmatpush1.bf16.msra.mxu0 %v210
  %261 = vmatprep.subr.bf16.mxu0 0
  %262 = vmatpush1.bf16.msra.mxu0 0
  %263 = vmatprep.subr.bf16.mxu0 0
  %264 = vmatpush1.bf16.msra.mxu0 0
  %265 = vmatprep.subr.bf16.mxu0 0
  %266 = vmatpush1.bf16.msra.mxu0 0
  %267 = vmatprep.subr.bf16.mxu0 0
  %268 = vmatpush1.bf16.msra.mxu0 0
  %269 = vmatprep.subr.bf16.mxu0 0
  %270 = vmatpush1.bf16.msra.mxu0 0
  %271 = vmatprep.subr.bf16.mxu0 0
  %272 = vmatpush1.bf16.msra.mxu0 0
  %273 = vmatprep.subr.bf16.mxu0 0
  %274 = vmatpush1.bf16.msra.mxu0 0
  %275 = vmatprep.subr.bf16.mxu0 0
  %276 = vmatpush1.bf16.msra.mxu0 0
  %277 = vmatprep.subr.bf16.mxu0 0
  %278 = vmatpush1.bf16.msra.mxu0 0
  %279 = vmatprep.subr.bf16.mxu0 0
  %280 = vmatpush1.bf16.msra.mxu0 0
  %281 = vmatprep.subr.bf16.mxu0 0
  %282 = vmatpush1.bf16.msra.mxu0 0
  %283 = vmatprep.subr.bf16.mxu0 0
  %284 = vmatpush1.bf16.msra.mxu0 0
  %285 = vmatprep.subr.bf16.mxu0 0
  %286 = vmatpush1.bf16.msra.mxu0 0
  %287 = vmatprep.subr.bf16.mxu0 0
  %288 = vmatpush1.bf16.msra.mxu0 0
  %289 = vmatprep.mubr.bf16.mxu0 0
  %290 = vmatmul.mubr.bf16.gmra.mrb[0].mxu0 %v203
  %v291 = vpop.f32.mrb[0].mxu0
  %v292 = vadd.f32 0.0, %v291
  %v293 = vpop.f32.mrb[0].mxu0
  %v294 = vadd.f32 0.0, %v293
  %v295 = vpop.f32.mrb[0].mxu0
  %v296 = vadd.f32 0.0, %v295
  %v297 = vpop.f32.mrb[0].mxu0
  %v298 = vadd.f32 0.0, %v297
  %299 = vdwg.mxu0
  %300 = vmatprep.subr.bf16.mxu0 %v156
  %301 = vmatpush1.bf16.msra.mxu0 %v155
  %302 = vmatprep.subr.bf16.mxu0 %v219
  %303 = vmatpush1.bf16.msra.mxu0 %v216
  %304 = vmatprep.subr.bf16.mxu0 0
  %305 = vmatpush1.bf16.msra.mxu0 0
  %306 = vmatprep.subr.bf16.mxu0 0
  %307 = vmatpush1.bf16.msra.mxu0 0
  %308 = vmatprep.subr.bf16.mxu0 0
  %309 = vmatpush1.bf16.msra.mxu0 0
  %310 = vmatprep.subr.bf16.mxu0 0
  %311 = vmatpush1.bf16.msra.mxu0 0
  %312 = vmatprep.subr.bf16.mxu0 0
  %313 = vmatpush1.bf16.msra.mxu0 0
  %314 = vmatprep.subr.bf16.mxu0 0
  %315 = vmatpush1.bf16.msra.mxu0 0
  %316 = vmatprep.subr.bf16.mxu0 0
  %317 = vmatpush1.bf16.msra.mxu0 0
  %318 = vmatprep.subr.bf16.mxu0 0
  %319 = vmatpush1.bf16.msra.mxu0 0
  %320 = vmatprep.subr.bf16.mxu0 0
  %321 = vmatpush1.bf16.msra.mxu0 0
  %322 = vmatprep.subr.bf16.mxu0 0
  %323 = vmatpush1.bf16.msra.mxu0 0
  %324 = vmatprep.subr.bf16.mxu0 0
  %325 = vmatpush1.bf16.msra.mxu0 0
  %326 = vmatprep.subr.bf16.mxu0 0
  %327 = vmatpush1.bf16.msra.mxu0 0
  %328 = vmatprep.subr.bf16.mxu0 0
  %329 = vmatpush1.bf16.msra.mxu0 0
  %330 = vmatprep.subr.bf16.mxu0 0
  %331 = vmatpush1.bf16.msra.mxu0 0
  %332 = vmatprep.mubr.bf16.mxu0 0
  %333 = vmatmul.mubr.bf16.gmra.mrb[0].mxu0 %v203
  %v334 = vpop.f32.mrb[0].mxu0
  %v335 = vadd.f32 0.0, %v334
  %v336 = vpop.f32.mrb[0].mxu0
  %v337 = vadd.f32 0.0, %v336
  %v338 = vpop.f32.mrb[0].mxu0
  %v339 = vadd.f32 0.0, %v338
  %v340 = vpop.f32.mrb[0].mxu0
  %v341 = vadd.f32 0.0, %v340
  %342 = vdwg.mxu0
  %343 = vmatprep.subr.bf16.mxu0 %v158
  %344 = vmatpush1.bf16.msra.mxu0 %v157
  %345 = vmatprep.subr.bf16.mxu0 %v225
  %346 = vmatpush1.bf16.msra.mxu0 %v222
  %347 = vmatprep.subr.bf16.mxu0 0
  %348 = vmatpush1.bf16.msra.mxu0 0
  %349 = vmatprep.subr.bf16.mxu0 0
  %350 = vmatpush1.bf16.msra.mxu0 0
  %351 = vmatprep.subr.bf16.mxu0 0
  %352 = vmatpush1.bf16.msra.mxu0 0
  %353 = vmatprep.subr.bf16.mxu0 0
  %354 = vmatpush1.bf16.msra.mxu0 0
  %355 = vmatprep.subr.bf16.mxu0 0
  %356 = vmatpush1.bf16.msra.mxu0 0
  %357 = vmatprep.subr.bf16.mxu0 0
  %358 = vmatpush1.bf16.msra.mxu0 0
  %359 = vmatprep.subr.bf16.mxu0 0
  %360 = vmatpush1.bf16.msra.mxu0 0
  %361 = vmatprep.subr.bf16.mxu0 0
  %362 = vmatpush1.bf16.msra.mxu0 0
  %363 = vmatprep.subr.bf16.mxu0 0
  %364 = vmatpush1.bf16.msra.mxu0 0
  %365 = vmatprep.subr.bf16.mxu0 0
  %366 = vmatpush1.bf16.msra.mxu0 0
  %367 = vmatprep.subr.bf16.mxu0 0
  %368 = vmatpush1.bf16.msra.mxu0 0
  %369 = vmatprep.subr.bf16.mxu0 0
  %370 = vmatpush1.bf16.msra.mxu0 0
  %371 = vmatprep.subr.bf16.mxu0 0
  %372 = vmatpush1.bf16.msra.mxu0 0
  %373 = vmatprep.subr.bf16.mxu0 0
  %374 = vmatpush1.bf16.msra.mxu0 0
  %375 = vmatprep.mubr.bf16.mxu0 0
  %376 = vmatmul.mubr.bf16.gmra.mrb[0].mxu0 %v203
  %v377 = vpop.f32.mrb[0].mxu0
  %v378 = vadd.f32 0.0, %v377
  %v379 = vpop.f32.mrb[0].mxu0
  %v380 = vadd.f32 0.0, %v379
  %v381 = vpop.f32.mrb[0].mxu0
  %v382 = vadd.f32 0.0, %v381
  %v383 = vpop.f32.mrb[0].mxu0
  %v384 = vadd.f32 0.0, %v383
  %385 = vdwg.mxu0
  %386 = vmatprep.subr.bf16.mxu0 %v160
  %387 = vmatpush1.bf16.msra.mxu0 %v159
  %388 = vmatprep.subr.bf16.mxu0 %v231
  %389 = vmatpush1.bf16.msra.mxu0 %v228
  %390 = vmatprep.subr.bf16.mxu0 0
  %391 = vmatpush1.bf16.msra.mxu0 0
  %392 = vmatprep.subr.bf16.mxu0 0
  %393 = vmatpush1.bf16.msra.mxu0 0
  %394 = vmatprep.subr.bf16.mxu0 0
  %395 = vmatpush1.bf16.msra.mxu0 0
  %396 = vmatprep.subr.bf16.mxu0 0
  %397 = vmatpush1.bf16.msra.mxu0 0
  %398 = vmatprep.subr.bf16.mxu0 0
  %399 = vmatpush1.bf16.msra.mxu0 0
  %400 = vmatprep.subr.bf16.mxu0 0
  %401 = vmatpush1.bf16.msra.mxu0 0
  %402 = vmatprep.subr.bf16.mxu0 0
  %403 = vmatpush1.bf16.msra.mxu0 0
  %404 = vmatprep.subr.bf16.mxu0 0
  %405 = vmatpush1.bf16.msra.mxu0 0
  %406 = vmatprep.subr.bf16.mxu0 0
  %407 = vmatpush1.bf16.msra.mxu0 0
  %408 = vmatprep.subr.bf16.mxu0 0
  %409 = vmatpush1.bf16.msra.mxu0 0
  %410 = vmatprep.subr.bf16.mxu0 0
  %411 = vmatpush1.bf16.msra.mxu0 0
  %412 = vmatprep.subr.bf16.mxu0 0
  %413 = vmatpush1.bf16.msra.mxu0 0
  %414 = vmatprep.subr.bf16.mxu0 0
  %415 = vmatpush1.bf16.msra.mxu0 0
  %416 = vmatprep.subr.bf16.mxu0 0
  %417 = vmatpush1.bf16.msra.mxu0 0
  %418 = vmatprep.mubr.bf16.mxu0 0
  %419 = vmatmul.mubr.bf16.gmra.mrb[0].mxu0 %v203
  %v420 = vpop.f32.mrb[0].mxu0
  %v421 = vadd.f32 0.0, %v420
  %v422 = vpop.f32.mrb[0].mxu0
  %v423 = vadd.f32 0.0, %v422
  %v424 = vpop.f32.mrb[0].mxu0
  %v425 = vadd.f32 0.0, %v424
  %v426 = vpop.f32.mrb[0].mxu0
  %v427 = vadd.f32 0.0, %v426
  %428 = vdwg.mxu0
  %429 = vmatprep.subr.bf16.mxu0 %v162
  %430 = vmatpush1.bf16.msra.mxu0 %v161
  %431 = vmatprep.subr.bf16.mxu0 %v237
  %432 = vmatpush1.bf16.msra.mxu0 %v234
  %433 = vmatprep.subr.bf16.mxu0 0
  %434 = vmatpush1.bf16.msra.mxu0 0
  %435 = vmatprep.subr.bf16.mxu0 0
  %436 = vmatpush1.bf16.msra.mxu0 0
  %437 = vmatprep.subr.bf16.mxu0 0
  %438 = vmatpush1.bf16.msra.mxu0 0
  %439 = vmatprep.subr.bf16.mxu0 0
  %440 = vmatpush1.bf16.msra.mxu0 0
  %441 = vmatprep.subr.bf16.mxu0 0
  %442 = vmatpush1.bf16.msra.mxu0 0
  %443 = vmatprep.subr.bf16.mxu0 0
  %444 = vmatpush1.bf16.msra.mxu0 0
  %445 = vmatprep.subr.bf16.mxu0 0
  %446 = vmatpush1.bf16.msra.mxu0 0
  %447 = vmatprep.subr.bf16.mxu0 0
  %448 = vmatpush1.bf16.msra.mxu0 0
  %449 = vmatprep.subr.bf16.mxu0 0
  %450 = vmatpush1.bf16.msra.mxu0 0
  %451 = vmatprep.subr.bf16.mxu0 0
  %452 = vmatpush1.bf16.msra.mxu0 0
  %453 = vmatprep.subr.bf16.mxu0 0
  %454 = vmatpush1.bf16.msra.mxu0 0
  %455 = vmatprep.subr.bf16.mxu0 0
  %456 = vmatpush1.bf16.msra.mxu0 0
  %457 = vmatprep.subr.bf16.mxu0 0
  %458 = vmatpush1.bf16.msra.mxu0 0
  %459 = vmatprep.subr.bf16.mxu0 0
  %460 = vmatpush1.bf16.msra.mxu0 0
  %461 = vmatprep.mubr.bf16.mxu0 0
  %462 = vmatmul.mubr.bf16.gmra.mrb[0].mxu0 %v203
  %v463 = vpop.f32.mrb[0].mxu0
  %v464 = vadd.f32 0.0, %v463
  %v465 = vpop.f32.mrb[0].mxu0
  %v466 = vadd.f32 0.0, %v465
  %v467 = vpop.f32.mrb[0].mxu0
  %v468 = vadd.f32 0.0, %v467
  %v469 = vpop.f32.mrb[0].mxu0
  %v470 = vadd.f32 0.0, %v469
  %471 = vdwg.mxu0
  %472 = vmatprep.subr.bf16.mxu0 %v164
  %473 = vmatpush1.bf16.msra.mxu0 %v163
  %474 = vmatprep.subr.bf16.mxu0 %v243
  %475 = vmatpush1.bf16.msra.mxu0 %v240
  %476 = vmatprep.subr.bf16.mxu0 0
  %477 = vmatpush1.bf16.msra.mxu0 0
  %478 = vmatprep.subr.bf16.mxu0 0
  %479 = vmatpush1.bf16.msra.mxu0 0
  %480 = vmatprep.subr.bf16.mxu0 0
  %481 = vmatpush1.bf16.msra.mxu0 0
  %482 = vmatprep.subr.bf16.mxu0 0
  %483 = vmatpush1.bf16.msra.mxu0 0
  %484 = vmatprep.subr.bf16.mxu0 0
  %485 = vmatpush1.bf16.msra.mxu0 0
  %486 = vmatprep.subr.bf16.mxu0 0
  %487 = vmatpush1.bf16.msra.mxu0 0
  %488 = vmatprep.subr.bf16.mxu0 0
  %489 = vmatpush1.bf16.msra.mxu0 0
  %490 = vmatprep.subr.bf16.mxu0 0
  %491 = vmatpush1.bf16.msra.mxu0 0
  %492 = vmatprep.subr.bf16.mxu0 0
  %493 = vmatpush1.bf16.msra.mxu0 0
  %494 = vmatprep.subr.bf16.mxu0 0
  %495 = vmatpush1.bf16.msra.mxu0 0
  %496 = vmatprep.subr.bf16.mxu0 0
  %497 = vmatpush1.bf16.msra.mxu0 0
  %498 = vmatprep.subr.bf16.mxu0 0
  %499 = vmatpush1.bf16.msra.mxu0 0
  %500 = vmatprep.subr.bf16.mxu0 0
  %501 = vmatpush1.bf16.msra.mxu0 0
  %502 = vmatprep.subr.bf16.mxu0 0
  %503 = vmatpush1.bf16.msra.mxu0 0
  %504 = vmatprep.mubr.bf16.mxu0 0
  %505 = vmatmul.mubr.bf16.gmra.mrb[0].mxu0 %v203
  %v506 = vpop.f32.mrb[0].mxu0
  %v507 = vadd.f32 0.0, %v506
  %v508 = vpop.f32.mrb[0].mxu0
  %v509 = vadd.f32 0.0, %v508
  %v510 = vpop.f32.mrb[0].mxu0
  %v511 = vadd.f32 0.0, %v510
  %v512 = vpop.f32.mrb[0].mxu0
  %v513 = vadd.f32 0.0, %v512
  %514 = vdwg.mxu0
  %515 = vmatprep.subr.bf16.mxu0 %v166
  %516 = vmatpush1.bf16.msra.mxu0 %v165
  %517 = vmatprep.subr.bf16.mxu0 %v249
  %518 = vmatpush1.bf16.msra.mxu0 %v246
  %519 = vmatprep.subr.bf16.mxu0 0
  %520 = vmatpush1.bf16.msra.mxu0 0
  %521 = vmatprep.subr.bf16.mxu0 0
  %522 = vmatpush1.bf16.msra.mxu0 0
  %523 = vmatprep.subr.bf16.mxu0 0
  %524 = vmatpush1.bf16.msra.mxu0 0
  %525 = vmatprep.subr.bf16.mxu0 0
  %526 = vmatpush1.bf16.msra.mxu0 0
  %527 = vmatprep.subr.bf16.mxu0 0
  %528 = vmatpush1.bf16.msra.mxu0 0
  %529 = vmatprep.subr.bf16.mxu0 0
  %530 = vmatpush1.bf16.msra.mxu0 0
  %531 = vmatprep.subr.bf16.mxu0 0
  %532 = vmatpush1.bf16.msra.mxu0 0
  %533 = vmatprep.subr.bf16.mxu0 0
  %534 = vmatpush1.bf16.msra.mxu0 0
  %535 = vmatprep.subr.bf16.mxu0 0
  %536 = vmatpush1.bf16.msra.mxu0 0
  %537 = vmatprep.subr.bf16.mxu0 0
  %538 = vmatpush1.bf16.msra.mxu0 0
  %539 = vmatprep.subr.bf16.mxu0 0
  %540 = vmatpush1.bf16.msra.mxu0 0
  %541 = vmatprep.subr.bf16.mxu0 0
  %542 = vmatpush1.bf16.msra.mxu0 0
  %543 = vmatprep.subr.bf16.mxu0 0
  %544 = vmatpush1.bf16.msra.mxu0 0
  %545 = vmatprep.subr.bf16.mxu0 0
  %546 = vmatpush1.bf16.msra.mxu0 0
  %547 = vmatprep.mubr.bf16.mxu0 0
  %548 = vmatmul.mubr.bf16.gmra.mrb[0].mxu0 %v203
  %v549 = vpop.f32.mrb[0].mxu0
  %v550 = vadd.f32 0.0, %v549
  %v551 = vpop.f32.mrb[0].mxu0
  %v552 = vadd.f32 0.0, %v551
  %v553 = vpop.f32.mrb[0].mxu0
  %v554 = vadd.f32 0.0, %v553
  %v555 = vpop.f32.mrb[0].mxu0
  %v556 = vadd.f32 0.0, %v555
  %557 = vdwg.mxu0
  %558 = vmatprep.subr.bf16.mxu0 %v168
  %559 = vmatpush1.bf16.msra.mxu0 %v167
  %560 = vmatprep.subr.bf16.mxu0 %v255
  %561 = vmatpush1.bf16.msra.mxu0 %v252
  %562 = vmatprep.subr.bf16.mxu0 0
  %563 = vmatpush1.bf16.msra.mxu0 0
  %564 = vmatprep.subr.bf16.mxu0 0
  %565 = vmatpush1.bf16.msra.mxu0 0
  %566 = vmatprep.subr.bf16.mxu0 0
  %567 = vmatpush1.bf16.msra.mxu0 0
  %568 = vmatprep.subr.bf16.mxu0 0
  %569 = vmatpush1.bf16.msra.mxu0 0
  %570 = vmatprep.subr.bf16.mxu0 0
  %571 = vmatpush1.bf16.msra.mxu0 0
  %572 = vmatprep.subr.bf16.mxu0 0
  %573 = vmatpush1.bf16.msra.mxu0 0
  %574 = vmatprep.subr.bf16.mxu0 0
  %575 = vmatpush1.bf16.msra.mxu0 0
  %576 = vmatprep.subr.bf16.mxu0 0
  %577 = vmatpush1.bf16.msra.mxu0 0
  %578 = vmatprep.subr.bf16.mxu0 0
  %579 = vmatpush1.bf16.msra.mxu0 0
  %580 = vmatprep.subr.bf16.mxu0 0
  %581 = vmatpush1.bf16.msra.mxu0 0
  %582 = vmatprep.subr.bf16.mxu0 0
  %583 = vmatpush1.bf16.msra.mxu0 0
  %584 = vmatprep.subr.bf16.mxu0 0
  %585 = vmatpush1.bf16.msra.mxu0 0
  %586 = vmatprep.subr.bf16.mxu0 0
  %587 = vmatpush1.bf16.msra.mxu0 0
  %588 = vmatprep.subr.bf16.mxu0 0
  %589 = vmatpush1.bf16.msra.mxu0 0
  %590 = vmatprep.mubr.bf16.mxu0 0
  %591 = vmatmul.mubr.bf16.gmra.mrb[0].mxu0 %v203
  %v592 = vpop.f32.mrb[0].mxu0
  %v593 = vadd.f32 0.0, %v592
  %v594 = vpop.f32.mrb[0].mxu0
  %v595 = vadd.f32 0.0, %v594
  %v596 = vpop.f32.mrb[0].mxu0
  %v597 = vadd.f32 0.0, %v596
  %v598 = vpop.f32.mrb[0].mxu0
  %v599 = vadd.f32 0.0, %v598
  %600 = vdwg.mxu0
  %v601 = vld [vmem:[%s2] sm:$0xff]
  %v602 = vld [vmem:[%s2 + $0x8] sm:$0xff]
  %v603 = vld [vmem:[%s3] sm:$0xff]
  %v604 = vld [vmem:[%s3 + $0x8] sm:$0xff]
  %v605 = vadd.f32 %v292, %v294
  %v606 = vadd.f32 %v605, %v335
  %v607 = vadd.f32 %v606, %v337
  %v608 = vadd.f32 %v607, %v378
  %v609 = vadd.f32 %v608, %v380
  %v610 = vadd.f32 %v609, %v421
  %v611 = vadd.f32 %v610, %v423
  %v612 = vadd.f32 %v611, %v464
  %v613 = vadd.f32 %v612, %v466
  %v614 = vadd.f32 %v613, %v507
  %v615 = vadd.f32 %v614, %v509
  %v616 = vadd.f32 %v615, %v550
  %v617 = vadd.f32 %v616, %v552
  %v618 = vadd.f32 %v617, %v593
  %v619 = vadd.f32 %v618, %v595
  %620 = vadd.xlane.f32.xlu0 %v619
  %v621 = vpop.xlane.xlu0 %620
  %v622 = vadd.f32 %v296, %v298
  %v623 = vadd.f32 %v622, %v339
  %v624 = vadd.f32 %v623, %v341
  %v625 = vadd.f32 %v624, %v382
  %v626 = vadd.f32 %v625, %v384
  %v627 = vadd.f32 %v626, %v425
  %v628 = vadd.f32 %v627, %v427
  %v629 = vadd.f32 %v628, %v468
  %v630 = vadd.f32 %v629, %v470
  %v631 = vadd.f32 %v630, %v511
  %v632 = vadd.f32 %v631, %v513
  %v633 = vadd.f32 %v632, %v554
  %v634 = vadd.f32 %v633, %v556
  %v635 = vadd.f32 %v634, %v597
  %v636 = vadd.f32 %v635, %v599
  %637 = vadd.xlane.f32.xlu0 %v636
  %v638 = vpop.xlane.xlu0 %637
  %v639 = vrcp.pop 2048.0
  %v640 = vmul.f32 %v621, %v639
  %v641 = vmul.f32 %v638, %v639
  %v642 = vsub.f32 %v292, %v640
  %v643 = vsub.f32 %v294, %v640
  %v644 = vsub.f32 %v335, %v640
  %v645 = vsub.f32 %v337, %v640
  %v646 = vsub.f32 %v378, %v640
  %v647 = vsub.f32 %v380, %v640
  %v648 = vsub.f32 %v421, %v640
  %v649 = vsub.f32 %v423, %v640
  %v650 = vsub.f32 %v464, %v640
  %v651 = vsub.f32 %v466, %v640
  %v652 = vsub.f32 %v507, %v640
  %v653 = vsub.f32 %v509, %v640
  %v654 = vsub.f32 %v550, %v640
  %v655 = vsub.f32 %v552, %v640
  %v656 = vsub.f32 %v593, %v640
  %v657 = vsub.f32 %v595, %v640
  %v658 = vsub.f32 %v296, %v641
  %v659 = vsub.f32 %v298, %v641
  %v660 = vsub.f32 %v339, %v641
  %v661 = vsub.f32 %v341, %v641
  %v662 = vsub.f32 %v382, %v641
  %v663 = vsub.f32 %v384, %v641
  %v664 = vsub.f32 %v425, %v641
  %v665 = vsub.f32 %v427, %v641
  %v666 = vsub.f32 %v468, %v641
  %v667 = vsub.f32 %v470, %v641
  %v668 = vsub.f32 %v511, %v641
  %v669 = vsub.f32 %v513, %v641
  %v670 = vsub.f32 %v554, %v641
  %v671 = vsub.f32 %v556, %v641
  %v672 = vsub.f32 %v597, %v641
  %v673 = vsub.f32 %v599, %v641
  %v674 = vmul.f32 %v642, %v642
  %v675 = vmul.f32 %v643, %v643
  %v676 = vmul.f32 %v644, %v644
  %v677 = vmul.f32 %v645, %v645
  %v678 = vmul.f32 %v646, %v646
  %v679 = vmul.f32 %v647, %v647
  %v680 = vmul.f32 %v648, %v648
  %v681 = vmul.f32 %v649, %v649
  %v682 = vmul.f32 %v650, %v650
  %v683 = vmul.f32 %v651, %v651
  %v684 = vmul.f32 %v652, %v652
  %v685 = vmul.f32 %v653, %v653
  %v686 = vmul.f32 %v654, %v654
  %v687 = vmul.f32 %v655, %v655
  %v688 = vmul.f32 %v656, %v656
  %v689 = vmul.f32 %v657, %v657
  %v690 = vmul.f32 %v658, %v658
  %v691 = vmul.f32 %v659, %v659
  %v692 = vmul.f32 %v660, %v660
  %v693 = vmul.f32 %v661, %v661
  %v694 = vmul.f32 %v662, %v662
  %v695 = vmul.f32 %v663, %v663
  %v696 = vmul.f32 %v664, %v664
  %v697 = vmul.f32 %v665, %v665
  %v698 = vmul.f32 %v666, %v666
  %v699 = vmul.f32 %v667, %v667
  %v700 = vmul.f32 %v668, %v668
  %v701 = vmul.f32 %v669, %v669
  %v702 = vmul.f32 %v670, %v670
  %v703 = vmul.f32 %v671, %v671
  %v704 = vmul.f32 %v672, %v672
  %v705 = vmul.f32 %v673, %v673
  %v706 = vadd.f32 %v674, %v675
  %v707 = vadd.f32 %v706, %v676
  %v708 = vadd.f32 %v707, %v677
  %v709 = vadd.f32 %v708, %v678
  %v710 = vadd.f32 %v709, %v679
  %v711 = vadd.f32 %v710, %v680
  %v712 = vadd.f32 %v711, %v681
  %v713 = vadd.f32 %v712, %v682
  %v714 = vadd.f32 %v713, %v683
  %v715 = vadd.f32 %v714, %v684
  %v716 = vadd.f32 %v715, %v685
  %v717 = vadd.f32 %v716, %v686
  %v718 = vadd.f32 %v717, %v687
  %v719 = vadd.f32 %v718, %v688
  %v720 = vadd.f32 %v719, %v689
  %721 = vadd.xlane.f32.xlu0 %v720
  %v722 = vpop.xlane.xlu0 %721
  %v723 = vadd.f32 %v690, %v691
  %v724 = vadd.f32 %v723, %v692
  %v725 = vadd.f32 %v724, %v693
  %v726 = vadd.f32 %v725, %v694
  %v727 = vadd.f32 %v726, %v695
  %v728 = vadd.f32 %v727, %v696
  %v729 = vadd.f32 %v728, %v697
  %v730 = vadd.f32 %v729, %v698
  %v731 = vadd.f32 %v730, %v699
  %v732 = vadd.f32 %v731, %v700
  %v733 = vadd.f32 %v732, %v701
  %v734 = vadd.f32 %v733, %v702
  %v735 = vadd.f32 %v734, %v703
  %v736 = vadd.f32 %v735, %v704
  %v737 = vadd.f32 %v736, %v705
  %738 = vadd.xlane.f32.xlu0 %v737
  %v739 = vpop.xlane.xlu0 %738
  %v740 = vmul.f32 %v722, %v639
  %v741 = vmul.f32 %v739, %v639
  %v742 = vadd.f32 %v740, 1e-05
  %v743 = vadd.f32 %v741, 1e-05
  %v744 = vrsqrt.pop %v742
  %v745 = vrsqrt.pop %v743
  %v746 = vmul.f32 %v642, %v744
  %v747 = vmul.f32 %v643, %v744
  %v748 = vmul.f32 %v644, %v744
  %v749 = vmul.f32 %v645, %v744
  %v750 = vmul.f32 %v646, %v744
  %v751 = vmul.f32 %v647, %v744
  %v752 = vmul.f32 %v648, %v744
  %v753 = vmul.f32 %v649, %v744
  %v754 = vmul.f32 %v650, %v744
  %v755 = vmul.f32 %v651, %v744
  %v756 = vmul.f32 %v652, %v744
  %v757 = vmul.f32 %v653, %v744
  %v758 = vmul.f32 %v654, %v744
  %v759 = vmul.f32 %v655, %v744
  %v760 = vmul.f32 %v656, %v744
  %v761 = vmul.f32 %v657, %v744
  %v762 = vmul.f32 %v658, %v745
  %v763 = vmul.f32 %v659, %v745
  %v764 = vmul.f32 %v660, %v745
  %v765 = vmul.f32 %v661, %v745
  %v766 = vmul.f32 %v662, %v745
  %v767 = vmul.f32 %v663, %v745
  %v768 = vmul.f32 %v664, %v745
  %v769 = vmul.f32 %v665, %v745
  %v770 = vmul.f32 %v666, %v745
  %v771 = vmul.f32 %v667, %v745
  %v772 = vmul.f32 %v668, %v745
  %v773 = vmul.f32 %v669, %v745
  %v774 = vmul.f32 %v670, %v745
  %v775 = vmul.f32 %v671, %v745
  %v776 = vmul.f32 %v672, %v745
  %v777 = vmul.f32 %v673, %v745
  %779 = vset.pattern.permute.xlu0 0
  %780 = vperm.xlu0 %779, %v601
  %v781 = vpop.permute.xlu0 %780
  %784 = vset.pattern.permute.xlu0 0
  %785 = vperm.xlu0 %784, %v602
  %v786 = vpop.permute.xlu0 %785
  %v788 = vmul.f32 %v746, %v781
  %v789 = vmul.f32 %v747, %v781
  %v790 = vmul.f32 %v748, %v781
  %v791 = vmul.f32 %v749, %v781
  %v792 = vmul.f32 %v750, %v781
  %v793 = vmul.f32 %v751, %v781
  %v794 = vmul.f32 %v752, %v781
  %v795 = vmul.f32 %v753, %v781
  %v796 = vmul.f32 %v754, %v781
  %v797 = vmul.f32 %v755, %v781
  %v798 = vmul.f32 %v756, %v781
  %v799 = vmul.f32 %v757, %v781
  %v800 = vmul.f32 %v758, %v781
  %v801 = vmul.f32 %v759, %v781
  %v802 = vmul.f32 %v760, %v781
  %v803 = vmul.f32 %v761, %v781
  %v804 = vmul.f32 %v762, %v786
  %v805 = vmul.f32 %v763, %v786
  %v806 = vmul.f32 %v764, %v786
  %v807 = vmul.f32 %v765, %v786
  %v808 = vmul.f32 %v766, %v786
  %v809 = vmul.f32 %v767, %v786
  %v810 = vmul.f32 %v768, %v786
  %v811 = vmul.f32 %v769, %v786
  %v812 = vmul.f32 %v770, %v786
  %v813 = vmul.f32 %v771, %v786
  %v814 = vmul.f32 %v772, %v786
  %v815 = vmul.f32 %v773, %v786
  %v816 = vmul.f32 %v774, %v786
  %v817 = vmul.f32 %v775, %v786
  %v818 = vmul.f32 %v776, %v786
  %v819 = vmul.f32 %v777, %v786
  %821 = vset.pattern.permute.xlu0 0
  %822 = vperm.xlu0 %821, %v603
  %v823 = vpop.permute.xlu0 %822
  %826 = vset.pattern.permute.xlu0 0
  %827 = vperm.xlu0 %826, %v604
  %v828 = vpop.permute.xlu0 %827
  %v830 = vadd.f32 %v788, %v823
  %v831 = vadd.f32 %v789, %v823
  %v832 = vadd.f32 %v790, %v823
  %v833 = vadd.f32 %v791, %v823
  %v834 = vadd.f32 %v792, %v823
  %v835 = vadd.f32 %v793, %v823
  %v836 = vadd.f32 %v794, %v823
  %v837 = vadd.f32 %v795, %v823
  %v838 = vadd.f32 %v796, %v823
  %v839 = vadd.f32 %v797, %v823
  %v840 = vadd.f32 %v798, %v823
  %v841 = vadd.f32 %v799, %v823
  %v842 = vadd.f32 %v800, %v823
  %v843 = vadd.f32 %v801, %v823
  %v844 = vadd.f32 %v802, %v823
  %v845 = vadd.f32 %v803, %v823
  %v846 = vadd.f32 %v804, %v828
  %v847 = vadd.f32 %v805, %v828
  %v848 = vadd.f32 %v806, %v828
  %v849 = vadd.f32 %v807, %v828
  %v850 = vadd.f32 %v808, %v828
  %v851 = vadd.f32 %v809, %v828
  %v852 = vadd.f32 %v810, %v828
  %v853 = vadd.f32 %v811, %v828
  %v854 = vadd.f32 %v812, %v828
  %v855 = vadd.f32 %v813, %v828
  %v856 = vadd.f32 %v814, %v828
  %v857 = vadd.f32 %v815, %v828
  %v858 = vadd.f32 %v816, %v828
  %v859 = vadd.f32 %v817, %v828
  %v860 = vadd.f32 %v818, %v828
  %v861 = vadd.f32 %v819, %v828
  %v862 = vmax.f32 %v830, 0.0
  %v863 = vmax.f32 %v831, 0.0
  %v864 = vmax.f32 %v832, 0.0
  %v865 = vmax.f32 %v833, 0.0
  %v866 = vmax.f32 %v834, 0.0
  %v867 = vmax.f32 %v835, 0.0
  %v868 = vmax.f32 %v836, 0.0
  %v869 = vmax.f32 %v837, 0.0
  %v870 = vmax.f32 %v838, 0.0
  %v871 = vmax.f32 %v839, 0.0
  %v872 = vmax.f32 %v840, 0.0
  %v873 = vmax.f32 %v841, 0.0
  %v874 = vmax.f32 %v842, 0.0
  %v875 = vmax.f32 %v843, 0.0
  %v876 = vmax.f32 %v844, 0.0
  %v877 = vmax.f32 %v845, 0.0
  %v878 = vmax.f32 %v846, 0.0
  %v879 = vmax.f32 %v847, 0.0
  %v880 = vmax.f32 %v848, 0.0
  %v881 = vmax.f32 %v849, 0.0
  %v882 = vmax.f32 %v850, 0.0
  %v883 = vmax.f32 %v851, 0.0
  %v884 = vmax.f32 %v852, 0.0
  %v885 = vmax.f32 %v853, 0.0
  %v886 = vmax.f32 %v854, 0.0
  %v887 = vmax.f32 %v855, 0.0
  %v888 = vmax.f32 %v856, 0.0
  %v889 = vmax.f32 %v857, 0.0
  %v890 = vmax.f32 %v858, 0.0
  %v891 = vmax.f32 %v859, 0.0
  %v892 = vmax.f32 %v860, 0.0
  %v893 = vmax.f32 %v861, 0.0
  %894 = vst [vmem:[%s4] sm:$0xff] %v862
  %895 = vst [vmem:[%s4 + $0x8] sm:$0xff] %v863
  %896 = vst [vmem:[%s4 + $0x10] sm:$0xff] %v864
  %897 = vst [vmem:[%s4 + $0x18] sm:$0xff] %v865
  %898 = vst [vmem:[%s4 + $0x20] sm:$0xff] %v866
  %899 = vst [vmem:[%s4 + $0x28] sm:$0xff] %v867
  %900 = vst [vmem:[%s4 + $0x30] sm:$0xff] %v868
  %901 = vst [vmem:[%s4 + $0x38] sm:$0xff] %v869
  %902 = vst [vmem:[%s4 + $0x40] sm:$0xff] %v870
  %903 = vst [vmem:[%s4 + $0x48] sm:$0xff] %v871
  %904 = vst [vmem:[%s4 + $0x50] sm:$0xff] %v872
  %905 = vst [vmem:[%s4 + $0x58] sm:$0xff] %v873
  %906 = vst [vmem:[%s4 + $0x60] sm:$0xff] %v874
  %907 = vst [vmem:[%s4 + $0x68] sm:$0xff] %v875
  %908 = vst [vmem:[%s4 + $0x70] sm:$0xff] %v876
  %909 = vst [vmem:[%s4 + $0x78] sm:$0xff] %v877
  %910 = vst [vmem:[%s4 + $0x80] sm:$0xff] %v878
  %911 = vst [vmem:[%s4 + $0x88] sm:$0xff] %v879
  %912 = vst [vmem:[%s4 + $0x90] sm:$0xff] %v880
  %913 = vst [vmem:[%s4 + $0x98] sm:$0xff] %v881
  %914 = vst [vmem:[%s4 + $0xa0] sm:$0xff] %v882
  %915 = vst [vmem:[%s4 + $0xa8] sm:$0xff] %v883
  %916 = vst [vmem:[%s4 + $0xb0] sm:$0xff] %v884
  %917 = vst [vmem:[%s4 + $0xb8] sm:$0xff] %v885
  %918 = vst [vmem:[%s4 + $0xc0] sm:$0xff] %v886
  %919 = vst [vmem:[%s4 + $0xc8] sm:$0xff] %v887
  %920 = vst [vmem:[%s4 + $0xd0] sm:$0xff] %v888
  %921 = vst [vmem:[%s4 + $0xd8] sm:$0xff] %v889
  %922 = vst [vmem:[%s4 + $0xe0] sm:$0xff] %v890
  %923 = vst [vmem:[%s4 + $0xe8] sm:$0xff] %v891
  %924 = vst [vmem:[%s4 + $0xf0] sm:$0xff] %v892
  %925 = vst [vmem:[%s4 + $0xf8] sm:$0xff] %v893
  // Predicated region
  $region18: #{resnet_forward.14} parent=0 // pred_check
    _
  $region19: #{resnet_forward.14} parent=0 // pred_check_branch
    %927 = sbr.rel (0) target = $region21
  $region20: #{resnet_forward.14} parent=0 // pred_region
    _
  $region21: #{resnet_forward.14} parent=0 // pred_fallthru
    _
  // Predicated region
  $region22: #{resnet_forward.14} parent=0 // pred_check
    _
  $region23: #{resnet_forward.14} parent=0 // pred_check_branch
    %929 = sbr.rel (0) target = $region25
  $region24: #{resnet_forward.14} parent=0 // pred_region
    _
  $region25: #{resnet_forward.14} parent=0 // pred_fallthru
    _

// kernel: resnet_forward.15
$region0: #{resnet_forward.15}
  #allocation0 [shape = 'u32[]', space=smem, size = 0x4, offset = 0x4, fixed_abs, tag = 'smem constant byte address 0x4 - core index']
  #allocation1 [shape = 'u32[144,128]{1,0:T(1,128)}', space=vmem, size = 0x12000, scoped, tag = 'internal scratch']
  %s0 = inlined_call_operand.vmem [shape: bf16[144,2048], index: 0, kind: input, shape index: {}]
  %s1 = inlined_call_operand.vmem [shape: bf16[16,144], index: 1, kind: input, shape index: {}]
  %s2 = inlined_call_operand.vmem [shape: f32[16,1], index: 2, kind: input, shape index: {}]
  %s3 = inlined_call_operand.vmem [shape: f32[16,1], index: 3, kind: input, shape index: {}]
  %s4 = inlined_call_operand.vmem [shape: f32[16,2048], index: 4, kind: output, shape index: {}]
  %s5 = sld [smem:[#allocation0]]
  $region26: #{resnet_forward.15} parent=0
    _
  %s7 = ssub.s32 1, %s5
  %s8 = scalar_select 0, %s7, %s5
  // Predicated region
  $region2: #{resnet_forward.15} parent=0 // pred_check
    _
  $region3: #{resnet_forward.15} parent=0 // pred_check_branch
    %10 = sbr.rel (0) target = $region5
  $region4: #{resnet_forward.15} parent=0 // pred_region
    _
  $region5: #{resnet_forward.15} parent=0 // pred_fallthru
    _
  // Predicated region
  $region6: #{resnet_forward.15} parent=0 // pred_check
    _
  $region7: #{resnet_forward.15} parent=0 // pred_check_branch
    %12 = sbr.rel (0) target = $region9
  $region8: #{resnet_forward.15} parent=0 // pred_region
    _
  $region9: #{resnet_forward.15} parent=0 // pred_fallthru
    _
  // Predicated region
  $region10: #{resnet_forward.15} parent=0 // pred_check
    _
  $region11: #{resnet_forward.15} parent=0 // pred_check_branch
    %14 = sbr.rel (0) target = $region13
  $region12: #{resnet_forward.15} parent=0 // pred_region
    _
  $region13: #{resnet_forward.15} parent=0 // pred_fallthru
    _
  // Predicated region
  $region14: #{resnet_forward.15} parent=0 // pred_check
    _
  $region15: #{resnet_forward.15} parent=0 // pred_check_branch
    %16 = sbr.rel (0) target = $region17
  $region16: #{resnet_forward.15} parent=0 // pred_region
    _
  $region17: #{resnet_forward.15} parent=0 // pred_fallthru
    _
  %v18 = vld [vmem:[%s1] sm:$0xff]
  %v19 = vld [vmem:[%s1 + $0x8] sm:$0xff]
  %v20 = vld [vmem:[%s0] sm:$0xff]
  %v21 = vld [vmem:[%s0 + $0x8] sm:$0xff]
  %v22 = vld [vmem:[%s0 + $0x10] sm:$0xff]
  %v23 = vld [vmem:[%s0 + $0x18] sm:$0xff]
  %v24 = vld [vmem:[%s0 + $0x20] sm:$0xff]
  %v25 = vld [vmem:[%s0 + $0x28] sm:$0xff]
  %v26 = vld [vmem:[%s0 + $0x30] sm:$0xff]
  %v27 = vld [vmem:[%s0 + $0x38] sm:$0xff]
  %v28 = vld [vmem:[%s0 + $0x40] sm:$0xff]
  %v29 = vld [vmem:[%s0 + $0x48] sm:$0xff]
  %v30 = vld [vmem:[%s0 + $0x50] sm:$0xff]
  %v31 = vld [vmem:[%s0 + $0x58] sm:$0xff]
  %v32 = vld [vmem:[%s0 + $0x60] sm:$0xff]
  %v33 = vld [vmem:[%s0 + $0x68] sm:$0xff]
  %v34 = vld [vmem:[%s0 + $0x70] sm:$0xff]
  %v35 = vld [vmem:[%s0 + $0x78] sm:$0xff]
  %v36 = vld [vmem:[%s0 + $0x80] sm:$0xff]
  %v37 = vld [vmem:[%s0 + $0x88] sm:$0xff]
  %v38 = vld [vmem:[%s0 + $0x90] sm:$0xff]
  %v39 = vld [vmem:[%s0 + $0x98] sm:$0xff]
  %v40 = vld [vmem:[%s0 + $0xa0] sm:$0xff]
  %v41 = vld [vmem:[%s0 + $0xa8] sm:$0xff]
  %v42 = vld [vmem:[%s0 + $0xb0] sm:$0xff]
  %v43 = vld [vmem:[%s0 + $0xb8] sm:$0xff]
  %v44 = vld [vmem:[%s0 + $0xc0] sm:$0xff]
  %v45 = vld [vmem:[%s0 + $0xc8] sm:$0xff]
  %v46 = vld [vmem:[%s0 + $0xd0] sm:$0xff]
  %v47 = vld [vmem:[%s0 + $0xd8] sm:$0xff]
  %v48 = vld [vmem:[%s0 + $0xe0] sm:$0xff]
  %v49 = vld [vmem:[%s0 + $0xe8] sm:$0xff]
  %v50 = vld [vmem:[%s0 + $0xf0] sm:$0xff]
  %v51 = vld [vmem:[%s0 + $0xf8] sm:$0xff]
  %v52 = vld [vmem:[%s0 + $0x100] sm:$0xff]
  %v53 = vld [vmem:[%s0 + $0x108] sm:$0xff]
  %v54 = vld [vmem:[%s0 + $0x110] sm:$0xff]
  %v55 = vld [vmem:[%s0 + $0x118] sm:$0xff]
  %v56 = vld [vmem:[%s0 + $0x120] sm:$0xff]
  %v57 = vld [vmem:[%s0 + $0x128] sm:$0xff]
  %v58 = vld [vmem:[%s0 + $0x130] sm:$0xff]
  %v59 = vld [vmem:[%s0 + $0x138] sm:$0xff]
  %v60 = vld [vmem:[%s0 + $0x140] sm:$0xff]
  %v61 = vld [vmem:[%s0 + $0x148] sm:$0xff]
  %v62 = vld [vmem:[%s0 + $0x150] sm:$0xff]
  %v63 = vld [vmem:[%s0 + $0x158] sm:$0xff]
  %v64 = vld [vmem:[%s0 + $0x160] sm:$0xff]
  %v65 = vld [vmem:[%s0 + $0x168] sm:$0xff]
  %v66 = vld [vmem:[%s0 + $0x170] sm:$0xff]
  %v67 = vld [vmem:[%s0 + $0x178] sm:$0xff]
  %v68 = vld [vmem:[%s0 + $0x180] sm:$0xff]
  %v69 = vld [vmem:[%s0 + $0x188] sm:$0xff]
  %v70 = vld [vmem:[%s0 + $0x190] sm:$0xff]
  %v71 = vld [vmem:[%s0 + $0x198] sm:$0xff]
  %v72 = vld [vmem:[%s0 + $0x1a0] sm:$0xff]
  %v73 = vld [vmem:[%s0 + $0x1a8] sm:$0xff]
  %v74 = vld [vmem:[%s0 + $0x1b0] sm:$0xff]
  %v75 = vld [vmem:[%s0 + $0x1b8] sm:$0xff]
  %v76 = vld [vmem:[%s0 + $0x1c0] sm:$0xff]
  %v77 = vld [vmem:[%s0 + $0x1c8] sm:$0xff]
  %v78 = vld [vmem:[%s0 + $0x1d0] sm:$0xff]
  %v79 = vld [vmem:[%s0 + $0x1d8] sm:$0xff]
  %v80 = vld [vmem:[%s0 + $0x1e0] sm:$0xff]
  %v81 = vld [vmem:[%s0 + $0x1e8] sm:$0xff]
  %v82 = vld [vmem:[%s0 + $0x1f0] sm:$0xff]
  %v83 = vld [vmem:[%s0 + $0x1f8] sm:$0xff]
  %v84 = vld [vmem:[%s0 + $0x200] sm:$0xff]
  %v85 = vld [vmem:[%s0 + $0x208] sm:$0xff]
  %v86 = vld [vmem:[%s0 + $0x210] sm:$0xff]
  %v87 = vld [vmem:[%s0 + $0x218] sm:$0xff]
  %v88 = vld [vmem:[%s0 + $0x220] sm:$0xff]
  %v89 = vld [vmem:[%s0 + $0x228] sm:$0xff]
  %v90 = vld [vmem:[%s0 + $0x230] sm:$0xff]
  %v91 = vld [vmem:[%s0 + $0x238] sm:$0xff]
  %v92 = vld [vmem:[%s0 + $0x240] sm:$0xff]
  %v93 = vld [vmem:[%s0 + $0x248] sm:$0xff]
  %v94 = vld [vmem:[%s0 + $0x250] sm:$0xff]
  %v95 = vld [vmem:[%s0 + $0x258] sm:$0xff]
  %v96 = vld [vmem:[%s0 + $0x260] sm:$0xff]
  %v97 = vld [vmem:[%s0 + $0x268] sm:$0xff]
  %v98 = vld [vmem:[%s0 + $0x270] sm:$0xff]
  %v99 = vld [vmem:[%s0 + $0x278] sm:$0xff]
  %v100 = vld [vmem:[%s0 + $0x280] sm:$0xff]
  %v101 = vld [vmem:[%s0 + $0x288] sm:$0xff]
  %v102 = vld [vmem:[%s0 + $0x290] sm:$0xff]
  %v103 = vld [vmem:[%s0 + $0x298] sm:$0xff]
  %v104 = vld [vmem:[%s0 + $0x2a0] sm:$0xff]
  %v105 = vld [vmem:[%s0 + $0x2a8] sm:$0xff]
  %v106 = vld [vmem:[%s0 + $0x2b0] sm:$0xff]
  %v107 = vld [vmem:[%s0 + $0x2b8] sm:$0xff]
  %v108 = vld [vmem:[%s0 + $0x2c0] sm:$0xff]
  %v109 = vld [vmem:[%s0 + $0x2c8] sm:$0xff]
  %v110 = vld [vmem:[%s0 + $0x2d0] sm:$0xff]
  %v111 = vld [vmem:[%s0 + $0x2d8] sm:$0xff]
  %v112 = vld [vmem:[%s0 + $0x2e0] sm:$0xff]
  %v113 = vld [vmem:[%s0 + $0x2e8] sm:$0xff]
  %v114 = vld [vmem:[%s0 + $0x2f0] sm:$0xff]
  %v115 = vld [vmem:[%s0 + $0x2f8] sm:$0xff]
  %v116 = vld [vmem:[%s0 + $0x300] sm:$0xff]
  %v117 = vld [vmem:[%s0 + $0x308] sm:$0xff]
  %v118 = vld [vmem:[%s0 + $0x310] sm:$0xff]
  %v119 = vld [vmem:[%s0 + $0x318] sm:$0xff]
  %v120 = vld [vmem:[%s0 + $0x320] sm:$0xff]
  %v121 = vld [vmem:[%s0 + $0x328] sm:$0xff]
  %v122 = vld [vmem:[%s0 + $0x330] sm:$0xff]
  %v123 = vld [vmem:[%s0 + $0x338] sm:$0xff]
  %v124 = vld [vmem:[%s0 + $0x340] sm:$0xff]
  %v125 = vld [vmem:[%s0 + $0x348] sm:$0xff]
  %v126 = vld [vmem:[%s0 + $0x350] sm:$0xff]
  %v127 = vld [vmem:[%s0 + $0x358] sm:$0xff]
  %v128 = vld [vmem:[%s0 + $0x360] sm:$0xff]
  %v129 = vld [vmem:[%s0 + $0x368] sm:$0xff]
  %v130 = vld [vmem:[%s0 + $0x370] sm:$0xff]
  %v131 = vld [vmem:[%s0 + $0x378] sm:$0xff]
  %v132 = vld [vmem:[%s0 + $0x380] sm:$0xff]
  %v133 = vld [vmem:[%s0 + $0x388] sm:$0xff]
  %v134 = vld [vmem:[%s0 + $0x390] sm:$0xff]
  %v135 = vld [vmem:[%s0 + $0x398] sm:$0xff]
  %v136 = vld [vmem:[%s0 + $0x3a0] sm:$0xff]
  %v137 = vld [vmem:[%s0 + $0x3a8] sm:$0xff]
  %v138 = vld [vmem:[%s0 + $0x3b0] sm:$0xff]
  %v139 = vld [vmem:[%s0 + $0x3b8] sm:$0xff]
  %v140 = vld [vmem:[%s0 + $0x3c0] sm:$0xff]
  %v141 = vld [vmem:[%s0 + $0x3c8] sm:$0xff]
  %v142 = vld [vmem:[%s0 + $0x3d0] sm:$0xff]
  %v143 = vld [vmem:[%s0 + $0x3d8] sm:$0xff]
  %v144 = vld [vmem:[%s0 + $0x3e0] sm:$0xff]
  %v145 = vld [vmem:[%s0 + $0x3e8] sm:$0xff]
  %v146 = vld [vmem:[%s0 + $0x3f0] sm:$0xff]
  %v147 = vld [vmem:[%s0 + $0x3f8] sm:$0xff]
  %v148 = vld [vmem:[%s0 + $0x400] sm:$0xff]
  %v149 = vld [vmem:[%s0 + $0x408] sm:$0xff]
  %v150 = vld [vmem:[%s0 + $0x410] sm:$0xff]
  %v151 = vld [vmem:[%s0 + $0x418] sm:$0xff]
  %v152 = vld [vmem:[%s0 + $0x420] sm:$0xff]
  %v153 = vld [vmem:[%s0 + $0x428] sm:$0xff]
  %v154 = vld [vmem:[%s0 + $0x430] sm:$0xff]
  %v155 = vld [vmem:[%s0 + $0x438] sm:$0xff]
  %v156 = vld [vmem:[%s0 + $0x440] sm:$0xff]
  %v157 = vld [vmem:[%s0 + $0x448] sm:$0xff]
  %v158 = vld [vmem:[%s0 + $0x450] sm:$0xff]
  %v159 = vld [vmem:[%s0 + $0x458] sm:$0xff]
  %v160 = vld [vmem:[%s0 + $0x460] sm:$0xff]
  %v161 = vld [vmem:[%s0 + $0x468] sm:$0xff]
  %v162 = vld [vmem:[%s0 + $0x470] sm:$0xff]
  %v163 = vld [vmem:[%s0 + $0x478] sm:$0xff]
  %v166 = vunpack.c.l.b16 %v18
  %v167 = vunpack.c.h.b16 %v18
  %v168 = vunpack.c.l.b16 %v19
  %v169 = vunpack.c.h.b16 %v19
  %v170 = vpack.c.b16 %v168, %v166
  %v171 = vpack.c.b16 %v169, %v167
  %v317 = vunpack.c.l.b16 %v20
  %v318 = vunpack.c.h.b16 %v20
  %v319 = vunpack.c.l.b16 %v21
  %v320 = vunpack.c.h.b16 %v21
  %v321 = vunpack.c.l.b16 %v22
  %v322 = vunpack.c.h.b16 %v22
  %v323 = vunpack.c.l.b16 %v23
  %v324 = vunpack.c.h.b16 %v23
  %v325 = vunpack.c.l.b16 %v24
  %v326 = vunpack.c.h.b16 %v24
  %v327 = vunpack.c.l.b16 %v25
  %v328 = vunpack.c.h.b16 %v25
  %v329 = vunpack.c.l.b16 %v26
  %v330 = vunpack.c.h.b16 %v26
  %v331 = vunpack.c.l.b16 %v27
  %v332 = vunpack.c.h.b16 %v27
  %v333 = vunpack.c.l.b16 %v28
  %v334 = vunpack.c.h.b16 %v28
  %v335 = vunpack.c.l.b16 %v29
  %v336 = vunpack.c.h.b16 %v29
  %v337 = vunpack.c.l.b16 %v30
  %v338 = vunpack.c.h.b16 %v30
  %v339 = vunpack.c.l.b16 %v31
  %v340 = vunpack.c.h.b16 %v31
  %v341 = vunpack.c.l.b16 %v32
  %v342 = vunpack.c.h.b16 %v32
  %v343 = vunpack.c.l.b16 %v33
  %v344 = vunpack.c.h.b16 %v33
  %v345 = vunpack.c.l.b16 %v34
  %v346 = vunpack.c.h.b16 %v34
  %v347 = vunpack.c.l.b16 %v35
  %v348 = vunpack.c.h.b16 %v35
  %v349 = vunpack.c.l.b16 %v36
  %v350 = vunpack.c.h.b16 %v36
  %v351 = vunpack.c.l.b16 %v37
  %v352 = vunpack.c.h.b16 %v37
  %v353 = vunpack.c.l.b16 %v38
  %v354 = vunpack.c.h.b16 %v38
  %v355 = vunpack.c.l.b16 %v39
  %v356 = vunpack.c.h.b16 %v39
  %v357 = vunpack.c.l.b16 %v40
  %v358 = vunpack.c.h.b16 %v40
  %v359 = vunpack.c.l.b16 %v41
  %v360 = vunpack.c.h.b16 %v41
  %v361 = vunpack.c.l.b16 %v42
  %v362 = vunpack.c.h.b16 %v42
  %v363 = vunpack.c.l.b16 %v43
  %v364 = vunpack.c.h.b16 %v43
  %v365 = vunpack.c.l.b16 %v44
  %v366 = vunpack.c.h.b16 %v44
  %v367 = vunpack.c.l.b16 %v45
  %v368 = vunpack.c.h.b16 %v45
  %v369 = vunpack.c.l.b16 %v46
  %v370 = vunpack.c.h.b16 %v46
  %v371 = vunpack.c.l.b16 %v47
  %v372 = vunpack.c.h.b16 %v47
  %v373 = vunpack.c.l.b16 %v48
  %v374 = vunpack.c.h.b16 %v48
  %v375 = vunpack.c.l.b16 %v49
  %v376 = vunpack.c.h.b16 %v49
  %v377 = vunpack.c.l.b16 %v50
  %v378 = vunpack.c.h.b16 %v50
  %v379 = vunpack.c.l.b16 %v51
  %v380 = vunpack.c.h.b16 %v51
  %v381 = vunpack.c.l.b16 %v52
  %v382 = vunpack.c.h.b16 %v52
  %v383 = vunpack.c.l.b16 %v53
  %v384 = vunpack.c.h.b16 %v53
  %v385 = vunpack.c.l.b16 %v54
  %v386 = vunpack.c.h.b16 %v54
  %v387 = vunpack.c.l.b16 %v55
  %v388 = vunpack.c.h.b16 %v55
  %v389 = vunpack.c.l.b16 %v56
  %v390 = vunpack.c.h.b16 %v56
  %v391 = vunpack.c.l.b16 %v57
  %v392 = vunpack.c.h.b16 %v57
  %v393 = vunpack.c.l.b16 %v58
  %v394 = vunpack.c.h.b16 %v58
  %v395 = vunpack.c.l.b16 %v59
  %v396 = vunpack.c.h.b16 %v59
  %v397 = vunpack.c.l.b16 %v60
  %v398 = vunpack.c.h.b16 %v60
  %v399 = vunpack.c.l.b16 %v61
  %v400 = vunpack.c.h.b16 %v61
  %v401 = vunpack.c.l.b16 %v62
  %v402 = vunpack.c.h.b16 %v62
  %v403 = vunpack.c.l.b16 %v63
  %v404 = vunpack.c.h.b16 %v63
  %v405 = vunpack.c.l.b16 %v64
  %v406 = vunpack.c.h.b16 %v64
  %v407 = vunpack.c.l.b16 %v65
  %v408 = vunpack.c.h.b16 %v65
  %v409 = vunpack.c.l.b16 %v66
  %v410 = vunpack.c.h.b16 %v66
  %v411 = vunpack.c.l.b16 %v67
  %v412 = vunpack.c.h.b16 %v67
  %v413 = vunpack.c.l.b16 %v68
  %v414 = vunpack.c.h.b16 %v68
  %v415 = vunpack.c.l.b16 %v69
  %v416 = vunpack.c.h.b16 %v69
  %v417 = vunpack.c.l.b16 %v70
  %v418 = vunpack.c.h.b16 %v70
  %v419 = vunpack.c.l.b16 %v71
  %v420 = vunpack.c.h.b16 %v71
  %v421 = vunpack.c.l.b16 %v72
  %v422 = vunpack.c.h.b16 %v72
  %v423 = vunpack.c.l.b16 %v73
  %v424 = vunpack.c.h.b16 %v73
  %v425 = vunpack.c.l.b16 %v74
  %v426 = vunpack.c.h.b16 %v74
  %v427 = vunpack.c.l.b16 %v75
  %v428 = vunpack.c.h.b16 %v75
  %v429 = vunpack.c.l.b16 %v76
  %v430 = vunpack.c.h.b16 %v76
  %v431 = vunpack.c.l.b16 %v77
  %v432 = vunpack.c.h.b16 %v77
  %v433 = vunpack.c.l.b16 %v78
  %v434 = vunpack.c.h.b16 %v78
  %v435 = vunpack.c.l.b16 %v79
  %v436 = vunpack.c.h.b16 %v79
  %v437 = vunpack.c.l.b16 %v80
  %v438 = vunpack.c.h.b16 %v80
  %v439 = vunpack.c.l.b16 %v81
  %v440 = vunpack.c.h.b16 %v81
  %v441 = vunpack.c.l.b16 %v82
  %v442 = vunpack.c.h.b16 %v82
  %v443 = vunpack.c.l.b16 %v83
  %v444 = vunpack.c.h.b16 %v83
  %v445 = vunpack.c.l.b16 %v84
  %v446 = vunpack.c.h.b16 %v84
  %v447 = vunpack.c.l.b16 %v85
  %v448 = vunpack.c.h.b16 %v85
  %v449 = vunpack.c.l.b16 %v86
  %v450 = vunpack.c.h.b16 %v86
  %v451 = vunpack.c.l.b16 %v87
  %v452 = vunpack.c.h.b16 %v87
  %v453 = vunpack.c.l.b16 %v88
  %v454 = vunpack.c.h.b16 %v88
  %v455 = vunpack.c.l.b16 %v89
  %v456 = vunpack.c.h.b16 %v89
  %v457 = vunpack.c.l.b16 %v90
  %v458 = vunpack.c.h.b16 %v90
  %v459 = vunpack.c.l.b16 %v91
  %v460 = vunpack.c.h.b16 %v91
  %v461 = vunpack.c.l.b16 %v92
  %v462 = vunpack.c.h.b16 %v92
  %v463 = vunpack.c.l.b16 %v93
  %v464 = vunpack.c.h.b16 %v93
  %v465 = vunpack.c.l.b16 %v94
  %v466 = vunpack.c.h.b16 %v94
  %v467 = vunpack.c.l.b16 %v95
  %v468 = vunpack.c.h.b16 %v95
  %v469 = vunpack.c.l.b16 %v96
  %v470 = vunpack.c.h.b16 %v96
  %v471 = vunpack.c.l.b16 %v97
  %v472 = vunpack.c.h.b16 %v97
  %v473 = vunpack.c.l.b16 %v98
  %v474 = vunpack.c.h.b16 %v98
  %v475 = vunpack.c.l.b16 %v99
  %v476 = vunpack.c.h.b16 %v99
  %v477 = vunpack.c.l.b16 %v100
  %v478 = vunpack.c.h.b16 %v100
  %v479 = vunpack.c.l.b16 %v101
  %v480 = vunpack.c.h.b16 %v101
  %v481 = vunpack.c.l.b16 %v102
  %v482 = vunpack.c.h.b16 %v102
  %v483 = vunpack.c.l.b16 %v103
  %v484 = vunpack.c.h.b16 %v103
  %v485 = vunpack.c.l.b16 %v104
  %v486 = vunpack.c.h.b16 %v104
  %v487 = vunpack.c.l.b16 %v105
  %v488 = vunpack.c.h.b16 %v105
  %v489 = vunpack.c.l.b16 %v106
  %v490 = vunpack.c.h.b16 %v106
  %v491 = vunpack.c.l.b16 %v107
  %v492 = vunpack.c.h.b16 %v107
  %v493 = vunpack.c.l.b16 %v108
  %v494 = vunpack.c.h.b16 %v108
  %v495 = vunpack.c.l.b16 %v109
  %v496 = vunpack.c.h.b16 %v109
  %v497 = vunpack.c.l.b16 %v110
  %v498 = vunpack.c.h.b16 %v110
  %v499 = vunpack.c.l.b16 %v111
  %v500 = vunpack.c.h.b16 %v111
  %v501 = vunpack.c.l.b16 %v112
  %v502 = vunpack.c.h.b16 %v112
  %v503 = vunpack.c.l.b16 %v113
  %v504 = vunpack.c.h.b16 %v113
  %v505 = vunpack.c.l.b16 %v114
  %v506 = vunpack.c.h.b16 %v114
  %v507 = vunpack.c.l.b16 %v115
  %v508 = vunpack.c.h.b16 %v115
  %v509 = vunpack.c.l.b16 %v116
  %v510 = vunpack.c.h.b16 %v116
  %v511 = vunpack.c.l.b16 %v117
  %v512 = vunpack.c.h.b16 %v117
  %v513 = vunpack.c.l.b16 %v118
  %v514 = vunpack.c.h.b16 %v118
  %v515 = vunpack.c.l.b16 %v119
  %v516 = vunpack.c.h.b16 %v119
  %v517 = vunpack.c.l.b16 %v120
  %v518 = vunpack.c.h.b16 %v120
  %v519 = vunpack.c.l.b16 %v121
  %v520 = vunpack.c.h.b16 %v121
  %v521 = vunpack.c.l.b16 %v122
  %v522 = vunpack.c.h.b16 %v122
  %v523 = vunpack.c.l.b16 %v123
  %v524 = vunpack.c.h.b16 %v123
  %v525 = vunpack.c.l.b16 %v124
  %v526 = vunpack.c.h.b16 %v124
  %v527 = vunpack.c.l.b16 %v125
  %v528 = vunpack.c.h.b16 %v125
  %v529 = vunpack.c.l.b16 %v126
  %v530 = vunpack.c.h.b16 %v126
  %v531 = vunpack.c.l.b16 %v127
  %v532 = vunpack.c.h.b16 %v127
  %v533 = vunpack.c.l.b16 %v128
  %v534 = vunpack.c.h.b16 %v128
  %v535 = vunpack.c.l.b16 %v129
  %v536 = vunpack.c.h.b16 %v129
  %v537 = vunpack.c.l.b16 %v130
  %v538 = vunpack.c.h.b16 %v130
  %v539 = vunpack.c.l.b16 %v131
  %v540 = vunpack.c.h.b16 %v131
  %v541 = vunpack.c.l.b16 %v132
  %v542 = vunpack.c.h.b16 %v132
  %v543 = vunpack.c.l.b16 %v133
  %v544 = vunpack.c.h.b16 %v133
  %v545 = vunpack.c.l.b16 %v134
  %v546 = vunpack.c.h.b16 %v134
  %v547 = vunpack.c.l.b16 %v135
  %v548 = vunpack.c.h.b16 %v135
  %v549 = vunpack.c.l.b16 %v136
  %v550 = vunpack.c.h.b16 %v136
  %v551 = vunpack.c.l.b16 %v137
  %v552 = vunpack.c.h.b16 %v137
  %v553 = vunpack.c.l.b16 %v138
  %v554 = vunpack.c.h.b16 %v138
  %v555 = vunpack.c.l.b16 %v139
  %v556 = vunpack.c.h.b16 %v139
  %v557 = vunpack.c.l.b16 %v140
  %v558 = vunpack.c.h.b16 %v140
  %v559 = vunpack.c.l.b16 %v141
  %v560 = vunpack.c.h.b16 %v141
  %v561 = vunpack.c.l.b16 %v142
  %v562 = vunpack.c.h.b16 %v142
  %v563 = vunpack.c.l.b16 %v143
  %v564 = vunpack.c.h.b16 %v143
  %v565 = vunpack.c.l.b16 %v144
  %v566 = vunpack.c.h.b16 %v144
  %v567 = vunpack.c.l.b16 %v145
  %v568 = vunpack.c.h.b16 %v145
  %v569 = vunpack.c.l.b16 %v146
  %v570 = vunpack.c.h.b16 %v146
  %v571 = vunpack.c.l.b16 %v147
  %v572 = vunpack.c.h.b16 %v147
  %v573 = vunpack.c.l.b16 %v148
  %v574 = vunpack.c.h.b16 %v148
  %v575 = vunpack.c.l.b16 %v149
  %v576 = vunpack.c.h.b16 %v149
  %v577 = vunpack.c.l.b16 %v150
  %v578 = vunpack.c.h.b16 %v150
  %v579 = vunpack.c.l.b16 %v151
  %v580 = vunpack.c.h.b16 %v151
  %v581 = vunpack.c.l.b16 %v152
  %v582 = vunpack.c.h.b16 %v152
  %v583 = vunpack.c.l.b16 %v153
  %v584 = vunpack.c.h.b16 %v153
  %v585 = vunpack.c.l.b16 %v154
  %v586 = vunpack.c.h.b16 %v154
  %v587 = vunpack.c.l.b16 %v155
  %v588 = vunpack.c.h.b16 %v155
  %v589 = vunpack.c.l.b16 %v156
  %v590 = vunpack.c.h.b16 %v156
  %v591 = vunpack.c.l.b16 %v157
  %v592 = vunpack.c.h.b16 %v157
  %v593 = vunpack.c.l.b16 %v158
  %v594 = vunpack.c.h.b16 %v158
  %v595 = vunpack.c.l.b16 %v159
  %v596 = vunpack.c.h.b16 %v159
  %v597 = vunpack.c.l.b16 %v160
  %v598 = vunpack.c.h.b16 %v160
  %v599 = vunpack.c.l.b16 %v161
  %v600 = vunpack.c.h.b16 %v161
  %v601 = vunpack.c.l.b16 %v162
  %v602 = vunpack.c.h.b16 %v162
  %v603 = vunpack.c.l.b16 %v163
  %v604 = vunpack.c.h.b16 %v163
  %v605 = vpack.c.b16 %v333, %v317
  %v606 = vpack.c.b16 %v334, %v318
  %v607 = vpack.c.b16 %v335, %v319
  %v608 = vpack.c.b16 %v336, %v320
  %v609 = vpack.c.b16 %v337, %v321
  %v610 = vpack.c.b16 %v338, %v322
  %v611 = vpack.c.b16 %v339, %v323
  %v612 = vpack.c.b16 %v340, %v324
  %v613 = vpack.c.b16 %v341, %v325
  %v614 = vpack.c.b16 %v342, %v326
  %v615 = vpack.c.b16 %v343, %v327
  %v616 = vpack.c.b16 %v344, %v328
  %v617 = vpack.c.b16 %v345, %v329
  %v618 = vpack.c.b16 %v346, %v330
  %v619 = vpack.c.b16 %v347, %v331
  %v620 = vpack.c.b16 %v348, %v332
  %v621 = vpack.c.b16 %v365, %v349
  %v622 = vpack.c.b16 %v366, %v350
  %v623 = vpack.c.b16 %v367, %v351
  %v624 = vpack.c.b16 %v368, %v352
  %v625 = vpack.c.b16 %v369, %v353
  %v626 = vpack.c.b16 %v370, %v354
  %v627 = vpack.c.b16 %v371, %v355
  %v628 = vpack.c.b16 %v372, %v356
  %v629 = vpack.c.b16 %v373, %v357
  %v630 = vpack.c.b16 %v374, %v358
  %v631 = vpack.c.b16 %v375, %v359
  %v632 = vpack.c.b16 %v376, %v360
  %v633 = vpack.c.b16 %v377, %v361
  %v634 = vpack.c.b16 %v378, %v362
  %v635 = vpack.c.b16 %v379, %v363
  %v636 = vpack.c.b16 %v380, %v364
  %v637 = vpack.c.b16 %v397, %v381
  %v638 = vpack.c.b16 %v398, %v382
  %v639 = vpack.c.b16 %v399, %v383
  %v640 = vpack.c.b16 %v400, %v384
  %v641 = vpack.c.b16 %v401, %v385
  %v642 = vpack.c.b16 %v402, %v386
  %v643 = vpack.c.b16 %v403, %v387
  %v644 = vpack.c.b16 %v404, %v388
  %v645 = vpack.c.b16 %v405, %v389
  %v646 = vpack.c.b16 %v406, %v390
  %v647 = vpack.c.b16 %v407, %v391
  %v648 = vpack.c.b16 %v408, %v392
  %v649 = vpack.c.b16 %v409, %v393
  %v650 = vpack.c.b16 %v410, %v394
  %v651 = vpack.c.b16 %v411, %v395
  %v652 = vpack.c.b16 %v412, %v396
  %v653 = vpack.c.b16 %v429, %v413
  %v654 = vpack.c.b16 %v430, %v414
  %v655 = vpack.c.b16 %v431, %v415
  %v656 = vpack.c.b16 %v432, %v416
  %v657 = vpack.c.b16 %v433, %v417
  %v658 = vpack.c.b16 %v434, %v418
  %v659 = vpack.c.b16 %v435, %v419
  %v660 = vpack.c.b16 %v436, %v420
  %v661 = vpack.c.b16 %v437, %v421
  %v662 = vpack.c.b16 %v438, %v422
  %v663 = vpack.c.b16 %v439, %v423
  %v664 = vpack.c.b16 %v440, %v424
  %v665 = vpack.c.b16 %v441, %v425
  %v666 = vpack.c.b16 %v442, %v426
  %v667 = vpack.c.b16 %v443, %v427
  %v668 = vpack.c.b16 %v444, %v428
  %v669 = vpack.c.b16 %v461, %v445
  %v670 = vpack.c.b16 %v462, %v446
  %v671 = vpack.c.b16 %v463, %v447
  %v672 = vpack.c.b16 %v464, %v448
  %v673 = vpack.c.b16 %v465, %v449
  %v674 = vpack.c.b16 %v466, %v450
  %v675 = vpack.c.b16 %v467, %v451
  %v676 = vpack.c.b16 %v468, %v452
  %v677 = vpack.c.b16 %v469, %v453
  %v678 = vpack.c.b16 %v470, %v454
  %v679 = vpack.c.b16 %v471, %v455
  %v680 = vpack.c.b16 %v472, %v456
  %v681 = vpack.c.b16 %v473, %v457
  %v682 = vpack.c.b16 %v474, %v458
  %v683 = vpack.c.b16 %v475, %v459
  %v684 = vpack.c.b16 %v476, %v460
  %v685 = vpack.c.b16 %v493, %v477
  %v686 = vpack.c.b16 %v494, %v478
  %v687 = vpack.c.b16 %v495, %v479
  %v688 = vpack.c.b16 %v496, %v480
  %v689 = vpack.c.b16 %v497, %v481
  %v690 = vpack.c.b16 %v498, %v482
  %v691 = vpack.c.b16 %v499, %v483
  %v692 = vpack.c.b16 %v500, %v484
  %v693 = vpack.c.b16 %v501, %v485
  %v694 = vpack.c.b16 %v502, %v486
  %v695 = vpack.c.b16 %v503, %v487
  %v696 = vpack.c.b16 %v504, %v488
  %v697 = vpack.c.b16 %v505, %v489
  %v698 = vpack.c.b16 %v506, %v490
  %v699 = vpack.c.b16 %v507, %v491
  %v700 = vpack.c.b16 %v508, %v492
  %v701 = vpack.c.b16 %v525, %v509
  %v702 = vpack.c.b16 %v526, %v510
  %v703 = vpack.c.b16 %v527, %v511
  %v704 = vpack.c.b16 %v528, %v512
  %v705 = vpack.c.b16 %v529, %v513
  %v706 = vpack.c.b16 %v530, %v514
  %v707 = vpack.c.b16 %v531, %v515
  %v708 = vpack.c.b16 %v532, %v516
  %v709 = vpack.c.b16 %v533, %v517
  %v710 = vpack.c.b16 %v534, %v518
  %v711 = vpack.c.b16 %v535, %v519
  %v712 = vpack.c.b16 %v536, %v520
  %v713 = vpack.c.b16 %v537, %v521
  %v714 = vpack.c.b16 %v538, %v522
  %v715 = vpack.c.b16 %v539, %v523
  %v716 = vpack.c.b16 %v540, %v524
  %v717 = vpack.c.b16 %v557, %v541
  %v718 = vpack.c.b16 %v558, %v542
  %v719 = vpack.c.b16 %v559, %v543
  %v720 = vpack.c.b16 %v560, %v544
  %v721 = vpack.c.b16 %v561, %v545
  %v722 = vpack.c.b16 %v562, %v546
  %v723 = vpack.c.b16 %v563, %v547
  %v724 = vpack.c.b16 %v564, %v548
  %v725 = vpack.c.b16 %v565, %v549
  %v726 = vpack.c.b16 %v566, %v550
  %v727 = vpack.c.b16 %v567, %v551
  %v728 = vpack.c.b16 %v568, %v552
  %v729 = vpack.c.b16 %v569, %v553
  %v730 = vpack.c.b16 %v570, %v554
  %v731 = vpack.c.b16 %v571, %v555
  %v732 = vpack.c.b16 %v572, %v556
  %v733 = vpack.c.b16 %v589, %v573
  %v734 = vpack.c.b16 %v590, %v574
  %v735 = vpack.c.b16 %v591, %v575
  %v736 = vpack.c.b16 %v592, %v576
  %v737 = vpack.c.b16 %v593, %v577
  %v738 = vpack.c.b16 %v594, %v578
  %v739 = vpack.c.b16 %v595, %v579
  %v740 = vpack.c.b16 %v596, %v580
  %v741 = vpack.c.b16 %v597, %v581
  %v742 = vpack.c.b16 %v598, %v582
  %v743 = vpack.c.b16 %v599, %v583
  %v744 = vpack.c.b16 %v600, %v584
  %v745 = vpack.c.b16 %v601, %v585
  %v746 = vpack.c.b16 %v602, %v586
  %v747 = vpack.c.b16 %v603, %v587
  %v748 = vpack.c.b16 %v604, %v588
  %vm893 = vcmask 130048
  %v895 = vsel %vm893, %v171, 0
  %897 = vmatprep.subr.bf16.mxu0 %v606
  %898 = vmatpush1.bf16.msra.mxu0 %v605
  %899 = vmatprep.subr.bf16.mxu0 %v622
  %900 = vmatpush1.bf16.msra.mxu0 %v621
  %901 = vmatprep.subr.bf16.mxu0 %v638
  %902 = vmatpush1.bf16.msra.mxu0 %v637
  %903 = vmatprep.subr.bf16.mxu0 %v654
  %904 = vmatpush1.bf16.msra.mxu0 %v653
  %905 = vmatprep.subr.bf16.mxu0 %v670
  %906 = vmatpush1.bf16.msra.mxu0 %v669
  %907 = vmatprep.subr.bf16.mxu0 %v686
  %908 = vmatpush1.bf16.msra.mxu0 %v685
  %909 = vmatprep.subr.bf16.mxu0 %v702
  %910 = vmatpush1.bf16.msra.mxu0 %v701
  %911 = vmatprep.subr.bf16.mxu0 %v718
  %912 = vmatpush1.bf16.msra.mxu0 %v717
  %913 = vmatprep.subr.bf16.mxu0 %v734
  %914 = vmatpush1.bf16.msra.mxu0 %v733
  %915 = vmatprep.subr.bf16.mxu0 0
  %916 = vmatpush1.bf16.msra.mxu0 0
  %917 = vmatprep.subr.bf16.mxu0 0
  %918 = vmatpush1.bf16.msra.mxu0 0
  %919 = vmatprep.subr.bf16.mxu0 0
  %920 = vmatpush1.bf16.msra.mxu0 0
  %921 = vmatprep.subr.bf16.mxu0 0
  %922 = vmatpush1.bf16.msra.mxu0 0
  %923 = vmatprep.subr.bf16.mxu0 0
  %924 = vmatpush1.bf16.msra.mxu0 0
  %925 = vmatprep.subr.bf16.mxu0 0
  %926 = vmatpush1.bf16.msra.mxu0 0
  %927 = vmatprep.subr.bf16.mxu0 0
  %928 = vmatpush1.bf16.msra.mxu0 0
  %929 = vmatprep.mubr.bf16.mxu0 %v895
  %930 = vmatmul.mubr.bf16.gmra.mrb[0].mxu0 %v170
  %v931 = vpop.f32.mrb[0].mxu0
  %v932 = vadd.f32 0.0, %v931
  %v933 = vpop.f32.mrb[0].mxu0
  %v934 = vadd.f32 0.0, %v933
  %v935 = vpop.f32.mrb[0].mxu0
  %v936 = vadd.f32 0.0, %v935
  %v937 = vpop.f32.mrb[0].mxu0
  %v938 = vadd.f32 0.0, %v937
  %939 = vdwg.mxu0
  %940 = vmatprep.subr.bf16.mxu0 %v608
  %941 = vmatpush1.bf16.msra.mxu0 %v607
  %942 = vmatprep.subr.bf16.mxu0 %v624
  %943 = vmatpush1.bf16.msra.mxu0 %v623
  %944 = vmatprep.subr.bf16.mxu0 %v640
  %945 = vmatpush1.bf16.msra.mxu0 %v639
  %946 = vmatprep.subr.bf16.mxu0 %v656
  %947 = vmatpush1.bf16.msra.mxu0 %v655
  %948 = vmatprep.subr.bf16.mxu0 %v672
  %949 = vmatpush1.bf16.msra.mxu0 %v671
  %950 = vmatprep.subr.bf16.mxu0 %v688
  %951 = vmatpush1.bf16.msra.mxu0 %v687
  %952 = vmatprep.subr.bf16.mxu0 %v704
  %953 = vmatpush1.bf16.msra.mxu0 %v703
  %954 = vmatprep.subr.bf16.mxu0 %v720
  %955 = vmatpush1.bf16.msra.mxu0 %v719
  %956 = vmatprep.subr.bf16.mxu0 %v736
  %957 = vmatpush1.bf16.msra.mxu0 %v735
  %958 = vmatprep.subr.bf16.mxu0 0
  %959 = vmatpush1.bf16.msra.mxu0 0
  %960 = vmatprep.subr.bf16.mxu0 0
  %961 = vmatpush1.bf16.msra.mxu0 0
  %962 = vmatprep.subr.bf16.mxu0 0
  %963 = vmatpush1.bf16.msra.mxu0 0
  %964 = vmatprep.subr.bf16.mxu0 0
  %965 = vmatpush1.bf16.msra.mxu0 0
  %966 = vmatprep.subr.bf16.mxu0 0
  %967 = vmatpush1.bf16.msra.mxu0 0
  %968 = vmatprep.subr.bf16.mxu0 0
  %969 = vmatpush1.bf16.msra.mxu0 0
  %970 = vmatprep.subr.bf16.mxu0 0
  %971 = vmatpush1.bf16.msra.mxu0 0
  %972 = vmatprep.mubr.bf16.mxu0 %v895
  %973 = vmatmul.mubr.bf16.gmra.mrb[0].mxu0 %v170
  %v974 = vpop.f32.mrb[0].mxu0
  %v975 = vadd.f32 0.0, %v974
  %v976 = vpop.f32.mrb[0].mxu0
  %v977 = vadd.f32 0.0, %v976
  %v978 = vpop.f32.mrb[0].mxu0
  %v979 = vadd.f32 0.0, %v978
  %v980 = vpop.f32.mrb[0].mxu0
  %v981 = vadd.f32 0.0, %v980
  %982 = vdwg.mxu0
  %983 = vmatprep.subr.bf16.mxu0 %v610
  %984 = vmatpush1.bf16.msra.mxu0 %v609
  %985 = vmatprep.subr.bf16.mxu0 %v626
  %986 = vmatpush1.bf16.msra.mxu0 %v625
  %987 = vmatprep.subr.bf16.mxu0 %v642
  %988 = vmatpush1.bf16.msra.mxu0 %v641
  %989 = vmatprep.subr.bf16.mxu0 %v658
  %990 = vmatpush1.bf16.msra.mxu0 %v657
  %991 = vmatprep.subr.bf16.mxu0 %v674
  %992 = vmatpush1.bf16.msra.mxu0 %v673
  %993 = vmatprep.subr.bf16.mxu0 %v690
  %994 = vmatpush1.bf16.msra.mxu0 %v689
  %995 = vmatprep.subr.bf16.mxu0 %v706
  %996 = vmatpush1.bf16.msra.mxu0 %v705
  %997 = vmatprep.subr.bf16.mxu0 %v722
  %998 = vmatpush1.bf16.msra.mxu0 %v721
  %999 = vmatprep.subr.bf16.mxu0 %v738
  %1000 = vmatpush1.bf16.msra.mxu0 %v737
  %1001 = vmatprep.subr.bf16.mxu0 0
  %1002 = vmatpush1.bf16.msra.mxu0 0
  %1003 = vmatprep.subr.bf16.mxu0 0
  %1004 = vmatpush1.bf16.msra.mxu0 0
  %1005 = vmatprep.subr.bf16.mxu0 0
  %1006 = vmatpush1.bf16.msra.mxu0 0
  %1007 = vmatprep.subr.bf16.mxu0 0
  %1008 = vmatpush1.bf16.msra.mxu0 0
  %1009 = vmatprep.subr.bf16.mxu0 0
  %1010 = vmatpush1.bf16.msra.mxu0 0
  %1011 = vmatprep.subr.bf16.mxu0 0
  %1012 = vmatpush1.bf16.msra.mxu0 0
  %1013 = vmatprep.subr.bf16.mxu0 0
  %1014 = vmatpush1.bf16.msra.mxu0 0
  %1015 = vmatprep.mubr.bf16.mxu0 %v895
  %1016 = vmatmul.mubr.bf16.gmra.mrb[0].mxu0 %v170
  %v1017 = vpop.f32.mrb[0].mxu0
  %v1018 = vadd.f32 0.0, %v1017
  %v1019 = vpop.f32.mrb[0].mxu0
  %v1020 = vadd.f32 0.0, %v1019
  %v1021 = vpop.f32.mrb[0].mxu0
  %v1022 = vadd.f32 0.0, %v1021
  %v1023 = vpop.f32.mrb[0].mxu0
  %v1024 = vadd.f32 0.0, %v1023
  %1025 = vdwg.mxu0
  %1026 = vmatprep.subr.bf16.mxu0 %v612
  %1027 = vmatpush1.bf16.msra.mxu0 %v611
  %1028 = vmatprep.subr.bf16.mxu0 %v628
  %1029 = vmatpush1.bf16.msra.mxu0 %v627
  %1030 = vmatprep.subr.bf16.mxu0 %v644
  %1031 = vmatpush1.bf16.msra.mxu0 %v643
  %1032 = vmatprep.subr.bf16.mxu0 %v660
  %1033 = vmatpush1.bf16.msra.mxu0 %v659
  %1034 = vmatprep.subr.bf16.mxu0 %v676
  %1035 = vmatpush1.bf16.msra.mxu0 %v675
  %1036 = vmatprep.subr.bf16.mxu0 %v692
  %1037 = vmatpush1.bf16.msra.mxu0 %v691
  %1038 = vmatprep.subr.bf16.mxu0 %v708
  %1039 = vmatpush1.bf16.msra.mxu0 %v707
  %1040 = vmatprep.subr.bf16.mxu0 %v724
  %1041 = vmatpush1.bf16.msra.mxu0 %v723
  %1042 = vmatprep.subr.bf16.mxu0 %v740
  %1043 = vmatpush1.bf16.msra.mxu0 %v739
  %1044 = vmatprep.subr.bf16.mxu0 0
  %1045 = vmatpush1.bf16.msra.mxu0 0
  %1046 = vmatprep.subr.bf16.mxu0 0
  %1047 = vmatpush1.bf16.msra.mxu0 0
  %1048 = vmatprep.subr.bf16.mxu0 0
  %1049 = vmatpush1.bf16.msra.mxu0 0
  %1050 = vmatprep.subr.bf16.mxu0 0
  %1051 = vmatpush1.bf16.msra.mxu0 0
  %1052 = vmatprep.subr.bf16.mxu0 0
  %1053 = vmatpush1.bf16.msra.mxu0 0
  %1054 = vmatprep.subr.bf16.mxu0 0
  %1055 = vmatpush1.bf16.msra.mxu0 0
  %1056 = vmatprep.subr.bf16.mxu0 0
  %1057 = vmatpush1.bf16.msra.mxu0 0
  %1058 = vmatprep.mubr.bf16.mxu0 %v895
  %1059 = vmatmul.mubr.bf16.gmra.mrb[0].mxu0 %v170
  %v1060 = vpop.f32.mrb[0].mxu0
  %v1061 = vadd.f32 0.0, %v1060
  %v1062 = vpop.f32.mrb[0].mxu0
  %v1063 = vadd.f32 0.0, %v1062
  %v1064 = vpop.f32.mrb[0].mxu0
  %v1065 = vadd.f32 0.0, %v1064
  %v1066 = vpop.f32.mrb[0].mxu0
  %v1067 = vadd.f32 0.0, %v1066
  %1068 = vdwg.mxu0
  %1069 = vmatprep.subr.bf16.mxu0 %v614
  %1070 = vmatpush1.bf16.msra.mxu0 %v613
  %1071 = vmatprep.subr.bf16.mxu0 %v630
  %1072 = vmatpush1.bf16.msra.mxu0 %v629
  %1073 = vmatprep.subr.bf16.mxu0 %v646
  %1074 = vmatpush1.bf16.msra.mxu0 %v645
  %1075 = vmatprep.subr.bf16.mxu0 %v662
  %1076 = vmatpush1.bf16.msra.mxu0 %v661
  %1077 = vmatprep.subr.bf16.mxu0 %v678
  %1078 = vmatpush1.bf16.msra.mxu0 %v677
  %1079 = vmatprep.subr.bf16.mxu0 %v694
  %1080 = vmatpush1.bf16.msra.mxu0 %v693
  %1081 = vmatprep.subr.bf16.mxu0 %v710
  %1082 = vmatpush1.bf16.msra.mxu0 %v709
  %1083 = vmatprep.subr.bf16.mxu0 %v726
  %1084 = vmatpush1.bf16.msra.mxu0 %v725
  %1085 = vmatprep.subr.bf16.mxu0 %v742
  %1086 = vmatpush1.bf16.msra.mxu0 %v741
  %1087 = vmatprep.subr.bf16.mxu0 0
  %1088 = vmatpush1.bf16.msra.mxu0 0
  %1089 = vmatprep.subr.bf16.mxu0 0
  %1090 = vmatpush1.bf16.msra.mxu0 0
  %1091 = vmatprep.subr.bf16.mxu0 0
  %1092 = vmatpush1.bf16.msra.mxu0 0
  %1093 = vmatprep.subr.bf16.mxu0 0
  %1094 = vmatpush1.bf16.msra.mxu0 0
  %1095 = vmatprep.subr.bf16.mxu0 0
  %1096 = vmatpush1.bf16.msra.mxu0 0
  %1097 = vmatprep.subr.bf16.mxu0 0
  %1098 = vmatpush1.bf16.msra.mxu0 0
  %1099 = vmatprep.subr.bf16.mxu0 0
  %1100 = vmatpush1.bf16.msra.mxu0 0
  %1101 = vmatprep.mubr.bf16.mxu0 %v895
  %1102 = vmatmul.mubr.bf16.gmra.mrb[0].mxu0 %v170
  %v1103 = vpop.f32.mrb[0].mxu0
  %v1104 = vadd.f32 0.0, %v1103
  %v1105 = vpop.f32.mrb[0].mxu0
  %v1106 = vadd.f32 0.0, %v1105
  %v1107 = vpop.f32.mrb[0].mxu0
  %v1108 = vadd.f32 0.0, %v1107
  %v1109 = vpop.f32.mrb[0].mxu0
  %v1110 = vadd.f32 0.0, %v1109
  %1111 = vdwg.mxu0
  %1112 = vmatprep.subr.bf16.mxu0 %v616
  %1113 = vmatpush1.bf16.msra.mxu0 %v615
  %1114 = vmatprep.subr.bf16.mxu0 %v632
  %1115 = vmatpush1.bf16.msra.mxu0 %v631
  %1116 = vmatprep.subr.bf16.mxu0 %v648
  %1117 = vmatpush1.bf16.msra.mxu0 %v647
  %1118 = vmatprep.subr.bf16.mxu0 %v664
  %1119 = vmatpush1.bf16.msra.mxu0 %v663
  %1120 = vmatprep.subr.bf16.mxu0 %v680
  %1121 = vmatpush1.bf16.msra.mxu0 %v679
  %1122 = vmatprep.subr.bf16.mxu0 %v696
  %1123 = vmatpush1.bf16.msra.mxu0 %v695
  %1124 = vmatprep.subr.bf16.mxu0 %v712
  %1125 = vmatpush1.bf16.msra.mxu0 %v711
  %1126 = vmatprep.subr.bf16.mxu0 %v728
  %1127 = vmatpush1.bf16.msra.mxu0 %v727
  %1128 = vmatprep.subr.bf16.mxu0 %v744
  %1129 = vmatpush1.bf16.msra.mxu0 %v743
  %1130 = vmatprep.subr.bf16.mxu0 0
  %1131 = vmatpush1.bf16.msra.mxu0 0
  %1132 = vmatprep.subr.bf16.mxu0 0
  %1133 = vmatpush1.bf16.msra.mxu0 0
  %1134 = vmatprep.subr.bf16.mxu0 0
  %1135 = vmatpush1.bf16.msra.mxu0 0
  %1136 = vmatprep.subr.bf16.mxu0 0
  %1137 = vmatpush1.bf16.msra.mxu0 0
  %1138 = vmatprep.subr.bf16.mxu0 0
  %1139 = vmatpush1.bf16.msra.mxu0 0
  %1140 = vmatprep.subr.bf16.mxu0 0
  %1141 = vmatpush1.bf16.msra.mxu0 0
  %1142 = vmatprep.subr.bf16.mxu0 0
  %1143 = vmatpush1.bf16.msra.mxu0 0
  %1144 = vmatprep.mubr.bf16.mxu0 %v895
  %1145 = vmatmul.mubr.bf16.gmra.mrb[0].mxu0 %v170
  %v1146 = vpop.f32.mrb[0].mxu0
  %v1147 = vadd.f32 0.0, %v1146
  %v1148 = vpop.f32.mrb[0].mxu0
  %v1149 = vadd.f32 0.0, %v1148
  %v1150 = vpop.f32.mrb[0].mxu0
  %v1151 = vadd.f32 0.0, %v1150
  %v1152 = vpop.f32.mrb[0].mxu0
  %v1153 = vadd.f32 0.0, %v1152
  %1154 = vdwg.mxu0
  %1155 = vmatprep.subr.bf16.mxu0 %v618
  %1156 = vmatpush1.bf16.msra.mxu0 %v617
  %1157 = vmatprep.subr.bf16.mxu0 %v634
  %1158 = vmatpush1.bf16.msra.mxu0 %v633
  %1159 = vmatprep.subr.bf16.mxu0 %v650
  %1160 = vmatpush1.bf16.msra.mxu0 %v649
  %1161 = vmatprep.subr.bf16.mxu0 %v666
  %1162 = vmatpush1.bf16.msra.mxu0 %v665
  %1163 = vmatprep.subr.bf16.mxu0 %v682
  %1164 = vmatpush1.bf16.msra.mxu0 %v681
  %1165 = vmatprep.subr.bf16.mxu0 %v698
  %1166 = vmatpush1.bf16.msra.mxu0 %v697
  %1167 = vmatprep.subr.bf16.mxu0 %v714
  %1168 = vmatpush1.bf16.msra.mxu0 %v713
  %1169 = vmatprep.subr.bf16.mxu0 %v730
  %1170 = vmatpush1.bf16.msra.mxu0 %v729
  %1171 = vmatprep.subr.bf16.mxu0 %v746
  %1172 = vmatpush1.bf16.msra.mxu0 %v745
  %1173 = vmatprep.subr.bf16.mxu0 0
  %1174 = vmatpush1.bf16.msra.mxu0 0
  %1175 = vmatprep.subr.bf16.mxu0 0
  %1176 = vmatpush1.bf16.msra.mxu0 0
  %1177 = vmatprep.subr.bf16.mxu0 0
  %1178 = vmatpush1.bf16.msra.mxu0 0
  %1179 = vmatprep.subr.bf16.mxu0 0
  %1180 = vmatpush1.bf16.msra.mxu0 0
  %1181 = vmatprep.subr.bf16.mxu0 0
  %1182 = vmatpush1.bf16.msra.mxu0 0
  %1183 = vmatprep.subr.bf16.mxu0 0
  %1184 = vmatpush1.bf16.msra.mxu0 0
  %1185 = vmatprep.subr.bf16.mxu0 0
  %1186 = vmatpush1.bf16.msra.mxu0 0
  %1187 = vmatprep.mubr.bf16.mxu0 %v895
  %1188 = vmatmul.mubr.bf16.gmra.mrb[0].mxu0 %v170
  %v1189 = vpop.f32.mrb[0].mxu0
  %v1190 = vadd.f32 0.0, %v1189
  %v1191 = vpop.f32.mrb[0].mxu0
  %v1192 = vadd.f32 0.0, %v1191
  %v1193 = vpop.f32.mrb[0].mxu0
  %v1194 = vadd.f32 0.0, %v1193
  %v1195 = vpop.f32.mrb[0].mxu0
  %v1196 = vadd.f32 0.0, %v1195
  %1197 = vdwg.mxu0
  %1198 = vmatprep.subr.bf16.mxu0 %v620
  %1199 = vmatpush1.bf16.msra.mxu0 %v619
  %1200 = vmatprep.subr.bf16.mxu0 %v636
  %1201 = vmatpush1.bf16.msra.mxu0 %v635
  %1202 = vmatprep.subr.bf16.mxu0 %v652
  %1203 = vmatpush1.bf16.msra.mxu0 %v651
  %1204 = vmatprep.subr.bf16.mxu0 %v668
  %1205 = vmatpush1.bf16.msra.mxu0 %v667
  %1206 = vmatprep.subr.bf16.mxu0 %v684
  %1207 = vmatpush1.bf16.msra.mxu0 %v683
  %1208 = vmatprep.subr.bf16.mxu0 %v700
  %1209 = vmatpush1.bf16.msra.mxu0 %v699
  %1210 = vmatprep.subr.bf16.mxu0 %v716
  %1211 = vmatpush1.bf16.msra.mxu0 %v715
  %1212 = vmatprep.subr.bf16.mxu0 %v732
  %1213 = vmatpush1.bf16.msra.mxu0 %v731
  %1214 = vmatprep.subr.bf16.mxu0 %v748
  %1215 = vmatpush1.bf16.msra.mxu0 %v747
  %1216 = vmatprep.subr.bf16.mxu0 0
  %1217 = vmatpush1.bf16.msra.mxu0 0
  %1218 = vmatprep.subr.bf16.mxu0 0
  %1219 = vmatpush1.bf16.msra.mxu0 0
  %1220 = vmatprep.subr.bf16.mxu0 0
  %1221 = vmatpush1.bf16.msra.mxu0 0
  %1222 = vmatprep.subr.bf16.mxu0 0
  %1223 = vmatpush1.bf16.msra.mxu0 0
  %1224 = vmatprep.subr.bf16.mxu0 0
  %1225 = vmatpush1.bf16.msra.mxu0 0
  %1226 = vmatprep.subr.bf16.mxu0 0
  %1227 = vmatpush1.bf16.msra.mxu0 0
  %1228 = vmatprep.subr.bf16.mxu0 0
  %1229 = vmatpush1.bf16.msra.mxu0 0
  %1230 = vmatprep.mubr.bf16.mxu0 %v895
  %1231 = vmatmul.mubr.bf16.gmra.mrb[0].mxu0 %v170
  %v1232 = vpop.f32.mrb[0].mxu0
  %v1233 = vadd.f32 0.0, %v1232
  %v1234 = vpop.f32.mrb[0].mxu0
  %v1235 = vadd.f32 0.0, %v1234
  %v1236 = vpop.f32.mrb[0].mxu0
  %v1237 = vadd.f32 0.0, %v1236
  %v1238 = vpop.f32.mrb[0].mxu0
  %v1239 = vadd.f32 0.0, %v1238
  %1240 = vdwg.mxu0
  %v1241 = vld [vmem:[%s2] sm:$0xff]
  %v1242 = vld [vmem:[%s2 + $0x8] sm:$0xff]
  %v1243 = vld [vmem:[%s3] sm:$0xff]
  %v1244 = vld [vmem:[%s3 + $0x8] sm:$0xff]
  %v1245 = vadd.f32 %v932, %v934
  %v1246 = vadd.f32 %v1245, %v975
  %v1247 = vadd.f32 %v1246, %v977
  %v1248 = vadd.f32 %v1247, %v1018
  %v1249 = vadd.f32 %v1248, %v1020
  %v1250 = vadd.f32 %v1249, %v1061
  %v1251 = vadd.f32 %v1250, %v1063
  %v1252 = vadd.f32 %v1251, %v1104
  %v1253 = vadd.f32 %v1252, %v1106
  %v1254 = vadd.f32 %v1253, %v1147
  %v1255 = vadd.f32 %v1254, %v1149
  %v1256 = vadd.f32 %v1255, %v1190
  %v1257 = vadd.f32 %v1256, %v1192
  %v1258 = vadd.f32 %v1257, %v1233
  %v1259 = vadd.f32 %v1258, %v1235
  %1260 = vadd.xlane.f32.xlu0 %v1259
  %v1261 = vpop.xlane.xlu0 %1260
  %v1262 = vadd.f32 %v936, %v938
  %v1263 = vadd.f32 %v1262, %v979
  %v1264 = vadd.f32 %v1263, %v981
  %v1265 = vadd.f32 %v1264, %v1022
  %v1266 = vadd.f32 %v1265, %v1024
  %v1267 = vadd.f32 %v1266, %v1065
  %v1268 = vadd.f32 %v1267, %v1067
  %v1269 = vadd.f32 %v1268, %v1108
  %v1270 = vadd.f32 %v1269, %v1110
  %v1271 = vadd.f32 %v1270, %v1151
  %v1272 = vadd.f32 %v1271, %v1153
  %v1273 = vadd.f32 %v1272, %v1194
  %v1274 = vadd.f32 %v1273, %v1196
  %v1275 = vadd.f32 %v1274, %v1237
  %v1276 = vadd.f32 %v1275, %v1239
  %1277 = vadd.xlane.f32.xlu0 %v1276
  %v1278 = vpop.xlane.xlu0 %1277
  %v1279 = vrcp.pop 2048.0
  %v1280 = vmul.f32 %v1261, %v1279
  %v1281 = vmul.f32 %v1278, %v1279
  %v1282 = vsub.f32 %v932, %v1280
  %v1283 = vsub.f32 %v934, %v1280
  %v1284 = vsub.f32 %v975, %v1280
  %v1285 = vsub.f32 %v977, %v1280
  %v1286 = vsub.f32 %v1018, %v1280
  %v1287 = vsub.f32 %v1020, %v1280
  %v1288 = vsub.f32 %v1061, %v1280
  %v1289 = vsub.f32 %v1063, %v1280
  %v1290 = vsub.f32 %v1104, %v1280
  %v1291 = vsub.f32 %v1106, %v1280
  %v1292 = vsub.f32 %v1147, %v1280
  %v1293 = vsub.f32 %v1149, %v1280
  %v1294 = vsub.f32 %v1190, %v1280
  %v1295 = vsub.f32 %v1192, %v1280
  %v1296 = vsub.f32 %v1233, %v1280
  %v1297 = vsub.f32 %v1235, %v1280
  %v1298 = vsub.f32 %v936, %v1281
  %v1299 = vsub.f32 %v938, %v1281
  %v1300 = vsub.f32 %v979, %v1281
  %v1301 = vsub.f32 %v981, %v1281
  %v1302 = vsub.f32 %v1022, %v1281
  %v1303 = vsub.f32 %v1024, %v1281
  %v1304 = vsub.f32 %v1065, %v1281
  %v1305 = vsub.f32 %v1067, %v1281
  %v1306 = vsub.f32 %v1108, %v1281
  %v1307 = vsub.f32 %v1110, %v1281
  %v1308 = vsub.f32 %v1151, %v1281
  %v1309 = vsub.f32 %v1153, %v1281
  %v1310 = vsub.f32 %v1194, %v1281
  %v1311 = vsub.f32 %v1196, %v1281
  %v1312 = vsub.f32 %v1237, %v1281
  %v1313 = vsub.f32 %v1239, %v1281
  %v1314 = vmul.f32 %v1282, %v1282
  %v1315 = vmul.f32 %v1283, %v1283
  %v1316 = vmul.f32 %v1284, %v1284
  %v1317 = vmul.f32 %v1285, %v1285
  %v1318 = vmul.f32 %v1286, %v1286
  %v1319 = vmul.f32 %v1287, %v1287
  %v1320 = vmul.f32 %v1288, %v1288
  %v1321 = vmul.f32 %v1289, %v1289
  %v1322 = vmul.f32 %v1290, %v1290
  %v1323 = vmul.f32 %v1291, %v1291
  %v1324 = vmul.f32 %v1292, %v1292
  %v1325 = vmul.f32 %v1293, %v1293
  %v1326 = vmul.f32 %v1294, %v1294
  %v1327 = vmul.f32 %v1295, %v1295
  %v1328 = vmul.f32 %v1296, %v1296
  %v1329 = vmul.f32 %v1297, %v1297
  %v1330 = vmul.f32 %v1298, %v1298
  %v1331 = vmul.f32 %v1299, %v1299
  %v1332 = vmul.f32 %v1300, %v1300
  %v1333 = vmul.f32 %v1301, %v1301
  %v1334 = vmul.f32 %v1302, %v1302
  %v1335 = vmul.f32 %v1303, %v1303
  %v1336 = vmul.f32 %v1304, %v1304
  %v1337 = vmul.f32 %v1305, %v1305
  %v1338 = vmul.f32 %v1306, %v1306
  %v1339 = vmul.f32 %v1307, %v1307
  %v1340 = vmul.f32 %v1308, %v1308
  %v1341 = vmul.f32 %v1309, %v1309
  %v1342 = vmul.f32 %v1310, %v1310
  %v1343 = vmul.f32 %v1311, %v1311
  %v1344 = vmul.f32 %v1312, %v1312
  %v1345 = vmul.f32 %v1313, %v1313
  %v1346 = vadd.f32 %v1314, %v1315
  %v1347 = vadd.f32 %v1346, %v1316
  %v1348 = vadd.f32 %v1347, %v1317
  %v1349 = vadd.f32 %v1348, %v1318
  %v1350 = vadd.f32 %v1349, %v1319
  %v1351 = vadd.f32 %v1350, %v1320
  %v1352 = vadd.f32 %v1351, %v1321
  %v1353 = vadd.f32 %v1352, %v1322
  %v1354 = vadd.f32 %v1353, %v1323
  %v1355 = vadd.f32 %v1354, %v1324
  %v1356 = vadd.f32 %v1355, %v1325
  %v1357 = vadd.f32 %v1356, %v1326
  %v1358 = vadd.f32 %v1357, %v1327
  %v1359 = vadd.f32 %v1358, %v1328
  %v1360 = vadd.f32 %v1359, %v1329
  %1361 = vadd.xlane.f32.xlu0 %v1360
  %v1362 = vpop.xlane.xlu0 %1361
  %v1363 = vadd.f32 %v1330, %v1331
  %v1364 = vadd.f32 %v1363, %v1332
  %v1365 = vadd.f32 %v1364, %v1333
  %v1366 = vadd.f32 %v1365, %v1334
  %v1367 = vadd.f32 %v1366, %v1335
  %v1368 = vadd.f32 %v1367, %v1336
  %v1369 = vadd.f32 %v1368, %v1337
  %v1370 = vadd.f32 %v1369, %v1338
  %v1371 = vadd.f32 %v1370, %v1339
  %v1372 = vadd.f32 %v1371, %v1340
  %v1373 = vadd.f32 %v1372, %v1341
  %v1374 = vadd.f32 %v1373, %v1342
  %v1375 = vadd.f32 %v1374, %v1343
  %v1376 = vadd.f32 %v1375, %v1344
  %v1377 = vadd.f32 %v1376, %v1345
  %1378 = vadd.xlane.f32.xlu0 %v1377
  %v1379 = vpop.xlane.xlu0 %1378
  %v1380 = vmul.f32 %v1362, %v1279
  %v1381 = vmul.f32 %v1379, %v1279
  %v1382 = vadd.f32 %v1380, 1e-05
  %v1383 = vadd.f32 %v1381, 1e-05
  %v1384 = vrsqrt.pop %v1382
  %v1385 = vrsqrt.pop %v1383
  %v1386 = vmul.f32 %v1282, %v1384
  %v1387 = vmul.f32 %v1283, %v1384
  %v1388 = vmul.f32 %v1284, %v1384
  %v1389 = vmul.f32 %v1285, %v1384
  %v1390 = vmul.f32 %v1286, %v1384
  %v1391 = vmul.f32 %v1287, %v1384
  %v1392 = vmul.f32 %v1288, %v1384
  %v1393 = vmul.f32 %v1289, %v1384
  %v1394 = vmul.f32 %v1290, %v1384
  %v1395 = vmul.f32 %v1291, %v1384
  %v1396 = vmul.f32 %v1292, %v1384
  %v1397 = vmul.f32 %v1293, %v1384
  %v1398 = vmul.f32 %v1294, %v1384
  %v1399 = vmul.f32 %v1295, %v1384
  %v1400 = vmul.f32 %v1296, %v1384
  %v1401 = vmul.f32 %v1297, %v1384
  %v1402 = vmul.f32 %v1298, %v1385
  %v1403 = vmul.f32 %v1299, %v1385
  %v1404 = vmul.f32 %v1300, %v1385
  %v1405 = vmul.f32 %v1301, %v1385
  %v1406 = vmul.f32 %v1302, %v1385
  %v1407 = vmul.f32 %v1303, %v1385
  %v1408 = vmul.f32 %v1304, %v1385
  %v1409 = vmul.f32 %v1305, %v1385
  %v1410 = vmul.f32 %v1306, %v1385
  %v1411 = vmul.f32 %v1307, %v1385
  %v1412 = vmul.f32 %v1308, %v1385
  %v1413 = vmul.f32 %v1309, %v1385
  %v1414 = vmul.f32 %v1310, %v1385
  %v1415 = vmul.f32 %v1311, %v1385
  %v1416 = vmul.f32 %v1312, %v1385
  %v1417 = vmul.f32 %v1313, %v1385
  %1419 = vset.pattern.permute.xlu0 0
  %1420 = vperm.xlu0 %1419, %v1241
  %v1421 = vpop.permute.xlu0 %1420
  %1424 = vset.pattern.permute.xlu0 0
  %1425 = vperm.xlu0 %1424, %v1242
  %v1426 = vpop.permute.xlu0 %1425
  %v1428 = vmul.f32 %v1386, %v1421
  %v1429 = vmul.f32 %v1387, %v1421
  %v1430 = vmul.f32 %v1388, %v1421
  %v1431 = vmul.f32 %v1389, %v1421
  %v1432 = vmul.f32 %v1390, %v1421
  %v1433 = vmul.f32 %v1391, %v1421
  %v1434 = vmul.f32 %v1392, %v1421
  %v1435 = vmul.f32 %v1393, %v1421
  %v1436 = vmul.f32 %v1394, %v1421
  %v1437 = vmul.f32 %v1395, %v1421
  %v1438 = vmul.f32 %v1396, %v1421
  %v1439 = vmul.f32 %v1397, %v1421
  %v1440 = vmul.f32 %v1398, %v1421
  %v1441 = vmul.f32 %v1399, %v1421
  %v1442 = vmul.f32 %v1400, %v1421
  %v1443 = vmul.f32 %v1401, %v1421
  %v1444 = vmul.f32 %v1402, %v1426
  %v1445 = vmul.f32 %v1403, %v1426
  %v1446 = vmul.f32 %v1404, %v1426
  %v1447 = vmul.f32 %v1405, %v1426
  %v1448 = vmul.f32 %v1406, %v1426
  %v1449 = vmul.f32 %v1407, %v1426
  %v1450 = vmul.f32 %v1408, %v1426
  %v1451 = vmul.f32 %v1409, %v1426
  %v1452 = vmul.f32 %v1410, %v1426
  %v1453 = vmul.f32 %v1411, %v1426
  %v1454 = vmul.f32 %v1412, %v1426
  %v1455 = vmul.f32 %v1413, %v1426
  %v1456 = vmul.f32 %v1414, %v1426
  %v1457 = vmul.f32 %v1415, %v1426
  %v1458 = vmul.f32 %v1416, %v1426
  %v1459 = vmul.f32 %v1417, %v1426
  %1461 = vset.pattern.permute.xlu0 0
  %1462 = vperm.xlu0 %1461, %v1243
  %v1463 = vpop.permute.xlu0 %1462
  %1466 = vset.pattern.permute.xlu0 0
  %1467 = vperm.xlu0 %1466, %v1244
  %v1468 = vpop.permute.xlu0 %1467
  %v1470 = vadd.f32 %v1428, %v1463
  %v1471 = vadd.f32 %v1429, %v1463
  %v1472 = vadd.f32 %v1430, %v1463
  %v1473 = vadd.f32 %v1431, %v1463
  %v1474 = vadd.f32 %v1432, %v1463
  %v1475 = vadd.f32 %v1433, %v1463
  %v1476 = vadd.f32 %v1434, %v1463
  %v1477 = vadd.f32 %v1435, %v1463
  %v1478 = vadd.f32 %v1436, %v1463
  %v1479 = vadd.f32 %v1437, %v1463
  %v1480 = vadd.f32 %v1438, %v1463
  %v1481 = vadd.f32 %v1439, %v1463
  %v1482 = vadd.f32 %v1440, %v1463
  %v1483 = vadd.f32 %v1441, %v1463
  %v1484 = vadd.f32 %v1442, %v1463
  %v1485 = vadd.f32 %v1443, %v1463
  %v1486 = vadd.f32 %v1444, %v1468
  %v1487 = vadd.f32 %v1445, %v1468
  %v1488 = vadd.f32 %v1446, %v1468
  %v1489 = vadd.f32 %v1447, %v1468
  %v1490 = vadd.f32 %v1448, %v1468
  %v1491 = vadd.f32 %v1449, %v1468
  %v1492 = vadd.f32 %v1450, %v1468
  %v1493 = vadd.f32 %v1451, %v1468
  %v1494 = vadd.f32 %v1452, %v1468
  %v1495 = vadd.f32 %v1453, %v1468
  %v1496 = vadd.f32 %v1454, %v1468
  %v1497 = vadd.f32 %v1455, %v1468
  %v1498 = vadd.f32 %v1456, %v1468
  %v1499 = vadd.f32 %v1457, %v1468
  %v1500 = vadd.f32 %v1458, %v1468
  %v1501 = vadd.f32 %v1459, %v1468
  %v1502 = vmax.f32 %v1470, 0.0
  %v1503 = vmax.f32 %v1471, 0.0
  %v1504 = vmax.f32 %v1472, 0.0
  %v1505 = vmax.f32 %v1473, 0.0
  %v1506 = vmax.f32 %v1474, 0.0
  %v1507 = vmax.f32 %v1475, 0.0
  %v1508 = vmax.f32 %v1476, 0.0
  %v1509 = vmax.f32 %v1477, 0.0
  %v1510 = vmax.f32 %v1478, 0.0
  %v1511 = vmax.f32 %v1479, 0.0
  %v1512 = vmax.f32 %v1480, 0.0
  %v1513 = vmax.f32 %v1481, 0.0
  %v1514 = vmax.f32 %v1482, 0.0
  %v1515 = vmax.f32 %v1483, 0.0
  %v1516 = vmax.f32 %v1484, 0.0
  %v1517 = vmax.f32 %v1485, 0.0
  %v1518 = vmax.f32 %v1486, 0.0
  %v1519 = vmax.f32 %v1487, 0.0
  %v1520 = vmax.f32 %v1488, 0.0
  %v1521 = vmax.f32 %v1489, 0.0
  %v1522 = vmax.f32 %v1490, 0.0
  %v1523 = vmax.f32 %v1491, 0.0
  %v1524 = vmax.f32 %v1492, 0.0
  %v1525 = vmax.f32 %v1493, 0.0
  %v1526 = vmax.f32 %v1494, 0.0
  %v1527 = vmax.f32 %v1495, 0.0
  %v1528 = vmax.f32 %v1496, 0.0
  %v1529 = vmax.f32 %v1497, 0.0
  %v1530 = vmax.f32 %v1498, 0.0
  %v1531 = vmax.f32 %v1499, 0.0
  %v1532 = vmax.f32 %v1500, 0.0
  %v1533 = vmax.f32 %v1501, 0.0
  %1534 = vst [vmem:[%s4] sm:$0xff] %v1502
  %1535 = vst [vmem:[%s4 + $0x8] sm:$0xff] %v1503
  %1536 = vst [vmem:[%s4 + $0x10] sm:$0xff] %v1504
  %1537 = vst [vmem:[%s4 + $0x18] sm:$0xff] %v1505
  %1538 = vst [vmem:[%s4 + $0x20] sm:$0xff] %v1506
  %1539 = vst [vmem:[%s4 + $0x28] sm:$0xff] %v1507
  %1540 = vst [vmem:[%s4 + $0x30] sm:$0xff] %v1508
  %1541 = vst [vmem:[%s4 + $0x38] sm:$0xff] %v1509
  %1542 = vst [vmem:[%s4 + $0x40] sm:$0xff] %v1510
  %1543 = vst [vmem:[%s4 + $0x48] sm:$0xff] %v1511
  %1544 = vst [vmem:[%s4 + $0x50] sm:$0xff] %v1512
  %1545 = vst [vmem:[%s4 + $0x58] sm:$0xff] %v1513
  %1546 = vst [vmem:[%s4 + $0x60] sm:$0xff] %v1514
  %1547 = vst [vmem:[%s4 + $0x68] sm:$0xff] %v1515
  %1548 = vst [vmem:[%s4 + $0x70] sm:$0xff] %v1516
  %1549 = vst [vmem:[%s4 + $0x78] sm:$0xff] %v1517
  %1550 = vst [vmem:[%s4 + $0x80] sm:$0xff] %v1518
  %1551 = vst [vmem:[%s4 + $0x88] sm:$0xff] %v1519
  %1552 = vst [vmem:[%s4 + $0x90] sm:$0xff] %v1520
  %1553 = vst [vmem:[%s4 + $0x98] sm:$0xff] %v1521
  %1554 = vst [vmem:[%s4 + $0xa0] sm:$0xff] %v1522
  %1555 = vst [vmem:[%s4 + $0xa8] sm:$0xff] %v1523
  %1556 = vst [vmem:[%s4 + $0xb0] sm:$0xff] %v1524
  %1557 = vst [vmem:[%s4 + $0xb8] sm:$0xff] %v1525
  %1558 = vst [vmem:[%s4 + $0xc0] sm:$0xff] %v1526
  %1559 = vst [vmem:[%s4 + $0xc8] sm:$0xff] %v1527
  %1560 = vst [vmem:[%s4 + $0xd0] sm:$0xff] %v1528
  %1561 = vst [vmem:[%s4 + $0xd8] sm:$0xff] %v1529
  %1562 = vst [vmem:[%s4 + $0xe0] sm:$0xff] %v1530
  %1563 = vst [vmem:[%s4 + $0xe8] sm:$0xff] %v1531
  %1564 = vst [vmem:[%s4 + $0xf0] sm:$0xff] %v1532
  %1565 = vst [vmem:[%s4 + $0xf8] sm:$0xff] %v1533
  // Predicated region
  $region18: #{resnet_forward.15} parent=0 // pred_check
    _
  $region19: #{resnet_forward.15} parent=0 // pred_check_branch
    %1567 = sbr.rel (0) target = $region21
  $region20: #{resnet_forward.15} parent=0 // pred_region
    _
  $region21: #{resnet_forward.15} parent=0 // pred_fallthru
    _
  // Predicated region
  $region22: #{resnet_forward.15} parent=0 // pred_check
    _
  $region23: #{resnet_forward.15} parent=0 // pred_check_branch
    %1569 = sbr.rel (0) target = $region25
  $region24: #{resnet_forward.15} parent=0 // pred_region
    _
  $region25: #{resnet_forward.15} parent=0 // pred_fallthru
    _

// kernel: resnet_forward.16
$region0: #{resnet_forward.16}
  #allocation0 [shape = 'u32[]', space=smem, size = 0x4, offset = 0x4, fixed_abs, tag = 'smem constant byte address 0x4 - core index']
  #allocation1 [shape = 'u32[144,128]{1,0:T(1,128)}', space=vmem, size = 0x12000, scoped, tag = 'internal scratch']
  %s0 = inlined_call_operand.vmem [shape: bf16[144,2048], index: 0, kind: input, shape index: {}]
  %s1 = inlined_call_operand.vmem [shape: bf16[16,144], index: 1, kind: input, shape index: {}]
  %s2 = inlined_call_operand.vmem [shape: f32[16,1], index: 2, kind: input, shape index: {}]
  %s3 = inlined_call_operand.vmem [shape: f32[16,1], index: 3, kind: input, shape index: {}]
  %s4 = inlined_call_operand.vmem [shape: f32[16,2048], index: 4, kind: input, shape index: {}]
  %s5 = inlined_call_operand.vmem [shape: f32[16,2048], index: 5, kind: output, shape index: {}]
  %s6 = sld [smem:[#allocation0]]
  $region30: #{resnet_forward.16} parent=0
    _
  %s8 = ssub.s32 1, %s6
  %s9 = scalar_select 0, %s8, %s6
  // Predicated region
  $region2: #{resnet_forward.16} parent=0 // pred_check
    _
  $region3: #{resnet_forward.16} parent=0 // pred_check_branch
    %11 = sbr.rel (0) target = $region5
  $region4: #{resnet_forward.16} parent=0 // pred_region
    _
  $region5: #{resnet_forward.16} parent=0 // pred_fallthru
    _
  // Predicated region
  $region6: #{resnet_forward.16} parent=0 // pred_check
    _
  $region7: #{resnet_forward.16} parent=0 // pred_check_branch
    %13 = sbr.rel (0) target = $region9
  $region8: #{resnet_forward.16} parent=0 // pred_region
    _
  $region9: #{resnet_forward.16} parent=0 // pred_fallthru
    _
  // Predicated region
  $region10: #{resnet_forward.16} parent=0 // pred_check
    _
  $region11: #{resnet_forward.16} parent=0 // pred_check_branch
    %15 = sbr.rel (0) target = $region13
  $region12: #{resnet_forward.16} parent=0 // pred_region
    _
  $region13: #{resnet_forward.16} parent=0 // pred_fallthru
    _
  // Predicated region
  $region14: #{resnet_forward.16} parent=0 // pred_check
    _
  $region15: #{resnet_forward.16} parent=0 // pred_check_branch
    %17 = sbr.rel (0) target = $region17
  $region16: #{resnet_forward.16} parent=0 // pred_region
    _
  $region17: #{resnet_forward.16} parent=0 // pred_fallthru
    _
  // Predicated region
  $region18: #{resnet_forward.16} parent=0 // pred_check
    _
  $region19: #{resnet_forward.16} parent=0 // pred_check_branch
    %19 = sbr.rel (0) target = $region21
  $region20: #{resnet_forward.16} parent=0 // pred_region
    _
  $region21: #{resnet_forward.16} parent=0 // pred_fallthru
    _
  %v21 = vld [vmem:[%s1] sm:$0xff]
  %v22 = vld [vmem:[%s1 + $0x8] sm:$0xff]
  %v23 = vld [vmem:[%s0] sm:$0xff]
  %v24 = vld [vmem:[%s0 + $0x8] sm:$0xff]
  %v25 = vld [vmem:[%s0 + $0x10] sm:$0xff]
  %v26 = vld [vmem:[%s0 + $0x18] sm:$0xff]
  %v27 = vld [vmem:[%s0 + $0x20] sm:$0xff]
  %v28 = vld [vmem:[%s0 + $0x28] sm:$0xff]
  %v29 = vld [vmem:[%s0 + $0x30] sm:$0xff]
  %v30 = vld [vmem:[%s0 + $0x38] sm:$0xff]
  %v31 = vld [vmem:[%s0 + $0x40] sm:$0xff]
  %v32 = vld [vmem:[%s0 + $0x48] sm:$0xff]
  %v33 = vld [vmem:[%s0 + $0x50] sm:$0xff]
  %v34 = vld [vmem:[%s0 + $0x58] sm:$0xff]
  %v35 = vld [vmem:[%s0 + $0x60] sm:$0xff]
  %v36 = vld [vmem:[%s0 + $0x68] sm:$0xff]
  %v37 = vld [vmem:[%s0 + $0x70] sm:$0xff]
  %v38 = vld [vmem:[%s0 + $0x78] sm:$0xff]
  %v39 = vld [vmem:[%s0 + $0x80] sm:$0xff]
  %v40 = vld [vmem:[%s0 + $0x88] sm:$0xff]
  %v41 = vld [vmem:[%s0 + $0x90] sm:$0xff]
  %v42 = vld [vmem:[%s0 + $0x98] sm:$0xff]
  %v43 = vld [vmem:[%s0 + $0xa0] sm:$0xff]
  %v44 = vld [vmem:[%s0 + $0xa8] sm:$0xff]
  %v45 = vld [vmem:[%s0 + $0xb0] sm:$0xff]
  %v46 = vld [vmem:[%s0 + $0xb8] sm:$0xff]
  %v47 = vld [vmem:[%s0 + $0xc0] sm:$0xff]
  %v48 = vld [vmem:[%s0 + $0xc8] sm:$0xff]
  %v49 = vld [vmem:[%s0 + $0xd0] sm:$0xff]
  %v50 = vld [vmem:[%s0 + $0xd8] sm:$0xff]
  %v51 = vld [vmem:[%s0 + $0xe0] sm:$0xff]
  %v52 = vld [vmem:[%s0 + $0xe8] sm:$0xff]
  %v53 = vld [vmem:[%s0 + $0xf0] sm:$0xff]
  %v54 = vld [vmem:[%s0 + $0xf8] sm:$0xff]
  %v55 = vld [vmem:[%s0 + $0x100] sm:$0xff]
  %v56 = vld [vmem:[%s0 + $0x108] sm:$0xff]
  %v57 = vld [vmem:[%s0 + $0x110] sm:$0xff]
  %v58 = vld [vmem:[%s0 + $0x118] sm:$0xff]
  %v59 = vld [vmem:[%s0 + $0x120] sm:$0xff]
  %v60 = vld [vmem:[%s0 + $0x128] sm:$0xff]
  %v61 = vld [vmem:[%s0 + $0x130] sm:$0xff]
  %v62 = vld [vmem:[%s0 + $0x138] sm:$0xff]
  %v63 = vld [vmem:[%s0 + $0x140] sm:$0xff]
  %v64 = vld [vmem:[%s0 + $0x148] sm:$0xff]
  %v65 = vld [vmem:[%s0 + $0x150] sm:$0xff]
  %v66 = vld [vmem:[%s0 + $0x158] sm:$0xff]
  %v67 = vld [vmem:[%s0 + $0x160] sm:$0xff]
  %v68 = vld [vmem:[%s0 + $0x168] sm:$0xff]
  %v69 = vld [vmem:[%s0 + $0x170] sm:$0xff]
  %v70 = vld [vmem:[%s0 + $0x178] sm:$0xff]
  %v71 = vld [vmem:[%s0 + $0x180] sm:$0xff]
  %v72 = vld [vmem:[%s0 + $0x188] sm:$0xff]
  %v73 = vld [vmem:[%s0 + $0x190] sm:$0xff]
  %v74 = vld [vmem:[%s0 + $0x198] sm:$0xff]
  %v75 = vld [vmem:[%s0 + $0x1a0] sm:$0xff]
  %v76 = vld [vmem:[%s0 + $0x1a8] sm:$0xff]
  %v77 = vld [vmem:[%s0 + $0x1b0] sm:$0xff]
  %v78 = vld [vmem:[%s0 + $0x1b8] sm:$0xff]
  %v79 = vld [vmem:[%s0 + $0x1c0] sm:$0xff]
  %v80 = vld [vmem:[%s0 + $0x1c8] sm:$0xff]
  %v81 = vld [vmem:[%s0 + $0x1d0] sm:$0xff]
  %v82 = vld [vmem:[%s0 + $0x1d8] sm:$0xff]
  %v83 = vld [vmem:[%s0 + $0x1e0] sm:$0xff]
  %v84 = vld [vmem:[%s0 + $0x1e8] sm:$0xff]
  %v85 = vld [vmem:[%s0 + $0x1f0] sm:$0xff]
  %v86 = vld [vmem:[%s0 + $0x1f8] sm:$0xff]
  %v87 = vld [vmem:[%s0 + $0x200] sm:$0xff]
  %v88 = vld [vmem:[%s0 + $0x208] sm:$0xff]
  %v89 = vld [vmem:[%s0 + $0x210] sm:$0xff]
  %v90 = vld [vmem:[%s0 + $0x218] sm:$0xff]
  %v91 = vld [vmem:[%s0 + $0x220] sm:$0xff]
  %v92 = vld [vmem:[%s0 + $0x228] sm:$0xff]
  %v93 = vld [vmem:[%s0 + $0x230] sm:$0xff]
  %v94 = vld [vmem:[%s0 + $0x238] sm:$0xff]
  %v95 = vld [vmem:[%s0 + $0x240] sm:$0xff]
  %v96 = vld [vmem:[%s0 + $0x248] sm:$0xff]
  %v97 = vld [vmem:[%s0 + $0x250] sm:$0xff]
  %v98 = vld [vmem:[%s0 + $0x258] sm:$0xff]
  %v99 = vld [vmem:[%s0 + $0x260] sm:$0xff]
  %v100 = vld [vmem:[%s0 + $0x268] sm:$0xff]
  %v101 = vld [vmem:[%s0 + $0x270] sm:$0xff]
  %v102 = vld [vmem:[%s0 + $0x278] sm:$0xff]
  %v103 = vld [vmem:[%s0 + $0x280] sm:$0xff]
  %v104 = vld [vmem:[%s0 + $0x288] sm:$0xff]
  %v105 = vld [vmem:[%s0 + $0x290] sm:$0xff]
  %v106 = vld [vmem:[%s0 + $0x298] sm:$0xff]
  %v107 = vld [vmem:[%s0 + $0x2a0] sm:$0xff]
  %v108 = vld [vmem:[%s0 + $0x2a8] sm:$0xff]
  %v109 = vld [vmem:[%s0 + $0x2b0] sm:$0xff]
  %v110 = vld [vmem:[%s0 + $0x2b8] sm:$0xff]
  %v111 = vld [vmem:[%s0 + $0x2c0] sm:$0xff]
  %v112 = vld [vmem:[%s0 + $0x2c8] sm:$0xff]
  %v113 = vld [vmem:[%s0 + $0x2d0] sm:$0xff]
  %v114 = vld [vmem:[%s0 + $0x2d8] sm:$0xff]
  %v115 = vld [vmem:[%s0 + $0x2e0] sm:$0xff]
  %v116 = vld [vmem:[%s0 + $0x2e8] sm:$0xff]
  %v117 = vld [vmem:[%s0 + $0x2f0] sm:$0xff]
  %v118 = vld [vmem:[%s0 + $0x2f8] sm:$0xff]
  %v119 = vld [vmem:[%s0 + $0x300] sm:$0xff]
  %v120 = vld [vmem:[%s0 + $0x308] sm:$0xff]
  %v121 = vld [vmem:[%s0 + $0x310] sm:$0xff]
  %v122 = vld [vmem:[%s0 + $0x318] sm:$0xff]
  %v123 = vld [vmem:[%s0 + $0x320] sm:$0xff]
  %v124 = vld [vmem:[%s0 + $0x328] sm:$0xff]
  %v125 = vld [vmem:[%s0 + $0x330] sm:$0xff]
  %v126 = vld [vmem:[%s0 + $0x338] sm:$0xff]
  %v127 = vld [vmem:[%s0 + $0x340] sm:$0xff]
  %v128 = vld [vmem:[%s0 + $0x348] sm:$0xff]
  %v129 = vld [vmem:[%s0 + $0x350] sm:$0xff]
  %v130 = vld [vmem:[%s0 + $0x358] sm:$0xff]
  %v131 = vld [vmem:[%s0 + $0x360] sm:$0xff]
  %v132 = vld [vmem:[%s0 + $0x368] sm:$0xff]
  %v133 = vld [vmem:[%s0 + $0x370] sm:$0xff]
  %v134 = vld [vmem:[%s0 + $0x378] sm:$0xff]
  %v135 = vld [vmem:[%s0 + $0x380] sm:$0xff]
  %v136 = vld [vmem:[%s0 + $0x388] sm:$0xff]
  %v137 = vld [vmem:[%s0 + $0x390] sm:$0xff]
  %v138 = vld [vmem:[%s0 + $0x398] sm:$0xff]
  %v139 = vld [vmem:[%s0 + $0x3a0] sm:$0xff]
  %v140 = vld [vmem:[%s0 + $0x3a8] sm:$0xff]
  %v141 = vld [vmem:[%s0 + $0x3b0] sm:$0xff]
  %v142 = vld [vmem:[%s0 + $0x3b8] sm:$0xff]
  %v143 = vld [vmem:[%s0 + $0x3c0] sm:$0xff]
  %v144 = vld [vmem:[%s0 + $0x3c8] sm:$0xff]
  %v145 = vld [vmem:[%s0 + $0x3d0] sm:$0xff]
  %v146 = vld [vmem:[%s0 + $0x3d8] sm:$0xff]
  %v147 = vld [vmem:[%s0 + $0x3e0] sm:$0xff]
  %v148 = vld [vmem:[%s0 + $0x3e8] sm:$0xff]
  %v149 = vld [vmem:[%s0 + $0x3f0] sm:$0xff]
  %v150 = vld [vmem:[%s0 + $0x3f8] sm:$0xff]
  %v151 = vld [vmem:[%s0 + $0x400] sm:$0xff]
  %v152 = vld [vmem:[%s0 + $0x408] sm:$0xff]
  %v153 = vld [vmem:[%s0 + $0x410] sm:$0xff]
  %v154 = vld [vmem:[%s0 + $0x418] sm:$0xff]
  %v155 = vld [vmem:[%s0 + $0x420] sm:$0xff]
  %v156 = vld [vmem:[%s0 + $0x428] sm:$0xff]
  %v157 = vld [vmem:[%s0 + $0x430] sm:$0xff]
  %v158 = vld [vmem:[%s0 + $0x438] sm:$0xff]
  %v159 = vld [vmem:[%s0 + $0x440] sm:$0xff]
  %v160 = vld [vmem:[%s0 + $0x448] sm:$0xff]
  %v161 = vld [vmem:[%s0 + $0x450] sm:$0xff]
  %v162 = vld [vmem:[%s0 + $0x458] sm:$0xff]
  %v163 = vld [vmem:[%s0 + $0x460] sm:$0xff]
  %v164 = vld [vmem:[%s0 + $0x468] sm:$0xff]
  %v165 = vld [vmem:[%s0 + $0x470] sm:$0xff]
  %v166 = vld [vmem:[%s0 + $0x478] sm:$0xff]
  %v169 = vunpack.c.l.b16 %v21
  %v170 = vunpack.c.h.b16 %v21
  %v171 = vunpack.c.l.b16 %v22
  %v172 = vunpack.c.h.b16 %v22
  %v173 = vpack.c.b16 %v171, %v169
  %v174 = vpack.c.b16 %v172, %v170
  %v320 = vunpack.c.l.b16 %v23
  %v321 = vunpack.c.h.b16 %v23
  %v322 = vunpack.c.l.b16 %v24
  %v323 = vunpack.c.h.b16 %v24
  %v324 = vunpack.c.l.b16 %v25
  %v325 = vunpack.c.h.b16 %v25
  %v326 = vunpack.c.l.b16 %v26
  %v327 = vunpack.c.h.b16 %v26
  %v328 = vunpack.c.l.b16 %v27
  %v329 = vunpack.c.h.b16 %v27
  %v330 = vunpack.c.l.b16 %v28
  %v331 = vunpack.c.h.b16 %v28
  %v332 = vunpack.c.l.b16 %v29
  %v333 = vunpack.c.h.b16 %v29
  %v334 = vunpack.c.l.b16 %v30
  %v335 = vunpack.c.h.b16 %v30
  %v336 = vunpack.c.l.b16 %v31
  %v337 = vunpack.c.h.b16 %v31
  %v338 = vunpack.c.l.b16 %v32
  %v339 = vunpack.c.h.b16 %v32
  %v340 = vunpack.c.l.b16 %v33
  %v341 = vunpack.c.h.b16 %v33
  %v342 = vunpack.c.l.b16 %v34
  %v343 = vunpack.c.h.b16 %v34
  %v344 = vunpack.c.l.b16 %v35
  %v345 = vunpack.c.h.b16 %v35
  %v346 = vunpack.c.l.b16 %v36
  %v347 = vunpack.c.h.b16 %v36
  %v348 = vunpack.c.l.b16 %v37
  %v349 = vunpack.c.h.b16 %v37
  %v350 = vunpack.c.l.b16 %v38
  %v351 = vunpack.c.h.b16 %v38
  %v352 = vunpack.c.l.b16 %v39
  %v353 = vunpack.c.h.b16 %v39
  %v354 = vunpack.c.l.b16 %v40
  %v355 = vunpack.c.h.b16 %v40
  %v356 = vunpack.c.l.b16 %v41
  %v357 = vunpack.c.h.b16 %v41
  %v358 = vunpack.c.l.b16 %v42
  %v359 = vunpack.c.h.b16 %v42
  %v360 = vunpack.c.l.b16 %v43
  %v361 = vunpack.c.h.b16 %v43
  %v362 = vunpack.c.l.b16 %v44
  %v363 = vunpack.c.h.b16 %v44
  %v364 = vunpack.c.l.b16 %v45
  %v365 = vunpack.c.h.b16 %v45
  %v366 = vunpack.c.l.b16 %v46
  %v367 = vunpack.c.h.b16 %v46
  %v368 = vunpack.c.l.b16 %v47
  %v369 = vunpack.c.h.b16 %v47
  %v370 = vunpack.c.l.b16 %v48
  %v371 = vunpack.c.h.b16 %v48
  %v372 = vunpack.c.l.b16 %v49
  %v373 = vunpack.c.h.b16 %v49
  %v374 = vunpack.c.l.b16 %v50
  %v375 = vunpack.c.h.b16 %v50
  %v376 = vunpack.c.l.b16 %v51
  %v377 = vunpack.c.h.b16 %v51
  %v378 = vunpack.c.l.b16 %v52
  %v379 = vunpack.c.h.b16 %v52
  %v380 = vunpack.c.l.b16 %v53
  %v381 = vunpack.c.h.b16 %v53
  %v382 = vunpack.c.l.b16 %v54
  %v383 = vunpack.c.h.b16 %v54
  %v384 = vunpack.c.l.b16 %v55
  %v385 = vunpack.c.h.b16 %v55
  %v386 = vunpack.c.l.b16 %v56
  %v387 = vunpack.c.h.b16 %v56
  %v388 = vunpack.c.l.b16 %v57
  %v389 = vunpack.c.h.b16 %v57
  %v390 = vunpack.c.l.b16 %v58
  %v391 = vunpack.c.h.b16 %v58
  %v392 = vunpack.c.l.b16 %v59
  %v393 = vunpack.c.h.b16 %v59
  %v394 = vunpack.c.l.b16 %v60
  %v395 = vunpack.c.h.b16 %v60
  %v396 = vunpack.c.l.b16 %v61
  %v397 = vunpack.c.h.b16 %v61
  %v398 = vunpack.c.l.b16 %v62
  %v399 = vunpack.c.h.b16 %v62
  %v400 = vunpack.c.l.b16 %v63
  %v401 = vunpack.c.h.b16 %v63
  %v402 = vunpack.c.l.b16 %v64
  %v403 = vunpack.c.h.b16 %v64
  %v404 = vunpack.c.l.b16 %v65
  %v405 = vunpack.c.h.b16 %v65
  %v406 = vunpack.c.l.b16 %v66
  %v407 = vunpack.c.h.b16 %v66
  %v408 = vunpack.c.l.b16 %v67
  %v409 = vunpack.c.h.b16 %v67
  %v410 = vunpack.c.l.b16 %v68
  %v411 = vunpack.c.h.b16 %v68
  %v412 = vunpack.c.l.b16 %v69
  %v413 = vunpack.c.h.b16 %v69
  %v414 = vunpack.c.l.b16 %v70
  %v415 = vunpack.c.h.b16 %v70
  %v416 = vunpack.c.l.b16 %v71
  %v417 = vunpack.c.h.b16 %v71
  %v418 = vunpack.c.l.b16 %v72
  %v419 = vunpack.c.h.b16 %v72
  %v420 = vunpack.c.l.b16 %v73
  %v421 = vunpack.c.h.b16 %v73
  %v422 = vunpack.c.l.b16 %v74
  %v423 = vunpack.c.h.b16 %v74
  %v424 = vunpack.c.l.b16 %v75
  %v425 = vunpack.c.h.b16 %v75
  %v426 = vunpack.c.l.b16 %v76
  %v427 = vunpack.c.h.b16 %v76
  %v428 = vunpack.c.l.b16 %v77
  %v429 = vunpack.c.h.b16 %v77
  %v430 = vunpack.c.l.b16 %v78
  %v431 = vunpack.c.h.b16 %v78
  %v432 = vunpack.c.l.b16 %v79
  %v433 = vunpack.c.h.b16 %v79
  %v434 = vunpack.c.l.b16 %v80
  %v435 = vunpack.c.h.b16 %v80
  %v436 = vunpack.c.l.b16 %v81
  %v437 = vunpack.c.h.b16 %v81
  %v438 = vunpack.c.l.b16 %v82
  %v439 = vunpack.c.h.b16 %v82
  %v440 = vunpack.c.l.b16 %v83
  %v441 = vunpack.c.h.b16 %v83
  %v442 = vunpack.c.l.b16 %v84
  %v443 = vunpack.c.h.b16 %v84
  %v444 = vunpack.c.l.b16 %v85
  %v445 = vunpack.c.h.b16 %v85
  %v446 = vunpack.c.l.b16 %v86
  %v447 = vunpack.c.h.b16 %v86
  %v448 = vunpack.c.l.b16 %v87
  %v449 = vunpack.c.h.b16 %v87
  %v450 = vunpack.c.l.b16 %v88
  %v451 = vunpack.c.h.b16 %v88
  %v452 = vunpack.c.l.b16 %v89
  %v453 = vunpack.c.h.b16 %v89
  %v454 = vunpack.c.l.b16 %v90
  %v455 = vunpack.c.h.b16 %v90
  %v456 = vunpack.c.l.b16 %v91
  %v457 = vunpack.c.h.b16 %v91
  %v458 = vunpack.c.l.b16 %v92
  %v459 = vunpack.c.h.b16 %v92
  %v460 = vunpack.c.l.b16 %v93
  %v461 = vunpack.c.h.b16 %v93
  %v462 = vunpack.c.l.b16 %v94
  %v463 = vunpack.c.h.b16 %v94
  %v464 = vunpack.c.l.b16 %v95
  %v465 = vunpack.c.h.b16 %v95
  %v466 = vunpack.c.l.b16 %v96
  %v467 = vunpack.c.h.b16 %v96
  %v468 = vunpack.c.l.b16 %v97
  %v469 = vunpack.c.h.b16 %v97
  %v470 = vunpack.c.l.b16 %v98
  %v471 = vunpack.c.h.b16 %v98
  %v472 = vunpack.c.l.b16 %v99
  %v473 = vunpack.c.h.b16 %v99
  %v474 = vunpack.c.l.b16 %v100
  %v475 = vunpack.c.h.b16 %v100
  %v476 = vunpack.c.l.b16 %v101
  %v477 = vunpack.c.h.b16 %v101
  %v478 = vunpack.c.l.b16 %v102
  %v479 = vunpack.c.h.b16 %v102
  %v480 = vunpack.c.l.b16 %v103
  %v481 = vunpack.c.h.b16 %v103
  %v482 = vunpack.c.l.b16 %v104
  %v483 = vunpack.c.h.b16 %v104
  %v484 = vunpack.c.l.b16 %v105
  %v485 = vunpack.c.h.b16 %v105
  %v486 = vunpack.c.l.b16 %v106
  %v487 = vunpack.c.h.b16 %v106
  %v488 = vunpack.c.l.b16 %v107
  %v489 = vunpack.c.h.b16 %v107
  %v490 = vunpack.c.l.b16 %v108
  %v491 = vunpack.c.h.b16 %v108
  %v492 = vunpack.c.l.b16 %v109
  %v493 = vunpack.c.h.b16 %v109
  %v494 = vunpack.c.l.b16 %v110
  %v495 = vunpack.c.h.b16 %v110
  %v496 = vunpack.c.l.b16 %v111
  %v497 = vunpack.c.h.b16 %v111
  %v498 = vunpack.c.l.b16 %v112
  %v499 = vunpack.c.h.b16 %v112
  %v500 = vunpack.c.l.b16 %v113
  %v501 = vunpack.c.h.b16 %v113
  %v502 = vunpack.c.l.b16 %v114
  %v503 = vunpack.c.h.b16 %v114
  %v504 = vunpack.c.l.b16 %v115
  %v505 = vunpack.c.h.b16 %v115
  %v506 = vunpack.c.l.b16 %v116
  %v507 = vunpack.c.h.b16 %v116
  %v508 = vunpack.c.l.b16 %v117
  %v509 = vunpack.c.h.b16 %v117
  %v510 = vunpack.c.l.b16 %v118
  %v511 = vunpack.c.h.b16 %v118
  %v512 = vunpack.c.l.b16 %v119
  %v513 = vunpack.c.h.b16 %v119
  %v514 = vunpack.c.l.b16 %v120
  %v515 = vunpack.c.h.b16 %v120
  %v516 = vunpack.c.l.b16 %v121
  %v517 = vunpack.c.h.b16 %v121
  %v518 = vunpack.c.l.b16 %v122
  %v519 = vunpack.c.h.b16 %v122
  %v520 = vunpack.c.l.b16 %v123
  %v521 = vunpack.c.h.b16 %v123
  %v522 = vunpack.c.l.b16 %v124
  %v523 = vunpack.c.h.b16 %v124
  %v524 = vunpack.c.l.b16 %v125
  %v525 = vunpack.c.h.b16 %v125
  %v526 = vunpack.c.l.b16 %v126
  %v527 = vunpack.c.h.b16 %v126
  %v528 = vunpack.c.l.b16 %v127
  %v529 = vunpack.c.h.b16 %v127
  %v530 = vunpack.c.l.b16 %v128
  %v531 = vunpack.c.h.b16 %v128
  %v532 = vunpack.c.l.b16 %v129
  %v533 = vunpack.c.h.b16 %v129
  %v534 = vunpack.c.l.b16 %v130
  %v535 = vunpack.c.h.b16 %v130
  %v536 = vunpack.c.l.b16 %v131
  %v537 = vunpack.c.h.b16 %v131
  %v538 = vunpack.c.l.b16 %v132
  %v539 = vunpack.c.h.b16 %v132
  %v540 = vunpack.c.l.b16 %v133
  %v541 = vunpack.c.h.b16 %v133
  %v542 = vunpack.c.l.b16 %v134
  %v543 = vunpack.c.h.b16 %v134
  %v544 = vunpack.c.l.b16 %v135
  %v545 = vunpack.c.h.b16 %v135
  %v546 = vunpack.c.l.b16 %v136
  %v547 = vunpack.c.h.b16 %v136
  %v548 = vunpack.c.l.b16 %v137
  %v549 = vunpack.c.h.b16 %v137
  %v550 = vunpack.c.l.b16 %v138
  %v551 = vunpack.c.h.b16 %v138
  %v552 = vunpack.c.l.b16 %v139
  %v553 = vunpack.c.h.b16 %v139
  %v554 = vunpack.c.l.b16 %v140
  %v555 = vunpack.c.h.b16 %v140
  %v556 = vunpack.c.l.b16 %v141
  %v557 = vunpack.c.h.b16 %v141
  %v558 = vunpack.c.l.b16 %v142
  %v559 = vunpack.c.h.b16 %v142
  %v560 = vunpack.c.l.b16 %v143
  %v561 = vunpack.c.h.b16 %v143
  %v562 = vunpack.c.l.b16 %v144
  %v563 = vunpack.c.h.b16 %v144
  %v564 = vunpack.c.l.b16 %v145
  %v565 = vunpack.c.h.b16 %v145
  %v566 = vunpack.c.l.b16 %v146
  %v567 = vunpack.c.h.b16 %v146
  %v568 = vunpack.c.l.b16 %v147
  %v569 = vunpack.c.h.b16 %v147
  %v570 = vunpack.c.l.b16 %v148
  %v571 = vunpack.c.h.b16 %v148
  %v572 = vunpack.c.l.b16 %v149
  %v573 = vunpack.c.h.b16 %v149
  %v574 = vunpack.c.l.b16 %v150
  %v575 = vunpack.c.h.b16 %v150
  %v576 = vunpack.c.l.b16 %v151
  %v577 = vunpack.c.h.b16 %v151
  %v578 = vunpack.c.l.b16 %v152
  %v579 = vunpack.c.h.b16 %v152
  %v580 = vunpack.c.l.b16 %v153
  %v581 = vunpack.c.h.b16 %v153
  %v582 = vunpack.c.l.b16 %v154
  %v583 = vunpack.c.h.b16 %v154
  %v584 = vunpack.c.l.b16 %v155
  %v585 = vunpack.c.h.b16 %v155
  %v586 = vunpack.c.l.b16 %v156
  %v587 = vunpack.c.h.b16 %v156
  %v588 = vunpack.c.l.b16 %v157
  %v589 = vunpack.c.h.b16 %v157
  %v590 = vunpack.c.l.b16 %v158
  %v591 = vunpack.c.h.b16 %v158
  %v592 = vunpack.c.l.b16 %v159
  %v593 = vunpack.c.h.b16 %v159
  %v594 = vunpack.c.l.b16 %v160
  %v595 = vunpack.c.h.b16 %v160
  %v596 = vunpack.c.l.b16 %v161
  %v597 = vunpack.c.h.b16 %v161
  %v598 = vunpack.c.l.b16 %v162
  %v599 = vunpack.c.h.b16 %v162
  %v600 = vunpack.c.l.b16 %v163
  %v601 = vunpack.c.h.b16 %v163
  %v602 = vunpack.c.l.b16 %v164
  %v603 = vunpack.c.h.b16 %v164
  %v604 = vunpack.c.l.b16 %v165
  %v605 = vunpack.c.h.b16 %v165
  %v606 = vunpack.c.l.b16 %v166
  %v607 = vunpack.c.h.b16 %v166
  %v608 = vpack.c.b16 %v336, %v320
  %v609 = vpack.c.b16 %v337, %v321
  %v610 = vpack.c.b16 %v338, %v322
  %v611 = vpack.c.b16 %v339, %v323
  %v612 = vpack.c.b16 %v340, %v324
  %v613 = vpack.c.b16 %v341, %v325
  %v614 = vpack.c.b16 %v342, %v326
  %v615 = vpack.c.b16 %v343, %v327
  %v616 = vpack.c.b16 %v344, %v328
  %v617 = vpack.c.b16 %v345, %v329
  %v618 = vpack.c.b16 %v346, %v330
  %v619 = vpack.c.b16 %v347, %v331
  %v620 = vpack.c.b16 %v348, %v332
  %v621 = vpack.c.b16 %v349, %v333
  %v622 = vpack.c.b16 %v350, %v334
  %v623 = vpack.c.b16 %v351, %v335
  %v624 = vpack.c.b16 %v368, %v352
  %v625 = vpack.c.b16 %v369, %v353
  %v626 = vpack.c.b16 %v370, %v354
  %v627 = vpack.c.b16 %v371, %v355
  %v628 = vpack.c.b16 %v372, %v356
  %v629 = vpack.c.b16 %v373, %v357
  %v630 = vpack.c.b16 %v374, %v358
  %v631 = vpack.c.b16 %v375, %v359
  %v632 = vpack.c.b16 %v376, %v360
  %v633 = vpack.c.b16 %v377, %v361
  %v634 = vpack.c.b16 %v378, %v362
  %v635 = vpack.c.b16 %v379, %v363
  %v636 = vpack.c.b16 %v380, %v364
  %v637 = vpack.c.b16 %v381, %v365
  %v638 = vpack.c.b16 %v382, %v366
  %v639 = vpack.c.b16 %v383, %v367
  %v640 = vpack.c.b16 %v400, %v384
  %v641 = vpack.c.b16 %v401, %v385
  %v642 = vpack.c.b16 %v402, %v386
  %v643 = vpack.c.b16 %v403, %v387
  %v644 = vpack.c.b16 %v404, %v388
  %v645 = vpack.c.b16 %v405, %v389
  %v646 = vpack.c.b16 %v406, %v390
  %v647 = vpack.c.b16 %v407, %v391
  %v648 = vpack.c.b16 %v408, %v392
  %v649 = vpack.c.b16 %v409, %v393
  %v650 = vpack.c.b16 %v410, %v394
  %v651 = vpack.c.b16 %v411, %v395
  %v652 = vpack.c.b16 %v412, %v396
  %v653 = vpack.c.b16 %v413, %v397
  %v654 = vpack.c.b16 %v414, %v398
  %v655 = vpack.c.b16 %v415, %v399
  %v656 = vpack.c.b16 %v432, %v416
  %v657 = vpack.c.b16 %v433, %v417
  %v658 = vpack.c.b16 %v434, %v418
  %v659 = vpack.c.b16 %v435, %v419
  %v660 = vpack.c.b16 %v436, %v420
  %v661 = vpack.c.b16 %v437, %v421
  %v662 = vpack.c.b16 %v438, %v422
  %v663 = vpack.c.b16 %v439, %v423
  %v664 = vpack.c.b16 %v440, %v424
  %v665 = vpack.c.b16 %v441, %v425
  %v666 = vpack.c.b16 %v442, %v426
  %v667 = vpack.c.b16 %v443, %v427
  %v668 = vpack.c.b16 %v444, %v428
  %v669 = vpack.c.b16 %v445, %v429
  %v670 = vpack.c.b16 %v446, %v430
  %v671 = vpack.c.b16 %v447, %v431
  %v672 = vpack.c.b16 %v464, %v448
  %v673 = vpack.c.b16 %v465, %v449
  %v674 = vpack.c.b16 %v466, %v450
  %v675 = vpack.c.b16 %v467, %v451
  %v676 = vpack.c.b16 %v468, %v452
  %v677 = vpack.c.b16 %v469, %v453
  %v678 = vpack.c.b16 %v470, %v454
  %v679 = vpack.c.b16 %v471, %v455
  %v680 = vpack.c.b16 %v472, %v456
  %v681 = vpack.c.b16 %v473, %v457
  %v682 = vpack.c.b16 %v474, %v458
  %v683 = vpack.c.b16 %v475, %v459
  %v684 = vpack.c.b16 %v476, %v460
  %v685 = vpack.c.b16 %v477, %v461
  %v686 = vpack.c.b16 %v478, %v462
  %v687 = vpack.c.b16 %v479, %v463
  %v688 = vpack.c.b16 %v496, %v480
  %v689 = vpack.c.b16 %v497, %v481
  %v690 = vpack.c.b16 %v498, %v482
  %v691 = vpack.c.b16 %v499, %v483
  %v692 = vpack.c.b16 %v500, %v484
  %v693 = vpack.c.b16 %v501, %v485
  %v694 = vpack.c.b16 %v502, %v486
  %v695 = vpack.c.b16 %v503, %v487
  %v696 = vpack.c.b16 %v504, %v488
  %v697 = vpack.c.b16 %v505, %v489
  %v698 = vpack.c.b16 %v506, %v490
  %v699 = vpack.c.b16 %v507, %v491
  %v700 = vpack.c.b16 %v508, %v492
  %v701 = vpack.c.b16 %v509, %v493
  %v702 = vpack.c.b16 %v510, %v494
  %v703 = vpack.c.b16 %v511, %v495
  %v704 = vpack.c.b16 %v528, %v512
  %v705 = vpack.c.b16 %v529, %v513
  %v706 = vpack.c.b16 %v530, %v514
  %v707 = vpack.c.b16 %v531, %v515
  %v708 = vpack.c.b16 %v532, %v516
  %v709 = vpack.c.b16 %v533, %v517
  %v710 = vpack.c.b16 %v534, %v518
  %v711 = vpack.c.b16 %v535, %v519
  %v712 = vpack.c.b16 %v536, %v520
  %v713 = vpack.c.b16 %v537, %v521
  %v714 = vpack.c.b16 %v538, %v522
  %v715 = vpack.c.b16 %v539, %v523
  %v716 = vpack.c.b16 %v540, %v524
  %v717 = vpack.c.b16 %v541, %v525
  %v718 = vpack.c.b16 %v542, %v526
  %v719 = vpack.c.b16 %v543, %v527
  %v720 = vpack.c.b16 %v560, %v544
  %v721 = vpack.c.b16 %v561, %v545
  %v722 = vpack.c.b16 %v562, %v546
  %v723 = vpack.c.b16 %v563, %v547
  %v724 = vpack.c.b16 %v564, %v548
  %v725 = vpack.c.b16 %v565, %v549
  %v726 = vpack.c.b16 %v566, %v550
  %v727 = vpack.c.b16 %v567, %v551
  %v728 = vpack.c.b16 %v568, %v552
  %v729 = vpack.c.b16 %v569, %v553
  %v730 = vpack.c.b16 %v570, %v554
  %v731 = vpack.c.b16 %v571, %v555
  %v732 = vpack.c.b16 %v572, %v556
  %v733 = vpack.c.b16 %v573, %v557
  %v734 = vpack.c.b16 %v574, %v558
  %v735 = vpack.c.b16 %v575, %v559
  %v736 = vpack.c.b16 %v592, %v576
  %v737 = vpack.c.b16 %v593, %v577
  %v738 = vpack.c.b16 %v594, %v578
  %v739 = vpack.c.b16 %v595, %v579
  %v740 = vpack.c.b16 %v596, %v580
  %v741 = vpack.c.b16 %v597, %v581
  %v742 = vpack.c.b16 %v598, %v582
  %v743 = vpack.c.b16 %v599, %v583
  %v744 = vpack.c.b16 %v600, %v584
  %v745 = vpack.c.b16 %v601, %v585
  %v746 = vpack.c.b16 %v602, %v586
  %v747 = vpack.c.b16 %v603, %v587
  %v748 = vpack.c.b16 %v604, %v588
  %v749 = vpack.c.b16 %v605, %v589
  %v750 = vpack.c.b16 %v606, %v590
  %v751 = vpack.c.b16 %v607, %v591
  %vm896 = vcmask 130048
  %v898 = vsel %vm896, %v174, 0
  %900 = vmatprep.subr.bf16.mxu0 %v609
  %901 = vmatpush1.bf16.msra.mxu0 %v608
  %902 = vmatprep.subr.bf16.mxu0 %v625
  %903 = vmatpush1.bf16.msra.mxu0 %v624
  %904 = vmatprep.subr.bf16.mxu0 %v641
  %905 = vmatpush1.bf16.msra.mxu0 %v640
  %906 = vmatprep.subr.bf16.mxu0 %v657
  %907 = vmatpush1.bf16.msra.mxu0 %v656
  %908 = vmatprep.subr.bf16.mxu0 %v673
  %909 = vmatpush1.bf16.msra.mxu0 %v672
  %910 = vmatprep.subr.bf16.mxu0 %v689
  %911 = vmatpush1.bf16.msra.mxu0 %v688
  %912 = vmatprep.subr.bf16.mxu0 %v705
  %913 = vmatpush1.bf16.msra.mxu0 %v704
  %914 = vmatprep.subr.bf16.mxu0 %v721
  %915 = vmatpush1.bf16.msra.mxu0 %v720
  %916 = vmatprep.subr.bf16.mxu0 %v737
  %917 = vmatpush1.bf16.msra.mxu0 %v736
  %918 = vmatprep.subr.bf16.mxu0 0
  %919 = vmatpush1.bf16.msra.mxu0 0
  %920 = vmatprep.subr.bf16.mxu0 0
  %921 = vmatpush1.bf16.msra.mxu0 0
  %922 = vmatprep.subr.bf16.mxu0 0
  %923 = vmatpush1.bf16.msra.mxu0 0
  %924 = vmatprep.subr.bf16.mxu0 0
  %925 = vmatpush1.bf16.msra.mxu0 0
  %926 = vmatprep.subr.bf16.mxu0 0
  %927 = vmatpush1.bf16.msra.mxu0 0
  %928 = vmatprep.subr.bf16.mxu0 0
  %929 = vmatpush1.bf16.msra.mxu0 0
  %930 = vmatprep.subr.bf16.mxu0 0
  %931 = vmatpush1.bf16.msra.mxu0 0
  %932 = vmatprep.mubr.bf16.mxu0 %v898
  %933 = vmatmul.mubr.bf16.gmra.mrb[0].mxu0 %v173
  %v934 = vpop.f32.mrb[0].mxu0
  %v935 = vadd.f32 0.0, %v934
  %v936 = vpop.f32.mrb[0].mxu0
  %v937 = vadd.f32 0.0, %v936
  %v938 = vpop.f32.mrb[0].mxu0
  %v939 = vadd.f32 0.0, %v938
  %v940 = vpop.f32.mrb[0].mxu0
  %v941 = vadd.f32 0.0, %v940
  %942 = vdwg.mxu0
  %943 = vmatprep.subr.bf16.mxu0 %v611
  %944 = vmatpush1.bf16.msra.mxu0 %v610
  %945 = vmatprep.subr.bf16.mxu0 %v627
  %946 = vmatpush1.bf16.msra.mxu0 %v626
  %947 = vmatprep.subr.bf16.mxu0 %v643
  %948 = vmatpush1.bf16.msra.mxu0 %v642
  %949 = vmatprep.subr.bf16.mxu0 %v659
  %950 = vmatpush1.bf16.msra.mxu0 %v658
  %951 = vmatprep.subr.bf16.mxu0 %v675
  %952 = vmatpush1.bf16.msra.mxu0 %v674
  %953 = vmatprep.subr.bf16.mxu0 %v691
  %954 = vmatpush1.bf16.msra.mxu0 %v690
  %955 = vmatprep.subr.bf16.mxu0 %v707
  %956 = vmatpush1.bf16.msra.mxu0 %v706
  %957 = vmatprep.subr.bf16.mxu0 %v723
  %958 = vmatpush1.bf16.msra.mxu0 %v722
  %959 = vmatprep.subr.bf16.mxu0 %v739
  %960 = vmatpush1.bf16.msra.mxu0 %v738
  %961 = vmatprep.subr.bf16.mxu0 0
  %962 = vmatpush1.bf16.msra.mxu0 0
  %963 = vmatprep.subr.bf16.mxu0 0
  %964 = vmatpush1.bf16.msra.mxu0 0
  %965 = vmatprep.subr.bf16.mxu0 0
  %966 = vmatpush1.bf16.msra.mxu0 0
  %967 = vmatprep.subr.bf16.mxu0 0
  %968 = vmatpush1.bf16.msra.mxu0 0
  %969 = vmatprep.subr.bf16.mxu0 0
  %970 = vmatpush1.bf16.msra.mxu0 0
  %971 = vmatprep.subr.bf16.mxu0 0
  %972 = vmatpush1.bf16.msra.mxu0 0
  %973 = vmatprep.subr.bf16.mxu0 0
  %974 = vmatpush1.bf16.msra.mxu0 0
  %975 = vmatprep.mubr.bf16.mxu0 %v898
  %976 = vmatmul.mubr.bf16.gmra.mrb[0].mxu0 %v173
  %v977 = vpop.f32.mrb[0].mxu0
  %v978 = vadd.f32 0.0, %v977
  %v979 = vpop.f32.mrb[0].mxu0
  %v980 = vadd.f32 0.0, %v979
  %v981 = vpop.f32.mrb[0].mxu0
  %v982 = vadd.f32 0.0, %v981
  %v983 = vpop.f32.mrb[0].mxu0
  %v984 = vadd.f32 0.0, %v983
  %985 = vdwg.mxu0
  %986 = vmatprep.subr.bf16.mxu0 %v613
  %987 = vmatpush1.bf16.msra.mxu0 %v612
  %988 = vmatprep.subr.bf16.mxu0 %v629
  %989 = vmatpush1.bf16.msra.mxu0 %v628
  %990 = vmatprep.subr.bf16.mxu0 %v645
  %991 = vmatpush1.bf16.msra.mxu0 %v644
  %992 = vmatprep.subr.bf16.mxu0 %v661
  %993 = vmatpush1.bf16.msra.mxu0 %v660
  %994 = vmatprep.subr.bf16.mxu0 %v677
  %995 = vmatpush1.bf16.msra.mxu0 %v676
  %996 = vmatprep.subr.bf16.mxu0 %v693
  %997 = vmatpush1.bf16.msra.mxu0 %v692
  %998 = vmatprep.subr.bf16.mxu0 %v709
  %999 = vmatpush1.bf16.msra.mxu0 %v708
  %1000 = vmatprep.subr.bf16.mxu0 %v725
  %1001 = vmatpush1.bf16.msra.mxu0 %v724
  %1002 = vmatprep.subr.bf16.mxu0 %v741
  %1003 = vmatpush1.bf16.msra.mxu0 %v740
  %1004 = vmatprep.subr.bf16.mxu0 0
  %1005 = vmatpush1.bf16.msra.mxu0 0
  %1006 = vmatprep.subr.bf16.mxu0 0
  %1007 = vmatpush1.bf16.msra.mxu0 0
  %1008 = vmatprep.subr.bf16.mxu0 0
  %1009 = vmatpush1.bf16.msra.mxu0 0
  %1010 = vmatprep.subr.bf16.mxu0 0
  %1011 = vmatpush1.bf16.msra.mxu0 0
  %1012 = vmatprep.subr.bf16.mxu0 0
  %1013 = vmatpush1.bf16.msra.mxu0 0
  %1014 = vmatprep.subr.bf16.mxu0 0
  %1015 = vmatpush1.bf16.msra.mxu0 0
  %1016 = vmatprep.subr.bf16.mxu0 0
  %1017 = vmatpush1.bf16.msra.mxu0 0
  %1018 = vmatprep.mubr.bf16.mxu0 %v898
  %1019 = vmatmul.mubr.bf16.gmra.mrb[0].mxu0 %v173
  %v1020 = vpop.f32.mrb[0].mxu0
  %v1021 = vadd.f32 0.0, %v1020
  %v1022 = vpop.f32.mrb[0].mxu0
  %v1023 = vadd.f32 0.0, %v1022
  %v1024 = vpop.f32.mrb[0].mxu0
  %v1025 = vadd.f32 0.0, %v1024
  %v1026 = vpop.f32.mrb[0].mxu0
  %v1027 = vadd.f32 0.0, %v1026
  %1028 = vdwg.mxu0
  %1029 = vmatprep.subr.bf16.mxu0 %v615
  %1030 = vmatpush1.bf16.msra.mxu0 %v614
  %1031 = vmatprep.subr.bf16.mxu0 %v631
  %1032 = vmatpush1.bf16.msra.mxu0 %v630
  %1033 = vmatprep.subr.bf16.mxu0 %v647
  %1034 = vmatpush1.bf16.msra.mxu0 %v646
  %1035 = vmatprep.subr.bf16.mxu0 %v663
  %1036 = vmatpush1.bf16.msra.mxu0 %v662
  %1037 = vmatprep.subr.bf16.mxu0 %v679
  %1038 = vmatpush1.bf16.msra.mxu0 %v678
  %1039 = vmatprep.subr.bf16.mxu0 %v695
  %1040 = vmatpush1.bf16.msra.mxu0 %v694
  %1041 = vmatprep.subr.bf16.mxu0 %v711
  %1042 = vmatpush1.bf16.msra.mxu0 %v710
  %1043 = vmatprep.subr.bf16.mxu0 %v727
  %1044 = vmatpush1.bf16.msra.mxu0 %v726
  %1045 = vmatprep.subr.bf16.mxu0 %v743
  %1046 = vmatpush1.bf16.msra.mxu0 %v742
  %1047 = vmatprep.subr.bf16.mxu0 0
  %1048 = vmatpush1.bf16.msra.mxu0 0
  %1049 = vmatprep.subr.bf16.mxu0 0
  %1050 = vmatpush1.bf16.msra.mxu0 0
  %1051 = vmatprep.subr.bf16.mxu0 0
  %1052 = vmatpush1.bf16.msra.mxu0 0
  %1053 = vmatprep.subr.bf16.mxu0 0
  %1054 = vmatpush1.bf16.msra.mxu0 0
  %1055 = vmatprep.subr.bf16.mxu0 0
  %1056 = vmatpush1.bf16.msra.mxu0 0
  %1057 = vmatprep.subr.bf16.mxu0 0
  %1058 = vmatpush1.bf16.msra.mxu0 0
  %1059 = vmatprep.subr.bf16.mxu0 0
  %1060 = vmatpush1.bf16.msra.mxu0 0
  %1061 = vmatprep.mubr.bf16.mxu0 %v898
  %1062 = vmatmul.mubr.bf16.gmra.mrb[0].mxu0 %v173
  %v1063 = vpop.f32.mrb[0].mxu0
  %v1064 = vadd.f32 0.0, %v1063
  %v1065 = vpop.f32.mrb[0].mxu0
  %v1066 = vadd.f32 0.0, %v1065
  %v1067 = vpop.f32.mrb[0].mxu0
  %v1068 = vadd.f32 0.0, %v1067
  %v1069 = vpop.f32.mrb[0].mxu0
  %v1070 = vadd.f32 0.0, %v1069
  %1071 = vdwg.mxu0
  %1072 = vmatprep.subr.bf16.mxu0 %v617
  %1073 = vmatpush1.bf16.msra.mxu0 %v616
  %1074 = vmatprep.subr.bf16.mxu0 %v633
  %1075 = vmatpush1.bf16.msra.mxu0 %v632
  %1076 = vmatprep.subr.bf16.mxu0 %v649
  %1077 = vmatpush1.bf16.msra.mxu0 %v648
  %1078 = vmatprep.subr.bf16.mxu0 %v665
  %1079 = vmatpush1.bf16.msra.mxu0 %v664
  %1080 = vmatprep.subr.bf16.mxu0 %v681
  %1081 = vmatpush1.bf16.msra.mxu0 %v680
  %1082 = vmatprep.subr.bf16.mxu0 %v697
  %1083 = vmatpush1.bf16.msra.mxu0 %v696
  %1084 = vmatprep.subr.bf16.mxu0 %v713
  %1085 = vmatpush1.bf16.msra.mxu0 %v712
  %1086 = vmatprep.subr.bf16.mxu0 %v729
  %1087 = vmatpush1.bf16.msra.mxu0 %v728
  %1088 = vmatprep.subr.bf16.mxu0 %v745
  %1089 = vmatpush1.bf16.msra.mxu0 %v744
  %1090 = vmatprep.subr.bf16.mxu0 0
  %1091 = vmatpush1.bf16.msra.mxu0 0
  %1092 = vmatprep.subr.bf16.mxu0 0
  %1093 = vmatpush1.bf16.msra.mxu0 0
  %1094 = vmatprep.subr.bf16.mxu0 0
  %1095 = vmatpush1.bf16.msra.mxu0 0
  %1096 = vmatprep.subr.bf16.mxu0 0
  %1097 = vmatpush1.bf16.msra.mxu0 0
  %1098 = vmatprep.subr.bf16.mxu0 0
  %1099 = vmatpush1.bf16.msra.mxu0 0
  %1100 = vmatprep.subr.bf16.mxu0 0
  %1101 = vmatpush1.bf16.msra.mxu0 0
  %1102 = vmatprep.subr.bf16.mxu0 0
  %1103 = vmatpush1.bf16.msra.mxu0 0
  %1104 = vmatprep.mubr.bf16.mxu0 %v898
  %1105 = vmatmul.mubr.bf16.gmra.mrb[0].mxu0 %v173
  %v1106 = vpop.f32.mrb[0].mxu0
  %v1107 = vadd.f32 0.0, %v1106
  %v1108 = vpop.f32.mrb[0].mxu0
  %v1109 = vadd.f32 0.0, %v1108
  %v1110 = vpop.f32.mrb[0].mxu0
  %v1111 = vadd.f32 0.0, %v1110
  %v1112 = vpop.f32.mrb[0].mxu0
  %v1113 = vadd.f32 0.0, %v1112
  %1114 = vdwg.mxu0
  %1115 = vmatprep.subr.bf16.mxu0 %v619
  %1116 = vmatpush1.bf16.msra.mxu0 %v618
  %1117 = vmatprep.subr.bf16.mxu0 %v635
  %1118 = vmatpush1.bf16.msra.mxu0 %v634
  %1119 = vmatprep.subr.bf16.mxu0 %v651
  %1120 = vmatpush1.bf16.msra.mxu0 %v650
  %1121 = vmatprep.subr.bf16.mxu0 %v667
  %1122 = vmatpush1.bf16.msra.mxu0 %v666
  %1123 = vmatprep.subr.bf16.mxu0 %v683
  %1124 = vmatpush1.bf16.msra.mxu0 %v682
  %1125 = vmatprep.subr.bf16.mxu0 %v699
  %1126 = vmatpush1.bf16.msra.mxu0 %v698
  %1127 = vmatprep.subr.bf16.mxu0 %v715
  %1128 = vmatpush1.bf16.msra.mxu0 %v714
  %1129 = vmatprep.subr.bf16.mxu0 %v731
  %1130 = vmatpush1.bf16.msra.mxu0 %v730
  %1131 = vmatprep.subr.bf16.mxu0 %v747
  %1132 = vmatpush1.bf16.msra.mxu0 %v746
  %1133 = vmatprep.subr.bf16.mxu0 0
  %1134 = vmatpush1.bf16.msra.mxu0 0
  %1135 = vmatprep.subr.bf16.mxu0 0
  %1136 = vmatpush1.bf16.msra.mxu0 0
  %1137 = vmatprep.subr.bf16.mxu0 0
  %1138 = vmatpush1.bf16.msra.mxu0 0
  %1139 = vmatprep.subr.bf16.mxu0 0
  %1140 = vmatpush1.bf16.msra.mxu0 0
  %1141 = vmatprep.subr.bf16.mxu0 0
  %1142 = vmatpush1.bf16.msra.mxu0 0
  %1143 = vmatprep.subr.bf16.mxu0 0
  %1144 = vmatpush1.bf16.msra.mxu0 0
  %1145 = vmatprep.subr.bf16.mxu0 0
  %1146 = vmatpush1.bf16.msra.mxu0 0
  %1147 = vmatprep.mubr.bf16.mxu0 %v898
  %1148 = vmatmul.mubr.bf16.gmra.mrb[0].mxu0 %v173
  %v1149 = vpop.f32.mrb[0].mxu0
  %v1150 = vadd.f32 0.0, %v1149
  %v1151 = vpop.f32.mrb[0].mxu0
  %v1152 = vadd.f32 0.0, %v1151
  %v1153 = vpop.f32.mrb[0].mxu0
  %v1154 = vadd.f32 0.0, %v1153
  %v1155 = vpop.f32.mrb[0].mxu0
  %v1156 = vadd.f32 0.0, %v1155
  %1157 = vdwg.mxu0
  %1158 = vmatprep.subr.bf16.mxu0 %v621
  %1159 = vmatpush1.bf16.msra.mxu0 %v620
  %1160 = vmatprep.subr.bf16.mxu0 %v637
  %1161 = vmatpush1.bf16.msra.mxu0 %v636
  %1162 = vmatprep.subr.bf16.mxu0 %v653
  %1163 = vmatpush1.bf16.msra.mxu0 %v652
  %1164 = vmatprep.subr.bf16.mxu0 %v669
  %1165 = vmatpush1.bf16.msra.mxu0 %v668
  %1166 = vmatprep.subr.bf16.mxu0 %v685
  %1167 = vmatpush1.bf16.msra.mxu0 %v684
  %1168 = vmatprep.subr.bf16.mxu0 %v701
  %1169 = vmatpush1.bf16.msra.mxu0 %v700
  %1170 = vmatprep.subr.bf16.mxu0 %v717
  %1171 = vmatpush1.bf16.msra.mxu0 %v716
  %1172 = vmatprep.subr.bf16.mxu0 %v733
  %1173 = vmatpush1.bf16.msra.mxu0 %v732
  %1174 = vmatprep.subr.bf16.mxu0 %v749
  %1175 = vmatpush1.bf16.msra.mxu0 %v748
  %1176 = vmatprep.subr.bf16.mxu0 0
  %1177 = vmatpush1.bf16.msra.mxu0 0
  %1178 = vmatprep.subr.bf16.mxu0 0
  %1179 = vmatpush1.bf16.msra.mxu0 0
  %1180 = vmatprep.subr.bf16.mxu0 0
  %1181 = vmatpush1.bf16.msra.mxu0 0
  %1182 = vmatprep.subr.bf16.mxu0 0
  %1183 = vmatpush1.bf16.msra.mxu0 0
  %1184 = vmatprep.subr.bf16.mxu0 0
  %1185 = vmatpush1.bf16.msra.mxu0 0
  %1186 = vmatprep.subr.bf16.mxu0 0
  %1187 = vmatpush1.bf16.msra.mxu0 0
  %1188 = vmatprep.subr.bf16.mxu0 0
  %1189 = vmatpush1.bf16.msra.mxu0 0
  %1190 = vmatprep.mubr.bf16.mxu0 %v898
  %1191 = vmatmul.mubr.bf16.gmra.mrb[0].mxu0 %v173
  %v1192 = vpop.f32.mrb[0].mxu0
  %v1193 = vadd.f32 0.0, %v1192
  %v1194 = vpop.f32.mrb[0].mxu0
  %v1195 = vadd.f32 0.0, %v1194
  %v1196 = vpop.f32.mrb[0].mxu0
  %v1197 = vadd.f32 0.0, %v1196
  %v1198 = vpop.f32.mrb[0].mxu0
  %v1199 = vadd.f32 0.0, %v1198
  %1200 = vdwg.mxu0
  %1201 = vmatprep.subr.bf16.mxu0 %v623
  %1202 = vmatpush1.bf16.msra.mxu0 %v622
  %1203 = vmatprep.subr.bf16.mxu0 %v639
  %1204 = vmatpush1.bf16.msra.mxu0 %v638
  %1205 = vmatprep.subr.bf16.mxu0 %v655
  %1206 = vmatpush1.bf16.msra.mxu0 %v654
  %1207 = vmatprep.subr.bf16.mxu0 %v671
  %1208 = vmatpush1.bf16.msra.mxu0 %v670
  %1209 = vmatprep.subr.bf16.mxu0 %v687
  %1210 = vmatpush1.bf16.msra.mxu0 %v686
  %1211 = vmatprep.subr.bf16.mxu0 %v703
  %1212 = vmatpush1.bf16.msra.mxu0 %v702
  %1213 = vmatprep.subr.bf16.mxu0 %v719
  %1214 = vmatpush1.bf16.msra.mxu0 %v718
  %1215 = vmatprep.subr.bf16.mxu0 %v735
  %1216 = vmatpush1.bf16.msra.mxu0 %v734
  %1217 = vmatprep.subr.bf16.mxu0 %v751
  %1218 = vmatpush1.bf16.msra.mxu0 %v750
  %1219 = vmatprep.subr.bf16.mxu0 0
  %1220 = vmatpush1.bf16.msra.mxu0 0
  %1221 = vmatprep.subr.bf16.mxu0 0
  %1222 = vmatpush1.bf16.msra.mxu0 0
  %1223 = vmatprep.subr.bf16.mxu0 0
  %1224 = vmatpush1.bf16.msra.mxu0 0
  %1225 = vmatprep.subr.bf16.mxu0 0
  %1226 = vmatpush1.bf16.msra.mxu0 0
  %1227 = vmatprep.subr.bf16.mxu0 0
  %1228 = vmatpush1.bf16.msra.mxu0 0
  %1229 = vmatprep.subr.bf16.mxu0 0
  %1230 = vmatpush1.bf16.msra.mxu0 0
  %1231 = vmatprep.subr.bf16.mxu0 0
  %1232 = vmatpush1.bf16.msra.mxu0 0
  %1233 = vmatprep.mubr.bf16.mxu0 %v898
  %1234 = vmatmul.mubr.bf16.gmra.mrb[0].mxu0 %v173
  %v1235 = vpop.f32.mrb[0].mxu0
  %v1236 = vadd.f32 0.0, %v1235
  %v1237 = vpop.f32.mrb[0].mxu0
  %v1238 = vadd.f32 0.0, %v1237
  %v1239 = vpop.f32.mrb[0].mxu0
  %v1240 = vadd.f32 0.0, %v1239
  %v1241 = vpop.f32.mrb[0].mxu0
  %v1242 = vadd.f32 0.0, %v1241
  %1243 = vdwg.mxu0
  %v1244 = vld [vmem:[%s2] sm:$0xff]
  %v1245 = vld [vmem:[%s2 + $0x8] sm:$0xff]
  %v1246 = vld [vmem:[%s3] sm:$0xff]
  %v1247 = vld [vmem:[%s3 + $0x8] sm:$0xff]
  %v1248 = vadd.f32 %v935, %v937
  %v1249 = vadd.f32 %v1248, %v978
  %v1250 = vadd.f32 %v1249, %v980
  %v1251 = vadd.f32 %v1250, %v1021
  %v1252 = vadd.f32 %v1251, %v1023
  %v1253 = vadd.f32 %v1252, %v1064
  %v1254 = vadd.f32 %v1253, %v1066
  %v1255 = vadd.f32 %v1254, %v1107
  %v1256 = vadd.f32 %v1255, %v1109
  %v1257 = vadd.f32 %v1256, %v1150
  %v1258 = vadd.f32 %v1257, %v1152
  %v1259 = vadd.f32 %v1258, %v1193
  %v1260 = vadd.f32 %v1259, %v1195
  %v1261 = vadd.f32 %v1260, %v1236
  %v1262 = vadd.f32 %v1261, %v1238
  %1263 = vadd.xlane.f32.xlu0 %v1262
  %v1264 = vpop.xlane.xlu0 %1263
  %v1265 = vadd.f32 %v939, %v941
  %v1266 = vadd.f32 %v1265, %v982
  %v1267 = vadd.f32 %v1266, %v984
  %v1268 = vadd.f32 %v1267, %v1025
  %v1269 = vadd.f32 %v1268, %v1027
  %v1270 = vadd.f32 %v1269, %v1068
  %v1271 = vadd.f32 %v1270, %v1070
  %v1272 = vadd.f32 %v1271, %v1111
  %v1273 = vadd.f32 %v1272, %v1113
  %v1274 = vadd.f32 %v1273, %v1154
  %v1275 = vadd.f32 %v1274, %v1156
  %v1276 = vadd.f32 %v1275, %v1197
  %v1277 = vadd.f32 %v1276, %v1199
  %v1278 = vadd.f32 %v1277, %v1240
  %v1279 = vadd.f32 %v1278, %v1242
  %1280 = vadd.xlane.f32.xlu0 %v1279
  %v1281 = vpop.xlane.xlu0 %1280
  %v1282 = vrcp.pop 2048.0
  %v1283 = vmul.f32 %v1264, %v1282
  %v1284 = vmul.f32 %v1281, %v1282
  %v1285 = vsub.f32 %v935, %v1283
  %v1286 = vsub.f32 %v937, %v1283
  %v1287 = vsub.f32 %v978, %v1283
  %v1288 = vsub.f32 %v980, %v1283
  %v1289 = vsub.f32 %v1021, %v1283
  %v1290 = vsub.f32 %v1023, %v1283
  %v1291 = vsub.f32 %v1064, %v1283
  %v1292 = vsub.f32 %v1066, %v1283
  %v1293 = vsub.f32 %v1107, %v1283
  %v1294 = vsub.f32 %v1109, %v1283
  %v1295 = vsub.f32 %v1150, %v1283
  %v1296 = vsub.f32 %v1152, %v1283
  %v1297 = vsub.f32 %v1193, %v1283
  %v1298 = vsub.f32 %v1195, %v1283
  %v1299 = vsub.f32 %v1236, %v1283
  %v1300 = vsub.f32 %v1238, %v1283
  %v1301 = vsub.f32 %v939, %v1284
  %v1302 = vsub.f32 %v941, %v1284
  %v1303 = vsub.f32 %v982, %v1284
  %v1304 = vsub.f32 %v984, %v1284
  %v1305 = vsub.f32 %v1025, %v1284
  %v1306 = vsub.f32 %v1027, %v1284
  %v1307 = vsub.f32 %v1068, %v1284
  %v1308 = vsub.f32 %v1070, %v1284
  %v1309 = vsub.f32 %v1111, %v1284
  %v1310 = vsub.f32 %v1113, %v1284
  %v1311 = vsub.f32 %v1154, %v1284
  %v1312 = vsub.f32 %v1156, %v1284
  %v1313 = vsub.f32 %v1197, %v1284
  %v1314 = vsub.f32 %v1199, %v1284
  %v1315 = vsub.f32 %v1240, %v1284
  %v1316 = vsub.f32 %v1242, %v1284
  %v1317 = vmul.f32 %v1285, %v1285
  %v1318 = vmul.f32 %v1286, %v1286
  %v1319 = vmul.f32 %v1287, %v1287
  %v1320 = vmul.f32 %v1288, %v1288
  %v1321 = vmul.f32 %v1289, %v1289
  %v1322 = vmul.f32 %v1290, %v1290
  %v1323 = vmul.f32 %v1291, %v1291
  %v1324 = vmul.f32 %v1292, %v1292
  %v1325 = vmul.f32 %v1293, %v1293
  %v1326 = vmul.f32 %v1294, %v1294
  %v1327 = vmul.f32 %v1295, %v1295
  %v1328 = vmul.f32 %v1296, %v1296
  %v1329 = vmul.f32 %v1297, %v1297
  %v1330 = vmul.f32 %v1298, %v1298
  %v1331 = vmul.f32 %v1299, %v1299
  %v1332 = vmul.f32 %v1300, %v1300
  %v1333 = vmul.f32 %v1301, %v1301
  %v1334 = vmul.f32 %v1302, %v1302
  %v1335 = vmul.f32 %v1303, %v1303
  %v1336 = vmul.f32 %v1304, %v1304
  %v1337 = vmul.f32 %v1305, %v1305
  %v1338 = vmul.f32 %v1306, %v1306
  %v1339 = vmul.f32 %v1307, %v1307
  %v1340 = vmul.f32 %v1308, %v1308
  %v1341 = vmul.f32 %v1309, %v1309
  %v1342 = vmul.f32 %v1310, %v1310
  %v1343 = vmul.f32 %v1311, %v1311
  %v1344 = vmul.f32 %v1312, %v1312
  %v1345 = vmul.f32 %v1313, %v1313
  %v1346 = vmul.f32 %v1314, %v1314
  %v1347 = vmul.f32 %v1315, %v1315
  %v1348 = vmul.f32 %v1316, %v1316
  %v1349 = vadd.f32 %v1317, %v1318
  %v1350 = vadd.f32 %v1349, %v1319
  %v1351 = vadd.f32 %v1350, %v1320
  %v1352 = vadd.f32 %v1351, %v1321
  %v1353 = vadd.f32 %v1352, %v1322
  %v1354 = vadd.f32 %v1353, %v1323
  %v1355 = vadd.f32 %v1354, %v1324
  %v1356 = vadd.f32 %v1355, %v1325
  %v1357 = vadd.f32 %v1356, %v1326
  %v1358 = vadd.f32 %v1357, %v1327
  %v1359 = vadd.f32 %v1358, %v1328
  %v1360 = vadd.f32 %v1359, %v1329
  %v1361 = vadd.f32 %v1360, %v1330
  %v1362 = vadd.f32 %v1361, %v1331
  %v1363 = vadd.f32 %v1362, %v1332
  %1364 = vadd.xlane.f32.xlu0 %v1363
  %v1365 = vpop.xlane.xlu0 %1364
  %v1366 = vadd.f32 %v1333, %v1334
  %v1367 = vadd.f32 %v1366, %v1335
  %v1368 = vadd.f32 %v1367, %v1336
  %v1369 = vadd.f32 %v1368, %v1337
  %v1370 = vadd.f32 %v1369, %v1338
  %v1371 = vadd.f32 %v1370, %v1339
  %v1372 = vadd.f32 %v1371, %v1340
  %v1373 = vadd.f32 %v1372, %v1341
  %v1374 = vadd.f32 %v1373, %v1342
  %v1375 = vadd.f32 %v1374, %v1343
  %v1376 = vadd.f32 %v1375, %v1344
  %v1377 = vadd.f32 %v1376, %v1345
  %v1378 = vadd.f32 %v1377, %v1346
  %v1379 = vadd.f32 %v1378, %v1347
  %v1380 = vadd.f32 %v1379, %v1348
  %1381 = vadd.xlane.f32.xlu0 %v1380
  %v1382 = vpop.xlane.xlu0 %1381
  %v1383 = vmul.f32 %v1365, %v1282
  %v1384 = vmul.f32 %v1382, %v1282
  %v1385 = vadd.f32 %v1383, 1e-05
  %v1386 = vadd.f32 %v1384, 1e-05
  %v1387 = vrsqrt.pop %v1385
  %v1388 = vrsqrt.pop %v1386
  %v1389 = vmul.f32 %v1285, %v1387
  %v1390 = vmul.f32 %v1286, %v1387
  %v1391 = vmul.f32 %v1287, %v1387
  %v1392 = vmul.f32 %v1288, %v1387
  %v1393 = vmul.f32 %v1289, %v1387
  %v1394 = vmul.f32 %v1290, %v1387
  %v1395 = vmul.f32 %v1291, %v1387
  %v1396 = vmul.f32 %v1292, %v1387
  %v1397 = vmul.f32 %v1293, %v1387
  %v1398 = vmul.f32 %v1294, %v1387
  %v1399 = vmul.f32 %v1295, %v1387
  %v1400 = vmul.f32 %v1296, %v1387
  %v1401 = vmul.f32 %v1297, %v1387
  %v1402 = vmul.f32 %v1298, %v1387
  %v1403 = vmul.f32 %v1299, %v1387
  %v1404 = vmul.f32 %v1300, %v1387
  %v1405 = vmul.f32 %v1301, %v1388
  %v1406 = vmul.f32 %v1302, %v1388
  %v1407 = vmul.f32 %v1303, %v1388
  %v1408 = vmul.f32 %v1304, %v1388
  %v1409 = vmul.f32 %v1305, %v1388
  %v1410 = vmul.f32 %v1306, %v1388
  %v1411 = vmul.f32 %v1307, %v1388
  %v1412 = vmul.f32 %v1308, %v1388
  %v1413 = vmul.f32 %v1309, %v1388
  %v1414 = vmul.f32 %v1310, %v1388
  %v1415 = vmul.f32 %v1311, %v1388
  %v1416 = vmul.f32 %v1312, %v1388
  %v1417 = vmul.f32 %v1313, %v1388
  %v1418 = vmul.f32 %v1314, %v1388
  %v1419 = vmul.f32 %v1315, %v1388
  %v1420 = vmul.f32 %v1316, %v1388
  %1422 = vset.pattern.permute.xlu0 0
  %1423 = vperm.xlu0 %1422, %v1244
  %v1424 = vpop.permute.xlu0 %1423
  %1427 = vset.pattern.permute.xlu0 0
  %1428 = vperm.xlu0 %1427, %v1245
  %v1429 = vpop.permute.xlu0 %1428
  %v1431 = vmul.f32 %v1389, %v1424
  %v1432 = vmul.f32 %v1390, %v1424
  %v1433 = vmul.f32 %v1391, %v1424
  %v1434 = vmul.f32 %v1392, %v1424
  %v1435 = vmul.f32 %v1393, %v1424
  %v1436 = vmul.f32 %v1394, %v1424
  %v1437 = vmul.f32 %v1395, %v1424
  %v1438 = vmul.f32 %v1396, %v1424
  %v1439 = vmul.f32 %v1397, %v1424
  %v1440 = vmul.f32 %v1398, %v1424
  %v1441 = vmul.f32 %v1399, %v1424
  %v1442 = vmul.f32 %v1400, %v1424
  %v1443 = vmul.f32 %v1401, %v1424
  %v1444 = vmul.f32 %v1402, %v1424
  %v1445 = vmul.f32 %v1403, %v1424
  %v1446 = vmul.f32 %v1404, %v1424
  %v1447 = vmul.f32 %v1405, %v1429
  %v1448 = vmul.f32 %v1406, %v1429
  %v1449 = vmul.f32 %v1407, %v1429
  %v1450 = vmul.f32 %v1408, %v1429
  %v1451 = vmul.f32 %v1409, %v1429
  %v1452 = vmul.f32 %v1410, %v1429
  %v1453 = vmul.f32 %v1411, %v1429
  %v1454 = vmul.f32 %v1412, %v1429
  %v1455 = vmul.f32 %v1413, %v1429
  %v1456 = vmul.f32 %v1414, %v1429
  %v1457 = vmul.f32 %v1415, %v1429
  %v1458 = vmul.f32 %v1416, %v1429
  %v1459 = vmul.f32 %v1417, %v1429
  %v1460 = vmul.f32 %v1418, %v1429
  %v1461 = vmul.f32 %v1419, %v1429
  %v1462 = vmul.f32 %v1420, %v1429
  %1464 = vset.pattern.permute.xlu0 0
  %1465 = vperm.xlu0 %1464, %v1246
  %v1466 = vpop.permute.xlu0 %1465
  %1469 = vset.pattern.permute.xlu0 0
  %1470 = vperm.xlu0 %1469, %v1247
  %v1471 = vpop.permute.xlu0 %1470
  %v1473 = vadd.f32 %v1431, %v1466
  %v1474 = vadd.f32 %v1432, %v1466
  %v1475 = vadd.f32 %v1433, %v1466
  %v1476 = vadd.f32 %v1434, %v1466
  %v1477 = vadd.f32 %v1435, %v1466
  %v1478 = vadd.f32 %v1436, %v1466
  %v1479 = vadd.f32 %v1437, %v1466
  %v1480 = vadd.f32 %v1438, %v1466
  %v1481 = vadd.f32 %v1439, %v1466
  %v1482 = vadd.f32 %v1440, %v1466
  %v1483 = vadd.f32 %v1441, %v1466
  %v1484 = vadd.f32 %v1442, %v1466
  %v1485 = vadd.f32 %v1443, %v1466
  %v1486 = vadd.f32 %v1444, %v1466
  %v1487 = vadd.f32 %v1445, %v1466
  %v1488 = vadd.f32 %v1446, %v1466
  %v1489 = vadd.f32 %v1447, %v1471
  %v1490 = vadd.f32 %v1448, %v1471
  %v1491 = vadd.f32 %v1449, %v1471
  %v1492 = vadd.f32 %v1450, %v1471
  %v1493 = vadd.f32 %v1451, %v1471
  %v1494 = vadd.f32 %v1452, %v1471
  %v1495 = vadd.f32 %v1453, %v1471
  %v1496 = vadd.f32 %v1454, %v1471
  %v1497 = vadd.f32 %v1455, %v1471
  %v1498 = vadd.f32 %v1456, %v1471
  %v1499 = vadd.f32 %v1457, %v1471
  %v1500 = vadd.f32 %v1458, %v1471
  %v1501 = vadd.f32 %v1459, %v1471
  %v1502 = vadd.f32 %v1460, %v1471
  %v1503 = vadd.f32 %v1461, %v1471
  %v1504 = vadd.f32 %v1462, %v1471
  %v1505 = vld [vmem:[%s4] sm:$0xff]
  %v1506 = vld [vmem:[%s4 + $0x8] sm:$0xff]
  %v1507 = vld [vmem:[%s4 + $0x10] sm:$0xff]
  %v1508 = vld [vmem:[%s4 + $0x18] sm:$0xff]
  %v1509 = vld [vmem:[%s4 + $0x20] sm:$0xff]
  %v1510 = vld [vmem:[%s4 + $0x28] sm:$0xff]
  %v1511 = vld [vmem:[%s4 + $0x30] sm:$0xff]
  %v1512 = vld [vmem:[%s4 + $0x38] sm:$0xff]
  %v1513 = vld [vmem:[%s4 + $0x40] sm:$0xff]
  %v1514 = vld [vmem:[%s4 + $0x48] sm:$0xff]
  %v1515 = vld [vmem:[%s4 + $0x50] sm:$0xff]
  %v1516 = vld [vmem:[%s4 + $0x58] sm:$0xff]
  %v1517 = vld [vmem:[%s4 + $0x60] sm:$0xff]
  %v1518 = vld [vmem:[%s4 + $0x68] sm:$0xff]
  %v1519 = vld [vmem:[%s4 + $0x70] sm:$0xff]
  %v1520 = vld [vmem:[%s4 + $0x78] sm:$0xff]
  %v1521 = vld [vmem:[%s4 + $0x80] sm:$0xff]
  %v1522 = vld [vmem:[%s4 + $0x88] sm:$0xff]
  %v1523 = vld [vmem:[%s4 + $0x90] sm:$0xff]
  %v1524 = vld [vmem:[%s4 + $0x98] sm:$0xff]
  %v1525 = vld [vmem:[%s4 + $0xa0] sm:$0xff]
  %v1526 = vld [vmem:[%s4 + $0xa8] sm:$0xff]
  %v1527 = vld [vmem:[%s4 + $0xb0] sm:$0xff]
  %v1528 = vld [vmem:[%s4 + $0xb8] sm:$0xff]
  %v1529 = vld [vmem:[%s4 + $0xc0] sm:$0xff]
  %v1530 = vld [vmem:[%s4 + $0xc8] sm:$0xff]
  %v1531 = vld [vmem:[%s4 + $0xd0] sm:$0xff]
  %v1532 = vld [vmem:[%s4 + $0xd8] sm:$0xff]
  %v1533 = vld [vmem:[%s4 + $0xe0] sm:$0xff]
  %v1534 = vld [vmem:[%s4 + $0xe8] sm:$0xff]
  %v1535 = vld [vmem:[%s4 + $0xf0] sm:$0xff]
  %v1536 = vld [vmem:[%s4 + $0xf8] sm:$0xff]
  %v1537 = vadd.f32 %v1473, %v1505
  %v1538 = vadd.f32 %v1474, %v1506
  %v1539 = vadd.f32 %v1475, %v1507
  %v1540 = vadd.f32 %v1476, %v1508
  %v1541 = vadd.f32 %v1477, %v1509
  %v1542 = vadd.f32 %v1478, %v1510
  %v1543 = vadd.f32 %v1479, %v1511
  %v1544 = vadd.f32 %v1480, %v1512
  %v1545 = vadd.f32 %v1481, %v1513
  %v1546 = vadd.f32 %v1482, %v1514
  %v1547 = vadd.f32 %v1483, %v1515
  %v1548 = vadd.f32 %v1484, %v1516
  %v1549 = vadd.f32 %v1485, %v1517
  %v1550 = vadd.f32 %v1486, %v1518
  %v1551 = vadd.f32 %v1487, %v1519
  %v1552 = vadd.f32 %v1488, %v1520
  %v1553 = vadd.f32 %v1489, %v1521
  %v1554 = vadd.f32 %v1490, %v1522
  %v1555 = vadd.f32 %v1491, %v1523
  %v1556 = vadd.f32 %v1492, %v1524
  %v1557 = vadd.f32 %v1493, %v1525
  %v1558 = vadd.f32 %v1494, %v1526
  %v1559 = vadd.f32 %v1495, %v1527
  %v1560 = vadd.f32 %v1496, %v1528
  %v1561 = vadd.f32 %v1497, %v1529
  %v1562 = vadd.f32 %v1498, %v1530
  %v1563 = vadd.f32 %v1499, %v1531
  %v1564 = vadd.f32 %v1500, %v1532
  %v1565 = vadd.f32 %v1501, %v1533
  %v1566 = vadd.f32 %v1502, %v1534
  %v1567 = vadd.f32 %v1503, %v1535
  %v1568 = vadd.f32 %v1504, %v1536
  %v1569 = vmax.f32 %v1537, 0.0
  %v1570 = vmax.f32 %v1538, 0.0
  %v1571 = vmax.f32 %v1539, 0.0
  %v1572 = vmax.f32 %v1540, 0.0
  %v1573 = vmax.f32 %v1541, 0.0
  %v1574 = vmax.f32 %v1542, 0.0
  %v1575 = vmax.f32 %v1543, 0.0
  %v1576 = vmax.f32 %v1544, 0.0
  %v1577 = vmax.f32 %v1545, 0.0
  %v1578 = vmax.f32 %v1546, 0.0
  %v1579 = vmax.f32 %v1547, 0.0
  %v1580 = vmax.f32 %v1548, 0.0
  %v1581 = vmax.f32 %v1549, 0.0
  %v1582 = vmax.f32 %v1550, 0.0
  %v1583 = vmax.f32 %v1551, 0.0
  %v1584 = vmax.f32 %v1552, 0.0
  %v1585 = vmax.f32 %v1553, 0.0
  %v1586 = vmax.f32 %v1554, 0.0
  %v1587 = vmax.f32 %v1555, 0.0
  %v1588 = vmax.f32 %v1556, 0.0
  %v1589 = vmax.f32 %v1557, 0.0
  %v1590 = vmax.f32 %v1558, 0.0
  %v1591 = vmax.f32 %v1559, 0.0
  %v1592 = vmax.f32 %v1560, 0.0
  %v1593 = vmax.f32 %v1561, 0.0
  %v1594 = vmax.f32 %v1562, 0.0
  %v1595 = vmax.f32 %v1563, 0.0
  %v1596 = vmax.f32 %v1564, 0.0
  %v1597 = vmax.f32 %v1565, 0.0
  %v1598 = vmax.f32 %v1566, 0.0
  %v1599 = vmax.f32 %v1567, 0.0
  %v1600 = vmax.f32 %v1568, 0.0
  %1601 = vst [vmem:[%s5] sm:$0xff] %v1569
  %1602 = vst [vmem:[%s5 + $0x8] sm:$0xff] %v1570
  %1603 = vst [vmem:[%s5 + $0x10] sm:$0xff] %v1571
  %1604 = vst [vmem:[%s5 + $0x18] sm:$0xff] %v1572
  %1605 = vst [vmem:[%s5 + $0x20] sm:$0xff] %v1573
  %1606 = vst [vmem:[%s5 + $0x28] sm:$0xff] %v1574
  %1607 = vst [vmem:[%s5 + $0x30] sm:$0xff] %v1575
  %1608 = vst [vmem:[%s5 + $0x38] sm:$0xff] %v1576
  %1609 = vst [vmem:[%s5 + $0x40] sm:$0xff] %v1577
  %1610 = vst [vmem:[%s5 + $0x48] sm:$0xff] %v1578
  %1611 = vst [vmem:[%s5 + $0x50] sm:$0xff] %v1579
  %1612 = vst [vmem:[%s5 + $0x58] sm:$0xff] %v1580
  %1613 = vst [vmem:[%s5 + $0x60] sm:$0xff] %v1581
  %1614 = vst [vmem:[%s5 + $0x68] sm:$0xff] %v1582
  %1615 = vst [vmem:[%s5 + $0x70] sm:$0xff] %v1583
  %1616 = vst [vmem:[%s5 + $0x78] sm:$0xff] %v1584
  %1617 = vst [vmem:[%s5 + $0x80] sm:$0xff] %v1585
  %1618 = vst [vmem:[%s5 + $0x88] sm:$0xff] %v1586
  %1619 = vst [vmem:[%s5 + $0x90] sm:$0xff] %v1587
  %1620 = vst [vmem:[%s5 + $0x98] sm:$0xff] %v1588
  %1621 = vst [vmem:[%s5 + $0xa0] sm:$0xff] %v1589
  %1622 = vst [vmem:[%s5 + $0xa8] sm:$0xff] %v1590
  %1623 = vst [vmem:[%s5 + $0xb0] sm:$0xff] %v1591
  %1624 = vst [vmem:[%s5 + $0xb8] sm:$0xff] %v1592
  %1625 = vst [vmem:[%s5 + $0xc0] sm:$0xff] %v1593
  %1626 = vst [vmem:[%s5 + $0xc8] sm:$0xff] %v1594
  %1627 = vst [vmem:[%s5 + $0xd0] sm:$0xff] %v1595
  %1628 = vst [vmem:[%s5 + $0xd8] sm:$0xff] %v1596
  %1629 = vst [vmem:[%s5 + $0xe0] sm:$0xff] %v1597
  %1630 = vst [vmem:[%s5 + $0xe8] sm:$0xff] %v1598
  %1631 = vst [vmem:[%s5 + $0xf0] sm:$0xff] %v1599
  %1632 = vst [vmem:[%s5 + $0xf8] sm:$0xff] %v1600
  // Predicated region
  $region22: #{resnet_forward.16} parent=0 // pred_check
    _
  $region23: #{resnet_forward.16} parent=0 // pred_check_branch
    %1634 = sbr.rel (0) target = $region25
  $region24: #{resnet_forward.16} parent=0 // pred_region
    _
  $region25: #{resnet_forward.16} parent=0 // pred_fallthru
    _
  // Predicated region
  $region26: #{resnet_forward.16} parent=0 // pred_check
    _
  $region27: #{resnet_forward.16} parent=0 // pred_check_branch
    %1636 = sbr.rel (0) target = $region29
  $region28: #{resnet_forward.16} parent=0 // pred_region
    _
  $region29: #{resnet_forward.16} parent=0 // pred_fallthru
    _

// kernel: resnet_forward.19
$region0: #{resnet_forward.19}
  #allocation0 [shape = 'u32[]', space=smem, size = 0x4, offset = 0x4, fixed_abs, tag = 'smem constant byte address 0x4 - core index']
  #allocation1 [shape = 'u32[144,128]{1,0:T(1,128)}', space=vmem, size = 0x12000, scoped, tag = 'internal scratch']
  %s0 = inlined_call_operand.vmem [shape: bf16[144,512], index: 0, kind: input, shape index: {}]
  %s1 = inlined_call_operand.vmem [shape: bf16[32,144], index: 1, kind: input, shape index: {}]
  %s2 = inlined_call_operand.vmem [shape: f32[32,1], index: 2, kind: input, shape index: {}]
  %s3 = inlined_call_operand.vmem [shape: f32[32,1], index: 3, kind: input, shape index: {}]
  %s4 = inlined_call_operand.vmem [shape: f32[32,512], index: 4, kind: output, shape index: {}]
  %s5 = sld [smem:[#allocation0]]
  $region26: #{resnet_forward.19} parent=0
    _
  %s7 = ssub.s32 1, %s5
  %s8 = scalar_select 0, %s7, %s5
  // Predicated region
  $region2: #{resnet_forward.19} parent=0 // pred_check
    _
  $region3: #{resnet_forward.19} parent=0 // pred_check_branch
    %10 = sbr.rel (0) target = $region5
  $region4: #{resnet_forward.19} parent=0 // pred_region
    _
  $region5: #{resnet_forward.19} parent=0 // pred_fallthru
    _
  // Predicated region
  $region6: #{resnet_forward.19} parent=0 // pred_check
    _
  $region7: #{resnet_forward.19} parent=0 // pred_check_branch
    %12 = sbr.rel (0) target = $region9
  $region8: #{resnet_forward.19} parent=0 // pred_region
    _
  $region9: #{resnet_forward.19} parent=0 // pred_fallthru
    _
  // Predicated region
  $region10: #{resnet_forward.19} parent=0 // pred_check
    _
  $region11: #{resnet_forward.19} parent=0 // pred_check_branch
    %14 = sbr.rel (0) target = $region13
  $region12: #{resnet_forward.19} parent=0 // pred_region
    _
  $region13: #{resnet_forward.19} parent=0 // pred_fallthru
    _
  // Predicated region
  $region14: #{resnet_forward.19} parent=0 // pred_check
    _
  $region15: #{resnet_forward.19} parent=0 // pred_check_branch
    %16 = sbr.rel (0) target = $region17
  $region16: #{resnet_forward.19} parent=0 // pred_region
    _
  $region17: #{resnet_forward.19} parent=0 // pred_fallthru
    _
  %v18 = vld [vmem:[%s1] sm:$0xff]
  %v19 = vld [vmem:[%s1 + $0x8] sm:$0xff]
  %v20 = vld [vmem:[%s1 + $0x10] sm:$0xff]
  %v21 = vld [vmem:[%s1 + $0x18] sm:$0xff]
  %v22 = vld [vmem:[%s0] sm:$0xff]
  %v23 = vld [vmem:[%s0 + $0x8] sm:$0xff]
  %v24 = vld [vmem:[%s0 + $0x10] sm:$0xff]
  %v25 = vld [vmem:[%s0 + $0x18] sm:$0xff]
  %v26 = vld [vmem:[%s0 + $0x20] sm:$0xff]
  %v27 = vld [vmem:[%s0 + $0x28] sm:$0xff]
  %v28 = vld [vmem:[%s0 + $0x30] sm:$0xff]
  %v29 = vld [vmem:[%s0 + $0x38] sm:$0xff]
  %v30 = vld [vmem:[%s0 + $0x40] sm:$0xff]
  %v31 = vld [vmem:[%s0 + $0x48] sm:$0xff]
  %v32 = vld [vmem:[%s0 + $0x50] sm:$0xff]
  %v33 = vld [vmem:[%s0 + $0x58] sm:$0xff]
  %v34 = vld [vmem:[%s0 + $0x60] sm:$0xff]
  %v35 = vld [vmem:[%s0 + $0x68] sm:$0xff]
  %v36 = vld [vmem:[%s0 + $0x70] sm:$0xff]
  %v37 = vld [vmem:[%s0 + $0x78] sm:$0xff]
  %v38 = vld [vmem:[%s0 + $0x80] sm:$0xff]
  %v39 = vld [vmem:[%s0 + $0x88] sm:$0xff]
  %v40 = vld [vmem:[%s0 + $0x90] sm:$0xff]
  %v41 = vld [vmem:[%s0 + $0x98] sm:$0xff]
  %v42 = vld [vmem:[%s0 + $0xa0] sm:$0xff]
  %v43 = vld [vmem:[%s0 + $0xa8] sm:$0xff]
  %v44 = vld [vmem:[%s0 + $0xb0] sm:$0xff]
  %v45 = vld [vmem:[%s0 + $0xb8] sm:$0xff]
  %v46 = vld [vmem:[%s0 + $0xc0] sm:$0xff]
  %v47 = vld [vmem:[%s0 + $0xc8] sm:$0xff]
  %v48 = vld [vmem:[%s0 + $0xd0] sm:$0xff]
  %v49 = vld [vmem:[%s0 + $0xd8] sm:$0xff]
  %v50 = vld [vmem:[%s0 + $0xe0] sm:$0xff]
  %v51 = vld [vmem:[%s0 + $0xe8] sm:$0xff]
  %v52 = vld [vmem:[%s0 + $0xf0] sm:$0xff]
  %v53 = vld [vmem:[%s0 + $0xf8] sm:$0xff]
  %v54 = vld [vmem:[%s0 + $0x100] sm:$0xff]
  %v55 = vld [vmem:[%s0 + $0x108] sm:$0xff]
  %v56 = vld [vmem:[%s0 + $0x110] sm:$0xff]
  %v57 = vld [vmem:[%s0 + $0x118] sm:$0xff]
  %v62 = vunpack.c.l.b16 %v18
  %v63 = vunpack.c.h.b16 %v18
  %v64 = vunpack.c.l.b16 %v19
  %v65 = vunpack.c.h.b16 %v19
  %v66 = vunpack.c.l.b16 %v20
  %v67 = vunpack.c.h.b16 %v20
  %v68 = vunpack.c.l.b16 %v21
  %v69 = vunpack.c.h.b16 %v21
  %v70 = vpack.c.b16 %v64, %v62
  %v71 = vpack.c.b16 %v65, %v63
  %v72 = vpack.c.b16 %v68, %v66
  %v73 = vpack.c.b16 %v69, %v67
  %v112 = vunpack.c.l.b16 %v22
  %v113 = vunpack.c.h.b16 %v22
  %v114 = vunpack.c.l.b16 %v23
  %v115 = vunpack.c.h.b16 %v23
  %v116 = vunpack.c.l.b16 %v24
  %v117 = vunpack.c.h.b16 %v24
  %v118 = vunpack.c.l.b16 %v25
  %v119 = vunpack.c.h.b16 %v25
  %v120 = vunpack.c.l.b16 %v26
  %v121 = vunpack.c.h.b16 %v26
  %v122 = vunpack.c.l.b16 %v27
  %v123 = vunpack.c.h.b16 %v27
  %v124 = vunpack.c.l.b16 %v28
  %v125 = vunpack.c.h.b16 %v28
  %v126 = vunpack.c.l.b16 %v29
  %v127 = vunpack.c.h.b16 %v29
  %v128 = vunpack.c.l.b16 %v30
  %v129 = vunpack.c.h.b16 %v30
  %v130 = vunpack.c.l.b16 %v31
  %v131 = vunpack.c.h.b16 %v31
  %v132 = vunpack.c.l.b16 %v32
  %v133 = vunpack.c.h.b16 %v32
  %v134 = vunpack.c.l.b16 %v33
  %v135 = vunpack.c.h.b16 %v33
  %v136 = vunpack.c.l.b16 %v34
  %v137 = vunpack.c.h.b16 %v34
  %v138 = vunpack.c.l.b16 %v35
  %v139 = vunpack.c.h.b16 %v35
  %v140 = vunpack.c.l.b16 %v36
  %v141 = vunpack.c.h.b16 %v36
  %v142 = vunpack.c.l.b16 %v37
  %v143 = vunpack.c.h.b16 %v37
  %v144 = vunpack.c.l.b16 %v38
  %v145 = vunpack.c.h.b16 %v38
  %v146 = vunpack.c.l.b16 %v39
  %v147 = vunpack.c.h.b16 %v39
  %v148 = vunpack.c.l.b16 %v40
  %v149 = vunpack.c.h.b16 %v40
  %v150 = vunpack.c.l.b16 %v41
  %v151 = vunpack.c.h.b16 %v41
  %v152 = vunpack.c.l.b16 %v42
  %v153 = vunpack.c.h.b16 %v42
  %v154 = vunpack.c.l.b16 %v43
  %v155 = vunpack.c.h.b16 %v43
  %v156 = vunpack.c.l.b16 %v44
  %v157 = vunpack.c.h.b16 %v44
  %v158 = vunpack.c.l.b16 %v45
  %v159 = vunpack.c.h.b16 %v45
  %v160 = vunpack.c.l.b16 %v46
  %v161 = vunpack.c.h.b16 %v46
  %v162 = vunpack.c.l.b16 %v47
  %v163 = vunpack.c.h.b16 %v47
  %v164 = vunpack.c.l.b16 %v48
  %v165 = vunpack.c.h.b16 %v48
  %v166 = vunpack.c.l.b16 %v49
  %v167 = vunpack.c.h.b16 %v49
  %v168 = vunpack.c.l.b16 %v50
  %v169 = vunpack.c.h.b16 %v50
  %v170 = vunpack.c.l.b16 %v51
  %v171 = vunpack.c.h.b16 %v51
  %v172 = vunpack.c.l.b16 %v52
  %v173 = vunpack.c.h.b16 %v52
  %v174 = vunpack.c.l.b16 %v53
  %v175 = vunpack.c.h.b16 %v53
  %v176 = vunpack.c.l.b16 %v54
  %v177 = vunpack.c.h.b16 %v54
  %v178 = vunpack.c.l.b16 %v55
  %v179 = vunpack.c.h.b16 %v55
  %v180 = vunpack.c.l.b16 %v56
  %v181 = vunpack.c.h.b16 %v56
  %v182 = vunpack.c.l.b16 %v57
  %v183 = vunpack.c.h.b16 %v57
  %v184 = vpack.c.b16 %v116, %v112
  %v185 = vpack.c.b16 %v117, %v113
  %v186 = vpack.c.b16 %v118, %v114
  %v187 = vpack.c.b16 %v119, %v115
  %v188 = vpack.c.b16 %v124, %v120
  %v189 = vpack.c.b16 %v125, %v121
  %v190 = vpack.c.b16 %v126, %v122
  %v191 = vpack.c.b16 %v127, %v123
  %v192 = vpack.c.b16 %v132, %v128
  %v193 = vpack.c.b16 %v133, %v129
  %v194 = vpack.c.b16 %v134, %v130
  %v195 = vpack.c.b16 %v135, %v131
  %v196 = vpack.c.b16 %v140, %v136
  %v197 = vpack.c.b16 %v141, %v137
  %v198 = vpack.c.b16 %v142, %v138
  %v199 = vpack.c.b16 %v143, %v139
  %v200 = vpack.c.b16 %v148, %v144
  %v201 = vpack.c.b16 %v149, %v145
  %v202 = vpack.c.b16 %v150, %v146
  %v203 = vpack.c.b16 %v151, %v147
  %v204 = vpack.c.b16 %v156, %v152
  %v205 = vpack.c.b16 %v157, %v153
  %v206 = vpack.c.b16 %v158, %v154
  %v207 = vpack.c.b16 %v159, %v155
  %v208 = vpack.c.b16 %v164, %v160
  %v209 = vpack.c.b16 %v165, %v161
  %v210 = vpack.c.b16 %v166, %v162
  %v211 = vpack.c.b16 %v167, %v163
  %v212 = vpack.c.b16 %v172, %v168
  %v213 = vpack.c.b16 %v173, %v169
  %v214 = vpack.c.b16 %v174, %v170
  %v215 = vpack.c.b16 %v175, %v171
  %v216 = vpack.c.b16 %v180, %v176
  %v217 = vpack.c.b16 %v181, %v177
  %v218 = vpack.c.b16 %v182, %v178
  %v219 = vpack.c.b16 %v183, %v179
  %vm256 = vcmask 130048
  %v258 = vsel %vm256, %v71, 0
  %v261 = vsel %vm256, %v73, 0
  %263 = vmatprep.subr.bf16.mxu0 %v185
  %264 = vmatpush1.bf16.msra.mxu0 %v184
  %265 = vmatprep.subr.bf16.mxu0 %v189
  %266 = vmatpush1.bf16.msra.mxu0 %v188
  %267 = vmatprep.subr.bf16.mxu0 %v193
  %268 = vmatpush1.bf16.msra.mxu0 %v192
  %269 = vmatprep.subr.bf16.mxu0 %v197
  %270 = vmatpush1.bf16.msra.mxu0 %v196
  %271 = vmatprep.subr.bf16.mxu0 %v201
  %272 = vmatpush1.bf16.msra.mxu0 %v200
  %273 = vmatprep.subr.bf16.mxu0 %v205
  %274 = vmatpush1.bf16.msra.mxu0 %v204
  %275 = vmatprep.subr.bf16.mxu0 %v209
  %276 = vmatpush1.bf16.msra.mxu0 %v208
  %277 = vmatprep.subr.bf16.mxu0 %v213
  %278 = vmatpush1.bf16.msra.mxu0 %v212
  %279 = vmatprep.subr.bf16.mxu0 %v217
  %280 = vmatpush1.bf16.msra.mxu0 %v216
  %281 = vmatprep.subr.bf16.mxu0 0
  %282 = vmatpush1.bf16.msra.mxu0 0
  %283 = vmatprep.subr.bf16.mxu0 0
  %284 = vmatpush1.bf16.msra.mxu0 0
  %285 = vmatprep.subr.bf16.mxu0 0
  %286 = vmatpush1.bf16.msra.mxu0 0
  %287 = vmatprep.subr.bf16.mxu0 0
  %288 = vmatpush1.bf16.msra.mxu0 0
  %289 = vmatprep.subr.bf16.mxu0 0
  %290 = vmatpush1.bf16.msra.mxu0 0
  %291 = vmatprep.subr.bf16.mxu0 0
  %292 = vmatpush1.bf16.msra.mxu0 0
  %293 = vmatprep.subr.bf16.mxu0 0
  %294 = vmatpush1.bf16.msra.mxu0 0
  %295 = vmatprep.mubr.bf16.mxu0 %v258
  %296 = vmatmul.mubr.bf16.gmra.mrb[0].mxu0 %v70
  %v297 = vpop.f32.mrb[0].mxu0
  %v298 = vadd.f32 0.0, %v297
  %v299 = vpop.f32.mrb[0].mxu0
  %v300 = vadd.f32 0.0, %v299
  %v301 = vpop.f32.mrb[0].mxu0
  %v302 = vadd.f32 0.0, %v301
  %v303 = vpop.f32.mrb[0].mxu0
  %v304 = vadd.f32 0.0, %v303
  %305 = vmatprep.mubr.bf16.mxu0 %v261
  %306 = vmatmul.mubr.bf16.gmra.mrb[0].mxu0 %v72
  %v307 = vpop.f32.mrb[0].mxu0
  %v308 = vadd.f32 0.0, %v307
  %v309 = vpop.f32.mrb[0].mxu0
  %v310 = vadd.f32 0.0, %v309
  %v311 = vpop.f32.mrb[0].mxu0
  %v312 = vadd.f32 0.0, %v311
  %v313 = vpop.f32.mrb[0].mxu0
  %v314 = vadd.f32 0.0, %v313
  %315 = vdwg.mxu0
  %316 = vmatprep.subr.bf16.mxu0 %v187
  %317 = vmatpush1.bf16.msra.mxu0 %v186
  %318 = vmatprep.subr.bf16.mxu0 %v191
  %319 = vmatpush1.bf16.msra.mxu0 %v190
  %320 = vmatprep.subr.bf16.mxu0 %v195
  %321 = vmatpush1.bf16.msra.mxu0 %v194
  %322 = vmatprep.subr.bf16.mxu0 %v199
  %323 = vmatpush1.bf16.msra.mxu0 %v198
  %324 = vmatprep.subr.bf16.mxu0 %v203
  %325 = vmatpush1.bf16.msra.mxu0 %v202
  %326 = vmatprep.subr.bf16.mxu0 %v207
  %327 = vmatpush1.bf16.msra.mxu0 %v206
  %328 = vmatprep.subr.bf16.mxu0 %v211
  %329 = vmatpush1.bf16.msra.mxu0 %v210
  %330 = vmatprep.subr.bf16.mxu0 %v215
  %331 = vmatpush1.bf16.msra.mxu0 %v214
  %332 = vmatprep.subr.bf16.mxu0 %v219
  %333 = vmatpush1.bf16.msra.mxu0 %v218
  %334 = vmatprep.subr.bf16.mxu0 0
  %335 = vmatpush1.bf16.msra.mxu0 0
  %336 = vmatprep.subr.bf16.mxu0 0
  %337 = vmatpush1.bf16.msra.mxu0 0
  %338 = vmatprep.subr.bf16.mxu0 0
  %339 = vmatpush1.bf16.msra.mxu0 0
  %340 = vmatprep.subr.bf16.mxu0 0
  %341 = vmatpush1.bf16.msra.mxu0 0
  %342 = vmatprep.subr.bf16.mxu0 0
  %343 = vmatpush1.bf16.msra.mxu0 0
  %344 = vmatprep.subr.bf16.mxu0 0
  %345 = vmatpush1.bf16.msra.mxu0 0
  %346 = vmatprep.subr.bf16.mxu0 0
  %347 = vmatpush1.bf16.msra.mxu0 0
  %348 = vmatprep.mubr.bf16.mxu0 %v258
  %349 = vmatmul.mubr.bf16.gmra.mrb[0].mxu0 %v70
  %v350 = vpop.f32.mrb[0].mxu0
  %v351 = vadd.f32 0.0, %v350
  %v352 = vpop.f32.mrb[0].mxu0
  %v353 = vadd.f32 0.0, %v352
  %v354 = vpop.f32.mrb[0].mxu0
  %v355 = vadd.f32 0.0, %v354
  %v356 = vpop.f32.mrb[0].mxu0
  %v357 = vadd.f32 0.0, %v356
  %358 = vmatprep.mubr.bf16.mxu0 %v261
  %359 = vmatmul.mubr.bf16.gmra.mrb[0].mxu0 %v72
  %v360 = vpop.f32.mrb[0].mxu0
  %v361 = vadd.f32 0.0, %v360
  %v362 = vpop.f32.mrb[0].mxu0
  %v363 = vadd.f32 0.0, %v362
  %v364 = vpop.f32.mrb[0].mxu0
  %v365 = vadd.f32 0.0, %v364
  %v366 = vpop.f32.mrb[0].mxu0
  %v367 = vadd.f32 0.0, %v366
  %368 = vdwg.mxu0
  %v369 = vld [vmem:[%s2] sm:$0xff]
  %v370 = vld [vmem:[%s2 + $0x8] sm:$0xff]
  %v371 = vld [vmem:[%s2 + $0x10] sm:$0xff]
  %v372 = vld [vmem:[%s2 + $0x18] sm:$0xff]
  %v373 = vld [vmem:[%s3] sm:$0xff]
  %v374 = vld [vmem:[%s3 + $0x8] sm:$0xff]
  %v375 = vld [vmem:[%s3 + $0x10] sm:$0xff]
  %v376 = vld [vmem:[%s3 + $0x18] sm:$0xff]
  %v377 = vadd.f32 %v298, %v300
  %v378 = vadd.f32 %v377, %v351
  %v379 = vadd.f32 %v378, %v353
  %380 = vadd.xlane.f32.xlu0 %v379
  %v381 = vpop.xlane.xlu0 %380
  %v382 = vadd.f32 %v302, %v304
  %v383 = vadd.f32 %v382, %v355
  %v384 = vadd.f32 %v383, %v357
  %385 = vadd.xlane.f32.xlu0 %v384
  %v386 = vpop.xlane.xlu0 %385
  %v387 = vadd.f32 %v308, %v310
  %v388 = vadd.f32 %v387, %v361
  %v389 = vadd.f32 %v388, %v363
  %390 = vadd.xlane.f32.xlu0 %v389
  %v391 = vpop.xlane.xlu0 %390
  %v392 = vadd.f32 %v312, %v314
  %v393 = vadd.f32 %v392, %v365
  %v394 = vadd.f32 %v393, %v367
  %395 = vadd.xlane.f32.xlu0 %v394
  %v396 = vpop.xlane.xlu0 %395
  %v397 = vrcp.pop 512.0
  %v398 = vmul.f32 %v381, %v397
  %v399 = vmul.f32 %v386, %v397
  %v400 = vmul.f32 %v391, %v397
  %v401 = vmul.f32 %v396, %v397
  %v402 = vsub.f32 %v298, %v398
  %v403 = vsub.f32 %v300, %v398
  %v404 = vsub.f32 %v351, %v398
  %v405 = vsub.f32 %v353, %v398
  %v406 = vsub.f32 %v302, %v399
  %v407 = vsub.f32 %v304, %v399
  %v408 = vsub.f32 %v355, %v399
  %v409 = vsub.f32 %v357, %v399
  %v410 = vsub.f32 %v308, %v400
  %v411 = vsub.f32 %v310, %v400
  %v412 = vsub.f32 %v361, %v400
  %v413 = vsub.f32 %v363, %v400
  %v414 = vsub.f32 %v312, %v401
  %v415 = vsub.f32 %v314, %v401
  %v416 = vsub.f32 %v365, %v401
  %v417 = vsub.f32 %v367, %v401
  %v418 = vmul.f32 %v402, %v402
  %v419 = vmul.f32 %v403, %v403
  %v420 = vmul.f32 %v404, %v404
  %v421 = vmul.f32 %v405, %v405
  %v422 = vmul.f32 %v406, %v406
  %v423 = vmul.f32 %v407, %v407
  %v424 = vmul.f32 %v408, %v408
  %v425 = vmul.f32 %v409, %v409
  %v426 = vmul.f32 %v410, %v410
  %v427 = vmul.f32 %v411, %v411
  %v428 = vmul.f32 %v412, %v412
  %v429 = vmul.f32 %v413, %v413
  %v430 = vmul.f32 %v414, %v414
  %v431 = vmul.f32 %v415, %v415
  %v432 = vmul.f32 %v416, %v416
  %v433 = vmul.f32 %v417, %v417
  %v434 = vadd.f32 %v418, %v419
  %v435 = vadd.f32 %v434, %v420
  %v436 = vadd.f32 %v435, %v421
  %437 = vadd.xlane.f32.xlu0 %v436
  %v438 = vpop.xlane.xlu0 %437
  %v439 = vadd.f32 %v422, %v423
  %v440 = vadd.f32 %v439, %v424
  %v441 = vadd.f32 %v440, %v425
  %442 = vadd.xlane.f32.xlu0 %v441
  %v443 = vpop.xlane.xlu0 %442
  %v444 = vadd.f32 %v426, %v427
  %v445 = vadd.f32 %v444, %v428
  %v446 = vadd.f32 %v445, %v429
  %447 = vadd.xlane.f32.xlu0 %v446
  %v448 = vpop.xlane.xlu0 %447
  %v449 = vadd.f32 %v430, %v431
  %v450 = vadd.f32 %v449, %v432
  %v451 = vadd.f32 %v450, %v433
  %452 = vadd.xlane.f32.xlu0 %v451
  %v453 = vpop.xlane.xlu0 %452
  %v454 = vmul.f32 %v438, %v397
  %v455 = vmul.f32 %v443, %v397
  %v456 = vmul.f32 %v448, %v397
  %v457 = vmul.f32 %v453, %v397
  %v458 = vadd.f32 %v454, 1e-05
  %v459 = vadd.f32 %v455, 1e-05
  %v460 = vadd.f32 %v456, 1e-05
  %v461 = vadd.f32 %v457, 1e-05
  %v462 = vrsqrt.pop %v458
  %v463 = vrsqrt.pop %v459
  %v464 = vrsqrt.pop %v460
  %v465 = vrsqrt.pop %v461
  %v466 = vmul.f32 %v402, %v462
  %v467 = vmul.f32 %v403, %v462
  %v468 = vmul.f32 %v404, %v462
  %v469 = vmul.f32 %v405, %v462
  %v470 = vmul.f32 %v406, %v463
  %v471 = vmul.f32 %v407, %v463
  %v472 = vmul.f32 %v408, %v463
  %v473 = vmul.f32 %v409, %v463
  %v474 = vmul.f32 %v410, %v464
  %v475 = vmul.f32 %v411, %v464
  %v476 = vmul.f32 %v412, %v464
  %v477 = vmul.f32 %v413, %v464
  %v478 = vmul.f32 %v414, %v465
  %v479 = vmul.f32 %v415, %v465
  %v480 = vmul.f32 %v416, %v465
  %v481 = vmul.f32 %v417, %v465
  %483 = vset.pattern.permute.xlu0 0
  %484 = vperm.xlu0 %483, %v369
  %v485 = vpop.permute.xlu0 %484
  %488 = vset.pattern.permute.xlu0 0
  %489 = vperm.xlu0 %488, %v370
  %v490 = vpop.permute.xlu0 %489
  %493 = vset.pattern.permute.xlu0 0
  %494 = vperm.xlu0 %493, %v371
  %v495 = vpop.permute.xlu0 %494
  %498 = vset.pattern.permute.xlu0 0
  %499 = vperm.xlu0 %498, %v372
  %v500 = vpop.permute.xlu0 %499
  %v502 = vmul.f32 %v466, %v485
  %v503 = vmul.f32 %v467, %v485
  %v504 = vmul.f32 %v468, %v485
  %v505 = vmul.f32 %v469, %v485
  %v506 = vmul.f32 %v470, %v490
  %v507 = vmul.f32 %v471, %v490
  %v508 = vmul.f32 %v472, %v490
  %v509 = vmul.f32 %v473, %v490
  %v510 = vmul.f32 %v474, %v495
  %v511 = vmul.f32 %v475, %v495
  %v512 = vmul.f32 %v476, %v495
  %v513 = vmul.f32 %v477, %v495
  %v514 = vmul.f32 %v478, %v500
  %v515 = vmul.f32 %v479, %v500
  %v516 = vmul.f32 %v480, %v500
  %v517 = vmul.f32 %v481, %v500
  %519 = vset.pattern.permute.xlu0 0
  %520 = vperm.xlu0 %519, %v373
  %v521 = vpop.permute.xlu0 %520
  %524 = vset.pattern.permute.xlu0 0
  %525 = vperm.xlu0 %524, %v374
  %v526 = vpop.permute.xlu0 %525
  %529 = vset.pattern.permute.xlu0 0
  %530 = vperm.xlu0 %529, %v375
  %v531 = vpop.permute.xlu0 %530
  %534 = vset.pattern.permute.xlu0 0
  %535 = vperm.xlu0 %534, %v376
  %v536 = vpop.permute.xlu0 %535
  %v538 = vadd.f32 %v502, %v521
  %v539 = vadd.f32 %v503, %v521
  %v540 = vadd.f32 %v504, %v521
  %v541 = vadd.f32 %v505, %v521
  %v542 = vadd.f32 %v506, %v526
  %v543 = vadd.f32 %v507, %v526
  %v544 = vadd.f32 %v508, %v526
  %v545 = vadd.f32 %v509, %v526
  %v546 = vadd.f32 %v510, %v531
  %v547 = vadd.f32 %v511, %v531
  %v548 = vadd.f32 %v512, %v531
  %v549 = vadd.f32 %v513, %v531
  %v550 = vadd.f32 %v514, %v536
  %v551 = vadd.f32 %v515, %v536
  %v552 = vadd.f32 %v516, %v536
  %v553 = vadd.f32 %v517, %v536
  %v554 = vmax.f32 %v538, 0.0
  %v555 = vmax.f32 %v539, 0.0
  %v556 = vmax.f32 %v540, 0.0
  %v557 = vmax.f32 %v541, 0.0
  %v558 = vmax.f32 %v542, 0.0
  %v559 = vmax.f32 %v543, 0.0
  %v560 = vmax.f32 %v544, 0.0
  %v561 = vmax.f32 %v545, 0.0
  %v562 = vmax.f32 %v546, 0.0
  %v563 = vmax.f32 %v547, 0.0
  %v564 = vmax.f32 %v548, 0.0
  %v565 = vmax.f32 %v549, 0.0
  %v566 = vmax.f32 %v550, 0.0
  %v567 = vmax.f32 %v551, 0.0
  %v568 = vmax.f32 %v552, 0.0
  %v569 = vmax.f32 %v553, 0.0
  %570 = vst [vmem:[%s4] sm:$0xff] %v554
  %571 = vst [vmem:[%s4 + $0x8] sm:$0xff] %v555
  %572 = vst [vmem:[%s4 + $0x10] sm:$0xff] %v556
  %573 = vst [vmem:[%s4 + $0x18] sm:$0xff] %v557
  %574 = vst [vmem:[%s4 + $0x20] sm:$0xff] %v558
  %575 = vst [vmem:[%s4 + $0x28] sm:$0xff] %v559
  %576 = vst [vmem:[%s4 + $0x30] sm:$0xff] %v560
  %577 = vst [vmem:[%s4 + $0x38] sm:$0xff] %v561
  %578 = vst [vmem:[%s4 + $0x40] sm:$0xff] %v562
  %579 = vst [vmem:[%s4 + $0x48] sm:$0xff] %v563
  %580 = vst [vmem:[%s4 + $0x50] sm:$0xff] %v564
  %581 = vst [vmem:[%s4 + $0x58] sm:$0xff] %v565
  %582 = vst [vmem:[%s4 + $0x60] sm:$0xff] %v566
  %583 = vst [vmem:[%s4 + $0x68] sm:$0xff] %v567
  %584 = vst [vmem:[%s4 + $0x70] sm:$0xff] %v568
  %585 = vst [vmem:[%s4 + $0x78] sm:$0xff] %v569
  // Predicated region
  $region18: #{resnet_forward.19} parent=0 // pred_check
    _
  $region19: #{resnet_forward.19} parent=0 // pred_check_branch
    %587 = sbr.rel (0) target = $region21
  $region20: #{resnet_forward.19} parent=0 // pred_region
    _
  $region21: #{resnet_forward.19} parent=0 // pred_fallthru
    _
  // Predicated region
  $region22: #{resnet_forward.19} parent=0 // pred_check
    _
  $region23: #{resnet_forward.19} parent=0 // pred_check_branch
    %589 = sbr.rel (0) target = $region25
  $region24: #{resnet_forward.19} parent=0 // pred_region
    _
  $region25: #{resnet_forward.19} parent=0 // pred_fallthru
    _

// kernel: resnet_forward.21
$region0: #{resnet_forward.21}
  #allocation0 [shape = 'u32[]', space=smem, size = 0x4, offset = 0x4, fixed_abs, tag = 'smem constant byte address 0x4 - core index']
  #allocation1 [shape = 'u32[144,128]{1,0:T(1,128)}', space=vmem, size = 0x12000, scoped, tag = 'internal scratch']
  %s0 = inlined_call_operand.vmem [shape: bf16[288,512], index: 0, kind: input, shape index: {}]
  %s1 = inlined_call_operand.vmem [shape: bf16[32,288], index: 1, kind: input, shape index: {}]
  %s2 = inlined_call_operand.vmem [shape: f32[32,1], index: 2, kind: input, shape index: {}]
  %s3 = inlined_call_operand.vmem [shape: f32[32,1], index: 3, kind: input, shape index: {}]
  %s4 = inlined_call_operand.vmem [shape: f32[32,512], index: 4, kind: output, shape index: {}]
  %s5 = sld [smem:[#allocation0]]
  $region26: #{resnet_forward.21} parent=0
    _
  %s7 = ssub.s32 1, %s5
  %s8 = scalar_select 0, %s7, %s5
  // Predicated region
  $region2: #{resnet_forward.21} parent=0 // pred_check
    _
  $region3: #{resnet_forward.21} parent=0 // pred_check_branch
    %10 = sbr.rel (0) target = $region5
  $region4: #{resnet_forward.21} parent=0 // pred_region
    _
  $region5: #{resnet_forward.21} parent=0 // pred_fallthru
    _
  // Predicated region
  $region6: #{resnet_forward.21} parent=0 // pred_check
    _
  $region7: #{resnet_forward.21} parent=0 // pred_check_branch
    %12 = sbr.rel (0) target = $region9
  $region8: #{resnet_forward.21} parent=0 // pred_region
    _
  $region9: #{resnet_forward.21} parent=0 // pred_fallthru
    _
  // Predicated region
  $region10: #{resnet_forward.21} parent=0 // pred_check
    _
  $region11: #{resnet_forward.21} parent=0 // pred_check_branch
    %14 = sbr.rel (0) target = $region13
  $region12: #{resnet_forward.21} parent=0 // pred_region
    _
  $region13: #{resnet_forward.21} parent=0 // pred_fallthru
    _
  // Predicated region
  $region14: #{resnet_forward.21} parent=0 // pred_check
    _
  $region15: #{resnet_forward.21} parent=0 // pred_check_branch
    %16 = sbr.rel (0) target = $region17
  $region16: #{resnet_forward.21} parent=0 // pred_region
    _
  $region17: #{resnet_forward.21} parent=0 // pred_fallthru
    _
  %v18 = vld [vmem:[%s1] sm:$0xff]
  %v19 = vld [vmem:[%s1 + $0x8] sm:$0xf]
  %v20 = vld [vmem:[%s1 + $0xc] sm:$0xff]
  %v21 = vld [vmem:[%s1 + $0x14] sm:$0xf]
  %v22 = vld [vmem:[%s1 + $0x18] sm:$0xff]
  %v23 = vld [vmem:[%s1 + $0x20] sm:$0xf]
  %v24 = vld [vmem:[%s1 + $0x24] sm:$0xff]
  %v25 = vld [vmem:[%s1 + $0x2c] sm:$0xf]
  %v26 = vld [vmem:[%s0] sm:$0xff]
  %v27 = vld [vmem:[%s0 + $0x8] sm:$0xff]
  %v28 = vld [vmem:[%s0 + $0x10] sm:$0xff]
  %v29 = vld [vmem:[%s0 + $0x18] sm:$0xff]
  %v30 = vld [vmem:[%s0 + $0x20] sm:$0xff]
  %v31 = vld [vmem:[%s0 + $0x28] sm:$0xff]
  %v32 = vld [vmem:[%s0 + $0x30] sm:$0xff]
  %v33 = vld [vmem:[%s0 + $0x38] sm:$0xff]
  %v34 = vld [vmem:[%s0 + $0x40] sm:$0xff]
  %v35 = vld [vmem:[%s0 + $0x48] sm:$0xff]
  %v36 = vld [vmem:[%s0 + $0x50] sm:$0xff]
  %v37 = vld [vmem:[%s0 + $0x58] sm:$0xff]
  %v38 = vld [vmem:[%s0 + $0x60] sm:$0xff]
  %v39 = vld [vmem:[%s0 + $0x68] sm:$0xff]
  %v40 = vld [vmem:[%s0 + $0x70] sm:$0xff]
  %v41 = vld [vmem:[%s0 + $0x78] sm:$0xff]
  %v42 = vld [vmem:[%s0 + $0x80] sm:$0xff]
  %v43 = vld [vmem:[%s0 + $0x88] sm:$0xff]
  %v44 = vld [vmem:[%s0 + $0x90] sm:$0xff]
  %v45 = vld [vmem:[%s0 + $0x98] sm:$0xff]
  %v46 = vld [vmem:[%s0 + $0xa0] sm:$0xff]
  %v47 = vld [vmem:[%s0 + $0xa8] sm:$0xff]
  %v48 = vld [vmem:[%s0 + $0xb0] sm:$0xff]
  %v49 = vld [vmem:[%s0 + $0xb8] sm:$0xff]
  %v50 = vld [vmem:[%s0 + $0xc0] sm:$0xff]
  %v51 = vld [vmem:[%s0 + $0xc8] sm:$0xff]
  %v52 = vld [vmem:[%s0 + $0xd0] sm:$0xff]
  %v53 = vld [vmem:[%s0 + $0xd8] sm:$0xff]
  %v54 = vld [vmem:[%s0 + $0xe0] sm:$0xff]
  %v55 = vld [vmem:[%s0 + $0xe8] sm:$0xff]
  %v56 = vld [vmem:[%s0 + $0xf0] sm:$0xff]
  %v57 = vld [vmem:[%s0 + $0xf8] sm:$0xff]
  %v58 = vld [vmem:[%s0 + $0x100] sm:$0xff]
  %v59 = vld [vmem:[%s0 + $0x108] sm:$0xff]
  %v60 = vld [vmem:[%s0 + $0x110] sm:$0xff]
  %v61 = vld [vmem:[%s0 + $0x118] sm:$0xff]
  %v62 = vld [vmem:[%s0 + $0x120] sm:$0xff]
  %v63 = vld [vmem:[%s0 + $0x128] sm:$0xff]
  %v64 = vld [vmem:[%s0 + $0x130] sm:$0xff]
  %v65 = vld [vmem:[%s0 + $0x138] sm:$0xff]
  %v66 = vld [vmem:[%s0 + $0x140] sm:$0xff]
  %v67 = vld [vmem:[%s0 + $0x148] sm:$0xff]
  %v68 = vld [vmem:[%s0 + $0x150] sm:$0xff]
  %v69 = vld [vmem:[%s0 + $0x158] sm:$0xff]
  %v70 = vld [vmem:[%s0 + $0x160] sm:$0xff]
  %v71 = vld [vmem:[%s0 + $0x168] sm:$0xff]
  %v72 = vld [vmem:[%s0 + $0x170] sm:$0xff]
  %v73 = vld [vmem:[%s0 + $0x178] sm:$0xff]
  %v74 = vld [vmem:[%s0 + $0x180] sm:$0xff]
  %v75 = vld [vmem:[%s0 + $0x188] sm:$0xff]
  %v76 = vld [vmem:[%s0 + $0x190] sm:$0xff]
  %v77 = vld [vmem:[%s0 + $0x198] sm:$0xff]
  %v78 = vld [vmem:[%s0 + $0x1a0] sm:$0xff]
  %v79 = vld [vmem:[%s0 + $0x1a8] sm:$0xff]
  %v80 = vld [vmem:[%s0 + $0x1b0] sm:$0xff]
  %v81 = vld [vmem:[%s0 + $0x1b8] sm:$0xff]
  %v82 = vld [vmem:[%s0 + $0x1c0] sm:$0xff]
  %v83 = vld [vmem:[%s0 + $0x1c8] sm:$0xff]
  %v84 = vld [vmem:[%s0 + $0x1d0] sm:$0xff]
  %v85 = vld [vmem:[%s0 + $0x1d8] sm:$0xff]
  %v86 = vld [vmem:[%s0 + $0x1e0] sm:$0xff]
  %v87 = vld [vmem:[%s0 + $0x1e8] sm:$0xff]
  %v88 = vld [vmem:[%s0 + $0x1f0] sm:$0xff]
  %v89 = vld [vmem:[%s0 + $0x1f8] sm:$0xff]
  %v90 = vld [vmem:[%s0 + $0x200] sm:$0xff]
  %v91 = vld [vmem:[%s0 + $0x208] sm:$0xff]
  %v92 = vld [vmem:[%s0 + $0x210] sm:$0xff]
  %v93 = vld [vmem:[%s0 + $0x218] sm:$0xff]
  %v94 = vld [vmem:[%s0 + $0x220] sm:$0xff]
  %v95 = vld [vmem:[%s0 + $0x228] sm:$0xff]
  %v96 = vld [vmem:[%s0 + $0x230] sm:$0xff]
  %v97 = vld [vmem:[%s0 + $0x238] sm:$0xff]
  %v106 = vunpack.c.l.b16 %v18
  %v107 = vunpack.c.h.b16 %v18
  %v108 = vunpack.c.l.b16 %v19
  %v109 = vunpack.c.l.b16 %v20
  %v110 = vunpack.c.h.b16 %v20
  %v111 = vunpack.c.l.b16 %v21
  %v112 = vunpack.c.l.b16 %v22
  %v113 = vunpack.c.h.b16 %v22
  %v114 = vunpack.c.l.b16 %v23
  %v115 = vunpack.c.l.b16 %v24
  %v116 = vunpack.c.h.b16 %v24
  %v117 = vunpack.c.l.b16 %v25
  %v118 = vpack.c.b16 %v109, %v106
  %v119 = vpack.c.b16 %v110, %v107
  %v120 = vpack.c.b16 %v111, %v108
  %v121 = vpack.c.b16 %v115, %v112
  %v122 = vpack.c.b16 %v116, %v113
  %v123 = vpack.c.b16 %v117, %v114
  %v200 = vunpack.c.l.b16 %v26
  %v201 = vunpack.c.h.b16 %v26
  %v202 = vunpack.c.l.b16 %v27
  %v203 = vunpack.c.h.b16 %v27
  %v204 = vunpack.c.l.b16 %v28
  %v205 = vunpack.c.h.b16 %v28
  %v206 = vunpack.c.l.b16 %v29
  %v207 = vunpack.c.h.b16 %v29
  %v208 = vunpack.c.l.b16 %v30
  %v209 = vunpack.c.h.b16 %v30
  %v210 = vunpack.c.l.b16 %v31
  %v211 = vunpack.c.h.b16 %v31
  %v212 = vunpack.c.l.b16 %v32
  %v213 = vunpack.c.h.b16 %v32
  %v214 = vunpack.c.l.b16 %v33
  %v215 = vunpack.c.h.b16 %v33
  %v216 = vunpack.c.l.b16 %v34
  %v217 = vunpack.c.h.b16 %v34
  %v218 = vunpack.c.l.b16 %v35
  %v219 = vunpack.c.h.b16 %v35
  %v220 = vunpack.c.l.b16 %v36
  %v221 = vunpack.c.h.b16 %v36
  %v222 = vunpack.c.l.b16 %v37
  %v223 = vunpack.c.h.b16 %v37
  %v224 = vunpack.c.l.b16 %v38
  %v225 = vunpack.c.h.b16 %v38
  %v226 = vunpack.c.l.b16 %v39
  %v227 = vunpack.c.h.b16 %v39
  %v228 = vunpack.c.l.b16 %v40
  %v229 = vunpack.c.h.b16 %v40
  %v230 = vunpack.c.l.b16 %v41
  %v231 = vunpack.c.h.b16 %v41
  %v232 = vunpack.c.l.b16 %v42
  %v233 = vunpack.c.h.b16 %v42
  %v234 = vunpack.c.l.b16 %v43
  %v235 = vunpack.c.h.b16 %v43
  %v236 = vunpack.c.l.b16 %v44
  %v237 = vunpack.c.h.b16 %v44
  %v238 = vunpack.c.l.b16 %v45
  %v239 = vunpack.c.h.b16 %v45
  %v240 = vunpack.c.l.b16 %v46
  %v241 = vunpack.c.h.b16 %v46
  %v242 = vunpack.c.l.b16 %v47
  %v243 = vunpack.c.h.b16 %v47
  %v244 = vunpack.c.l.b16 %v48
  %v245 = vunpack.c.h.b16 %v48
  %v246 = vunpack.c.l.b16 %v49
  %v247 = vunpack.c.h.b16 %v49
  %v248 = vunpack.c.l.b16 %v50
  %v249 = vunpack.c.h.b16 %v50
  %v250 = vunpack.c.l.b16 %v51
  %v251 = vunpack.c.h.b16 %v51
  %v252 = vunpack.c.l.b16 %v52
  %v253 = vunpack.c.h.b16 %v52
  %v254 = vunpack.c.l.b16 %v53
  %v255 = vunpack.c.h.b16 %v53
  %v256 = vunpack.c.l.b16 %v54
  %v257 = vunpack.c.h.b16 %v54
  %v258 = vunpack.c.l.b16 %v55
  %v259 = vunpack.c.h.b16 %v55
  %v260 = vunpack.c.l.b16 %v56
  %v261 = vunpack.c.h.b16 %v56
  %v262 = vunpack.c.l.b16 %v57
  %v263 = vunpack.c.h.b16 %v57
  %v264 = vunpack.c.l.b16 %v58
  %v265 = vunpack.c.h.b16 %v58
  %v266 = vunpack.c.l.b16 %v59
  %v267 = vunpack.c.h.b16 %v59
  %v268 = vunpack.c.l.b16 %v60
  %v269 = vunpack.c.h.b16 %v60
  %v270 = vunpack.c.l.b16 %v61
  %v271 = vunpack.c.h.b16 %v61
  %v272 = vunpack.c.l.b16 %v62
  %v273 = vunpack.c.h.b16 %v62
  %v274 = vunpack.c.l.b16 %v63
  %v275 = vunpack.c.h.b16 %v63
  %v276 = vunpack.c.l.b16 %v64
  %v277 = vunpack.c.h.b16 %v64
  %v278 = vunpack.c.l.b16 %v65
  %v279 = vunpack.c.h.b16 %v65
  %v280 = vunpack.c.l.b16 %v66
  %v281 = vunpack.c.h.b16 %v66
  %v282 = vunpack.c.l.b16 %v67
  %v283 = vunpack.c.h.b16 %v67
  %v284 = vunpack.c.l.b16 %v68
  %v285 = vunpack.c.h.b16 %v68
  %v286 = vunpack.c.l.b16 %v69
  %v287 = vunpack.c.h.b16 %v69
  %v288 = vunpack.c.l.b16 %v70
  %v289 = vunpack.c.h.b16 %v70
  %v290 = vunpack.c.l.b16 %v71
  %v291 = vunpack.c.h.b16 %v71
  %v292 = vunpack.c.l.b16 %v72
  %v293 = vunpack.c.h.b16 %v72
  %v294 = vunpack.c.l.b16 %v73
  %v295 = vunpack.c.h.b16 %v73
  %v296 = vunpack.c.l.b16 %v74
  %v297 = vunpack.c.h.b16 %v74
  %v298 = vunpack.c.l.b16 %v75
  %v299 = vunpack.c.h.b16 %v75
  %v300 = vunpack.c.l.b16 %v76
  %v301 = vunpack.c.h.b16 %v76
  %v302 = vunpack.c.l.b16 %v77
  %v303 = vunpack.c.h.b16 %v77
  %v304 = vunpack.c.l.b16 %v78
  %v305 = vunpack.c.h.b16 %v78
  %v306 = vunpack.c.l.b16 %v79
  %v307 = vunpack.c.h.b16 %v79
  %v308 = vunpack.c.l.b16 %v80
  %v309 = vunpack.c.h.b16 %v80
  %v310 = vunpack.c.l.b16 %v81
  %v311 = vunpack.c.h.b16 %v81
  %v312 = vunpack.c.l.b16 %v82
  %v313 = vunpack.c.h.b16 %v82
  %v314 = vunpack.c.l.b16 %v83
  %v315 = vunpack.c.h.b16 %v83
  %v316 = vunpack.c.l.b16 %v84
  %v317 = vunpack.c.h.b16 %v84
  %v318 = vunpack.c.l.b16 %v85
  %v319 = vunpack.c.h.b16 %v85
  %v320 = vunpack.c.l.b16 %v86
  %v321 = vunpack.c.h.b16 %v86
  %v322 = vunpack.c.l.b16 %v87
  %v323 = vunpack.c.h.b16 %v87
  %v324 = vunpack.c.l.b16 %v88
  %v325 = vunpack.c.h.b16 %v88
  %v326 = vunpack.c.l.b16 %v89
  %v327 = vunpack.c.h.b16 %v89
  %v328 = vunpack.c.l.b16 %v90
  %v329 = vunpack.c.h.b16 %v90
  %v330 = vunpack.c.l.b16 %v91
  %v331 = vunpack.c.h.b16 %v91
  %v332 = vunpack.c.l.b16 %v92
  %v333 = vunpack.c.h.b16 %v92
  %v334 = vunpack.c.l.b16 %v93
  %v335 = vunpack.c.h.b16 %v93
  %v336 = vunpack.c.l.b16 %v94
  %v337 = vunpack.c.h.b16 %v94
  %v338 = vunpack.c.l.b16 %v95
  %v339 = vunpack.c.h.b16 %v95
  %v340 = vunpack.c.l.b16 %v96
  %v341 = vunpack.c.h.b16 %v96
  %v342 = vunpack.c.l.b16 %v97
  %v343 = vunpack.c.h.b16 %v97
  %v344 = vpack.c.b16 %v204, %v200
  %v345 = vpack.c.b16 %v205, %v201
  %v346 = vpack.c.b16 %v206, %v202
  %v347 = vpack.c.b16 %v207, %v203
  %v348 = vpack.c.b16 %v212, %v208
  %v349 = vpack.c.b16 %v213, %v209
  %v350 = vpack.c.b16 %v214, %v210
  %v351 = vpack.c.b16 %v215, %v211
  %v352 = vpack.c.b16 %v220, %v216
  %v353 = vpack.c.b16 %v221, %v217
  %v354 = vpack.c.b16 %v222, %v218
  %v355 = vpack.c.b16 %v223, %v219
  %v356 = vpack.c.b16 %v228, %v224
  %v357 = vpack.c.b16 %v229, %v225
  %v358 = vpack.c.b16 %v230, %v226
  %v359 = vpack.c.b16 %v231, %v227
  %v360 = vpack.c.b16 %v236, %v232
  %v361 = vpack.c.b16 %v237, %v233
  %v362 = vpack.c.b16 %v238, %v234
  %v363 = vpack.c.b16 %v239, %v235
  %v364 = vpack.c.b16 %v244, %v240
  %v365 = vpack.c.b16 %v245, %v241
  %v366 = vpack.c.b16 %v246, %v242
  %v367 = vpack.c.b16 %v247, %v243
  %v368 = vpack.c.b16 %v252, %v248
  %v369 = vpack.c.b16 %v253, %v249
  %v370 = vpack.c.b16 %v254, %v250
  %v371 = vpack.c.b16 %v255, %v251
  %v372 = vpack.c.b16 %v260, %v256
  %v373 = vpack.c.b16 %v261, %v257
  %v374 = vpack.c.b16 %v262, %v258
  %v375 = vpack.c.b16 %v263, %v259
  %v376 = vpack.c.b16 %v268, %v264
  %v377 = vpack.c.b16 %v269, %v265
  %v378 = vpack.c.b16 %v270, %v266
  %v379 = vpack.c.b16 %v271, %v267
  %v380 = vpack.c.b16 %v276, %v272
  %v381 = vpack.c.b16 %v277, %v273
  %v382 = vpack.c.b16 %v278, %v274
  %v383 = vpack.c.b16 %v279, %v275
  %v384 = vpack.c.b16 %v284, %v280
  %v385 = vpack.c.b16 %v285, %v281
  %v386 = vpack.c.b16 %v286, %v282
  %v387 = vpack.c.b16 %v287, %v283
  %v388 = vpack.c.b16 %v292, %v288
  %v389 = vpack.c.b16 %v293, %v289
  %v390 = vpack.c.b16 %v294, %v290
  %v391 = vpack.c.b16 %v295, %v291
  %v392 = vpack.c.b16 %v300, %v296
  %v393 = vpack.c.b16 %v301, %v297
  %v394 = vpack.c.b16 %v302, %v298
  %v395 = vpack.c.b16 %v303, %v299
  %v396 = vpack.c.b16 %v308, %v304
  %v397 = vpack.c.b16 %v309, %v305
  %v398 = vpack.c.b16 %v310, %v306
  %v399 = vpack.c.b16 %v311, %v307
  %v400 = vpack.c.b16 %v316, %v312
  %v401 = vpack.c.b16 %v317, %v313
  %v402 = vpack.c.b16 %v318, %v314
  %v403 = vpack.c.b16 %v319, %v315
  %v404 = vpack.c.b16 %v324, %v320
  %v405 = vpack.c.b16 %v325, %v321
  %v406 = vpack.c.b16 %v326, %v322
  %v407 = vpack.c.b16 %v327, %v323
  %v408 = vpack.c.b16 %v332, %v328
  %v409 = vpack.c.b16 %v333, %v329
  %v410 = vpack.c.b16 %v334, %v330
  %v411 = vpack.c.b16 %v335, %v331
  %v412 = vpack.c.b16 %v340, %v336
  %v413 = vpack.c.b16 %v341, %v337
  %v414 = vpack.c.b16 %v342, %v338
  %v415 = vpack.c.b16 %v343, %v339
  %vm488 = vcmask 261120
  %v490 = vsel %vm488, %v120, 0
  %v493 = vsel %vm488, %v123, 0
  %495 = vmatprep.subr.bf16.mxu0 %v345
  %496 = vmatpush1.bf16.msra.mxu0 %v344
  %497 = vmatprep.subr.bf16.mxu0 %v349
  %498 = vmatpush1.bf16.msra.mxu0 %v348
  %499 = vmatprep.subr.bf16.mxu0 %v353
  %500 = vmatpush1.bf16.msra.mxu0 %v352
  %501 = vmatprep.subr.bf16.mxu0 %v357
  %502 = vmatpush1.bf16.msra.mxu0 %v356
  %503 = vmatprep.subr.bf16.mxu0 %v361
  %504 = vmatpush1.bf16.msra.mxu0 %v360
  %505 = vmatprep.subr.bf16.mxu0 %v365
  %506 = vmatpush1.bf16.msra.mxu0 %v364
  %507 = vmatprep.subr.bf16.mxu0 %v369
  %508 = vmatpush1.bf16.msra.mxu0 %v368
  %509 = vmatprep.subr.bf16.mxu0 %v373
  %510 = vmatpush1.bf16.msra.mxu0 %v372
  %511 = vmatprep.subr.bf16.mxu0 %v377
  %512 = vmatpush1.bf16.msra.mxu0 %v376
  %513 = vmatprep.subr.bf16.mxu0 %v381
  %514 = vmatpush1.bf16.msra.mxu0 %v380
  %515 = vmatprep.subr.bf16.mxu0 %v385
  %516 = vmatpush1.bf16.msra.mxu0 %v384
  %517 = vmatprep.subr.bf16.mxu0 %v389
  %518 = vmatpush1.bf16.msra.mxu0 %v388
  %519 = vmatprep.subr.bf16.mxu0 %v393
  %520 = vmatpush1.bf16.msra.mxu0 %v392
  %521 = vmatprep.subr.bf16.mxu0 %v397
  %522 = vmatpush1.bf16.msra.mxu0 %v396
  %523 = vmatprep.subr.bf16.mxu0 %v401
  %524 = vmatpush1.bf16.msra.mxu0 %v400
  %525 = vmatprep.subr.bf16.mxu0 %v405
  %526 = vmatpush1.bf16.msra.mxu0 %v404
  %527 = vmatprep.mubr.bf16.mxu0 %v119
  %528 = vmatmul.mubr.bf16.gmra.mrb[0].mxu0 %v118
  %v529 = vpop.f32.mrb[0].mxu0
  %v530 = vadd.f32 0.0, %v529
  %v531 = vpop.f32.mrb[0].mxu0
  %v532 = vadd.f32 0.0, %v531
  %v533 = vpop.f32.mrb[0].mxu0
  %v534 = vadd.f32 0.0, %v533
  %v535 = vpop.f32.mrb[0].mxu0
  %v536 = vadd.f32 0.0, %v535
  %537 = vmatprep.mubr.bf16.mxu0 %v122
  %538 = vmatmul.mubr.bf16.gmra.mrb[0].mxu0 %v121
  %v539 = vpop.f32.mrb[0].mxu0
  %v540 = vadd.f32 0.0, %v539
  %v541 = vpop.f32.mrb[0].mxu0
  %v542 = vadd.f32 0.0, %v541
  %v543 = vpop.f32.mrb[0].mxu0
  %v544 = vadd.f32 0.0, %v543
  %v545 = vpop.f32.mrb[0].mxu0
  %v546 = vadd.f32 0.0, %v545
  %547 = vdwg.mxu0
  %548 = vmatprep.subr.bf16.mxu0 %v409
  %549 = vmatpush1.bf16.msra.mxu0 %v408
  %550 = vmatprep.subr.bf16.mxu0 %v413
  %551 = vmatpush1.bf16.msra.mxu0 %v412
  %552 = vmatprep.subr.bf16.mxu0 0
  %553 = vmatpush1.bf16.msra.mxu0 0
  %554 = vmatprep.subr.bf16.mxu0 0
  %555 = vmatpush1.bf16.msra.mxu0 0
  %556 = vmatprep.subr.bf16.mxu0 0
  %557 = vmatpush1.bf16.msra.mxu0 0
  %558 = vmatprep.subr.bf16.mxu0 0
  %559 = vmatpush1.bf16.msra.mxu0 0
  %560 = vmatprep.subr.bf16.mxu0 0
  %561 = vmatpush1.bf16.msra.mxu0 0
  %562 = vmatprep.subr.bf16.mxu0 0
  %563 = vmatpush1.bf16.msra.mxu0 0
  %564 = vmatprep.subr.bf16.mxu0 0
  %565 = vmatpush1.bf16.msra.mxu0 0
  %566 = vmatprep.subr.bf16.mxu0 0
  %567 = vmatpush1.bf16.msra.mxu0 0
  %568 = vmatprep.subr.bf16.mxu0 0
  %569 = vmatpush1.bf16.msra.mxu0 0
  %570 = vmatprep.subr.bf16.mxu0 0
  %571 = vmatpush1.bf16.msra.mxu0 0
  %572 = vmatprep.subr.bf16.mxu0 0
  %573 = vmatpush1.bf16.msra.mxu0 0
  %574 = vmatprep.subr.bf16.mxu0 0
  %575 = vmatpush1.bf16.msra.mxu0 0
  %576 = vmatprep.subr.bf16.mxu0 0
  %577 = vmatpush1.bf16.msra.mxu0 0
  %578 = vmatprep.subr.bf16.mxu0 0
  %579 = vmatpush1.bf16.msra.mxu0 0
  %580 = vmatprep.mubr.bf16.mxu0 0
  %581 = vmatmul.mubr.bf16.gmra.mrb[0].mxu0 %v490
  %v582 = vpop.f32.mrb[0].mxu0
  %v583 = vadd.f32 %v530, %v582
  %v584 = vpop.f32.mrb[0].mxu0
  %v585 = vadd.f32 %v532, %v584
  %v586 = vpop.f32.mrb[0].mxu0
  %v587 = vadd.f32 %v534, %v586
  %v588 = vpop.f32.mrb[0].mxu0
  %v589 = vadd.f32 %v536, %v588
  %590 = vmatprep.mubr.bf16.mxu0 0
  %591 = vmatmul.mubr.bf16.gmra.mrb[0].mxu0 %v493
  %v592 = vpop.f32.mrb[0].mxu0
  %v593 = vadd.f32 %v540, %v592
  %v594 = vpop.f32.mrb[0].mxu0
  %v595 = vadd.f32 %v542, %v594
  %v596 = vpop.f32.mrb[0].mxu0
  %v597 = vadd.f32 %v544, %v596
  %v598 = vpop.f32.mrb[0].mxu0
  %v599 = vadd.f32 %v546, %v598
  %600 = vdwg.mxu0
  %601 = vmatprep.subr.bf16.mxu0 %v347
  %602 = vmatpush1.bf16.msra.mxu0 %v346
  %603 = vmatprep.subr.bf16.mxu0 %v351
  %604 = vmatpush1.bf16.msra.mxu0 %v350
  %605 = vmatprep.subr.bf16.mxu0 %v355
  %606 = vmatpush1.bf16.msra.mxu0 %v354
  %607 = vmatprep.subr.bf16.mxu0 %v359
  %608 = vmatpush1.bf16.msra.mxu0 %v358
  %609 = vmatprep.subr.bf16.mxu0 %v363
  %610 = vmatpush1.bf16.msra.mxu0 %v362
  %611 = vmatprep.subr.bf16.mxu0 %v367
  %612 = vmatpush1.bf16.msra.mxu0 %v366
  %613 = vmatprep.subr.bf16.mxu0 %v371
  %614 = vmatpush1.bf16.msra.mxu0 %v370
  %615 = vmatprep.subr.bf16.mxu0 %v375
  %616 = vmatpush1.bf16.msra.mxu0 %v374
  %617 = vmatprep.subr.bf16.mxu0 %v379
  %618 = vmatpush1.bf16.msra.mxu0 %v378
  %619 = vmatprep.subr.bf16.mxu0 %v383
  %620 = vmatpush1.bf16.msra.mxu0 %v382
  %621 = vmatprep.subr.bf16.mxu0 %v387
  %622 = vmatpush1.bf16.msra.mxu0 %v386
  %623 = vmatprep.subr.bf16.mxu0 %v391
  %624 = vmatpush1.bf16.msra.mxu0 %v390
  %625 = vmatprep.subr.bf16.mxu0 %v395
  %626 = vmatpush1.bf16.msra.mxu0 %v394
  %627 = vmatprep.subr.bf16.mxu0 %v399
  %628 = vmatpush1.bf16.msra.mxu0 %v398
  %629 = vmatprep.subr.bf16.mxu0 %v403
  %630 = vmatpush1.bf16.msra.mxu0 %v402
  %631 = vmatprep.subr.bf16.mxu0 %v407
  %632 = vmatpush1.bf16.msra.mxu0 %v406
  %633 = vmatprep.mubr.bf16.mxu0 %v119
  %634 = vmatmul.mubr.bf16.gmra.mrb[0].mxu0 %v118
  %v635 = vpop.f32.mrb[0].mxu0
  %v636 = vadd.f32 0.0, %v635
  %v637 = vpop.f32.mrb[0].mxu0
  %v638 = vadd.f32 0.0, %v637
  %v639 = vpop.f32.mrb[0].mxu0
  %v640 = vadd.f32 0.0, %v639
  %v641 = vpop.f32.mrb[0].mxu0
  %v642 = vadd.f32 0.0, %v641
  %643 = vmatprep.mubr.bf16.mxu0 %v122
  %644 = vmatmul.mubr.bf16.gmra.mrb[0].mxu0 %v121
  %v645 = vpop.f32.mrb[0].mxu0
  %v646 = vadd.f32 0.0, %v645
  %v647 = vpop.f32.mrb[0].mxu0
  %v648 = vadd.f32 0.0, %v647
  %v649 = vpop.f32.mrb[0].mxu0
  %v650 = vadd.f32 0.0, %v649
  %v651 = vpop.f32.mrb[0].mxu0
  %v652 = vadd.f32 0.0, %v651
  %653 = vdwg.mxu0
  %654 = vmatprep.subr.bf16.mxu0 %v411
  %655 = vmatpush1.bf16.msra.mxu0 %v410
  %656 = vmatprep.subr.bf16.mxu0 %v415
  %657 = vmatpush1.bf16.msra.mxu0 %v414
  %658 = vmatprep.subr.bf16.mxu0 0
  %659 = vmatpush1.bf16.msra.mxu0 0
  %660 = vmatprep.subr.bf16.mxu0 0
  %661 = vmatpush1.bf16.msra.mxu0 0
  %662 = vmatprep.subr.bf16.mxu0 0
  %663 = vmatpush1.bf16.msra.mxu0 0
  %664 = vmatprep.subr.bf16.mxu0 0
  %665 = vmatpush1.bf16.msra.mxu0 0
  %666 = vmatprep.subr.bf16.mxu0 0
  %667 = vmatpush1.bf16.msra.mxu0 0
  %668 = vmatprep.subr.bf16.mxu0 0
  %669 = vmatpush1.bf16.msra.mxu0 0
  %670 = vmatprep.subr.bf16.mxu0 0
  %671 = vmatpush1.bf16.msra.mxu0 0
  %672 = vmatprep.subr.bf16.mxu0 0
  %673 = vmatpush1.bf16.msra.mxu0 0
  %674 = vmatprep.subr.bf16.mxu0 0
  %675 = vmatpush1.bf16.msra.mxu0 0
  %676 = vmatprep.subr.bf16.mxu0 0
  %677 = vmatpush1.bf16.msra.mxu0 0
  %678 = vmatprep.subr.bf16.mxu0 0
  %679 = vmatpush1.bf16.msra.mxu0 0
  %680 = vmatprep.subr.bf16.mxu0 0
  %681 = vmatpush1.bf16.msra.mxu0 0
  %682 = vmatprep.subr.bf16.mxu0 0
  %683 = vmatpush1.bf16.msra.mxu0 0
  %684 = vmatprep.subr.bf16.mxu0 0
  %685 = vmatpush1.bf16.msra.mxu0 0
  %686 = vmatprep.mubr.bf16.mxu0 0
  %687 = vmatmul.mubr.bf16.gmra.mrb[0].mxu0 %v490
  %v688 = vpop.f32.mrb[0].mxu0
  %v689 = vadd.f32 %v636, %v688
  %v690 = vpop.f32.mrb[0].mxu0
  %v691 = vadd.f32 %v638, %v690
  %v692 = vpop.f32.mrb[0].mxu0
  %v693 = vadd.f32 %v640, %v692
  %v694 = vpop.f32.mrb[0].mxu0
  %v695 = vadd.f32 %v642, %v694
  %696 = vmatprep.mubr.bf16.mxu0 0
  %697 = vmatmul.mubr.bf16.gmra.mrb[0].mxu0 %v493
  %v698 = vpop.f32.mrb[0].mxu0
  %v699 = vadd.f32 %v646, %v698
  %v700 = vpop.f32.mrb[0].mxu0
  %v701 = vadd.f32 %v648, %v700
  %v702 = vpop.f32.mrb[0].mxu0
  %v703 = vadd.f32 %v650, %v702
  %v704 = vpop.f32.mrb[0].mxu0
  %v705 = vadd.f32 %v652, %v704
  %706 = vdwg.mxu0
  %v707 = vld [vmem:[%s2] sm:$0xff]
  %v708 = vld [vmem:[%s2 + $0x8] sm:$0xff]
  %v709 = vld [vmem:[%s2 + $0x10] sm:$0xff]
  %v710 = vld [vmem:[%s2 + $0x18] sm:$0xff]
  %v711 = vld [vmem:[%s3] sm:$0xff]
  %v712 = vld [vmem:[%s3 + $0x8] sm:$0xff]
  %v713 = vld [vmem:[%s3 + $0x10] sm:$0xff]
  %v714 = vld [vmem:[%s3 + $0x18] sm:$0xff]
  %v715 = vadd.f32 %v583, %v585
  %v716 = vadd.f32 %v715, %v689
  %v717 = vadd.f32 %v716, %v691
  %718 = vadd.xlane.f32.xlu0 %v717
  %v719 = vpop.xlane.xlu0 %718
  %v720 = vadd.f32 %v587, %v589
  %v721 = vadd.f32 %v720, %v693
  %v722 = vadd.f32 %v721, %v695
  %723 = vadd.xlane.f32.xlu0 %v722
  %v724 = vpop.xlane.xlu0 %723
  %v725 = vadd.f32 %v593, %v595
  %v726 = vadd.f32 %v725, %v699
  %v727 = vadd.f32 %v726, %v701
  %728 = vadd.xlane.f32.xlu0 %v727
  %v729 = vpop.xlane.xlu0 %728
  %v730 = vadd.f32 %v597, %v599
  %v731 = vadd.f32 %v730, %v703
  %v732 = vadd.f32 %v731, %v705
  %733 = vadd.xlane.f32.xlu0 %v732
  %v734 = vpop.xlane.xlu0 %733
  %v735 = vrcp.pop 512.0
  %v736 = vmul.f32 %v719, %v735
  %v737 = vmul.f32 %v724, %v735
  %v738 = vmul.f32 %v729, %v735
  %v739 = vmul.f32 %v734, %v735
  %v740 = vsub.f32 %v583, %v736
  %v741 = vsub.f32 %v585, %v736
  %v742 = vsub.f32 %v689, %v736
  %v743 = vsub.f32 %v691, %v736
  %v744 = vsub.f32 %v587, %v737
  %v745 = vsub.f32 %v589, %v737
  %v746 = vsub.f32 %v693, %v737
  %v747 = vsub.f32 %v695, %v737
  %v748 = vsub.f32 %v593, %v738
  %v749 = vsub.f32 %v595, %v738
  %v750 = vsub.f32 %v699, %v738
  %v751 = vsub.f32 %v701, %v738
  %v752 = vsub.f32 %v597, %v739
  %v753 = vsub.f32 %v599, %v739
  %v754 = vsub.f32 %v703, %v739
  %v755 = vsub.f32 %v705, %v739
  %v756 = vmul.f32 %v740, %v740
  %v757 = vmul.f32 %v741, %v741
  %v758 = vmul.f32 %v742, %v742
  %v759 = vmul.f32 %v743, %v743
  %v760 = vmul.f32 %v744, %v744
  %v761 = vmul.f32 %v745, %v745
  %v762 = vmul.f32 %v746, %v746
  %v763 = vmul.f32 %v747, %v747
  %v764 = vmul.f32 %v748, %v748
  %v765 = vmul.f32 %v749, %v749
  %v766 = vmul.f32 %v750, %v750
  %v767 = vmul.f32 %v751, %v751
  %v768 = vmul.f32 %v752, %v752
  %v769 = vmul.f32 %v753, %v753
  %v770 = vmul.f32 %v754, %v754
  %v771 = vmul.f32 %v755, %v755
  %v772 = vadd.f32 %v756, %v757
  %v773 = vadd.f32 %v772, %v758
  %v774 = vadd.f32 %v773, %v759
  %775 = vadd.xlane.f32.xlu0 %v774
  %v776 = vpop.xlane.xlu0 %775
  %v777 = vadd.f32 %v760, %v761
  %v778 = vadd.f32 %v777, %v762
  %v779 = vadd.f32 %v778, %v763
  %780 = vadd.xlane.f32.xlu0 %v779
  %v781 = vpop.xlane.xlu0 %780
  %v782 = vadd.f32 %v764, %v765
  %v783 = vadd.f32 %v782, %v766
  %v784 = vadd.f32 %v783, %v767
  %785 = vadd.xlane.f32.xlu0 %v784
  %v786 = vpop.xlane.xlu0 %785
  %v787 = vadd.f32 %v768, %v769
  %v788 = vadd.f32 %v787, %v770
  %v789 = vadd.f32 %v788, %v771
  %790 = vadd.xlane.f32.xlu0 %v789
  %v791 = vpop.xlane.xlu0 %790
  %v792 = vmul.f32 %v776, %v735
  %v793 = vmul.f32 %v781, %v735
  %v794 = vmul.f32 %v786, %v735
  %v795 = vmul.f32 %v791, %v735
  %v796 = vadd.f32 %v792, 1e-05
  %v797 = vadd.f32 %v793, 1e-05
  %v798 = vadd.f32 %v794, 1e-05
  %v799 = vadd.f32 %v795, 1e-05
  %v800 = vrsqrt.pop %v796
  %v801 = vrsqrt.pop %v797
  %v802 = vrsqrt.pop %v798
  %v803 = vrsqrt.pop %v799
  %v804 = vmul.f32 %v740, %v800
  %v805 = vmul.f32 %v741, %v800
  %v806 = vmul.f32 %v742, %v800
  %v807 = vmul.f32 %v743, %v800
  %v808 = vmul.f32 %v744, %v801
  %v809 = vmul.f32 %v745, %v801
  %v810 = vmul.f32 %v746, %v801
  %v811 = vmul.f32 %v747, %v801
  %v812 = vmul.f32 %v748, %v802
  %v813 = vmul.f32 %v749, %v802
  %v814 = vmul.f32 %v750, %v802
  %v815 = vmul.f32 %v751, %v802
  %v816 = vmul.f32 %v752, %v803
  %v817 = vmul.f32 %v753, %v803
  %v818 = vmul.f32 %v754, %v803
  %v819 = vmul.f32 %v755, %v803
  %821 = vset.pattern.permute.xlu0 0
  %822 = vperm.xlu0 %821, %v707
  %v823 = vpop.permute.xlu0 %822
  %826 = vset.pattern.permute.xlu0 0
  %827 = vperm.xlu0 %826, %v708
  %v828 = vpop.permute.xlu0 %827
  %831 = vset.pattern.permute.xlu0 0
  %832 = vperm.xlu0 %831, %v709
  %v833 = vpop.permute.xlu0 %832
  %836 = vset.pattern.permute.xlu0 0
  %837 = vperm.xlu0 %836, %v710
  %v838 = vpop.permute.xlu0 %837
  %v840 = vmul.f32 %v804, %v823
  %v841 = vmul.f32 %v805, %v823
  %v842 = vmul.f32 %v806, %v823
  %v843 = vmul.f32 %v807, %v823
  %v844 = vmul.f32 %v808, %v828
  %v845 = vmul.f32 %v809, %v828
  %v846 = vmul.f32 %v810, %v828
  %v847 = vmul.f32 %v811, %v828
  %v848 = vmul.f32 %v812, %v833
  %v849 = vmul.f32 %v813, %v833
  %v850 = vmul.f32 %v814, %v833
  %v851 = vmul.f32 %v815, %v833
  %v852 = vmul.f32 %v816, %v838
  %v853 = vmul.f32 %v817, %v838
  %v854 = vmul.f32 %v818, %v838
  %v855 = vmul.f32 %v819, %v838
  %857 = vset.pattern.permute.xlu0 0
  %858 = vperm.xlu0 %857, %v711
  %v859 = vpop.permute.xlu0 %858
  %862 = vset.pattern.permute.xlu0 0
  %863 = vperm.xlu0 %862, %v712
  %v864 = vpop.permute.xlu0 %863
  %867 = vset.pattern.permute.xlu0 0
  %868 = vperm.xlu0 %867, %v713
  %v869 = vpop.permute.xlu0 %868
  %872 = vset.pattern.permute.xlu0 0
  %873 = vperm.xlu0 %872, %v714
  %v874 = vpop.permute.xlu0 %873
  %v876 = vadd.f32 %v840, %v859
  %v877 = vadd.f32 %v841, %v859
  %v878 = vadd.f32 %v842, %v859
  %v879 = vadd.f32 %v843, %v859
  %v880 = vadd.f32 %v844, %v864
  %v881 = vadd.f32 %v845, %v864
  %v882 = vadd.f32 %v846, %v864
  %v883 = vadd.f32 %v847, %v864
  %v884 = vadd.f32 %v848, %v869
  %v885 = vadd.f32 %v849, %v869
  %v886 = vadd.f32 %v850, %v869
  %v887 = vadd.f32 %v851, %v869
  %v888 = vadd.f32 %v852, %v874
  %v889 = vadd.f32 %v853, %v874
  %v890 = vadd.f32 %v854, %v874
  %v891 = vadd.f32 %v855, %v874
  %v892 = vmax.f32 %v876, 0.0
  %v893 = vmax.f32 %v877, 0.0
  %v894 = vmax.f32 %v878, 0.0
  %v895 = vmax.f32 %v879, 0.0
  %v896 = vmax.f32 %v880, 0.0
  %v897 = vmax.f32 %v881, 0.0
  %v898 = vmax.f32 %v882, 0.0
  %v899 = vmax.f32 %v883, 0.0
  %v900 = vmax.f32 %v884, 0.0
  %v901 = vmax.f32 %v885, 0.0
  %v902 = vmax.f32 %v886, 0.0
  %v903 = vmax.f32 %v887, 0.0
  %v904 = vmax.f32 %v888, 0.0
  %v905 = vmax.f32 %v889, 0.0
  %v906 = vmax.f32 %v890, 0.0
  %v907 = vmax.f32 %v891, 0.0
  %908 = vst [vmem:[%s4] sm:$0xff] %v892
  %909 = vst [vmem:[%s4 + $0x8] sm:$0xff] %v893
  %910 = vst [vmem:[%s4 + $0x10] sm:$0xff] %v894
  %911 = vst [vmem:[%s4 + $0x18] sm:$0xff] %v895
  %912 = vst [vmem:[%s4 + $0x20] sm:$0xff] %v896
  %913 = vst [vmem:[%s4 + $0x28] sm:$0xff] %v897
  %914 = vst [vmem:[%s4 + $0x30] sm:$0xff] %v898
  %915 = vst [vmem:[%s4 + $0x38] sm:$0xff] %v899
  %916 = vst [vmem:[%s4 + $0x40] sm:$0xff] %v900
  %917 = vst [vmem:[%s4 + $0x48] sm:$0xff] %v901
  %918 = vst [vmem:[%s4 + $0x50] sm:$0xff] %v902
  %919 = vst [vmem:[%s4 + $0x58] sm:$0xff] %v903
  %920 = vst [vmem:[%s4 + $0x60] sm:$0xff] %v904
  %921 = vst [vmem:[%s4 + $0x68] sm:$0xff] %v905
  %922 = vst [vmem:[%s4 + $0x70] sm:$0xff] %v906
  %923 = vst [vmem:[%s4 + $0x78] sm:$0xff] %v907
  // Predicated region
  $region18: #{resnet_forward.21} parent=0 // pred_check
    _
  $region19: #{resnet_forward.21} parent=0 // pred_check_branch
    %925 = sbr.rel (0) target = $region21
  $region20: #{resnet_forward.21} parent=0 // pred_region
    _
  $region21: #{resnet_forward.21} parent=0 // pred_fallthru
    _
  // Predicated region
  $region22: #{resnet_forward.21} parent=0 // pred_check
    _
  $region23: #{resnet_forward.21} parent=0 // pred_check_branch
    %927 = sbr.rel (0) target = $region25
  $region24: #{resnet_forward.21} parent=0 // pred_region
    _
  $region25: #{resnet_forward.21} parent=0 // pred_fallthru
    _

// kernel: resnet_forward.20
$region0: #{resnet_forward.20}
  #allocation0 [shape = 'u32[]', space=smem, size = 0x4, offset = 0x4, fixed_abs, tag = 'smem constant byte address 0x4 - core index']
  #allocation1 [shape = 'u32[144,128]{1,0:T(1,128)}', space=vmem, size = 0x12000, scoped, tag = 'internal scratch']
  %s0 = inlined_call_operand.vmem [shape: bf16[288,512], index: 0, kind: input, shape index: {}]
  %s1 = inlined_call_operand.vmem [shape: bf16[32,288], index: 1, kind: input, shape index: {}]
  %s2 = inlined_call_operand.vmem [shape: f32[32,1], index: 2, kind: input, shape index: {}]
  %s3 = inlined_call_operand.vmem [shape: f32[32,1], index: 3, kind: input, shape index: {}]
  %s4 = inlined_call_operand.vmem [shape: bf16[16,512], index: 4, kind: input, shape index: {}]
  %s5 = inlined_call_operand.vmem [shape: bf16[32,16], index: 5, kind: input, shape index: {}]
  %s6 = inlined_call_operand.vmem [shape: f32[32,1], index: 6, kind: input, shape index: {}]
  %s7 = inlined_call_operand.vmem [shape: f32[32,1], index: 7, kind: input, shape index: {}]
  %s8 = inlined_call_operand.vmem [shape: f32[32,512], index: 8, kind: output, shape index: {}]
  %s9 = sld [smem:[#allocation0]]
  $region42: #{resnet_forward.20} parent=0
    _
  %s11 = ssub.s32 1, %s9
  %s12 = scalar_select 0, %s11, %s9
  // Predicated region
  $region2: #{resnet_forward.20} parent=0 // pred_check
    _
  $region3: #{resnet_forward.20} parent=0 // pred_check_branch
    %14 = sbr.rel (0) target = $region5
  $region4: #{resnet_forward.20} parent=0 // pred_region
    _
  $region5: #{resnet_forward.20} parent=0 // pred_fallthru
    _
  // Predicated region
  $region6: #{resnet_forward.20} parent=0 // pred_check
    _
  $region7: #{resnet_forward.20} parent=0 // pred_check_branch
    %16 = sbr.rel (0) target = $region9
  $region8: #{resnet_forward.20} parent=0 // pred_region
    _
  $region9: #{resnet_forward.20} parent=0 // pred_fallthru
    _
  // Predicated region
  $region10: #{resnet_forward.20} parent=0 // pred_check
    _
  $region11: #{resnet_forward.20} parent=0 // pred_check_branch
    %18 = sbr.rel (0) target = $region13
  $region12: #{resnet_forward.20} parent=0 // pred_region
    _
  $region13: #{resnet_forward.20} parent=0 // pred_fallthru
    _
  // Predicated region
  $region14: #{resnet_forward.20} parent=0 // pred_check
    _
  $region15: #{resnet_forward.20} parent=0 // pred_check_branch
    %20 = sbr.rel (0) target = $region17
  $region16: #{resnet_forward.20} parent=0 // pred_region
    _
  $region17: #{resnet_forward.20} parent=0 // pred_fallthru
    _
  // Predicated region
  $region18: #{resnet_forward.20} parent=0 // pred_check
    _
  $region19: #{resnet_forward.20} parent=0 // pred_check_branch
    %22 = sbr.rel (0) target = $region21
  $region20: #{resnet_forward.20} parent=0 // pred_region
    _
  $region21: #{resnet_forward.20} parent=0 // pred_fallthru
    _
  // Predicated region
  $region22: #{resnet_forward.20} parent=0 // pred_check
    _
  $region23: #{resnet_forward.20} parent=0 // pred_check_branch
    %24 = sbr.rel (0) target = $region25
  $region24: #{resnet_forward.20} parent=0 // pred_region
    _
  $region25: #{resnet_forward.20} parent=0 // pred_fallthru
    _
  // Predicated region
  $region26: #{resnet_forward.20} parent=0 // pred_check
    _
  $region27: #{resnet_forward.20} parent=0 // pred_check_branch
    %26 = sbr.rel (0) target = $region29
  $region28: #{resnet_forward.20} parent=0 // pred_region
    _
  $region29: #{resnet_forward.20} parent=0 // pred_fallthru
    _
  // Predicated region
  $region30: #{resnet_forward.20} parent=0 // pred_check
    _
  $region31: #{resnet_forward.20} parent=0 // pred_check_branch
    %28 = sbr.rel (0) target = $region33
  $region32: #{resnet_forward.20} parent=0 // pred_region
    _
  $region33: #{resnet_forward.20} parent=0 // pred_fallthru
    _
  %v30 = vld [vmem:[%s1] sm:$0xff]
  %v31 = vld [vmem:[%s1 + $0x8] sm:$0xf]
  %v32 = vld [vmem:[%s1 + $0xc] sm:$0xff]
  %v33 = vld [vmem:[%s1 + $0x14] sm:$0xf]
  %v34 = vld [vmem:[%s1 + $0x18] sm:$0xff]
  %v35 = vld [vmem:[%s1 + $0x20] sm:$0xf]
  %v36 = vld [vmem:[%s1 + $0x24] sm:$0xff]
  %v37 = vld [vmem:[%s1 + $0x2c] sm:$0xf]
  %v38 = vld [vmem:[%s0] sm:$0xff]
  %v39 = vld [vmem:[%s0 + $0x8] sm:$0xff]
  %v40 = vld [vmem:[%s0 + $0x10] sm:$0xff]
  %v41 = vld [vmem:[%s0 + $0x18] sm:$0xff]
  %v42 = vld [vmem:[%s0 + $0x20] sm:$0xff]
  %v43 = vld [vmem:[%s0 + $0x28] sm:$0xff]
  %v44 = vld [vmem:[%s0 + $0x30] sm:$0xff]
  %v45 = vld [vmem:[%s0 + $0x38] sm:$0xff]
  %v46 = vld [vmem:[%s0 + $0x40] sm:$0xff]
  %v47 = vld [vmem:[%s0 + $0x48] sm:$0xff]
  %v48 = vld [vmem:[%s0 + $0x50] sm:$0xff]
  %v49 = vld [vmem:[%s0 + $0x58] sm:$0xff]
  %v50 = vld [vmem:[%s0 + $0x60] sm:$0xff]
  %v51 = vld [vmem:[%s0 + $0x68] sm:$0xff]
  %v52 = vld [vmem:[%s0 + $0x70] sm:$0xff]
  %v53 = vld [vmem:[%s0 + $0x78] sm:$0xff]
  %v54 = vld [vmem:[%s0 + $0x80] sm:$0xff]
  %v55 = vld [vmem:[%s0 + $0x88] sm:$0xff]
  %v56 = vld [vmem:[%s0 + $0x90] sm:$0xff]
  %v57 = vld [vmem:[%s0 + $0x98] sm:$0xff]
  %v58 = vld [vmem:[%s0 + $0xa0] sm:$0xff]
  %v59 = vld [vmem:[%s0 + $0xa8] sm:$0xff]
  %v60 = vld [vmem:[%s0 + $0xb0] sm:$0xff]
  %v61 = vld [vmem:[%s0 + $0xb8] sm:$0xff]
  %v62 = vld [vmem:[%s0 + $0xc0] sm:$0xff]
  %v63 = vld [vmem:[%s0 + $0xc8] sm:$0xff]
  %v64 = vld [vmem:[%s0 + $0xd0] sm:$0xff]
  %v65 = vld [vmem:[%s0 + $0xd8] sm:$0xff]
  %v66 = vld [vmem:[%s0 + $0xe0] sm:$0xff]
  %v67 = vld [vmem:[%s0 + $0xe8] sm:$0xff]
  %v68 = vld [vmem:[%s0 + $0xf0] sm:$0xff]
  %v69 = vld [vmem:[%s0 + $0xf8] sm:$0xff]
  %v70 = vld [vmem:[%s0 + $0x100] sm:$0xff]
  %v71 = vld [vmem:[%s0 + $0x108] sm:$0xff]
  %v72 = vld [vmem:[%s0 + $0x110] sm:$0xff]
  %v73 = vld [vmem:[%s0 + $0x118] sm:$0xff]
  %v74 = vld [vmem:[%s0 + $0x120] sm:$0xff]
  %v75 = vld [vmem:[%s0 + $0x128] sm:$0xff]
  %v76 = vld [vmem:[%s0 + $0x130] sm:$0xff]
  %v77 = vld [vmem:[%s0 + $0x138] sm:$0xff]
  %v78 = vld [vmem:[%s0 + $0x140] sm:$0xff]
  %v79 = vld [vmem:[%s0 + $0x148] sm:$0xff]
  %v80 = vld [vmem:[%s0 + $0x150] sm:$0xff]
  %v81 = vld [vmem:[%s0 + $0x158] sm:$0xff]
  %v82 = vld [vmem:[%s0 + $0x160] sm:$0xff]
  %v83 = vld [vmem:[%s0 + $0x168] sm:$0xff]
  %v84 = vld [vmem:[%s0 + $0x170] sm:$0xff]
  %v85 = vld [vmem:[%s0 + $0x178] sm:$0xff]
  %v86 = vld [vmem:[%s0 + $0x180] sm:$0xff]
  %v87 = vld [vmem:[%s0 + $0x188] sm:$0xff]
  %v88 = vld [vmem:[%s0 + $0x190] sm:$0xff]
  %v89 = vld [vmem:[%s0 + $0x198] sm:$0xff]
  %v90 = vld [vmem:[%s0 + $0x1a0] sm:$0xff]
  %v91 = vld [vmem:[%s0 + $0x1a8] sm:$0xff]
  %v92 = vld [vmem:[%s0 + $0x1b0] sm:$0xff]
  %v93 = vld [vmem:[%s0 + $0x1b8] sm:$0xff]
  %v94 = vld [vmem:[%s0 + $0x1c0] sm:$0xff]
  %v95 = vld [vmem:[%s0 + $0x1c8] sm:$0xff]
  %v96 = vld [vmem:[%s0 + $0x1d0] sm:$0xff]
  %v97 = vld [vmem:[%s0 + $0x1d8] sm:$0xff]
  %v98 = vld [vmem:[%s0 + $0x1e0] sm:$0xff]
  %v99 = vld [vmem:[%s0 + $0x1e8] sm:$0xff]
  %v100 = vld [vmem:[%s0 + $0x1f0] sm:$0xff]
  %v101 = vld [vmem:[%s0 + $0x1f8] sm:$0xff]
  %v102 = vld [vmem:[%s0 + $0x200] sm:$0xff]
  %v103 = vld [vmem:[%s0 + $0x208] sm:$0xff]
  %v104 = vld [vmem:[%s0 + $0x210] sm:$0xff]
  %v105 = vld [vmem:[%s0 + $0x218] sm:$0xff]
  %v106 = vld [vmem:[%s0 + $0x220] sm:$0xff]
  %v107 = vld [vmem:[%s0 + $0x228] sm:$0xff]
  %v108 = vld [vmem:[%s0 + $0x230] sm:$0xff]
  %v109 = vld [vmem:[%s0 + $0x238] sm:$0xff]
  %v118 = vunpack.c.l.b16 %v30
  %v119 = vunpack.c.h.b16 %v30
  %v120 = vunpack.c.l.b16 %v31
  %v121 = vunpack.c.l.b16 %v32
  %v122 = vunpack.c.h.b16 %v32
  %v123 = vunpack.c.l.b16 %v33
  %v124 = vunpack.c.l.b16 %v34
  %v125 = vunpack.c.h.b16 %v34
  %v126 = vunpack.c.l.b16 %v35
  %v127 = vunpack.c.l.b16 %v36
  %v128 = vunpack.c.h.b16 %v36
  %v129 = vunpack.c.l.b16 %v37
  %v130 = vpack.c.b16 %v121, %v118
  %v131 = vpack.c.b16 %v122, %v119
  %v132 = vpack.c.b16 %v123, %v120
  %v133 = vpack.c.b16 %v127, %v124
  %v134 = vpack.c.b16 %v128, %v125
  %v135 = vpack.c.b16 %v129, %v126
  %v212 = vunpack.c.l.b16 %v38
  %v213 = vunpack.c.h.b16 %v38
  %v214 = vunpack.c.l.b16 %v39
  %v215 = vunpack.c.h.b16 %v39
  %v216 = vunpack.c.l.b16 %v40
  %v217 = vunpack.c.h.b16 %v40
  %v218 = vunpack.c.l.b16 %v41
  %v219 = vunpack.c.h.b16 %v41
  %v220 = vunpack.c.l.b16 %v42
  %v221 = vunpack.c.h.b16 %v42
  %v222 = vunpack.c.l.b16 %v43
  %v223 = vunpack.c.h.b16 %v43
  %v224 = vunpack.c.l.b16 %v44
  %v225 = vunpack.c.h.b16 %v44
  %v226 = vunpack.c.l.b16 %v45
  %v227 = vunpack.c.h.b16 %v45
  %v228 = vunpack.c.l.b16 %v46
  %v229 = vunpack.c.h.b16 %v46
  %v230 = vunpack.c.l.b16 %v47
  %v231 = vunpack.c.h.b16 %v47
  %v232 = vunpack.c.l.b16 %v48
  %v233 = vunpack.c.h.b16 %v48
  %v234 = vunpack.c.l.b16 %v49
  %v235 = vunpack.c.h.b16 %v49
  %v236 = vunpack.c.l.b16 %v50
  %v237 = vunpack.c.h.b16 %v50
  %v238 = vunpack.c.l.b16 %v51
  %v239 = vunpack.c.h.b16 %v51
  %v240 = vunpack.c.l.b16 %v52
  %v241 = vunpack.c.h.b16 %v52
  %v242 = vunpack.c.l.b16 %v53
  %v243 = vunpack.c.h.b16 %v53
  %v244 = vunpack.c.l.b16 %v54
  %v245 = vunpack.c.h.b16 %v54
  %v246 = vunpack.c.l.b16 %v55
  %v247 = vunpack.c.h.b16 %v55
  %v248 = vunpack.c.l.b16 %v56
  %v249 = vunpack.c.h.b16 %v56
  %v250 = vunpack.c.l.b16 %v57
  %v251 = vunpack.c.h.b16 %v57
  %v252 = vunpack.c.l.b16 %v58
  %v253 = vunpack.c.h.b16 %v58
  %v254 = vunpack.c.l.b16 %v59
  %v255 = vunpack.c.h.b16 %v59
  %v256 = vunpack.c.l.b16 %v60
  %v257 = vunpack.c.h.b16 %v60
  %v258 = vunpack.c.l.b16 %v61
  %v259 = vunpack.c.h.b16 %v61
  %v260 = vunpack.c.l.b16 %v62
  %v261 = vunpack.c.h.b16 %v62
  %v262 = vunpack.c.l.b16 %v63
  %v263 = vunpack.c.h.b16 %v63
  %v264 = vunpack.c.l.b16 %v64
  %v265 = vunpack.c.h.b16 %v64
  %v266 = vunpack.c.l.b16 %v65
  %v267 = vunpack.c.h.b16 %v65
  %v268 = vunpack.c.l.b16 %v66
  %v269 = vunpack.c.h.b16 %v66
  %v270 = vunpack.c.l.b16 %v67
  %v271 = vunpack.c.h.b16 %v67
  %v272 = vunpack.c.l.b16 %v68
  %v273 = vunpack.c.h.b16 %v68
  %v274 = vunpack.c.l.b16 %v69
  %v275 = vunpack.c.h.b16 %v69
  %v276 = vunpack.c.l.b16 %v70
  %v277 = vunpack.c.h.b16 %v70
  %v278 = vunpack.c.l.b16 %v71
  %v279 = vunpack.c.h.b16 %v71
  %v280 = vunpack.c.l.b16 %v72
  %v281 = vunpack.c.h.b16 %v72
  %v282 = vunpack.c.l.b16 %v73
  %v283 = vunpack.c.h.b16 %v73
  %v284 = vunpack.c.l.b16 %v74
  %v285 = vunpack.c.h.b16 %v74
  %v286 = vunpack.c.l.b16 %v75
  %v287 = vunpack.c.h.b16 %v75
  %v288 = vunpack.c.l.b16 %v76
  %v289 = vunpack.c.h.b16 %v76
  %v290 = vunpack.c.l.b16 %v77
  %v291 = vunpack.c.h.b16 %v77
  %v292 = vunpack.c.l.b16 %v78
  %v293 = vunpack.c.h.b16 %v78
  %v294 = vunpack.c.l.b16 %v79
  %v295 = vunpack.c.h.b16 %v79
  %v296 = vunpack.c.l.b16 %v80
  %v297 = vunpack.c.h.b16 %v80
  %v298 = vunpack.c.l.b16 %v81
  %v299 = vunpack.c.h.b16 %v81
  %v300 = vunpack.c.l.b16 %v82
  %v301 = vunpack.c.h.b16 %v82
  %v302 = vunpack.c.l.b16 %v83
  %v303 = vunpack.c.h.b16 %v83
  %v304 = vunpack.c.l.b16 %v84
  %v305 = vunpack.c.h.b16 %v84
  %v306 = vunpack.c.l.b16 %v85
  %v307 = vunpack.c.h.b16 %v85
  %v308 = vunpack.c.l.b16 %v86
  %v309 = vunpack.c.h.b16 %v86
  %v310 = vunpack.c.l.b16 %v87
  %v311 = vunpack.c.h.b16 %v87
  %v312 = vunpack.c.l.b16 %v88
  %v313 = vunpack.c.h.b16 %v88
  %v314 = vunpack.c.l.b16 %v89
  %v315 = vunpack.c.h.b16 %v89
  %v316 = vunpack.c.l.b16 %v90
  %v317 = vunpack.c.h.b16 %v90
  %v318 = vunpack.c.l.b16 %v91
  %v319 = vunpack.c.h.b16 %v91
  %v320 = vunpack.c.l.b16 %v92
  %v321 = vunpack.c.h.b16 %v92
  %v322 = vunpack.c.l.b16 %v93
  %v323 = vunpack.c.h.b16 %v93
  %v324 = vunpack.c.l.b16 %v94
  %v325 = vunpack.c.h.b16 %v94
  %v326 = vunpack.c.l.b16 %v95
  %v327 = vunpack.c.h.b16 %v95
  %v328 = vunpack.c.l.b16 %v96
  %v329 = vunpack.c.h.b16 %v96
  %v330 = vunpack.c.l.b16 %v97
  %v331 = vunpack.c.h.b16 %v97
  %v332 = vunpack.c.l.b16 %v98
  %v333 = vunpack.c.h.b16 %v98
  %v334 = vunpack.c.l.b16 %v99
  %v335 = vunpack.c.h.b16 %v99
  %v336 = vunpack.c.l.b16 %v100
  %v337 = vunpack.c.h.b16 %v100
  %v338 = vunpack.c.l.b16 %v101
  %v339 = vunpack.c.h.b16 %v101
  %v340 = vunpack.c.l.b16 %v102
  %v341 = vunpack.c.h.b16 %v102
  %v342 = vunpack.c.l.b16 %v103
  %v343 = vunpack.c.h.b16 %v103
  %v344 = vunpack.c.l.b16 %v104
  %v345 = vunpack.c.h.b16 %v104
  %v346 = vunpack.c.l.b16 %v105
  %v347 = vunpack.c.h.b16 %v105
  %v348 = vunpack.c.l.b16 %v106
  %v349 = vunpack.c.h.b16 %v106
  %v350 = vunpack.c.l.b16 %v107
  %v351 = vunpack.c.h.b16 %v107
  %v352 = vunpack.c.l.b16 %v108
  %v353 = vunpack.c.h.b16 %v108
  %v354 = vunpack.c.l.b16 %v109
  %v355 = vunpack.c.h.b16 %v109
  %v356 = vpack.c.b16 %v216, %v212
  %v357 = vpack.c.b16 %v217, %v213
  %v358 = vpack.c.b16 %v218, %v214
  %v359 = vpack.c.b16 %v219, %v215
  %v360 = vpack.c.b16 %v224, %v220
  %v361 = vpack.c.b16 %v225, %v221
  %v362 = vpack.c.b16 %v226, %v222
  %v363 = vpack.c.b16 %v227, %v223
  %v364 = vpack.c.b16 %v232, %v228
  %v365 = vpack.c.b16 %v233, %v229
  %v366 = vpack.c.b16 %v234, %v230
  %v367 = vpack.c.b16 %v235, %v231
  %v368 = vpack.c.b16 %v240, %v236
  %v369 = vpack.c.b16 %v241, %v237
  %v370 = vpack.c.b16 %v242, %v238
  %v371 = vpack.c.b16 %v243, %v239
  %v372 = vpack.c.b16 %v248, %v244
  %v373 = vpack.c.b16 %v249, %v245
  %v374 = vpack.c.b16 %v250, %v246
  %v375 = vpack.c.b16 %v251, %v247
  %v376 = vpack.c.b16 %v256, %v252
  %v377 = vpack.c.b16 %v257, %v253
  %v378 = vpack.c.b16 %v258, %v254
  %v379 = vpack.c.b16 %v259, %v255
  %v380 = vpack.c.b16 %v264, %v260
  %v381 = vpack.c.b16 %v265, %v261
  %v382 = vpack.c.b16 %v266, %v262
  %v383 = vpack.c.b16 %v267, %v263
  %v384 = vpack.c.b16 %v272, %v268
  %v385 = vpack.c.b16 %v273, %v269
  %v386 = vpack.c.b16 %v274, %v270
  %v387 = vpack.c.b16 %v275, %v271
  %v388 = vpack.c.b16 %v280, %v276
  %v389 = vpack.c.b16 %v281, %v277
  %v390 = vpack.c.b16 %v282, %v278
  %v391 = vpack.c.b16 %v283, %v279
  %v392 = vpack.c.b16 %v288, %v284
  %v393 = vpack.c.b16 %v289, %v285
  %v394 = vpack.c.b16 %v290, %v286
  %v395 = vpack.c.b16 %v291, %v287
  %v396 = vpack.c.b16 %v296, %v292
  %v397 = vpack.c.b16 %v297, %v293
  %v398 = vpack.c.b16 %v298, %v294
  %v399 = vpack.c.b16 %v299, %v295
  %v400 = vpack.c.b16 %v304, %v300
  %v401 = vpack.c.b16 %v305, %v301
  %v402 = vpack.c.b16 %v306, %v302
  %v403 = vpack.c.b16 %v307, %v303
  %v404 = vpack.c.b16 %v312, %v308
  %v405 = vpack.c.b16 %v313, %v309
  %v406 = vpack.c.b16 %v314, %v310
  %v407 = vpack.c.b16 %v315, %v311
  %v408 = vpack.c.b16 %v320, %v316
  %v409 = vpack.c.b16 %v321, %v317
  %v410 = vpack.c.b16 %v322, %v318
  %v411 = vpack.c.b16 %v323, %v319
  %v412 = vpack.c.b16 %v328, %v324
  %v413 = vpack.c.b16 %v329, %v325
  %v414 = vpack.c.b16 %v330, %v326
  %v415 = vpack.c.b16 %v331, %v327
  %v416 = vpack.c.b16 %v336, %v332
  %v417 = vpack.c.b16 %v337, %v333
  %v418 = vpack.c.b16 %v338, %v334
  %v419 = vpack.c.b16 %v339, %v335
  %v420 = vpack.c.b16 %v344, %v340
  %v421 = vpack.c.b16 %v345, %v341
  %v422 = vpack.c.b16 %v346, %v342
  %v423 = vpack.c.b16 %v347, %v343
  %v424 = vpack.c.b16 %v352, %v348
  %v425 = vpack.c.b16 %v353, %v349
  %v426 = vpack.c.b16 %v354, %v350
  %v427 = vpack.c.b16 %v355, %v351
  %vm500 = vcmask 261120
  %v502 = vsel %vm500, %v132, 0
  %v505 = vsel %vm500, %v135, 0
  %507 = vmatprep.subr.bf16.mxu0 %v357
  %508 = vmatpush1.bf16.msra.mxu0 %v356
  %509 = vmatprep.subr.bf16.mxu0 %v361
  %510 = vmatpush1.bf16.msra.mxu0 %v360
  %511 = vmatprep.subr.bf16.mxu0 %v365
  %512 = vmatpush1.bf16.msra.mxu0 %v364
  %513 = vmatprep.subr.bf16.mxu0 %v369
  %514 = vmatpush1.bf16.msra.mxu0 %v368
  %515 = vmatprep.subr.bf16.mxu0 %v373
  %516 = vmatpush1.bf16.msra.mxu0 %v372
  %517 = vmatprep.subr.bf16.mxu0 %v377
  %518 = vmatpush1.bf16.msra.mxu0 %v376
  %519 = vmatprep.subr.bf16.mxu0 %v381
  %520 = vmatpush1.bf16.msra.mxu0 %v380
  %521 = vmatprep.subr.bf16.mxu0 %v385
  %522 = vmatpush1.bf16.msra.mxu0 %v384
  %523 = vmatprep.subr.bf16.mxu0 %v389
  %524 = vmatpush1.bf16.msra.mxu0 %v388
  %525 = vmatprep.subr.bf16.mxu0 %v393
  %526 = vmatpush1.bf16.msra.mxu0 %v392
  %527 = vmatprep.subr.bf16.mxu0 %v397
  %528 = vmatpush1.bf16.msra.mxu0 %v396
  %529 = vmatprep.subr.bf16.mxu0 %v401
  %530 = vmatpush1.bf16.msra.mxu0 %v400
  %531 = vmatprep.subr.bf16.mxu0 %v405
  %532 = vmatpush1.bf16.msra.mxu0 %v404
  %533 = vmatprep.subr.bf16.mxu0 %v409
  %534 = vmatpush1.bf16.msra.mxu0 %v408
  %535 = vmatprep.subr.bf16.mxu0 %v413
  %536 = vmatpush1.bf16.msra.mxu0 %v412
  %537 = vmatprep.subr.bf16.mxu0 %v417
  %538 = vmatpush1.bf16.msra.mxu0 %v416
  %539 = vmatprep.mubr.bf16.mxu0 %v131
  %540 = vmatmul.mubr.bf16.gmra.mrb[0].mxu0 %v130
  %v541 = vpop.f32.mrb[0].mxu0
  %v542 = vadd.f32 0.0, %v541
  %v543 = vpop.f32.mrb[0].mxu0
  %v544 = vadd.f32 0.0, %v543
  %v545 = vpop.f32.mrb[0].mxu0
  %v546 = vadd.f32 0.0, %v545
  %v547 = vpop.f32.mrb[0].mxu0
  %v548 = vadd.f32 0.0, %v547
  %549 = vmatprep.mubr.bf16.mxu0 %v134
  %550 = vmatmul.mubr.bf16.gmra.mrb[0].mxu0 %v133
  %v551 = vpop.f32.mrb[0].mxu0
  %v552 = vadd.f32 0.0, %v551
  %v553 = vpop.f32.mrb[0].mxu0
  %v554 = vadd.f32 0.0, %v553
  %v555 = vpop.f32.mrb[0].mxu0
  %v556 = vadd.f32 0.0, %v555
  %v557 = vpop.f32.mrb[0].mxu0
  %v558 = vadd.f32 0.0, %v557
  %559 = vdwg.mxu0
  %560 = vmatprep.subr.bf16.mxu0 %v421
  %561 = vmatpush1.bf16.msra.mxu0 %v420
  %562 = vmatprep.subr.bf16.mxu0 %v425
  %563 = vmatpush1.bf16.msra.mxu0 %v424
  %564 = vmatprep.subr.bf16.mxu0 0
  %565 = vmatpush1.bf16.msra.mxu0 0
  %566 = vmatprep.subr.bf16.mxu0 0
  %567 = vmatpush1.bf16.msra.mxu0 0
  %568 = vmatprep.subr.bf16.mxu0 0
  %569 = vmatpush1.bf16.msra.mxu0 0
  %570 = vmatprep.subr.bf16.mxu0 0
  %571 = vmatpush1.bf16.msra.mxu0 0
  %572 = vmatprep.subr.bf16.mxu0 0
  %573 = vmatpush1.bf16.msra.mxu0 0
  %574 = vmatprep.subr.bf16.mxu0 0
  %575 = vmatpush1.bf16.msra.mxu0 0
  %576 = vmatprep.subr.bf16.mxu0 0
  %577 = vmatpush1.bf16.msra.mxu0 0
  %578 = vmatprep.subr.bf16.mxu0 0
  %579 = vmatpush1.bf16.msra.mxu0 0
  %580 = vmatprep.subr.bf16.mxu0 0
  %581 = vmatpush1.bf16.msra.mxu0 0
  %582 = vmatprep.subr.bf16.mxu0 0
  %583 = vmatpush1.bf16.msra.mxu0 0
  %584 = vmatprep.subr.bf16.mxu0 0
  %585 = vmatpush1.bf16.msra.mxu0 0
  %586 = vmatprep.subr.bf16.mxu0 0
  %587 = vmatpush1.bf16.msra.mxu0 0
  %588 = vmatprep.subr.bf16.mxu0 0
  %589 = vmatpush1.bf16.msra.mxu0 0
  %590 = vmatprep.subr.bf16.mxu0 0
  %591 = vmatpush1.bf16.msra.mxu0 0
  %592 = vmatprep.mubr.bf16.mxu0 0
  %593 = vmatmul.mubr.bf16.gmra.mrb[0].mxu0 %v502
  %v594 = vpop.f32.mrb[0].mxu0
  %v595 = vadd.f32 %v542, %v594
  %v596 = vpop.f32.mrb[0].mxu0
  %v597 = vadd.f32 %v544, %v596
  %v598 = vpop.f32.mrb[0].mxu0
  %v599 = vadd.f32 %v546, %v598
  %v600 = vpop.f32.mrb[0].mxu0
  %v601 = vadd.f32 %v548, %v600
  %602 = vmatprep.mubr.bf16.mxu0 0
  %603 = vmatmul.mubr.bf16.gmra.mrb[0].mxu0 %v505
  %v604 = vpop.f32.mrb[0].mxu0
  %v605 = vadd.f32 %v552, %v604
  %v606 = vpop.f32.mrb[0].mxu0
  %v607 = vadd.f32 %v554, %v606
  %v608 = vpop.f32.mrb[0].mxu0
  %v609 = vadd.f32 %v556, %v608
  %v610 = vpop.f32.mrb[0].mxu0
  %v611 = vadd.f32 %v558, %v610
  %612 = vdwg.mxu0
  %613 = vmatprep.subr.bf16.mxu0 %v359
  %614 = vmatpush1.bf16.msra.mxu0 %v358
  %615 = vmatprep.subr.bf16.mxu0 %v363
  %616 = vmatpush1.bf16.msra.mxu0 %v362
  %617 = vmatprep.subr.bf16.mxu0 %v367
  %618 = vmatpush1.bf16.msra.mxu0 %v366
  %619 = vmatprep.subr.bf16.mxu0 %v371
  %620 = vmatpush1.bf16.msra.mxu0 %v370
  %621 = vmatprep.subr.bf16.mxu0 %v375
  %622 = vmatpush1.bf16.msra.mxu0 %v374
  %623 = vmatprep.subr.bf16.mxu0 %v379
  %624 = vmatpush1.bf16.msra.mxu0 %v378
  %625 = vmatprep.subr.bf16.mxu0 %v383
  %626 = vmatpush1.bf16.msra.mxu0 %v382
  %627 = vmatprep.subr.bf16.mxu0 %v387
  %628 = vmatpush1.bf16.msra.mxu0 %v386
  %629 = vmatprep.subr.bf16.mxu0 %v391
  %630 = vmatpush1.bf16.msra.mxu0 %v390
  %631 = vmatprep.subr.bf16.mxu0 %v395
  %632 = vmatpush1.bf16.msra.mxu0 %v394
  %633 = vmatprep.subr.bf16.mxu0 %v399
  %634 = vmatpush1.bf16.msra.mxu0 %v398
  %635 = vmatprep.subr.bf16.mxu0 %v403
  %636 = vmatpush1.bf16.msra.mxu0 %v402
  %637 = vmatprep.subr.bf16.mxu0 %v407
  %638 = vmatpush1.bf16.msra.mxu0 %v406
  %639 = vmatprep.subr.bf16.mxu0 %v411
  %640 = vmatpush1.bf16.msra.mxu0 %v410
  %641 = vmatprep.subr.bf16.mxu0 %v415
  %642 = vmatpush1.bf16.msra.mxu0 %v414
  %643 = vmatprep.subr.bf16.mxu0 %v419
  %644 = vmatpush1.bf16.msra.mxu0 %v418
  %645 = vmatprep.mubr.bf16.mxu0 %v131
  %646 = vmatmul.mubr.bf16.gmra.mrb[0].mxu0 %v130
  %v647 = vpop.f32.mrb[0].mxu0
  %v648 = vadd.f32 0.0, %v647
  %v649 = vpop.f32.mrb[0].mxu0
  %v650 = vadd.f32 0.0, %v649
  %v651 = vpop.f32.mrb[0].mxu0
  %v652 = vadd.f32 0.0, %v651
  %v653 = vpop.f32.mrb[0].mxu0
  %v654 = vadd.f32 0.0, %v653
  %655 = vmatprep.mubr.bf16.mxu0 %v134
  %656 = vmatmul.mubr.bf16.gmra.mrb[0].mxu0 %v133
  %v657 = vpop.f32.mrb[0].mxu0
  %v658 = vadd.f32 0.0, %v657
  %v659 = vpop.f32.mrb[0].mxu0
  %v660 = vadd.f32 0.0, %v659
  %v661 = vpop.f32.mrb[0].mxu0
  %v662 = vadd.f32 0.0, %v661
  %v663 = vpop.f32.mrb[0].mxu0
  %v664 = vadd.f32 0.0, %v663
  %665 = vdwg.mxu0
  %666 = vmatprep.subr.bf16.mxu0 %v423
  %667 = vmatpush1.bf16.msra.mxu0 %v422
  %668 = vmatprep.subr.bf16.mxu0 %v427
  %669 = vmatpush1.bf16.msra.mxu0 %v426
  %670 = vmatprep.subr.bf16.mxu0 0
  %671 = vmatpush1.bf16.msra.mxu0 0
  %672 = vmatprep.subr.bf16.mxu0 0
  %673 = vmatpush1.bf16.msra.mxu0 0
  %674 = vmatprep.subr.bf16.mxu0 0
  %675 = vmatpush1.bf16.msra.mxu0 0
  %676 = vmatprep.subr.bf16.mxu0 0
  %677 = vmatpush1.bf16.msra.mxu0 0
  %678 = vmatprep.subr.bf16.mxu0 0
  %679 = vmatpush1.bf16.msra.mxu0 0
  %680 = vmatprep.subr.bf16.mxu0 0
  %681 = vmatpush1.bf16.msra.mxu0 0
  %682 = vmatprep.subr.bf16.mxu0 0
  %683 = vmatpush1.bf16.msra.mxu0 0
  %684 = vmatprep.subr.bf16.mxu0 0
  %685 = vmatpush1.bf16.msra.mxu0 0
  %686 = vmatprep.subr.bf16.mxu0 0
  %687 = vmatpush1.bf16.msra.mxu0 0
  %688 = vmatprep.subr.bf16.mxu0 0
  %689 = vmatpush1.bf16.msra.mxu0 0
  %690 = vmatprep.subr.bf16.mxu0 0
  %691 = vmatpush1.bf16.msra.mxu0 0
  %692 = vmatprep.subr.bf16.mxu0 0
  %693 = vmatpush1.bf16.msra.mxu0 0
  %694 = vmatprep.subr.bf16.mxu0 0
  %695 = vmatpush1.bf16.msra.mxu0 0
  %696 = vmatprep.subr.bf16.mxu0 0
  %697 = vmatpush1.bf16.msra.mxu0 0
  %698 = vmatprep.mubr.bf16.mxu0 0
  %699 = vmatmul.mubr.bf16.gmra.mrb[0].mxu0 %v502
  %v700 = vpop.f32.mrb[0].mxu0
  %v701 = vadd.f32 %v648, %v700
  %v702 = vpop.f32.mrb[0].mxu0
  %v703 = vadd.f32 %v650, %v702
  %v704 = vpop.f32.mrb[0].mxu0
  %v705 = vadd.f32 %v652, %v704
  %v706 = vpop.f32.mrb[0].mxu0
  %v707 = vadd.f32 %v654, %v706
  %708 = vmatprep.mubr.bf16.mxu0 0
  %709 = vmatmul.mubr.bf16.gmra.mrb[0].mxu0 %v505
  %v710 = vpop.f32.mrb[0].mxu0
  %v711 = vadd.f32 %v658, %v710
  %v712 = vpop.f32.mrb[0].mxu0
  %v713 = vadd.f32 %v660, %v712
  %v714 = vpop.f32.mrb[0].mxu0
  %v715 = vadd.f32 %v662, %v714
  %v716 = vpop.f32.mrb[0].mxu0
  %v717 = vadd.f32 %v664, %v716
  %718 = vdwg.mxu0
  %v719 = vld [vmem:[%s2] sm:$0xff]
  %v720 = vld [vmem:[%s2 + $0x8] sm:$0xff]
  %v721 = vld [vmem:[%s2 + $0x10] sm:$0xff]
  %v722 = vld [vmem:[%s2 + $0x18] sm:$0xff]
  %v723 = vld [vmem:[%s3] sm:$0xff]
  %v724 = vld [vmem:[%s3 + $0x8] sm:$0xff]
  %v725 = vld [vmem:[%s3 + $0x10] sm:$0xff]
  %v726 = vld [vmem:[%s3 + $0x18] sm:$0xff]
  %v727 = vadd.f32 %v595, %v597
  %v728 = vadd.f32 %v727, %v701
  %v729 = vadd.f32 %v728, %v703
  %730 = vadd.xlane.f32.xlu0 %v729
  %v731 = vpop.xlane.xlu0 %730
  %v732 = vadd.f32 %v599, %v601
  %v733 = vadd.f32 %v732, %v705
  %v734 = vadd.f32 %v733, %v707
  %735 = vadd.xlane.f32.xlu0 %v734
  %v736 = vpop.xlane.xlu0 %735
  %v737 = vadd.f32 %v605, %v607
  %v738 = vadd.f32 %v737, %v711
  %v739 = vadd.f32 %v738, %v713
  %740 = vadd.xlane.f32.xlu0 %v739
  %v741 = vpop.xlane.xlu0 %740
  %v742 = vadd.f32 %v609, %v611
  %v743 = vadd.f32 %v742, %v715
  %v744 = vadd.f32 %v743, %v717
  %745 = vadd.xlane.f32.xlu0 %v744
  %v746 = vpop.xlane.xlu0 %745
  %v747 = vrcp.pop 512.0
  %v748 = vmul.f32 %v731, %v747
  %v749 = vmul.f32 %v736, %v747
  %v750 = vmul.f32 %v741, %v747
  %v751 = vmul.f32 %v746, %v747
  %v752 = vsub.f32 %v595, %v748
  %v753 = vsub.f32 %v597, %v748
  %v754 = vsub.f32 %v701, %v748
  %v755 = vsub.f32 %v703, %v748
  %v756 = vsub.f32 %v599, %v749
  %v757 = vsub.f32 %v601, %v749
  %v758 = vsub.f32 %v705, %v749
  %v759 = vsub.f32 %v707, %v749
  %v760 = vsub.f32 %v605, %v750
  %v761 = vsub.f32 %v607, %v750
  %v762 = vsub.f32 %v711, %v750
  %v763 = vsub.f32 %v713, %v750
  %v764 = vsub.f32 %v609, %v751
  %v765 = vsub.f32 %v611, %v751
  %v766 = vsub.f32 %v715, %v751
  %v767 = vsub.f32 %v717, %v751
  %v768 = vmul.f32 %v752, %v752
  %v769 = vmul.f32 %v753, %v753
  %v770 = vmul.f32 %v754, %v754
  %v771 = vmul.f32 %v755, %v755
  %v772 = vmul.f32 %v756, %v756
  %v773 = vmul.f32 %v757, %v757
  %v774 = vmul.f32 %v758, %v758
  %v775 = vmul.f32 %v759, %v759
  %v776 = vmul.f32 %v760, %v760
  %v777 = vmul.f32 %v761, %v761
  %v778 = vmul.f32 %v762, %v762
  %v779 = vmul.f32 %v763, %v763
  %v780 = vmul.f32 %v764, %v764
  %v781 = vmul.f32 %v765, %v765
  %v782 = vmul.f32 %v766, %v766
  %v783 = vmul.f32 %v767, %v767
  %v784 = vadd.f32 %v768, %v769
  %v785 = vadd.f32 %v784, %v770
  %v786 = vadd.f32 %v785, %v771
  %787 = vadd.xlane.f32.xlu0 %v786
  %v788 = vpop.xlane.xlu0 %787
  %v789 = vadd.f32 %v772, %v773
  %v790 = vadd.f32 %v789, %v774
  %v791 = vadd.f32 %v790, %v775
  %792 = vadd.xlane.f32.xlu0 %v791
  %v793 = vpop.xlane.xlu0 %792
  %v794 = vadd.f32 %v776, %v777
  %v795 = vadd.f32 %v794, %v778
  %v796 = vadd.f32 %v795, %v779
  %797 = vadd.xlane.f32.xlu0 %v796
  %v798 = vpop.xlane.xlu0 %797
  %v799 = vadd.f32 %v780, %v781
  %v800 = vadd.f32 %v799, %v782
  %v801 = vadd.f32 %v800, %v783
  %802 = vadd.xlane.f32.xlu0 %v801
  %v803 = vpop.xlane.xlu0 %802
  %v804 = vmul.f32 %v788, %v747
  %v805 = vmul.f32 %v793, %v747
  %v806 = vmul.f32 %v798, %v747
  %v807 = vmul.f32 %v803, %v747
  %v808 = vadd.f32 %v804, 1e-05
  %v809 = vadd.f32 %v805, 1e-05
  %v810 = vadd.f32 %v806, 1e-05
  %v811 = vadd.f32 %v807, 1e-05
  %v812 = vrsqrt.pop %v808
  %v813 = vrsqrt.pop %v809
  %v814 = vrsqrt.pop %v810
  %v815 = vrsqrt.pop %v811
  %v816 = vmul.f32 %v752, %v812
  %v817 = vmul.f32 %v753, %v812
  %v818 = vmul.f32 %v754, %v812
  %v819 = vmul.f32 %v755, %v812
  %v820 = vmul.f32 %v756, %v813
  %v821 = vmul.f32 %v757, %v813
  %v822 = vmul.f32 %v758, %v813
  %v823 = vmul.f32 %v759, %v813
  %v824 = vmul.f32 %v760, %v814
  %v825 = vmul.f32 %v761, %v814
  %v826 = vmul.f32 %v762, %v814
  %v827 = vmul.f32 %v763, %v814
  %v828 = vmul.f32 %v764, %v815
  %v829 = vmul.f32 %v765, %v815
  %v830 = vmul.f32 %v766, %v815
  %v831 = vmul.f32 %v767, %v815
  %833 = vset.pattern.permute.xlu0 0
  %834 = vperm.xlu0 %833, %v719
  %v835 = vpop.permute.xlu0 %834
  %838 = vset.pattern.permute.xlu0 0
  %839 = vperm.xlu0 %838, %v720
  %v840 = vpop.permute.xlu0 %839
  %843 = vset.pattern.permute.xlu0 0
  %844 = vperm.xlu0 %843, %v721
  %v845 = vpop.permute.xlu0 %844
  %848 = vset.pattern.permute.xlu0 0
  %849 = vperm.xlu0 %848, %v722
  %v850 = vpop.permute.xlu0 %849
  %v852 = vmul.f32 %v816, %v835
  %v853 = vmul.f32 %v817, %v835
  %v854 = vmul.f32 %v818, %v835
  %v855 = vmul.f32 %v819, %v835
  %v856 = vmul.f32 %v820, %v840
  %v857 = vmul.f32 %v821, %v840
  %v858 = vmul.f32 %v822, %v840
  %v859 = vmul.f32 %v823, %v840
  %v860 = vmul.f32 %v824, %v845
  %v861 = vmul.f32 %v825, %v845
  %v862 = vmul.f32 %v826, %v845
  %v863 = vmul.f32 %v827, %v845
  %v864 = vmul.f32 %v828, %v850
  %v865 = vmul.f32 %v829, %v850
  %v866 = vmul.f32 %v830, %v850
  %v867 = vmul.f32 %v831, %v850
  %869 = vset.pattern.permute.xlu0 0
  %870 = vperm.xlu0 %869, %v723
  %v871 = vpop.permute.xlu0 %870
  %874 = vset.pattern.permute.xlu0 0
  %875 = vperm.xlu0 %874, %v724
  %v876 = vpop.permute.xlu0 %875
  %879 = vset.pattern.permute.xlu0 0
  %880 = vperm.xlu0 %879, %v725
  %v881 = vpop.permute.xlu0 %880
  %884 = vset.pattern.permute.xlu0 0
  %885 = vperm.xlu0 %884, %v726
  %v886 = vpop.permute.xlu0 %885
  %v888 = vadd.f32 %v852, %v871
  %v889 = vadd.f32 %v853, %v871
  %v890 = vadd.f32 %v854, %v871
  %v891 = vadd.f32 %v855, %v871
  %v892 = vadd.f32 %v856, %v876
  %v893 = vadd.f32 %v857, %v876
  %v894 = vadd.f32 %v858, %v876
  %v895 = vadd.f32 %v859, %v876
  %v896 = vadd.f32 %v860, %v881
  %v897 = vadd.f32 %v861, %v881
  %v898 = vadd.f32 %v862, %v881
  %v899 = vadd.f32 %v863, %v881
  %v900 = vadd.f32 %v864, %v886
  %v901 = vadd.f32 %v865, %v886
  %v902 = vadd.f32 %v866, %v886
  %v903 = vadd.f32 %v867, %v886
  %v904 = vld [vmem:[%s5] sm:$0xf]
  %v905 = vld [vmem:[%s5 + $0x4] sm:$0xf]
  %v906 = vld [vmem:[%s5 + $0x8] sm:$0xf]
  %v907 = vld [vmem:[%s5 + $0xc] sm:$0xf]
  %v908 = vld [vmem:[%s4] sm:$0xff]
  %v909 = vld [vmem:[%s4 + $0x8] sm:$0xff]
  %v910 = vld [vmem:[%s4 + $0x10] sm:$0xff]
  %v911 = vld [vmem:[%s4 + $0x18] sm:$0xff]
  %v916 = vunpack.c.l.b16 %v904
  %v917 = vunpack.c.l.b16 %v905
  %v918 = vunpack.c.l.b16 %v906
  %v919 = vunpack.c.l.b16 %v907
  %v920 = vpack.c.b16 %v917, %v916
  %v921 = vpack.c.b16 %v919, %v918
  %v926 = vunpack.c.l.b16 %v908
  %v927 = vunpack.c.h.b16 %v908
  %v928 = vunpack.c.l.b16 %v909
  %v929 = vunpack.c.h.b16 %v909
  %v930 = vunpack.c.l.b16 %v910
  %v931 = vunpack.c.h.b16 %v910
  %v932 = vunpack.c.l.b16 %v911
  %v933 = vunpack.c.h.b16 %v911
  %v934 = vpack.c.b16 %v930, %v926
  %v935 = vpack.c.b16 %v931, %v927
  %v936 = vpack.c.b16 %v932, %v928
  %v937 = vpack.c.b16 %v933, %v929
  %vm942 = vcmask 130048
  %v944 = vsel %vm942, %v920, 0
  %v947 = vsel %vm942, %v921, 0
  %949 = vmatprep.subr.bf16.mxu0 %v935
  %950 = vmatpush1.bf16.msra.mxu0 %v934
  %951 = vmatprep.subr.bf16.mxu0 0
  %952 = vmatpush1.bf16.msra.mxu0 0
  %953 = vmatprep.subr.bf16.mxu0 0
  %954 = vmatpush1.bf16.msra.mxu0 0
  %955 = vmatprep.subr.bf16.mxu0 0
  %956 = vmatpush1.bf16.msra.mxu0 0
  %957 = vmatprep.subr.bf16.mxu0 0
  %958 = vmatpush1.bf16.msra.mxu0 0
  %959 = vmatprep.subr.bf16.mxu0 0
  %960 = vmatpush1.bf16.msra.mxu0 0
  %961 = vmatprep.subr.bf16.mxu0 0
  %962 = vmatpush1.bf16.msra.mxu0 0
  %963 = vmatprep.subr.bf16.mxu0 0
  %964 = vmatpush1.bf16.msra.mxu0 0
  %965 = vmatprep.subr.bf16.mxu0 0
  %966 = vmatpush1.bf16.msra.mxu0 0
  %967 = vmatprep.subr.bf16.mxu0 0
  %968 = vmatpush1.bf16.msra.mxu0 0
  %969 = vmatprep.subr.bf16.mxu0 0
  %970 = vmatpush1.bf16.msra.mxu0 0
  %971 = vmatprep.subr.bf16.mxu0 0
  %972 = vmatpush1.bf16.msra.mxu0 0
  %973 = vmatprep.subr.bf16.mxu0 0
  %974 = vmatpush1.bf16.msra.mxu0 0
  %975 = vmatprep.subr.bf16.mxu0 0
  %976 = vmatpush1.bf16.msra.mxu0 0
  %977 = vmatprep.subr.bf16.mxu0 0
  %978 = vmatpush1.bf16.msra.mxu0 0
  %979 = vmatprep.subr.bf16.mxu0 0
  %980 = vmatpush1.bf16.msra.mxu0 0
  %981 = vmatprep.mubr.bf16.mxu0 0
  %982 = vmatmul.mubr.bf16.gmra.mrb[0].mxu0 %v944
  %v983 = vpop.f32.mrb[0].mxu0
  %v984 = vadd.f32 0.0, %v983
  %v985 = vpop.f32.mrb[0].mxu0
  %v986 = vadd.f32 0.0, %v985
  %v987 = vpop.f32.mrb[0].mxu0
  %v988 = vadd.f32 0.0, %v987
  %v989 = vpop.f32.mrb[0].mxu0
  %v990 = vadd.f32 0.0, %v989
  %991 = vmatprep.mubr.bf16.mxu0 0
  %992 = vmatmul.mubr.bf16.gmra.mrb[0].mxu0 %v947
  %v993 = vpop.f32.mrb[0].mxu0
  %v994 = vadd.f32 0.0, %v993
  %v995 = vpop.f32.mrb[0].mxu0
  %v996 = vadd.f32 0.0, %v995
  %v997 = vpop.f32.mrb[0].mxu0
  %v998 = vadd.f32 0.0, %v997
  %v999 = vpop.f32.mrb[0].mxu0
  %v1000 = vadd.f32 0.0, %v999
  %1001 = vdwg.mxu0
  %1002 = vmatprep.subr.bf16.mxu0 %v937
  %1003 = vmatpush1.bf16.msra.mxu0 %v936
  %1004 = vmatprep.subr.bf16.mxu0 0
  %1005 = vmatpush1.bf16.msra.mxu0 0
  %1006 = vmatprep.subr.bf16.mxu0 0
  %1007 = vmatpush1.bf16.msra.mxu0 0
  %1008 = vmatprep.subr.bf16.mxu0 0
  %1009 = vmatpush1.bf16.msra.mxu0 0
  %1010 = vmatprep.subr.bf16.mxu0 0
  %1011 = vmatpush1.bf16.msra.mxu0 0
  %1012 = vmatprep.subr.bf16.mxu0 0
  %1013 = vmatpush1.bf16.msra.mxu0 0
  %1014 = vmatprep.subr.bf16.mxu0 0
  %1015 = vmatpush1.bf16.msra.mxu0 0
  %1016 = vmatprep.subr.bf16.mxu0 0
  %1017 = vmatpush1.bf16.msra.mxu0 0
  %1018 = vmatprep.subr.bf16.mxu0 0
  %1019 = vmatpush1.bf16.msra.mxu0 0
  %1020 = vmatprep.subr.bf16.mxu0 0
  %1021 = vmatpush1.bf16.msra.mxu0 0
  %1022 = vmatprep.subr.bf16.mxu0 0
  %1023 = vmatpush1.bf16.msra.mxu0 0
  %1024 = vmatprep.subr.bf16.mxu0 0
  %1025 = vmatpush1.bf16.msra.mxu0 0
  %1026 = vmatprep.subr.bf16.mxu0 0
  %1027 = vmatpush1.bf16.msra.mxu0 0
  %1028 = vmatprep.subr.bf16.mxu0 0
  %1029 = vmatpush1.bf16.msra.mxu0 0
  %1030 = vmatprep.subr.bf16.mxu0 0
  %1031 = vmatpush1.bf16.msra.mxu0 0
  %1032 = vmatprep.subr.bf16.mxu0 0
  %1033 = vmatpush1.bf16.msra.mxu0 0
  %1034 = vmatprep.mubr.bf16.mxu0 0
  %1035 = vmatmul.mubr.bf16.gmra.mrb[0].mxu0 %v944
  %v1036 = vpop.f32.mrb[0].mxu0
  %v1037 = vadd.f32 0.0, %v1036
  %v1038 = vpop.f32.mrb[0].mxu0
  %v1039 = vadd.f32 0.0, %v1038
  %v1040 = vpop.f32.mrb[0].mxu0
  %v1041 = vadd.f32 0.0, %v1040
  %v1042 = vpop.f32.mrb[0].mxu0
  %v1043 = vadd.f32 0.0, %v1042
  %1044 = vmatprep.mubr.bf16.mxu0 0
  %1045 = vmatmul.mubr.bf16.gmra.mrb[0].mxu0 %v947
  %v1046 = vpop.f32.mrb[0].mxu0
  %v1047 = vadd.f32 0.0, %v1046
  %v1048 = vpop.f32.mrb[0].mxu0
  %v1049 = vadd.f32 0.0, %v1048
  %v1050 = vpop.f32.mrb[0].mxu0
  %v1051 = vadd.f32 0.0, %v1050
  %v1052 = vpop.f32.mrb[0].mxu0
  %v1053 = vadd.f32 0.0, %v1052
  %1054 = vdwg.mxu0
  %v1055 = vld [vmem:[%s6] sm:$0xff]
  %v1056 = vld [vmem:[%s6 + $0x8] sm:$0xff]
  %v1057 = vld [vmem:[%s6 + $0x10] sm:$0xff]
  %v1058 = vld [vmem:[%s6 + $0x18] sm:$0xff]
  %v1059 = vld [vmem:[%s7] sm:$0xff]
  %v1060 = vld [vmem:[%s7 + $0x8] sm:$0xff]
  %v1061 = vld [vmem:[%s7 + $0x10] sm:$0xff]
  %v1062 = vld [vmem:[%s7 + $0x18] sm:$0xff]
  %v1063 = vadd.f32 %v984, %v986
  %v1064 = vadd.f32 %v1063, %v1037
  %v1065 = vadd.f32 %v1064, %v1039
  %1066 = vadd.xlane.f32.xlu0 %v1065
  %v1067 = vpop.xlane.xlu0 %1066
  %v1068 = vadd.f32 %v988, %v990
  %v1069 = vadd.f32 %v1068, %v1041
  %v1070 = vadd.f32 %v1069, %v1043
  %1071 = vadd.xlane.f32.xlu0 %v1070
  %v1072 = vpop.xlane.xlu0 %1071
  %v1073 = vadd.f32 %v994, %v996
  %v1074 = vadd.f32 %v1073, %v1047
  %v1075 = vadd.f32 %v1074, %v1049
  %1076 = vadd.xlane.f32.xlu0 %v1075
  %v1077 = vpop.xlane.xlu0 %1076
  %v1078 = vadd.f32 %v998, %v1000
  %v1079 = vadd.f32 %v1078, %v1051
  %v1080 = vadd.f32 %v1079, %v1053
  %1081 = vadd.xlane.f32.xlu0 %v1080
  %v1082 = vpop.xlane.xlu0 %1081
  %v1083 = vmul.f32 %v1067, %v747
  %v1084 = vmul.f32 %v1072, %v747
  %v1085 = vmul.f32 %v1077, %v747
  %v1086 = vmul.f32 %v1082, %v747
  %v1087 = vsub.f32 %v984, %v1083
  %v1088 = vsub.f32 %v986, %v1083
  %v1089 = vsub.f32 %v1037, %v1083
  %v1090 = vsub.f32 %v1039, %v1083
  %v1091 = vsub.f32 %v988, %v1084
  %v1092 = vsub.f32 %v990, %v1084
  %v1093 = vsub.f32 %v1041, %v1084
  %v1094 = vsub.f32 %v1043, %v1084
  %v1095 = vsub.f32 %v994, %v1085
  %v1096 = vsub.f32 %v996, %v1085
  %v1097 = vsub.f32 %v1047, %v1085
  %v1098 = vsub.f32 %v1049, %v1085
  %v1099 = vsub.f32 %v998, %v1086
  %v1100 = vsub.f32 %v1000, %v1086
  %v1101 = vsub.f32 %v1051, %v1086
  %v1102 = vsub.f32 %v1053, %v1086
  %v1103 = vmul.f32 %v1087, %v1087
  %v1104 = vmul.f32 %v1088, %v1088
  %v1105 = vmul.f32 %v1089, %v1089
  %v1106 = vmul.f32 %v1090, %v1090
  %v1107 = vmul.f32 %v1091, %v1091
  %v1108 = vmul.f32 %v1092, %v1092
  %v1109 = vmul.f32 %v1093, %v1093
  %v1110 = vmul.f32 %v1094, %v1094
  %v1111 = vmul.f32 %v1095, %v1095
  %v1112 = vmul.f32 %v1096, %v1096
  %v1113 = vmul.f32 %v1097, %v1097
  %v1114 = vmul.f32 %v1098, %v1098
  %v1115 = vmul.f32 %v1099, %v1099
  %v1116 = vmul.f32 %v1100, %v1100
  %v1117 = vmul.f32 %v1101, %v1101
  %v1118 = vmul.f32 %v1102, %v1102
  %v1119 = vadd.f32 %v1103, %v1104
  %v1120 = vadd.f32 %v1119, %v1105
  %v1121 = vadd.f32 %v1120, %v1106
  %1122 = vadd.xlane.f32.xlu0 %v1121
  %v1123 = vpop.xlane.xlu0 %1122
  %v1124 = vadd.f32 %v1107, %v1108
  %v1125 = vadd.f32 %v1124, %v1109
  %v1126 = vadd.f32 %v1125, %v1110
  %1127 = vadd.xlane.f32.xlu0 %v1126
  %v1128 = vpop.xlane.xlu0 %1127
  %v1129 = vadd.f32 %v1111, %v1112
  %v1130 = vadd.f32 %v1129, %v1113
  %v1131 = vadd.f32 %v1130, %v1114
  %1132 = vadd.xlane.f32.xlu0 %v1131
  %v1133 = vpop.xlane.xlu0 %1132
  %v1134 = vadd.f32 %v1115, %v1116
  %v1135 = vadd.f32 %v1134, %v1117
  %v1136 = vadd.f32 %v1135, %v1118
  %1137 = vadd.xlane.f32.xlu0 %v1136
  %v1138 = vpop.xlane.xlu0 %1137
  %v1139 = vmul.f32 %v1123, %v747
  %v1140 = vmul.f32 %v1128, %v747
  %v1141 = vmul.f32 %v1133, %v747
  %v1142 = vmul.f32 %v1138, %v747
  %v1143 = vadd.f32 %v1139, 1e-05
  %v1144 = vadd.f32 %v1140, 1e-05
  %v1145 = vadd.f32 %v1141, 1e-05
  %v1146 = vadd.f32 %v1142, 1e-05
  %v1147 = vrsqrt.pop %v1143
  %v1148 = vrsqrt.pop %v1144
  %v1149 = vrsqrt.pop %v1145
  %v1150 = vrsqrt.pop %v1146
  %v1151 = vmul.f32 %v1087, %v1147
  %v1152 = vmul.f32 %v1088, %v1147
  %v1153 = vmul.f32 %v1089, %v1147
  %v1154 = vmul.f32 %v1090, %v1147
  %v1155 = vmul.f32 %v1091, %v1148
  %v1156 = vmul.f32 %v1092, %v1148
  %v1157 = vmul.f32 %v1093, %v1148
  %v1158 = vmul.f32 %v1094, %v1148
  %v1159 = vmul.f32 %v1095, %v1149
  %v1160 = vmul.f32 %v1096, %v1149
  %v1161 = vmul.f32 %v1097, %v1149
  %v1162 = vmul.f32 %v1098, %v1149
  %v1163 = vmul.f32 %v1099, %v1150
  %v1164 = vmul.f32 %v1100, %v1150
  %v1165 = vmul.f32 %v1101, %v1150
  %v1166 = vmul.f32 %v1102, %v1150
  %1168 = vset.pattern.permute.xlu0 0
  %1169 = vperm.xlu0 %1168, %v1055
  %v1170 = vpop.permute.xlu0 %1169
  %1173 = vset.pattern.permute.xlu0 0
  %1174 = vperm.xlu0 %1173, %v1056
  %v1175 = vpop.permute.xlu0 %1174
  %1178 = vset.pattern.permute.xlu0 0
  %1179 = vperm.xlu0 %1178, %v1057
  %v1180 = vpop.permute.xlu0 %1179
  %1183 = vset.pattern.permute.xlu0 0
  %1184 = vperm.xlu0 %1183, %v1058
  %v1185 = vpop.permute.xlu0 %1184
  %v1187 = vmul.f32 %v1151, %v1170
  %v1188 = vmul.f32 %v1152, %v1170
  %v1189 = vmul.f32 %v1153, %v1170
  %v1190 = vmul.f32 %v1154, %v1170
  %v1191 = vmul.f32 %v1155, %v1175
  %v1192 = vmul.f32 %v1156, %v1175
  %v1193 = vmul.f32 %v1157, %v1175
  %v1194 = vmul.f32 %v1158, %v1175
  %v1195 = vmul.f32 %v1159, %v1180
  %v1196 = vmul.f32 %v1160, %v1180
  %v1197 = vmul.f32 %v1161, %v1180
  %v1198 = vmul.f32 %v1162, %v1180
  %v1199 = vmul.f32 %v1163, %v1185
  %v1200 = vmul.f32 %v1164, %v1185
  %v1201 = vmul.f32 %v1165, %v1185
  %v1202 = vmul.f32 %v1166, %v1185
  %1204 = vset.pattern.permute.xlu0 0
  %1205 = vperm.xlu0 %1204, %v1059
  %v1206 = vpop.permute.xlu0 %1205
  %1209 = vset.pattern.permute.xlu0 0
  %1210 = vperm.xlu0 %1209, %v1060
  %v1211 = vpop.permute.xlu0 %1210
  %1214 = vset.pattern.permute.xlu0 0
  %1215 = vperm.xlu0 %1214, %v1061
  %v1216 = vpop.permute.xlu0 %1215
  %1219 = vset.pattern.permute.xlu0 0
  %1220 = vperm.xlu0 %1219, %v1062
  %v1221 = vpop.permute.xlu0 %1220
  %v1223 = vadd.f32 %v1187, %v1206
  %v1224 = vadd.f32 %v1188, %v1206
  %v1225 = vadd.f32 %v1189, %v1206
  %v1226 = vadd.f32 %v1190, %v1206
  %v1227 = vadd.f32 %v1191, %v1211
  %v1228 = vadd.f32 %v1192, %v1211
  %v1229 = vadd.f32 %v1193, %v1211
  %v1230 = vadd.f32 %v1194, %v1211
  %v1231 = vadd.f32 %v1195, %v1216
  %v1232 = vadd.f32 %v1196, %v1216
  %v1233 = vadd.f32 %v1197, %v1216
  %v1234 = vadd.f32 %v1198, %v1216
  %v1235 = vadd.f32 %v1199, %v1221
  %v1236 = vadd.f32 %v1200, %v1221
  %v1237 = vadd.f32 %v1201, %v1221
  %v1238 = vadd.f32 %v1202, %v1221
  %v1239 = vadd.f32 %v888, %v1223
  %v1240 = vadd.f32 %v889, %v1224
  %v1241 = vadd.f32 %v890, %v1225
  %v1242 = vadd.f32 %v891, %v1226
  %v1243 = vadd.f32 %v892, %v1227
  %v1244 = vadd.f32 %v893, %v1228
  %v1245 = vadd.f32 %v894, %v1229
  %v1246 = vadd.f32 %v895, %v1230
  %v1247 = vadd.f32 %v896, %v1231
  %v1248 = vadd.f32 %v897, %v1232
  %v1249 = vadd.f32 %v898, %v1233
  %v1250 = vadd.f32 %v899, %v1234
  %v1251 = vadd.f32 %v900, %v1235
  %v1252 = vadd.f32 %v901, %v1236
  %v1253 = vadd.f32 %v902, %v1237
  %v1254 = vadd.f32 %v903, %v1238
  %v1255 = vmax.f32 %v1239, 0.0
  %v1256 = vmax.f32 %v1240, 0.0
  %v1257 = vmax.f32 %v1241, 0.0
  %v1258 = vmax.f32 %v1242, 0.0
  %v1259 = vmax.f32 %v1243, 0.0
  %v1260 = vmax.f32 %v1244, 0.0
  %v1261 = vmax.f32 %v1245, 0.0
  %v1262 = vmax.f32 %v1246, 0.0
  %v1263 = vmax.f32 %v1247, 0.0
  %v1264 = vmax.f32 %v1248, 0.0
  %v1265 = vmax.f32 %v1249, 0.0
  %v1266 = vmax.f32 %v1250, 0.0
  %v1267 = vmax.f32 %v1251, 0.0
  %v1268 = vmax.f32 %v1252, 0.0
  %v1269 = vmax.f32 %v1253, 0.0
  %v1270 = vmax.f32 %v1254, 0.0
  %1271 = vst [vmem:[%s8] sm:$0xff] %v1255
  %1272 = vst [vmem:[%s8 + $0x8] sm:$0xff] %v1256
  %1273 = vst [vmem:[%s8 + $0x10] sm:$0xff] %v1257
  %1274 = vst [vmem:[%s8 + $0x18] sm:$0xff] %v1258
  %1275 = vst [vmem:[%s8 + $0x20] sm:$0xff] %v1259
  %1276 = vst [vmem:[%s8 + $0x28] sm:$0xff] %v1260
  %1277 = vst [vmem:[%s8 + $0x30] sm:$0xff] %v1261
  %1278 = vst [vmem:[%s8 + $0x38] sm:$0xff] %v1262
  %1279 = vst [vmem:[%s8 + $0x40] sm:$0xff] %v1263
  %1280 = vst [vmem:[%s8 + $0x48] sm:$0xff] %v1264
  %1281 = vst [vmem:[%s8 + $0x50] sm:$0xff] %v1265
  %1282 = vst [vmem:[%s8 + $0x58] sm:$0xff] %v1266
  %1283 = vst [vmem:[%s8 + $0x60] sm:$0xff] %v1267
  %1284 = vst [vmem:[%s8 + $0x68] sm:$0xff] %v1268
  %1285 = vst [vmem:[%s8 + $0x70] sm:$0xff] %v1269
  %1286 = vst [vmem:[%s8 + $0x78] sm:$0xff] %v1270
  // Predicated region
  $region34: #{resnet_forward.20} parent=0 // pred_check
    _
  $region35: #{resnet_forward.20} parent=0 // pred_check_branch
    %1288 = sbr.rel (0) target = $region37
  $region36: #{resnet_forward.20} parent=0 // pred_region
    _
  $region37: #{resnet_forward.20} parent=0 // pred_fallthru
    _
  // Predicated region
  $region38: #{resnet_forward.20} parent=0 // pred_check
    _
  $region39: #{resnet_forward.20} parent=0 // pred_check_branch
    %1290 = sbr.rel (0) target = $region41
  $region40: #{resnet_forward.20} parent=0 // pred_region
    _
  $region41: #{resnet_forward.20} parent=0 // pred_fallthru
    _

// kernel: resnet_forward.22
$region0: #{resnet_forward.22}
  #allocation0 [shape = 'u32[]', space=smem, size = 0x4, offset = 0x4, fixed_abs, tag = 'smem constant byte address 0x4 - core index']
  #allocation1 [shape = 'u32[144,128]{1,0:T(1,128)}', space=vmem, size = 0x12000, scoped, tag = 'internal scratch']
  %s0 = inlined_call_operand.vmem [shape: bf16[288,512], index: 0, kind: input, shape index: {}]
  %s1 = inlined_call_operand.vmem [shape: bf16[32,288], index: 1, kind: input, shape index: {}]
  %s2 = inlined_call_operand.vmem [shape: f32[32,1], index: 2, kind: input, shape index: {}]
  %s3 = inlined_call_operand.vmem [shape: f32[32,1], index: 3, kind: input, shape index: {}]
  %s4 = inlined_call_operand.vmem [shape: f32[32,512], index: 4, kind: input, shape index: {}]
  %s5 = inlined_call_operand.vmem [shape: f32[32,512], index: 5, kind: output, shape index: {}]
  %s6 = sld [smem:[#allocation0]]
  $region30: #{resnet_forward.22} parent=0
    _
  %s8 = ssub.s32 1, %s6
  %s9 = scalar_select 0, %s8, %s6
  // Predicated region
  $region2: #{resnet_forward.22} parent=0 // pred_check
    _
  $region3: #{resnet_forward.22} parent=0 // pred_check_branch
    %11 = sbr.rel (0) target = $region5
  $region4: #{resnet_forward.22} parent=0 // pred_region
    _
  $region5: #{resnet_forward.22} parent=0 // pred_fallthru
    _
  // Predicated region
  $region6: #{resnet_forward.22} parent=0 // pred_check
    _
  $region7: #{resnet_forward.22} parent=0 // pred_check_branch
    %13 = sbr.rel (0) target = $region9
  $region8: #{resnet_forward.22} parent=0 // pred_region
    _
  $region9: #{resnet_forward.22} parent=0 // pred_fallthru
    _
  // Predicated region
  $region10: #{resnet_forward.22} parent=0 // pred_check
    _
  $region11: #{resnet_forward.22} parent=0 // pred_check_branch
    %15 = sbr.rel (0) target = $region13
  $region12: #{resnet_forward.22} parent=0 // pred_region
    _
  $region13: #{resnet_forward.22} parent=0 // pred_fallthru
    _
  // Predicated region
  $region14: #{resnet_forward.22} parent=0 // pred_check
    _
  $region15: #{resnet_forward.22} parent=0 // pred_check_branch
    %17 = sbr.rel (0) target = $region17
  $region16: #{resnet_forward.22} parent=0 // pred_region
    _
  $region17: #{resnet_forward.22} parent=0 // pred_fallthru
    _
  // Predicated region
  $region18: #{resnet_forward.22} parent=0 // pred_check
    _
  $region19: #{resnet_forward.22} parent=0 // pred_check_branch
    %19 = sbr.rel (0) target = $region21
  $region20: #{resnet_forward.22} parent=0 // pred_region
    _
  $region21: #{resnet_forward.22} parent=0 // pred_fallthru
    _
  %v21 = vld [vmem:[%s1] sm:$0xff]
  %v22 = vld [vmem:[%s1 + $0x8] sm:$0xf]
  %v23 = vld [vmem:[%s1 + $0xc] sm:$0xff]
  %v24 = vld [vmem:[%s1 + $0x14] sm:$0xf]
  %v25 = vld [vmem:[%s1 + $0x18] sm:$0xff]
  %v26 = vld [vmem:[%s1 + $0x20] sm:$0xf]
  %v27 = vld [vmem:[%s1 + $0x24] sm:$0xff]
  %v28 = vld [vmem:[%s1 + $0x2c] sm:$0xf]
  %v29 = vld [vmem:[%s0] sm:$0xff]
  %v30 = vld [vmem:[%s0 + $0x8] sm:$0xff]
  %v31 = vld [vmem:[%s0 + $0x10] sm:$0xff]
  %v32 = vld [vmem:[%s0 + $0x18] sm:$0xff]
  %v33 = vld [vmem:[%s0 + $0x20] sm:$0xff]
  %v34 = vld [vmem:[%s0 + $0x28] sm:$0xff]
  %v35 = vld [vmem:[%s0 + $0x30] sm:$0xff]
  %v36 = vld [vmem:[%s0 + $0x38] sm:$0xff]
  %v37 = vld [vmem:[%s0 + $0x40] sm:$0xff]
  %v38 = vld [vmem:[%s0 + $0x48] sm:$0xff]
  %v39 = vld [vmem:[%s0 + $0x50] sm:$0xff]
  %v40 = vld [vmem:[%s0 + $0x58] sm:$0xff]
  %v41 = vld [vmem:[%s0 + $0x60] sm:$0xff]
  %v42 = vld [vmem:[%s0 + $0x68] sm:$0xff]
  %v43 = vld [vmem:[%s0 + $0x70] sm:$0xff]
  %v44 = vld [vmem:[%s0 + $0x78] sm:$0xff]
  %v45 = vld [vmem:[%s0 + $0x80] sm:$0xff]
  %v46 = vld [vmem:[%s0 + $0x88] sm:$0xff]
  %v47 = vld [vmem:[%s0 + $0x90] sm:$0xff]
  %v48 = vld [vmem:[%s0 + $0x98] sm:$0xff]
  %v49 = vld [vmem:[%s0 + $0xa0] sm:$0xff]
  %v50 = vld [vmem:[%s0 + $0xa8] sm:$0xff]
  %v51 = vld [vmem:[%s0 + $0xb0] sm:$0xff]
  %v52 = vld [vmem:[%s0 + $0xb8] sm:$0xff]
  %v53 = vld [vmem:[%s0 + $0xc0] sm:$0xff]
  %v54 = vld [vmem:[%s0 + $0xc8] sm:$0xff]
  %v55 = vld [vmem:[%s0 + $0xd0] sm:$0xff]
  %v56 = vld [vmem:[%s0 + $0xd8] sm:$0xff]
  %v57 = vld [vmem:[%s0 + $0xe0] sm:$0xff]
  %v58 = vld [vmem:[%s0 + $0xe8] sm:$0xff]
  %v59 = vld [vmem:[%s0 + $0xf0] sm:$0xff]
  %v60 = vld [vmem:[%s0 + $0xf8] sm:$0xff]
  %v61 = vld [vmem:[%s0 + $0x100] sm:$0xff]
  %v62 = vld [vmem:[%s0 + $0x108] sm:$0xff]
  %v63 = vld [vmem:[%s0 + $0x110] sm:$0xff]
  %v64 = vld [vmem:[%s0 + $0x118] sm:$0xff]
  %v65 = vld [vmem:[%s0 + $0x120] sm:$0xff]
  %v66 = vld [vmem:[%s0 + $0x128] sm:$0xff]
  %v67 = vld [vmem:[%s0 + $0x130] sm:$0xff]
  %v68 = vld [vmem:[%s0 + $0x138] sm:$0xff]
  %v69 = vld [vmem:[%s0 + $0x140] sm:$0xff]
  %v70 = vld [vmem:[%s0 + $0x148] sm:$0xff]
  %v71 = vld [vmem:[%s0 + $0x150] sm:$0xff]
  %v72 = vld [vmem:[%s0 + $0x158] sm:$0xff]
  %v73 = vld [vmem:[%s0 + $0x160] sm:$0xff]
  %v74 = vld [vmem:[%s0 + $0x168] sm:$0xff]
  %v75 = vld [vmem:[%s0 + $0x170] sm:$0xff]
  %v76 = vld [vmem:[%s0 + $0x178] sm:$0xff]
  %v77 = vld [vmem:[%s0 + $0x180] sm:$0xff]
  %v78 = vld [vmem:[%s0 + $0x188] sm:$0xff]
  %v79 = vld [vmem:[%s0 + $0x190] sm:$0xff]
  %v80 = vld [vmem:[%s0 + $0x198] sm:$0xff]
  %v81 = vld [vmem:[%s0 + $0x1a0] sm:$0xff]
  %v82 = vld [vmem:[%s0 + $0x1a8] sm:$0xff]
  %v83 = vld [vmem:[%s0 + $0x1b0] sm:$0xff]
  %v84 = vld [vmem:[%s0 + $0x1b8] sm:$0xff]
  %v85 = vld [vmem:[%s0 + $0x1c0] sm:$0xff]
  %v86 = vld [vmem:[%s0 + $0x1c8] sm:$0xff]
  %v87 = vld [vmem:[%s0 + $0x1d0] sm:$0xff]
  %v88 = vld [vmem:[%s0 + $0x1d8] sm:$0xff]
  %v89 = vld [vmem:[%s0 + $0x1e0] sm:$0xff]
  %v90 = vld [vmem:[%s0 + $0x1e8] sm:$0xff]
  %v91 = vld [vmem:[%s0 + $0x1f0] sm:$0xff]
  %v92 = vld [vmem:[%s0 + $0x1f8] sm:$0xff]
  %v93 = vld [vmem:[%s0 + $0x200] sm:$0xff]
  %v94 = vld [vmem:[%s0 + $0x208] sm:$0xff]
  %v95 = vld [vmem:[%s0 + $0x210] sm:$0xff]
  %v96 = vld [vmem:[%s0 + $0x218] sm:$0xff]
  %v97 = vld [vmem:[%s0 + $0x220] sm:$0xff]
  %v98 = vld [vmem:[%s0 + $0x228] sm:$0xff]
  %v99 = vld [vmem:[%s0 + $0x230] sm:$0xff]
  %v100 = vld [vmem:[%s0 + $0x238] sm:$0xff]
  %v109 = vunpack.c.l.b16 %v21
  %v110 = vunpack.c.h.b16 %v21
  %v111 = vunpack.c.l.b16 %v22
  %v112 = vunpack.c.l.b16 %v23
  %v113 = vunpack.c.h.b16 %v23
  %v114 = vunpack.c.l.b16 %v24
  %v115 = vunpack.c.l.b16 %v25
  %v116 = vunpack.c.h.b16 %v25
  %v117 = vunpack.c.l.b16 %v26
  %v118 = vunpack.c.l.b16 %v27
  %v119 = vunpack.c.h.b16 %v27
  %v120 = vunpack.c.l.b16 %v28
  %v121 = vpack.c.b16 %v112, %v109
  %v122 = vpack.c.b16 %v113, %v110
  %v123 = vpack.c.b16 %v114, %v111
  %v124 = vpack.c.b16 %v118, %v115
  %v125 = vpack.c.b16 %v119, %v116
  %v126 = vpack.c.b16 %v120, %v117
  %v203 = vunpack.c.l.b16 %v29
  %v204 = vunpack.c.h.b16 %v29
  %v205 = vunpack.c.l.b16 %v30
  %v206 = vunpack.c.h.b16 %v30
  %v207 = vunpack.c.l.b16 %v31
  %v208 = vunpack.c.h.b16 %v31
  %v209 = vunpack.c.l.b16 %v32
  %v210 = vunpack.c.h.b16 %v32
  %v211 = vunpack.c.l.b16 %v33
  %v212 = vunpack.c.h.b16 %v33
  %v213 = vunpack.c.l.b16 %v34
  %v214 = vunpack.c.h.b16 %v34
  %v215 = vunpack.c.l.b16 %v35
  %v216 = vunpack.c.h.b16 %v35
  %v217 = vunpack.c.l.b16 %v36
  %v218 = vunpack.c.h.b16 %v36
  %v219 = vunpack.c.l.b16 %v37
  %v220 = vunpack.c.h.b16 %v37
  %v221 = vunpack.c.l.b16 %v38
  %v222 = vunpack.c.h.b16 %v38
  %v223 = vunpack.c.l.b16 %v39
  %v224 = vunpack.c.h.b16 %v39
  %v225 = vunpack.c.l.b16 %v40
  %v226 = vunpack.c.h.b16 %v40
  %v227 = vunpack.c.l.b16 %v41
  %v228 = vunpack.c.h.b16 %v41
  %v229 = vunpack.c.l.b16 %v42
  %v230 = vunpack.c.h.b16 %v42
  %v231 = vunpack.c.l.b16 %v43
  %v232 = vunpack.c.h.b16 %v43
  %v233 = vunpack.c.l.b16 %v44
  %v234 = vunpack.c.h.b16 %v44
  %v235 = vunpack.c.l.b16 %v45
  %v236 = vunpack.c.h.b16 %v45
  %v237 = vunpack.c.l.b16 %v46
  %v238 = vunpack.c.h.b16 %v46
  %v239 = vunpack.c.l.b16 %v47
  %v240 = vunpack.c.h.b16 %v47
  %v241 = vunpack.c.l.b16 %v48
  %v242 = vunpack.c.h.b16 %v48
  %v243 = vunpack.c.l.b16 %v49
  %v244 = vunpack.c.h.b16 %v49
  %v245 = vunpack.c.l.b16 %v50
  %v246 = vunpack.c.h.b16 %v50
  %v247 = vunpack.c.l.b16 %v51
  %v248 = vunpack.c.h.b16 %v51
  %v249 = vunpack.c.l.b16 %v52
  %v250 = vunpack.c.h.b16 %v52
  %v251 = vunpack.c.l.b16 %v53
  %v252 = vunpack.c.h.b16 %v53
  %v253 = vunpack.c.l.b16 %v54
  %v254 = vunpack.c.h.b16 %v54
  %v255 = vunpack.c.l.b16 %v55
  %v256 = vunpack.c.h.b16 %v55
  %v257 = vunpack.c.l.b16 %v56
  %v258 = vunpack.c.h.b16 %v56
  %v259 = vunpack.c.l.b16 %v57
  %v260 = vunpack.c.h.b16 %v57
  %v261 = vunpack.c.l.b16 %v58
  %v262 = vunpack.c.h.b16 %v58
  %v263 = vunpack.c.l.b16 %v59
  %v264 = vunpack.c.h.b16 %v59
  %v265 = vunpack.c.l.b16 %v60
  %v266 = vunpack.c.h.b16 %v60
  %v267 = vunpack.c.l.b16 %v61
  %v268 = vunpack.c.h.b16 %v61
  %v269 = vunpack.c.l.b16 %v62
  %v270 = vunpack.c.h.b16 %v62
  %v271 = vunpack.c.l.b16 %v63
  %v272 = vunpack.c.h.b16 %v63
  %v273 = vunpack.c.l.b16 %v64
  %v274 = vunpack.c.h.b16 %v64
  %v275 = vunpack.c.l.b16 %v65
  %v276 = vunpack.c.h.b16 %v65
  %v277 = vunpack.c.l.b16 %v66
  %v278 = vunpack.c.h.b16 %v66
  %v279 = vunpack.c.l.b16 %v67
  %v280 = vunpack.c.h.b16 %v67
  %v281 = vunpack.c.l.b16 %v68
  %v282 = vunpack.c.h.b16 %v68
  %v283 = vunpack.c.l.b16 %v69
  %v284 = vunpack.c.h.b16 %v69
  %v285 = vunpack.c.l.b16 %v70
  %v286 = vunpack.c.h.b16 %v70
  %v287 = vunpack.c.l.b16 %v71
  %v288 = vunpack.c.h.b16 %v71
  %v289 = vunpack.c.l.b16 %v72
  %v290 = vunpack.c.h.b16 %v72
  %v291 = vunpack.c.l.b16 %v73
  %v292 = vunpack.c.h.b16 %v73
  %v293 = vunpack.c.l.b16 %v74
  %v294 = vunpack.c.h.b16 %v74
  %v295 = vunpack.c.l.b16 %v75
  %v296 = vunpack.c.h.b16 %v75
  %v297 = vunpack.c.l.b16 %v76
  %v298 = vunpack.c.h.b16 %v76
  %v299 = vunpack.c.l.b16 %v77
  %v300 = vunpack.c.h.b16 %v77
  %v301 = vunpack.c.l.b16 %v78
  %v302 = vunpack.c.h.b16 %v78
  %v303 = vunpack.c.l.b16 %v79
  %v304 = vunpack.c.h.b16 %v79
  %v305 = vunpack.c.l.b16 %v80
  %v306 = vunpack.c.h.b16 %v80
  %v307 = vunpack.c.l.b16 %v81
  %v308 = vunpack.c.h.b16 %v81
  %v309 = vunpack.c.l.b16 %v82
  %v310 = vunpack.c.h.b16 %v82
  %v311 = vunpack.c.l.b16 %v83
  %v312 = vunpack.c.h.b16 %v83
  %v313 = vunpack.c.l.b16 %v84
  %v314 = vunpack.c.h.b16 %v84
  %v315 = vunpack.c.l.b16 %v85
  %v316 = vunpack.c.h.b16 %v85
  %v317 = vunpack.c.l.b16 %v86
  %v318 = vunpack.c.h.b16 %v86
  %v319 = vunpack.c.l.b16 %v87
  %v320 = vunpack.c.h.b16 %v87
  %v321 = vunpack.c.l.b16 %v88
  %v322 = vunpack.c.h.b16 %v88
  %v323 = vunpack.c.l.b16 %v89
  %v324 = vunpack.c.h.b16 %v89
  %v325 = vunpack.c.l.b16 %v90
  %v326 = vunpack.c.h.b16 %v90
  %v327 = vunpack.c.l.b16 %v91
  %v328 = vunpack.c.h.b16 %v91
  %v329 = vunpack.c.l.b16 %v92
  %v330 = vunpack.c.h.b16 %v92
  %v331 = vunpack.c.l.b16 %v93
  %v332 = vunpack.c.h.b16 %v93
  %v333 = vunpack.c.l.b16 %v94
  %v334 = vunpack.c.h.b16 %v94
  %v335 = vunpack.c.l.b16 %v95
  %v336 = vunpack.c.h.b16 %v95
  %v337 = vunpack.c.l.b16 %v96
  %v338 = vunpack.c.h.b16 %v96
  %v339 = vunpack.c.l.b16 %v97
  %v340 = vunpack.c.h.b16 %v97
  %v341 = vunpack.c.l.b16 %v98
  %v342 = vunpack.c.h.b16 %v98
  %v343 = vunpack.c.l.b16 %v99
  %v344 = vunpack.c.h.b16 %v99
  %v345 = vunpack.c.l.b16 %v100
  %v346 = vunpack.c.h.b16 %v100
  %v347 = vpack.c.b16 %v207, %v203
  %v348 = vpack.c.b16 %v208, %v204
  %v349 = vpack.c.b16 %v209, %v205
  %v350 = vpack.c.b16 %v210, %v206
  %v351 = vpack.c.b16 %v215, %v211
  %v352 = vpack.c.b16 %v216, %v212
  %v353 = vpack.c.b16 %v217, %v213
  %v354 = vpack.c.b16 %v218, %v214
  %v355 = vpack.c.b16 %v223, %v219
  %v356 = vpack.c.b16 %v224, %v220
  %v357 = vpack.c.b16 %v225, %v221
  %v358 = vpack.c.b16 %v226, %v222
  %v359 = vpack.c.b16 %v231, %v227
  %v360 = vpack.c.b16 %v232, %v228
  %v361 = vpack.c.b16 %v233, %v229
  %v362 = vpack.c.b16 %v234, %v230
  %v363 = vpack.c.b16 %v239, %v235
  %v364 = vpack.c.b16 %v240, %v236
  %v365 = vpack.c.b16 %v241, %v237
  %v366 = vpack.c.b16 %v242, %v238
  %v367 = vpack.c.b16 %v247, %v243
  %v368 = vpack.c.b16 %v248, %v244
  %v369 = vpack.c.b16 %v249, %v245
  %v370 = vpack.c.b16 %v250, %v246
  %v371 = vpack.c.b16 %v255, %v251
  %v372 = vpack.c.b16 %v256, %v252
  %v373 = vpack.c.b16 %v257, %v253
  %v374 = vpack.c.b16 %v258, %v254
  %v375 = vpack.c.b16 %v263, %v259
  %v376 = vpack.c.b16 %v264, %v260
  %v377 = vpack.c.b16 %v265, %v261
  %v378 = vpack.c.b16 %v266, %v262
  %v379 = vpack.c.b16 %v271, %v267
  %v380 = vpack.c.b16 %v272, %v268
  %v381 = vpack.c.b16 %v273, %v269
  %v382 = vpack.c.b16 %v274, %v270
  %v383 = vpack.c.b16 %v279, %v275
  %v384 = vpack.c.b16 %v280, %v276
  %v385 = vpack.c.b16 %v281, %v277
  %v386 = vpack.c.b16 %v282, %v278
  %v387 = vpack.c.b16 %v287, %v283
  %v388 = vpack.c.b16 %v288, %v284
  %v389 = vpack.c.b16 %v289, %v285
  %v390 = vpack.c.b16 %v290, %v286
  %v391 = vpack.c.b16 %v295, %v291
  %v392 = vpack.c.b16 %v296, %v292
  %v393 = vpack.c.b16 %v297, %v293
  %v394 = vpack.c.b16 %v298, %v294
  %v395 = vpack.c.b16 %v303, %v299
  %v396 = vpack.c.b16 %v304, %v300
  %v397 = vpack.c.b16 %v305, %v301
  %v398 = vpack.c.b16 %v306, %v302
  %v399 = vpack.c.b16 %v311, %v307
  %v400 = vpack.c.b16 %v312, %v308
  %v401 = vpack.c.b16 %v313, %v309
  %v402 = vpack.c.b16 %v314, %v310
  %v403 = vpack.c.b16 %v319, %v315
  %v404 = vpack.c.b16 %v320, %v316
  %v405 = vpack.c.b16 %v321, %v317
  %v406 = vpack.c.b16 %v322, %v318
  %v407 = vpack.c.b16 %v327, %v323
  %v408 = vpack.c.b16 %v328, %v324
  %v409 = vpack.c.b16 %v329, %v325
  %v410 = vpack.c.b16 %v330, %v326
  %v411 = vpack.c.b16 %v335, %v331
  %v412 = vpack.c.b16 %v336, %v332
  %v413 = vpack.c.b16 %v337, %v333
  %v414 = vpack.c.b16 %v338, %v334
  %v415 = vpack.c.b16 %v343, %v339
  %v416 = vpack.c.b16 %v344, %v340
  %v417 = vpack.c.b16 %v345, %v341
  %v418 = vpack.c.b16 %v346, %v342
  %vm491 = vcmask 261120
  %v493 = vsel %vm491, %v123, 0
  %v496 = vsel %vm491, %v126, 0
  %498 = vmatprep.subr.bf16.mxu0 %v348
  %499 = vmatpush1.bf16.msra.mxu0 %v347
  %500 = vmatprep.subr.bf16.mxu0 %v352
  %501 = vmatpush1.bf16.msra.mxu0 %v351
  %502 = vmatprep.subr.bf16.mxu0 %v356
  %503 = vmatpush1.bf16.msra.mxu0 %v355
  %504 = vmatprep.subr.bf16.mxu0 %v360
  %505 = vmatpush1.bf16.msra.mxu0 %v359
  %506 = vmatprep.subr.bf16.mxu0 %v364
  %507 = vmatpush1.bf16.msra.mxu0 %v363
  %508 = vmatprep.subr.bf16.mxu0 %v368
  %509 = vmatpush1.bf16.msra.mxu0 %v367
  %510 = vmatprep.subr.bf16.mxu0 %v372
  %511 = vmatpush1.bf16.msra.mxu0 %v371
  %512 = vmatprep.subr.bf16.mxu0 %v376
  %513 = vmatpush1.bf16.msra.mxu0 %v375
  %514 = vmatprep.subr.bf16.mxu0 %v380
  %515 = vmatpush1.bf16.msra.mxu0 %v379
  %516 = vmatprep.subr.bf16.mxu0 %v384
  %517 = vmatpush1.bf16.msra.mxu0 %v383
  %518 = vmatprep.subr.bf16.mxu0 %v388
  %519 = vmatpush1.bf16.msra.mxu0 %v387
  %520 = vmatprep.subr.bf16.mxu0 %v392
  %521 = vmatpush1.bf16.msra.mxu0 %v391
  %522 = vmatprep.subr.bf16.mxu0 %v396
  %523 = vmatpush1.bf16.msra.mxu0 %v395
  %524 = vmatprep.subr.bf16.mxu0 %v400
  %525 = vmatpush1.bf16.msra.mxu0 %v399
  %526 = vmatprep.subr.bf16.mxu0 %v404
  %527 = vmatpush1.bf16.msra.mxu0 %v403
  %528 = vmatprep.subr.bf16.mxu0 %v408
  %529 = vmatpush1.bf16.msra.mxu0 %v407
  %530 = vmatprep.mubr.bf16.mxu0 %v122
  %531 = vmatmul.mubr.bf16.gmra.mrb[0].mxu0 %v121
  %v532 = vpop.f32.mrb[0].mxu0
  %v533 = vadd.f32 0.0, %v532
  %v534 = vpop.f32.mrb[0].mxu0
  %v535 = vadd.f32 0.0, %v534
  %v536 = vpop.f32.mrb[0].mxu0
  %v537 = vadd.f32 0.0, %v536
  %v538 = vpop.f32.mrb[0].mxu0
  %v539 = vadd.f32 0.0, %v538
  %540 = vmatprep.mubr.bf16.mxu0 %v125
  %541 = vmatmul.mubr.bf16.gmra.mrb[0].mxu0 %v124
  %v542 = vpop.f32.mrb[0].mxu0
  %v543 = vadd.f32 0.0, %v542
  %v544 = vpop.f32.mrb[0].mxu0
  %v545 = vadd.f32 0.0, %v544
  %v546 = vpop.f32.mrb[0].mxu0
  %v547 = vadd.f32 0.0, %v546
  %v548 = vpop.f32.mrb[0].mxu0
  %v549 = vadd.f32 0.0, %v548
  %550 = vdwg.mxu0
  %551 = vmatprep.subr.bf16.mxu0 %v412
  %552 = vmatpush1.bf16.msra.mxu0 %v411
  %553 = vmatprep.subr.bf16.mxu0 %v416
  %554 = vmatpush1.bf16.msra.mxu0 %v415
  %555 = vmatprep.subr.bf16.mxu0 0
  %556 = vmatpush1.bf16.msra.mxu0 0
  %557 = vmatprep.subr.bf16.mxu0 0
  %558 = vmatpush1.bf16.msra.mxu0 0
  %559 = vmatprep.subr.bf16.mxu0 0
  %560 = vmatpush1.bf16.msra.mxu0 0
  %561 = vmatprep.subr.bf16.mxu0 0
  %562 = vmatpush1.bf16.msra.mxu0 0
  %563 = vmatprep.subr.bf16.mxu0 0
  %564 = vmatpush1.bf16.msra.mxu0 0
  %565 = vmatprep.subr.bf16.mxu0 0
  %566 = vmatpush1.bf16.msra.mxu0 0
  %567 = vmatprep.subr.bf16.mxu0 0
  %568 = vmatpush1.bf16.msra.mxu0 0
  %569 = vmatprep.subr.bf16.mxu0 0
  %570 = vmatpush1.bf16.msra.mxu0 0
  %571 = vmatprep.subr.bf16.mxu0 0
  %572 = vmatpush1.bf16.msra.mxu0 0
  %573 = vmatprep.subr.bf16.mxu0 0
  %574 = vmatpush1.bf16.msra.mxu0 0
  %575 = vmatprep.subr.bf16.mxu0 0
  %576 = vmatpush1.bf16.msra.mxu0 0
  %577 = vmatprep.subr.bf16.mxu0 0
  %578 = vmatpush1.bf16.msra.mxu0 0
  %579 = vmatprep.subr.bf16.mxu0 0
  %580 = vmatpush1.bf16.msra.mxu0 0
  %581 = vmatprep.subr.bf16.mxu0 0
  %582 = vmatpush1.bf16.msra.mxu0 0
  %583 = vmatprep.mubr.bf16.mxu0 0
  %584 = vmatmul.mubr.bf16.gmra.mrb[0].mxu0 %v493
  %v585 = vpop.f32.mrb[0].mxu0
  %v586 = vadd.f32 %v533, %v585
  %v587 = vpop.f32.mrb[0].mxu0
  %v588 = vadd.f32 %v535, %v587
  %v589 = vpop.f32.mrb[0].mxu0
  %v590 = vadd.f32 %v537, %v589
  %v591 = vpop.f32.mrb[0].mxu0
  %v592 = vadd.f32 %v539, %v591
  %593 = vmatprep.mubr.bf16.mxu0 0
  %594 = vmatmul.mubr.bf16.gmra.mrb[0].mxu0 %v496
  %v595 = vpop.f32.mrb[0].mxu0
  %v596 = vadd.f32 %v543, %v595
  %v597 = vpop.f32.mrb[0].mxu0
  %v598 = vadd.f32 %v545, %v597
  %v599 = vpop.f32.mrb[0].mxu0
  %v600 = vadd.f32 %v547, %v599
  %v601 = vpop.f32.mrb[0].mxu0
  %v602 = vadd.f32 %v549, %v601
  %603 = vdwg.mxu0
  %604 = vmatprep.subr.bf16.mxu0 %v350
  %605 = vmatpush1.bf16.msra.mxu0 %v349
  %606 = vmatprep.subr.bf16.mxu0 %v354
  %607 = vmatpush1.bf16.msra.mxu0 %v353
  %608 = vmatprep.subr.bf16.mxu0 %v358
  %609 = vmatpush1.bf16.msra.mxu0 %v357
  %610 = vmatprep.subr.bf16.mxu0 %v362
  %611 = vmatpush1.bf16.msra.mxu0 %v361
  %612 = vmatprep.subr.bf16.mxu0 %v366
  %613 = vmatpush1.bf16.msra.mxu0 %v365
  %614 = vmatprep.subr.bf16.mxu0 %v370
  %615 = vmatpush1.bf16.msra.mxu0 %v369
  %616 = vmatprep.subr.bf16.mxu0 %v374
  %617 = vmatpush1.bf16.msra.mxu0 %v373
  %618 = vmatprep.subr.bf16.mxu0 %v378
  %619 = vmatpush1.bf16.msra.mxu0 %v377
  %620 = vmatprep.subr.bf16.mxu0 %v382
  %621 = vmatpush1.bf16.msra.mxu0 %v381
  %622 = vmatprep.subr.bf16.mxu0 %v386
  %623 = vmatpush1.bf16.msra.mxu0 %v385
  %624 = vmatprep.subr.bf16.mxu0 %v390
  %625 = vmatpush1.bf16.msra.mxu0 %v389
  %626 = vmatprep.subr.bf16.mxu0 %v394
  %627 = vmatpush1.bf16.msra.mxu0 %v393
  %628 = vmatprep.subr.bf16.mxu0 %v398
  %629 = vmatpush1.bf16.msra.mxu0 %v397
  %630 = vmatprep.subr.bf16.mxu0 %v402
  %631 = vmatpush1.bf16.msra.mxu0 %v401
  %632 = vmatprep.subr.bf16.mxu0 %v406
  %633 = vmatpush1.bf16.msra.mxu0 %v405
  %634 = vmatprep.subr.bf16.mxu0 %v410
  %635 = vmatpush1.bf16.msra.mxu0 %v409
  %636 = vmatprep.mubr.bf16.mxu0 %v122
  %637 = vmatmul.mubr.bf16.gmra.mrb[0].mxu0 %v121
  %v638 = vpop.f32.mrb[0].mxu0
  %v639 = vadd.f32 0.0, %v638
  %v640 = vpop.f32.mrb[0].mxu0
  %v641 = vadd.f32 0.0, %v640
  %v642 = vpop.f32.mrb[0].mxu0
  %v643 = vadd.f32 0.0, %v642
  %v644 = vpop.f32.mrb[0].mxu0
  %v645 = vadd.f32 0.0, %v644
  %646 = vmatprep.mubr.bf16.mxu0 %v125
  %647 = vmatmul.mubr.bf16.gmra.mrb[0].mxu0 %v124
  %v648 = vpop.f32.mrb[0].mxu0
  %v649 = vadd.f32 0.0, %v648
  %v650 = vpop.f32.mrb[0].mxu0
  %v651 = vadd.f32 0.0, %v650
  %v652 = vpop.f32.mrb[0].mxu0
  %v653 = vadd.f32 0.0, %v652
  %v654 = vpop.f32.mrb[0].mxu0
  %v655 = vadd.f32 0.0, %v654
  %656 = vdwg.mxu0
  %657 = vmatprep.subr.bf16.mxu0 %v414
  %658 = vmatpush1.bf16.msra.mxu0 %v413
  %659 = vmatprep.subr.bf16.mxu0 %v418
  %660 = vmatpush1.bf16.msra.mxu0 %v417
  %661 = vmatprep.subr.bf16.mxu0 0
  %662 = vmatpush1.bf16.msra.mxu0 0
  %663 = vmatprep.subr.bf16.mxu0 0
  %664 = vmatpush1.bf16.msra.mxu0 0
  %665 = vmatprep.subr.bf16.mxu0 0
  %666 = vmatpush1.bf16.msra.mxu0 0
  %667 = vmatprep.subr.bf16.mxu0 0
  %668 = vmatpush1.bf16.msra.mxu0 0
  %669 = vmatprep.subr.bf16.mxu0 0
  %670 = vmatpush1.bf16.msra.mxu0 0
  %671 = vmatprep.subr.bf16.mxu0 0
  %672 = vmatpush1.bf16.msra.mxu0 0
  %673 = vmatprep.subr.bf16.mxu0 0
  %674 = vmatpush1.bf16.msra.mxu0 0
  %675 = vmatprep.subr.bf16.mxu0 0
  %676 = vmatpush1.bf16.msra.mxu0 0
  %677 = vmatprep.subr.bf16.mxu0 0
  %678 = vmatpush1.bf16.msra.mxu0 0
  %679 = vmatprep.subr.bf16.mxu0 0
  %680 = vmatpush1.bf16.msra.mxu0 0
  %681 = vmatprep.subr.bf16.mxu0 0
  %682 = vmatpush1.bf16.msra.mxu0 0
  %683 = vmatprep.subr.bf16.mxu0 0
  %684 = vmatpush1.bf16.msra.mxu0 0
  %685 = vmatprep.subr.bf16.mxu0 0
  %686 = vmatpush1.bf16.msra.mxu0 0
  %687 = vmatprep.subr.bf16.mxu0 0
  %688 = vmatpush1.bf16.msra.mxu0 0
  %689 = vmatprep.mubr.bf16.mxu0 0
  %690 = vmatmul.mubr.bf16.gmra.mrb[0].mxu0 %v493
  %v691 = vpop.f32.mrb[0].mxu0
  %v692 = vadd.f32 %v639, %v691
  %v693 = vpop.f32.mrb[0].mxu0
  %v694 = vadd.f32 %v641, %v693
  %v695 = vpop.f32.mrb[0].mxu0
  %v696 = vadd.f32 %v643, %v695
  %v697 = vpop.f32.mrb[0].mxu0
  %v698 = vadd.f32 %v645, %v697
  %699 = vmatprep.mubr.bf16.mxu0 0
  %700 = vmatmul.mubr.bf16.gmra.mrb[0].mxu0 %v496
  %v701 = vpop.f32.mrb[0].mxu0
  %v702 = vadd.f32 %v649, %v701
  %v703 = vpop.f32.mrb[0].mxu0
  %v704 = vadd.f32 %v651, %v703
  %v705 = vpop.f32.mrb[0].mxu0
  %v706 = vadd.f32 %v653, %v705
  %v707 = vpop.f32.mrb[0].mxu0
  %v708 = vadd.f32 %v655, %v707
  %709 = vdwg.mxu0
  %v710 = vld [vmem:[%s2] sm:$0xff]
  %v711 = vld [vmem:[%s2 + $0x8] sm:$0xff]
  %v712 = vld [vmem:[%s2 + $0x10] sm:$0xff]
  %v713 = vld [vmem:[%s2 + $0x18] sm:$0xff]
  %v714 = vld [vmem:[%s3] sm:$0xff]
  %v715 = vld [vmem:[%s3 + $0x8] sm:$0xff]
  %v716 = vld [vmem:[%s3 + $0x10] sm:$0xff]
  %v717 = vld [vmem:[%s3 + $0x18] sm:$0xff]
  %v718 = vadd.f32 %v586, %v588
  %v719 = vadd.f32 %v718, %v692
  %v720 = vadd.f32 %v719, %v694
  %721 = vadd.xlane.f32.xlu0 %v720
  %v722 = vpop.xlane.xlu0 %721
  %v723 = vadd.f32 %v590, %v592
  %v724 = vadd.f32 %v723, %v696
  %v725 = vadd.f32 %v724, %v698
  %726 = vadd.xlane.f32.xlu0 %v725
  %v727 = vpop.xlane.xlu0 %726
  %v728 = vadd.f32 %v596, %v598
  %v729 = vadd.f32 %v728, %v702
  %v730 = vadd.f32 %v729, %v704
  %731 = vadd.xlane.f32.xlu0 %v730
  %v732 = vpop.xlane.xlu0 %731
  %v733 = vadd.f32 %v600, %v602
  %v734 = vadd.f32 %v733, %v706
  %v735 = vadd.f32 %v734, %v708
  %736 = vadd.xlane.f32.xlu0 %v735
  %v737 = vpop.xlane.xlu0 %736
  %v738 = vrcp.pop 512.0
  %v739 = vmul.f32 %v722, %v738
  %v740 = vmul.f32 %v727, %v738
  %v741 = vmul.f32 %v732, %v738
  %v742 = vmul.f32 %v737, %v738
  %v743 = vsub.f32 %v586, %v739
  %v744 = vsub.f32 %v588, %v739
  %v745 = vsub.f32 %v692, %v739
  %v746 = vsub.f32 %v694, %v739
  %v747 = vsub.f32 %v590, %v740
  %v748 = vsub.f32 %v592, %v740
  %v749 = vsub.f32 %v696, %v740
  %v750 = vsub.f32 %v698, %v740
  %v751 = vsub.f32 %v596, %v741
  %v752 = vsub.f32 %v598, %v741
  %v753 = vsub.f32 %v702, %v741
  %v754 = vsub.f32 %v704, %v741
  %v755 = vsub.f32 %v600, %v742
  %v756 = vsub.f32 %v602, %v742
  %v757 = vsub.f32 %v706, %v742
  %v758 = vsub.f32 %v708, %v742
  %v759 = vmul.f32 %v743, %v743
  %v760 = vmul.f32 %v744, %v744
  %v761 = vmul.f32 %v745, %v745
  %v762 = vmul.f32 %v746, %v746
  %v763 = vmul.f32 %v747, %v747
  %v764 = vmul.f32 %v748, %v748
  %v765 = vmul.f32 %v749, %v749
  %v766 = vmul.f32 %v750, %v750
  %v767 = vmul.f32 %v751, %v751
  %v768 = vmul.f32 %v752, %v752
  %v769 = vmul.f32 %v753, %v753
  %v770 = vmul.f32 %v754, %v754
  %v771 = vmul.f32 %v755, %v755
  %v772 = vmul.f32 %v756, %v756
  %v773 = vmul.f32 %v757, %v757
  %v774 = vmul.f32 %v758, %v758
  %v775 = vadd.f32 %v759, %v760
  %v776 = vadd.f32 %v775, %v761
  %v777 = vadd.f32 %v776, %v762
  %778 = vadd.xlane.f32.xlu0 %v777
  %v779 = vpop.xlane.xlu0 %778
  %v780 = vadd.f32 %v763, %v764
  %v781 = vadd.f32 %v780, %v765
  %v782 = vadd.f32 %v781, %v766
  %783 = vadd.xlane.f32.xlu0 %v782
  %v784 = vpop.xlane.xlu0 %783
  %v785 = vadd.f32 %v767, %v768
  %v786 = vadd.f32 %v785, %v769
  %v787 = vadd.f32 %v786, %v770
  %788 = vadd.xlane.f32.xlu0 %v787
  %v789 = vpop.xlane.xlu0 %788
  %v790 = vadd.f32 %v771, %v772
  %v791 = vadd.f32 %v790, %v773
  %v792 = vadd.f32 %v791, %v774
  %793 = vadd.xlane.f32.xlu0 %v792
  %v794 = vpop.xlane.xlu0 %793
  %v795 = vmul.f32 %v779, %v738
  %v796 = vmul.f32 %v784, %v738
  %v797 = vmul.f32 %v789, %v738
  %v798 = vmul.f32 %v794, %v738
  %v799 = vadd.f32 %v795, 1e-05
  %v800 = vadd.f32 %v796, 1e-05
  %v801 = vadd.f32 %v797, 1e-05
  %v802 = vadd.f32 %v798, 1e-05
  %v803 = vrsqrt.pop %v799
  %v804 = vrsqrt.pop %v800
  %v805 = vrsqrt.pop %v801
  %v806 = vrsqrt.pop %v802
  %v807 = vmul.f32 %v743, %v803
  %v808 = vmul.f32 %v744, %v803
  %v809 = vmul.f32 %v745, %v803
  %v810 = vmul.f32 %v746, %v803
  %v811 = vmul.f32 %v747, %v804
  %v812 = vmul.f32 %v748, %v804
  %v813 = vmul.f32 %v749, %v804
  %v814 = vmul.f32 %v750, %v804
  %v815 = vmul.f32 %v751, %v805
  %v816 = vmul.f32 %v752, %v805
  %v817 = vmul.f32 %v753, %v805
  %v818 = vmul.f32 %v754, %v805
  %v819 = vmul.f32 %v755, %v806
  %v820 = vmul.f32 %v756, %v806
  %v821 = vmul.f32 %v757, %v806
  %v822 = vmul.f32 %v758, %v806
  %824 = vset.pattern.permute.xlu0 0
  %825 = vperm.xlu0 %824, %v710
  %v826 = vpop.permute.xlu0 %825
  %829 = vset.pattern.permute.xlu0 0
  %830 = vperm.xlu0 %829, %v711
  %v831 = vpop.permute.xlu0 %830
  %834 = vset.pattern.permute.xlu0 0
  %835 = vperm.xlu0 %834, %v712
  %v836 = vpop.permute.xlu0 %835
  %839 = vset.pattern.permute.xlu0 0
  %840 = vperm.xlu0 %839, %v713
  %v841 = vpop.permute.xlu0 %840
  %v843 = vmul.f32 %v807, %v826
  %v844 = vmul.f32 %v808, %v826
  %v845 = vmul.f32 %v809, %v826
  %v846 = vmul.f32 %v810, %v826
  %v847 = vmul.f32 %v811, %v831
  %v848 = vmul.f32 %v812, %v831
  %v849 = vmul.f32 %v813, %v831
  %v850 = vmul.f32 %v814, %v831
  %v851 = vmul.f32 %v815, %v836
  %v852 = vmul.f32 %v816, %v836
  %v853 = vmul.f32 %v817, %v836
  %v854 = vmul.f32 %v818, %v836
  %v855 = vmul.f32 %v819, %v841
  %v856 = vmul.f32 %v820, %v841
  %v857 = vmul.f32 %v821, %v841
  %v858 = vmul.f32 %v822, %v841
  %860 = vset.pattern.permute.xlu0 0
  %861 = vperm.xlu0 %860, %v714
  %v862 = vpop.permute.xlu0 %861
  %865 = vset.pattern.permute.xlu0 0
  %866 = vperm.xlu0 %865, %v715
  %v867 = vpop.permute.xlu0 %866
  %870 = vset.pattern.permute.xlu0 0
  %871 = vperm.xlu0 %870, %v716
  %v872 = vpop.permute.xlu0 %871
  %875 = vset.pattern.permute.xlu0 0
  %876 = vperm.xlu0 %875, %v717
  %v877 = vpop.permute.xlu0 %876
  %v879 = vadd.f32 %v843, %v862
  %v880 = vadd.f32 %v844, %v862
  %v881 = vadd.f32 %v845, %v862
  %v882 = vadd.f32 %v846, %v862
  %v883 = vadd.f32 %v847, %v867
  %v884 = vadd.f32 %v848, %v867
  %v885 = vadd.f32 %v849, %v867
  %v886 = vadd.f32 %v850, %v867
  %v887 = vadd.f32 %v851, %v872
  %v888 = vadd.f32 %v852, %v872
  %v889 = vadd.f32 %v853, %v872
  %v890 = vadd.f32 %v854, %v872
  %v891 = vadd.f32 %v855, %v877
  %v892 = vadd.f32 %v856, %v877
  %v893 = vadd.f32 %v857, %v877
  %v894 = vadd.f32 %v858, %v877
  %v895 = vld [vmem:[%s4] sm:$0xff]
  %v896 = vld [vmem:[%s4 + $0x8] sm:$0xff]
  %v897 = vld [vmem:[%s4 + $0x10] sm:$0xff]
  %v898 = vld [vmem:[%s4 + $0x18] sm:$0xff]
  %v899 = vld [vmem:[%s4 + $0x20] sm:$0xff]
  %v900 = vld [vmem:[%s4 + $0x28] sm:$0xff]
  %v901 = vld [vmem:[%s4 + $0x30] sm:$0xff]
  %v902 = vld [vmem:[%s4 + $0x38] sm:$0xff]
  %v903 = vld [vmem:[%s4 + $0x40] sm:$0xff]
  %v904 = vld [vmem:[%s4 + $0x48] sm:$0xff]
  %v905 = vld [vmem:[%s4 + $0x50] sm:$0xff]
  %v906 = vld [vmem:[%s4 + $0x58] sm:$0xff]
  %v907 = vld [vmem:[%s4 + $0x60] sm:$0xff]
  %v908 = vld [vmem:[%s4 + $0x68] sm:$0xff]
  %v909 = vld [vmem:[%s4 + $0x70] sm:$0xff]
  %v910 = vld [vmem:[%s4 + $0x78] sm:$0xff]
  %v911 = vadd.f32 %v879, %v895
  %v912 = vadd.f32 %v880, %v896
  %v913 = vadd.f32 %v881, %v897
  %v914 = vadd.f32 %v882, %v898
  %v915 = vadd.f32 %v883, %v899
  %v916 = vadd.f32 %v884, %v900
  %v917 = vadd.f32 %v885, %v901
  %v918 = vadd.f32 %v886, %v902
  %v919 = vadd.f32 %v887, %v903
  %v920 = vadd.f32 %v888, %v904
  %v921 = vadd.f32 %v889, %v905
  %v922 = vadd.f32 %v890, %v906
  %v923 = vadd.f32 %v891, %v907
  %v924 = vadd.f32 %v892, %v908
  %v925 = vadd.f32 %v893, %v909
  %v926 = vadd.f32 %v894, %v910
  %v927 = vmax.f32 %v911, 0.0
  %v928 = vmax.f32 %v912, 0.0
  %v929 = vmax.f32 %v913, 0.0
  %v930 = vmax.f32 %v914, 0.0
  %v931 = vmax.f32 %v915, 0.0
  %v932 = vmax.f32 %v916, 0.0
  %v933 = vmax.f32 %v917, 0.0
  %v934 = vmax.f32 %v918, 0.0
  %v935 = vmax.f32 %v919, 0.0
  %v936 = vmax.f32 %v920, 0.0
  %v937 = vmax.f32 %v921, 0.0
  %v938 = vmax.f32 %v922, 0.0
  %v939 = vmax.f32 %v923, 0.0
  %v940 = vmax.f32 %v924, 0.0
  %v941 = vmax.f32 %v925, 0.0
  %v942 = vmax.f32 %v926, 0.0
  %943 = vst [vmem:[%s5] sm:$0xff] %v927
  %944 = vst [vmem:[%s5 + $0x8] sm:$0xff] %v928
  %945 = vst [vmem:[%s5 + $0x10] sm:$0xff] %v929
  %946 = vst [vmem:[%s5 + $0x18] sm:$0xff] %v930
  %947 = vst [vmem:[%s5 + $0x20] sm:$0xff] %v931
  %948 = vst [vmem:[%s5 + $0x28] sm:$0xff] %v932
  %949 = vst [vmem:[%s5 + $0x30] sm:$0xff] %v933
  %950 = vst [vmem:[%s5 + $0x38] sm:$0xff] %v934
  %951 = vst [vmem:[%s5 + $0x40] sm:$0xff] %v935
  %952 = vst [vmem:[%s5 + $0x48] sm:$0xff] %v936
  %953 = vst [vmem:[%s5 + $0x50] sm:$0xff] %v937
  %954 = vst [vmem:[%s5 + $0x58] sm:$0xff] %v938
  %955 = vst [vmem:[%s5 + $0x60] sm:$0xff] %v939
  %956 = vst [vmem:[%s5 + $0x68] sm:$0xff] %v940
  %957 = vst [vmem:[%s5 + $0x70] sm:$0xff] %v941
  %958 = vst [vmem:[%s5 + $0x78] sm:$0xff] %v942
  // Predicated region
  $region22: #{resnet_forward.22} parent=0 // pred_check
    _
  $region23: #{resnet_forward.22} parent=0 // pred_check_branch
    %960 = sbr.rel (0) target = $region25
  $region24: #{resnet_forward.22} parent=0 // pred_region
    _
  $region25: #{resnet_forward.22} parent=0 // pred_fallthru
    _
  // Predicated region
  $region26: #{resnet_forward.22} parent=0 // pred_check
    _
  $region27: #{resnet_forward.22} parent=0 // pred_check_branch
    %962 = sbr.rel (0) target = $region29
  $region28: #{resnet_forward.22} parent=0 // pred_region
    _
  $region29: #{resnet_forward.22} parent=0 // pred_fallthru
    _

// kernel: resnet_forward.23
$region0: #{resnet_forward.23}
  #allocation0 [shape = 'u32[]', space=smem, size = 0x4, offset = 0x4, fixed_abs, tag = 'smem constant byte address 0x4 - core index']
  #allocation1 [shape = 'u32[144,128]{1,0:T(1,128)}', space=vmem, size = 0x12000, scoped, tag = 'internal scratch']
  %s0 = inlined_call_operand.vmem [shape: bf16[288,128], index: 0, kind: input, shape index: {}]
  %s1 = inlined_call_operand.vmem [shape: bf16[64,288], index: 1, kind: input, shape index: {}]
  %s2 = inlined_call_operand.vmem [shape: f32[64,1], index: 2, kind: input, shape index: {}]
  %s3 = inlined_call_operand.vmem [shape: f32[64,1], index: 3, kind: input, shape index: {}]
  %s4 = inlined_call_operand.vmem [shape: f32[64,128], index: 4, kind: output, shape index: {}]
  %s5 = sld [smem:[#allocation0]]
  $region26: #{resnet_forward.23} parent=0
    _
  %s7 = ssub.s32 1, %s5
  %s8 = scalar_select 0, %s7, %s5
  // Predicated region
  $region2: #{resnet_forward.23} parent=0 // pred_check
    _
  $region3: #{resnet_forward.23} parent=0 // pred_check_branch
    %10 = sbr.rel (0) target = $region5
  $region4: #{resnet_forward.23} parent=0 // pred_region
    _
  $region5: #{resnet_forward.23} parent=0 // pred_fallthru
    _
  // Predicated region
  $region6: #{resnet_forward.23} parent=0 // pred_check
    _
  $region7: #{resnet_forward.23} parent=0 // pred_check_branch
    %12 = sbr.rel (0) target = $region9
  $region8: #{resnet_forward.23} parent=0 // pred_region
    _
  $region9: #{resnet_forward.23} parent=0 // pred_fallthru
    _
  // Predicated region
  $region10: #{resnet_forward.23} parent=0 // pred_check
    _
  $region11: #{resnet_forward.23} parent=0 // pred_check_branch
    %14 = sbr.rel (0) target = $region13
  $region12: #{resnet_forward.23} parent=0 // pred_region
    _
  $region13: #{resnet_forward.23} parent=0 // pred_fallthru
    _
  // Predicated region
  $region14: #{resnet_forward.23} parent=0 // pred_check
    _
  $region15: #{resnet_forward.23} parent=0 // pred_check_branch
    %16 = sbr.rel (0) target = $region17
  $region16: #{resnet_forward.23} parent=0 // pred_region
    _
  $region17: #{resnet_forward.23} parent=0 // pred_fallthru
    _
  %v18 = vld [vmem:[%s1] sm:$0xff]
  %v19 = vld [vmem:[%s1 + $0x8] sm:$0xf]
  %v20 = vld [vmem:[%s1 + $0xc] sm:$0xff]
  %v21 = vld [vmem:[%s1 + $0x14] sm:$0xf]
  %v22 = vld [vmem:[%s1 + $0x18] sm:$0xff]
  %v23 = vld [vmem:[%s1 + $0x20] sm:$0xf]
  %v24 = vld [vmem:[%s1 + $0x24] sm:$0xff]
  %v25 = vld [vmem:[%s1 + $0x2c] sm:$0xf]
  %v26 = vld [vmem:[%s1 + $0x30] sm:$0xff]
  %v27 = vld [vmem:[%s1 + $0x38] sm:$0xf]
  %v28 = vld [vmem:[%s1 + $0x3c] sm:$0xff]
  %v29 = vld [vmem:[%s1 + $0x44] sm:$0xf]
  %v30 = vld [vmem:[%s1 + $0x48] sm:$0xff]
  %v31 = vld [vmem:[%s1 + $0x50] sm:$0xf]
  %v32 = vld [vmem:[%s1 + $0x54] sm:$0xff]
  %v33 = vld [vmem:[%s1 + $0x5c] sm:$0xf]
  %v34 = vld [vmem:[%s0] sm:$0xf]
  %v35 = vld [vmem:[%s0 + $0x4] sm:$0xf]
  %v36 = vld [vmem:[%s0 + $0x8] sm:$0xf]
  %v37 = vld [vmem:[%s0 + $0xc] sm:$0xf]
  %v38 = vld [vmem:[%s0 + $0x10] sm:$0xf]
  %v39 = vld [vmem:[%s0 + $0x14] sm:$0xf]
  %v40 = vld [vmem:[%s0 + $0x18] sm:$0xf]
  %v41 = vld [vmem:[%s0 + $0x1c] sm:$0xf]
  %v42 = vld [vmem:[%s0 + $0x20] sm:$0xf]
  %v43 = vld [vmem:[%s0 + $0x24] sm:$0xf]
  %v44 = vld [vmem:[%s0 + $0x28] sm:$0xf]
  %v45 = vld [vmem:[%s0 + $0x2c] sm:$0xf]
  %v46 = vld [vmem:[%s0 + $0x30] sm:$0xf]
  %v47 = vld [vmem:[%s0 + $0x34] sm:$0xf]
  %v48 = vld [vmem:[%s0 + $0x38] sm:$0xf]
  %v49 = vld [vmem:[%s0 + $0x3c] sm:$0xf]
  %v50 = vld [vmem:[%s0 + $0x40] sm:$0xf]
  %v51 = vld [vmem:[%s0 + $0x44] sm:$0xf]
  %v52 = vld [vmem:[%s0 + $0x48] sm:$0xf]
  %v53 = vld [vmem:[%s0 + $0x4c] sm:$0xf]
  %v54 = vld [vmem:[%s0 + $0x50] sm:$0xf]
  %v55 = vld [vmem:[%s0 + $0x54] sm:$0xf]
  %v56 = vld [vmem:[%s0 + $0x58] sm:$0xf]
  %v57 = vld [vmem:[%s0 + $0x5c] sm:$0xf]
  %v58 = vld [vmem:[%s0 + $0x60] sm:$0xf]
  %v59 = vld [vmem:[%s0 + $0x64] sm:$0xf]
  %v60 = vld [vmem:[%s0 + $0x68] sm:$0xf]
  %v61 = vld [vmem:[%s0 + $0x6c] sm:$0xf]
  %v62 = vld [vmem:[%s0 + $0x70] sm:$0xf]
  %v63 = vld [vmem:[%s0 + $0x74] sm:$0xf]
  %v64 = vld [vmem:[%s0 + $0x78] sm:$0xf]
  %v65 = vld [vmem:[%s0 + $0x7c] sm:$0xf]
  %v66 = vld [vmem:[%s0 + $0x80] sm:$0xf]
  %v67 = vld [vmem:[%s0 + $0x84] sm:$0xf]
  %v68 = vld [vmem:[%s0 + $0x88] sm:$0xf]
  %v69 = vld [vmem:[%s0 + $0x8c] sm:$0xf]
  %v86 = vunpack.c.l.b16 %v18
  %v87 = vunpack.c.h.b16 %v18
  %v88 = vunpack.c.l.b16 %v19
  %v89 = vunpack.c.l.b16 %v20
  %v90 = vunpack.c.h.b16 %v20
  %v91 = vunpack.c.l.b16 %v21
  %v92 = vunpack.c.l.b16 %v22
  %v93 = vunpack.c.h.b16 %v22
  %v94 = vunpack.c.l.b16 %v23
  %v95 = vunpack.c.l.b16 %v24
  %v96 = vunpack.c.h.b16 %v24
  %v97 = vunpack.c.l.b16 %v25
  %v98 = vunpack.c.l.b16 %v26
  %v99 = vunpack.c.h.b16 %v26
  %v100 = vunpack.c.l.b16 %v27
  %v101 = vunpack.c.l.b16 %v28
  %v102 = vunpack.c.h.b16 %v28
  %v103 = vunpack.c.l.b16 %v29
  %v104 = vunpack.c.l.b16 %v30
  %v105 = vunpack.c.h.b16 %v30
  %v106 = vunpack.c.l.b16 %v31
  %v107 = vunpack.c.l.b16 %v32
  %v108 = vunpack.c.h.b16 %v32
  %v109 = vunpack.c.l.b16 %v33
  %v110 = vpack.c.b16 %v89, %v86
  %v111 = vpack.c.b16 %v90, %v87
  %v112 = vpack.c.b16 %v91, %v88
  %v113 = vpack.c.b16 %v95, %v92
  %v114 = vpack.c.b16 %v96, %v93
  %v115 = vpack.c.b16 %v97, %v94
  %v116 = vpack.c.b16 %v101, %v98
  %v117 = vpack.c.b16 %v102, %v99
  %v118 = vpack.c.b16 %v103, %v100
  %v119 = vpack.c.b16 %v107, %v104
  %v120 = vpack.c.b16 %v108, %v105
  %v121 = vpack.c.b16 %v109, %v106
  %v166 = vunpack.c.l.b16 %v34
  %v167 = vunpack.c.l.b16 %v35
  %v168 = vunpack.c.l.b16 %v36
  %v169 = vunpack.c.l.b16 %v37
  %v170 = vunpack.c.l.b16 %v38
  %v171 = vunpack.c.l.b16 %v39
  %v172 = vunpack.c.l.b16 %v40
  %v173 = vunpack.c.l.b16 %v41
  %v174 = vunpack.c.l.b16 %v42
  %v175 = vunpack.c.l.b16 %v43
  %v176 = vunpack.c.l.b16 %v44
  %v177 = vunpack.c.l.b16 %v45
  %v178 = vunpack.c.l.b16 %v46
  %v179 = vunpack.c.l.b16 %v47
  %v180 = vunpack.c.l.b16 %v48
  %v181 = vunpack.c.l.b16 %v49
  %v182 = vunpack.c.l.b16 %v50
  %v183 = vunpack.c.l.b16 %v51
  %v184 = vunpack.c.l.b16 %v52
  %v185 = vunpack.c.l.b16 %v53
  %v186 = vunpack.c.l.b16 %v54
  %v187 = vunpack.c.l.b16 %v55
  %v188 = vunpack.c.l.b16 %v56
  %v189 = vunpack.c.l.b16 %v57
  %v190 = vunpack.c.l.b16 %v58
  %v191 = vunpack.c.l.b16 %v59
  %v192 = vunpack.c.l.b16 %v60
  %v193 = vunpack.c.l.b16 %v61
  %v194 = vunpack.c.l.b16 %v62
  %v195 = vunpack.c.l.b16 %v63
  %v196 = vunpack.c.l.b16 %v64
  %v197 = vunpack.c.l.b16 %v65
  %v198 = vunpack.c.l.b16 %v66
  %v199 = vunpack.c.l.b16 %v67
  %v200 = vunpack.c.l.b16 %v68
  %v201 = vunpack.c.l.b16 %v69
  %v202 = vpack.c.b16 %v167, %v166
  %v203 = vpack.c.b16 %v169, %v168
  %v204 = vpack.c.b16 %v171, %v170
  %v205 = vpack.c.b16 %v173, %v172
  %v206 = vpack.c.b16 %v175, %v174
  %v207 = vpack.c.b16 %v177, %v176
  %v208 = vpack.c.b16 %v179, %v178
  %v209 = vpack.c.b16 %v181, %v180
  %v210 = vpack.c.b16 %v183, %v182
  %v211 = vpack.c.b16 %v185, %v184
  %v212 = vpack.c.b16 %v187, %v186
  %v213 = vpack.c.b16 %v189, %v188
  %v214 = vpack.c.b16 %v191, %v190
  %v215 = vpack.c.b16 %v193, %v192
  %v216 = vpack.c.b16 %v195, %v194
  %v217 = vpack.c.b16 %v197, %v196
  %v218 = vpack.c.b16 %v199, %v198
  %v219 = vpack.c.b16 %v201, %v200
  %vm238 = vcmask 261120
  %v240 = vsel %vm238, %v112, 0
  %v243 = vsel %vm238, %v115, 0
  %v246 = vsel %vm238, %v118, 0
  %v249 = vsel %vm238, %v121, 0
  %251 = vmatprep.subr.bf16.mxu0 0
  %252 = vmatpush1.bf16.msra.mxu0 %v202
  %253 = vmatprep.subr.bf16.mxu0 0
  %254 = vmatpush1.bf16.msra.mxu0 %v203
  %255 = vmatprep.subr.bf16.mxu0 0
  %256 = vmatpush1.bf16.msra.mxu0 %v204
  %257 = vmatprep.subr.bf16.mxu0 0
  %258 = vmatpush1.bf16.msra.mxu0 %v205
  %259 = vmatprep.subr.bf16.mxu0 0
  %260 = vmatpush1.bf16.msra.mxu0 %v206
  %261 = vmatprep.subr.bf16.mxu0 0
  %262 = vmatpush1.bf16.msra.mxu0 %v207
  %263 = vmatprep.subr.bf16.mxu0 0
  %264 = vmatpush1.bf16.msra.mxu0 %v208
  %265 = vmatprep.subr.bf16.mxu0 0
  %266 = vmatpush1.bf16.msra.mxu0 %v209
  %267 = vmatprep.subr.bf16.mxu0 0
  %268 = vmatpush1.bf16.msra.mxu0 %v210
  %269 = vmatprep.subr.bf16.mxu0 0
  %270 = vmatpush1.bf16.msra.mxu0 %v211
  %271 = vmatprep.subr.bf16.mxu0 0
  %272 = vmatpush1.bf16.msra.mxu0 %v212
  %273 = vmatprep.subr.bf16.mxu0 0
  %274 = vmatpush1.bf16.msra.mxu0 %v213
  %275 = vmatprep.subr.bf16.mxu0 0
  %276 = vmatpush1.bf16.msra.mxu0 %v214
  %277 = vmatprep.subr.bf16.mxu0 0
  %278 = vmatpush1.bf16.msra.mxu0 %v215
  %279 = vmatprep.subr.bf16.mxu0 0
  %280 = vmatpush1.bf16.msra.mxu0 %v216
  %281 = vmatprep.subr.bf16.mxu0 0
  %282 = vmatpush1.bf16.msra.mxu0 %v217
  %283 = vmatprep.mubr.bf16.mxu0 %v111
  %284 = vmatmul.mubr.bf16.gmra.mrb[0].mxu0 %v110
  %v285 = vpop.f32.mrb[0].mxu0
  %v286 = vadd.f32 0.0, %v285
  %v287 = vpop.f32.mrb[0].mxu0
  %v288 = vpop.f32.mrb[0].mxu0
  %v289 = vadd.f32 0.0, %v288
  %v290 = vpop.f32.mrb[0].mxu0
  %291 = vmatprep.mubr.bf16.mxu0 %v114
  %292 = vmatmul.mubr.bf16.gmra.mrb[0].mxu0 %v113
  %v293 = vpop.f32.mrb[0].mxu0
  %v294 = vadd.f32 0.0, %v293
  %v295 = vpop.f32.mrb[0].mxu0
  %v296 = vpop.f32.mrb[0].mxu0
  %v297 = vadd.f32 0.0, %v296
  %v298 = vpop.f32.mrb[0].mxu0
  %299 = vmatprep.mubr.bf16.mxu0 %v117
  %300 = vmatmul.mubr.bf16.gmra.mrb[0].mxu0 %v116
  %v301 = vpop.f32.mrb[0].mxu0
  %v302 = vadd.f32 0.0, %v301
  %v303 = vpop.f32.mrb[0].mxu0
  %v304 = vpop.f32.mrb[0].mxu0
  %v305 = vadd.f32 0.0, %v304
  %v306 = vpop.f32.mrb[0].mxu0
  %307 = vmatprep.mubr.bf16.mxu0 %v120
  %308 = vmatmul.mubr.bf16.gmra.mrb[0].mxu0 %v119
  %v309 = vpop.f32.mrb[0].mxu0
  %v310 = vadd.f32 0.0, %v309
  %v311 = vpop.f32.mrb[0].mxu0
  %v312 = vpop.f32.mrb[0].mxu0
  %v313 = vadd.f32 0.0, %v312
  %v314 = vpop.f32.mrb[0].mxu0
  %315 = vdwg.mxu0
  %316 = vmatprep.subr.bf16.mxu0 0
  %317 = vmatpush1.bf16.msra.mxu0 %v218
  %318 = vmatprep.subr.bf16.mxu0 0
  %319 = vmatpush1.bf16.msra.mxu0 %v219
  %320 = vmatprep.subr.bf16.mxu0 0
  %321 = vmatpush1.bf16.msra.mxu0 0
  %322 = vmatprep.subr.bf16.mxu0 0
  %323 = vmatpush1.bf16.msra.mxu0 0
  %324 = vmatprep.subr.bf16.mxu0 0
  %325 = vmatpush1.bf16.msra.mxu0 0
  %326 = vmatprep.subr.bf16.mxu0 0
  %327 = vmatpush1.bf16.msra.mxu0 0
  %328 = vmatprep.subr.bf16.mxu0 0
  %329 = vmatpush1.bf16.msra.mxu0 0
  %330 = vmatprep.subr.bf16.mxu0 0
  %331 = vmatpush1.bf16.msra.mxu0 0
  %332 = vmatprep.subr.bf16.mxu0 0
  %333 = vmatpush1.bf16.msra.mxu0 0
  %334 = vmatprep.subr.bf16.mxu0 0
  %335 = vmatpush1.bf16.msra.mxu0 0
  %336 = vmatprep.subr.bf16.mxu0 0
  %337 = vmatpush1.bf16.msra.mxu0 0
  %338 = vmatprep.subr.bf16.mxu0 0
  %339 = vmatpush1.bf16.msra.mxu0 0
  %340 = vmatprep.subr.bf16.mxu0 0
  %341 = vmatpush1.bf16.msra.mxu0 0
  %342 = vmatprep.subr.bf16.mxu0 0
  %343 = vmatpush1.bf16.msra.mxu0 0
  %344 = vmatprep.subr.bf16.mxu0 0
  %345 = vmatpush1.bf16.msra.mxu0 0
  %346 = vmatprep.subr.bf16.mxu0 0
  %347 = vmatpush1.bf16.msra.mxu0 0
  %348 = vmatprep.mubr.bf16.mxu0 0
  %349 = vmatmul.mubr.bf16.gmra.mrb[0].mxu0 %v240
  %v350 = vpop.f32.mrb[0].mxu0
  %v351 = vadd.f32 %v286, %v350
  %v352 = vpop.f32.mrb[0].mxu0
  %v353 = vpop.f32.mrb[0].mxu0
  %v354 = vadd.f32 %v289, %v353
  %v355 = vpop.f32.mrb[0].mxu0
  %356 = vmatprep.mubr.bf16.mxu0 0
  %357 = vmatmul.mubr.bf16.gmra.mrb[0].mxu0 %v243
  %v358 = vpop.f32.mrb[0].mxu0
  %v359 = vadd.f32 %v294, %v358
  %v360 = vpop.f32.mrb[0].mxu0
  %v361 = vpop.f32.mrb[0].mxu0
  %v362 = vadd.f32 %v297, %v361
  %v363 = vpop.f32.mrb[0].mxu0
  %364 = vmatprep.mubr.bf16.mxu0 0
  %365 = vmatmul.mubr.bf16.gmra.mrb[0].mxu0 %v246
  %v366 = vpop.f32.mrb[0].mxu0
  %v367 = vadd.f32 %v302, %v366
  %v368 = vpop.f32.mrb[0].mxu0
  %v369 = vpop.f32.mrb[0].mxu0
  %v370 = vadd.f32 %v305, %v369
  %v371 = vpop.f32.mrb[0].mxu0
  %372 = vmatprep.mubr.bf16.mxu0 0
  %373 = vmatmul.mubr.bf16.gmra.mrb[0].mxu0 %v249
  %v374 = vpop.f32.mrb[0].mxu0
  %v375 = vadd.f32 %v310, %v374
  %v376 = vpop.f32.mrb[0].mxu0
  %v377 = vpop.f32.mrb[0].mxu0
  %v378 = vadd.f32 %v313, %v377
  %v379 = vpop.f32.mrb[0].mxu0
  %380 = vdwg.mxu0
  %v381 = vld [vmem:[%s2] sm:$0xff]
  %v382 = vld [vmem:[%s2 + $0x8] sm:$0xff]
  %v383 = vld [vmem:[%s2 + $0x10] sm:$0xff]
  %v384 = vld [vmem:[%s2 + $0x18] sm:$0xff]
  %v385 = vld [vmem:[%s2 + $0x20] sm:$0xff]
  %v386 = vld [vmem:[%s2 + $0x28] sm:$0xff]
  %v387 = vld [vmem:[%s2 + $0x30] sm:$0xff]
  %v388 = vld [vmem:[%s2 + $0x38] sm:$0xff]
  %v389 = vld [vmem:[%s3] sm:$0xff]
  %v390 = vld [vmem:[%s3 + $0x8] sm:$0xff]
  %v391 = vld [vmem:[%s3 + $0x10] sm:$0xff]
  %v392 = vld [vmem:[%s3 + $0x18] sm:$0xff]
  %v393 = vld [vmem:[%s3 + $0x20] sm:$0xff]
  %v394 = vld [vmem:[%s3 + $0x28] sm:$0xff]
  %v395 = vld [vmem:[%s3 + $0x30] sm:$0xff]
  %v396 = vld [vmem:[%s3 + $0x38] sm:$0xff]
  %397 = vadd.xlane.f32.xlu0 %v351
  %v398 = vpop.xlane.xlu0 %397
  %399 = vadd.xlane.f32.xlu0 %v354
  %v400 = vpop.xlane.xlu0 %399
  %401 = vadd.xlane.f32.xlu0 %v359
  %v402 = vpop.xlane.xlu0 %401
  %403 = vadd.xlane.f32.xlu0 %v362
  %v404 = vpop.xlane.xlu0 %403
  %405 = vadd.xlane.f32.xlu0 %v367
  %v406 = vpop.xlane.xlu0 %405
  %407 = vadd.xlane.f32.xlu0 %v370
  %v408 = vpop.xlane.xlu0 %407
  %409 = vadd.xlane.f32.xlu0 %v375
  %v410 = vpop.xlane.xlu0 %409
  %411 = vadd.xlane.f32.xlu0 %v378
  %v412 = vpop.xlane.xlu0 %411
  %v413 = vrcp.pop 128.0
  %v414 = vmul.f32 %v398, %v413
  %v415 = vmul.f32 %v400, %v413
  %v416 = vmul.f32 %v402, %v413
  %v417 = vmul.f32 %v404, %v413
  %v418 = vmul.f32 %v406, %v413
  %v419 = vmul.f32 %v408, %v413
  %v420 = vmul.f32 %v410, %v413
  %v421 = vmul.f32 %v412, %v413
  %v422 = vsub.f32 %v351, %v414
  %v423 = vsub.f32 %v354, %v415
  %v424 = vsub.f32 %v359, %v416
  %v425 = vsub.f32 %v362, %v417
  %v426 = vsub.f32 %v367, %v418
  %v427 = vsub.f32 %v370, %v419
  %v428 = vsub.f32 %v375, %v420
  %v429 = vsub.f32 %v378, %v421
  %v430 = vmul.f32 %v422, %v422
  %v431 = vmul.f32 %v423, %v423
  %v432 = vmul.f32 %v424, %v424
  %v433 = vmul.f32 %v425, %v425
  %v434 = vmul.f32 %v426, %v426
  %v435 = vmul.f32 %v427, %v427
  %v436 = vmul.f32 %v428, %v428
  %v437 = vmul.f32 %v429, %v429
  %438 = vadd.xlane.f32.xlu0 %v430
  %v439 = vpop.xlane.xlu0 %438
  %440 = vadd.xlane.f32.xlu0 %v431
  %v441 = vpop.xlane.xlu0 %440
  %442 = vadd.xlane.f32.xlu0 %v432
  %v443 = vpop.xlane.xlu0 %442
  %444 = vadd.xlane.f32.xlu0 %v433
  %v445 = vpop.xlane.xlu0 %444
  %446 = vadd.xlane.f32.xlu0 %v434
  %v447 = vpop.xlane.xlu0 %446
  %448 = vadd.xlane.f32.xlu0 %v435
  %v449 = vpop.xlane.xlu0 %448
  %450 = vadd.xlane.f32.xlu0 %v436
  %v451 = vpop.xlane.xlu0 %450
  %452 = vadd.xlane.f32.xlu0 %v437
  %v453 = vpop.xlane.xlu0 %452
  %v454 = vmul.f32 %v439, %v413
  %v455 = vmul.f32 %v441, %v413
  %v456 = vmul.f32 %v443, %v413
  %v457 = vmul.f32 %v445, %v413
  %v458 = vmul.f32 %v447, %v413
  %v459 = vmul.f32 %v449, %v413
  %v460 = vmul.f32 %v451, %v413
  %v461 = vmul.f32 %v453, %v413
  %v462 = vadd.f32 %v454, 1e-05
  %v463 = vadd.f32 %v455, 1e-05
  %v464 = vadd.f32 %v456, 1e-05
  %v465 = vadd.f32 %v457, 1e-05
  %v466 = vadd.f32 %v458, 1e-05
  %v467 = vadd.f32 %v459, 1e-05
  %v468 = vadd.f32 %v460, 1e-05
  %v469 = vadd.f32 %v461, 1e-05
  %v470 = vrsqrt.pop %v462
  %v471 = vrsqrt.pop %v463
  %v472 = vrsqrt.pop %v464
  %v473 = vrsqrt.pop %v465
  %v474 = vrsqrt.pop %v466
  %v475 = vrsqrt.pop %v467
  %v476 = vrsqrt.pop %v468
  %v477 = vrsqrt.pop %v469
  %v478 = vmul.f32 %v422, %v470
  %v479 = vmul.f32 %v423, %v471
  %v480 = vmul.f32 %v424, %v472
  %v481 = vmul.f32 %v425, %v473
  %v482 = vmul.f32 %v426, %v474
  %v483 = vmul.f32 %v427, %v475
  %v484 = vmul.f32 %v428, %v476
  %v485 = vmul.f32 %v429, %v477
  %487 = vset.pattern.permute.xlu0 0
  %488 = vperm.xlu0 %487, %v381
  %v489 = vpop.permute.xlu0 %488
  %492 = vset.pattern.permute.xlu0 0
  %493 = vperm.xlu0 %492, %v382
  %v494 = vpop.permute.xlu0 %493
  %497 = vset.pattern.permute.xlu0 0
  %498 = vperm.xlu0 %497, %v383
  %v499 = vpop.permute.xlu0 %498
  %502 = vset.pattern.permute.xlu0 0
  %503 = vperm.xlu0 %502, %v384
  %v504 = vpop.permute.xlu0 %503
  %507 = vset.pattern.permute.xlu0 0
  %508 = vperm.xlu0 %507, %v385
  %v509 = vpop.permute.xlu0 %508
  %512 = vset.pattern.permute.xlu0 0
  %513 = vperm.xlu0 %512, %v386
  %v514 = vpop.permute.xlu0 %513
  %517 = vset.pattern.permute.xlu0 0
  %518 = vperm.xlu0 %517, %v387
  %v519 = vpop.permute.xlu0 %518
  %522 = vset.pattern.permute.xlu0 0
  %523 = vperm.xlu0 %522, %v388
  %v524 = vpop.permute.xlu0 %523
  %v526 = vmul.f32 %v478, %v489
  %v527 = vmul.f32 %v479, %v494
  %v528 = vmul.f32 %v480, %v499
  %v529 = vmul.f32 %v481, %v504
  %v530 = vmul.f32 %v482, %v509
  %v531 = vmul.f32 %v483, %v514
  %v532 = vmul.f32 %v484, %v519
  %v533 = vmul.f32 %v485, %v524
  %535 = vset.pattern.permute.xlu0 0
  %536 = vperm.xlu0 %535, %v389
  %v537 = vpop.permute.xlu0 %536
  %540 = vset.pattern.permute.xlu0 0
  %541 = vperm.xlu0 %540, %v390
  %v542 = vpop.permute.xlu0 %541
  %545 = vset.pattern.permute.xlu0 0
  %546 = vperm.xlu0 %545, %v391
  %v547 = vpop.permute.xlu0 %546
  %550 = vset.pattern.permute.xlu0 0
  %551 = vperm.xlu0 %550, %v392
  %v552 = vpop.permute.xlu0 %551
  %555 = vset.pattern.permute.xlu0 0
  %556 = vperm.xlu0 %555, %v393
  %v557 = vpop.permute.xlu0 %556
  %560 = vset.pattern.permute.xlu0 0
  %561 = vperm.xlu0 %560, %v394
  %v562 = vpop.permute.xlu0 %561
  %565 = vset.pattern.permute.xlu0 0
  %566 = vperm.xlu0 %565, %v395
  %v567 = vpop.permute.xlu0 %566
  %570 = vset.pattern.permute.xlu0 0
  %571 = vperm.xlu0 %570, %v396
  %v572 = vpop.permute.xlu0 %571
  %v574 = vadd.f32 %v526, %v537
  %v575 = vadd.f32 %v527, %v542
  %v576 = vadd.f32 %v528, %v547
  %v577 = vadd.f32 %v529, %v552
  %v578 = vadd.f32 %v530, %v557
  %v579 = vadd.f32 %v531, %v562
  %v580 = vadd.f32 %v532, %v567
  %v581 = vadd.f32 %v533, %v572
  %v582 = vmax.f32 %v574, 0.0
  %v583 = vmax.f32 %v575, 0.0
  %v584 = vmax.f32 %v576, 0.0
  %v585 = vmax.f32 %v577, 0.0
  %v586 = vmax.f32 %v578, 0.0
  %v587 = vmax.f32 %v579, 0.0
  %v588 = vmax.f32 %v580, 0.0
  %v589 = vmax.f32 %v581, 0.0
  %590 = vst [vmem:[%s4] sm:$0xff] %v582
  %591 = vst [vmem:[%s4 + $0x8] sm:$0xff] %v583
  %592 = vst [vmem:[%s4 + $0x10] sm:$0xff] %v584
  %593 = vst [vmem:[%s4 + $0x18] sm:$0xff] %v585
  %594 = vst [vmem:[%s4 + $0x20] sm:$0xff] %v586
  %595 = vst [vmem:[%s4 + $0x28] sm:$0xff] %v587
  %596 = vst [vmem:[%s4 + $0x30] sm:$0xff] %v588
  %597 = vst [vmem:[%s4 + $0x38] sm:$0xff] %v589
  // Predicated region
  $region18: #{resnet_forward.23} parent=0 // pred_check
    _
  $region19: #{resnet_forward.23} parent=0 // pred_check_branch
    %599 = sbr.rel (0) target = $region21
  $region20: #{resnet_forward.23} parent=0 // pred_region
    _
  $region21: #{resnet_forward.23} parent=0 // pred_fallthru
    _
  // Predicated region
  $region22: #{resnet_forward.23} parent=0 // pred_check
    _
  $region23: #{resnet_forward.23} parent=0 // pred_check_branch
    %601 = sbr.rel (0) target = $region25
  $region24: #{resnet_forward.23} parent=0 // pred_region
    _
  $region25: #{resnet_forward.23} parent=0 // pred_fallthru
    _

// kernel: resnet_forward.24
$region0: #{resnet_forward.24}
  #allocation0 [shape = 'u32[]', space=smem, size = 0x4, offset = 0x4, fixed_abs, tag = 'smem constant byte address 0x4 - core index']
  #allocation1 [shape = 'u32[144,128]{1,0:T(1,128)}', space=vmem, size = 0x12000, scoped, tag = 'internal scratch']
  %s0 = inlined_call_operand.vmem [shape: bf16[576,128], index: 0, kind: input, shape index: {}]
  %s1 = inlined_call_operand.vmem [shape: bf16[64,576], index: 1, kind: input, shape index: {}]
  %s2 = inlined_call_operand.vmem [shape: f32[64,1], index: 2, kind: input, shape index: {}]
  %s3 = inlined_call_operand.vmem [shape: f32[64,1], index: 3, kind: input, shape index: {}]
  %s4 = inlined_call_operand.vmem [shape: bf16[32,128], index: 4, kind: input, shape index: {}]
  %s5 = inlined_call_operand.vmem [shape: bf16[64,32], index: 5, kind: input, shape index: {}]
  %s6 = inlined_call_operand.vmem [shape: f32[64,1], index: 6, kind: input, shape index: {}]
  %s7 = inlined_call_operand.vmem [shape: f32[64,1], index: 7, kind: input, shape index: {}]
  %s8 = inlined_call_operand.vmem [shape: f32[64,128], index: 8, kind: output, shape index: {}]
  %s9 = sld [smem:[#allocation0]]
  $region42: #{resnet_forward.24} parent=0
    _
  %s11 = ssub.s32 1, %s9
  %s12 = scalar_select 0, %s11, %s9
  // Predicated region
  $region2: #{resnet_forward.24} parent=0 // pred_check
    _
  $region3: #{resnet_forward.24} parent=0 // pred_check_branch
    %14 = sbr.rel (0) target = $region5
  $region4: #{resnet_forward.24} parent=0 // pred_region
    _
  $region5: #{resnet_forward.24} parent=0 // pred_fallthru
    _
  // Predicated region
  $region6: #{resnet_forward.24} parent=0 // pred_check
    _
  $region7: #{resnet_forward.24} parent=0 // pred_check_branch
    %16 = sbr.rel (0) target = $region9
  $region8: #{resnet_forward.24} parent=0 // pred_region
    _
  $region9: #{resnet_forward.24} parent=0 // pred_fallthru
    _
  // Predicated region
  $region10: #{resnet_forward.24} parent=0 // pred_check
    _
  $region11: #{resnet_forward.24} parent=0 // pred_check_branch
    %18 = sbr.rel (0) target = $region13
  $region12: #{resnet_forward.24} parent=0 // pred_region
    _
  $region13: #{resnet_forward.24} parent=0 // pred_fallthru
    _
  // Predicated region
  $region14: #{resnet_forward.24} parent=0 // pred_check
    _
  $region15: #{resnet_forward.24} parent=0 // pred_check_branch
    %20 = sbr.rel (0) target = $region17
  $region16: #{resnet_forward.24} parent=0 // pred_region
    _
  $region17: #{resnet_forward.24} parent=0 // pred_fallthru
    _
  // Predicated region
  $region18: #{resnet_forward.24} parent=0 // pred_check
    _
  $region19: #{resnet_forward.24} parent=0 // pred_check_branch
    %22 = sbr.rel (0) target = $region21
  $region20: #{resnet_forward.24} parent=0 // pred_region
    _
  $region21: #{resnet_forward.24} parent=0 // pred_fallthru
    _
  // Predicated region
  $region22: #{resnet_forward.24} parent=0 // pred_check
    _
  $region23: #{resnet_forward.24} parent=0 // pred_check_branch
    %24 = sbr.rel (0) target = $region25
  $region24: #{resnet_forward.24} parent=0 // pred_region
    _
  $region25: #{resnet_forward.24} parent=0 // pred_fallthru
    _
  // Predicated region
  $region26: #{resnet_forward.24} parent=0 // pred_check
    _
  $region27: #{resnet_forward.24} parent=0 // pred_check_branch
    %26 = sbr.rel (0) target = $region29
  $region28: #{resnet_forward.24} parent=0 // pred_region
    _
  $region29: #{resnet_forward.24} parent=0 // pred_fallthru
    _
  // Predicated region
  $region30: #{resnet_forward.24} parent=0 // pred_check
    _
  $region31: #{resnet_forward.24} parent=0 // pred_check_branch
    %28 = sbr.rel (0) target = $region33
  $region32: #{resnet_forward.24} parent=0 // pred_region
    _
  $region33: #{resnet_forward.24} parent=0 // pred_fallthru
    _
  %v30 = vld [vmem:[%s1] sm:$0xff]
  %v31 = vld [vmem:[%s1 + $0x8] sm:$0xff]
  %v32 = vld [vmem:[%s1 + $0x10] sm:$0xf]
  %v33 = vld [vmem:[%s1 + $0x14] sm:$0xff]
  %v34 = vld [vmem:[%s1 + $0x1c] sm:$0xff]
  %v35 = vld [vmem:[%s1 + $0x24] sm:$0xf]
  %v36 = vld [vmem:[%s1 + $0x28] sm:$0xff]
  %v37 = vld [vmem:[%s1 + $0x30] sm:$0xff]
  %v38 = vld [vmem:[%s1 + $0x38] sm:$0xf]
  %v39 = vld [vmem:[%s1 + $0x3c] sm:$0xff]
  %v40 = vld [vmem:[%s1 + $0x44] sm:$0xff]
  %v41 = vld [vmem:[%s1 + $0x4c] sm:$0xf]
  %v42 = vld [vmem:[%s1 + $0x50] sm:$0xff]
  %v43 = vld [vmem:[%s1 + $0x58] sm:$0xff]
  %v44 = vld [vmem:[%s1 + $0x60] sm:$0xf]
  %v45 = vld [vmem:[%s1 + $0x64] sm:$0xff]
  %v46 = vld [vmem:[%s1 + $0x6c] sm:$0xff]
  %v47 = vld [vmem:[%s1 + $0x74] sm:$0xf]
  %v48 = vld [vmem:[%s1 + $0x78] sm:$0xff]
  %v49 = vld [vmem:[%s1 + $0x80] sm:$0xff]
  %v50 = vld [vmem:[%s1 + $0x88] sm:$0xf]
  %v51 = vld [vmem:[%s1 + $0x8c] sm:$0xff]
  %v52 = vld [vmem:[%s1 + $0x94] sm:$0xff]
  %v53 = vld [vmem:[%s1 + $0x9c] sm:$0xf]
  %v54 = vld [vmem:[%s0] sm:$0xf]
  %v55 = vld [vmem:[%s0 + $0x4] sm:$0xf]
  %v56 = vld [vmem:[%s0 + $0x8] sm:$0xf]
  %v57 = vld [vmem:[%s0 + $0xc] sm:$0xf]
  %v58 = vld [vmem:[%s0 + $0x10] sm:$0xf]
  %v59 = vld [vmem:[%s0 + $0x14] sm:$0xf]
  %v60 = vld [vmem:[%s0 + $0x18] sm:$0xf]
  %v61 = vld [vmem:[%s0 + $0x1c] sm:$0xf]
  %v62 = vld [vmem:[%s0 + $0x20] sm:$0xf]
  %v63 = vld [vmem:[%s0 + $0x24] sm:$0xf]
  %v64 = vld [vmem:[%s0 + $0x28] sm:$0xf]
  %v65 = vld [vmem:[%s0 + $0x2c] sm:$0xf]
  %v66 = vld [vmem:[%s0 + $0x30] sm:$0xf]
  %v67 = vld [vmem:[%s0 + $0x34] sm:$0xf]
  %v68 = vld [vmem:[%s0 + $0x38] sm:$0xf]
  %v69 = vld [vmem:[%s0 + $0x3c] sm:$0xf]
  %v70 = vld [vmem:[%s0 + $0x40] sm:$0xf]
  %v71 = vld [vmem:[%s0 + $0x44] sm:$0xf]
  %v72 = vld [vmem:[%s0 + $0x48] sm:$0xf]
  %v73 = vld [vmem:[%s0 + $0x4c] sm:$0xf]
  %v74 = vld [vmem:[%s0 + $0x50] sm:$0xf]
  %v75 = vld [vmem:[%s0 + $0x54] sm:$0xf]
  %v76 = vld [vmem:[%s0 + $0x58] sm:$0xf]
  %v77 = vld [vmem:[%s0 + $0x5c] sm:$0xf]
  %v78 = vld [vmem:[%s0 + $0x60] sm:$0xf]
  %v79 = vld [vmem:[%s0 + $0x64] sm:$0xf]
  %v80 = vld [vmem:[%s0 + $0x68] sm:$0xf]
  %v81 = vld [vmem:[%s0 + $0x6c] sm:$0xf]
  %v82 = vld [vmem:[%s0 + $0x70] sm:$0xf]
  %v83 = vld [vmem:[%s0 + $0x74] sm:$0xf]
  %v84 = vld [vmem:[%s0 + $0x78] sm:$0xf]
  %v85 = vld [vmem:[%s0 + $0x7c] sm:$0xf]
  %v86 = vld [vmem:[%s0 + $0x80] sm:$0xf]
  %v87 = vld [vmem:[%s0 + $0x84] sm:$0xf]
  %v88 = vld [vmem:[%s0 + $0x88] sm:$0xf]
  %v89 = vld [vmem:[%s0 + $0x8c] sm:$0xf]
  %v90 = vld [vmem:[%s0 + $0x90] sm:$0xf]
  %v91 = vld [vmem:[%s0 + $0x94] sm:$0xf]
  %v92 = vld [vmem:[%s0 + $0x98] sm:$0xf]
  %v93 = vld [vmem:[%s0 + $0x9c] sm:$0xf]
  %v94 = vld [vmem:[%s0 + $0xa0] sm:$0xf]
  %v95 = vld [vmem:[%s0 + $0xa4] sm:$0xf]
  %v96 = vld [vmem:[%s0 + $0xa8] sm:$0xf]
  %v97 = vld [vmem:[%s0 + $0xac] sm:$0xf]
  %v98 = vld [vmem:[%s0 + $0xb0] sm:$0xf]
  %v99 = vld [vmem:[%s0 + $0xb4] sm:$0xf]
  %v100 = vld [vmem:[%s0 + $0xb8] sm:$0xf]
  %v101 = vld [vmem:[%s0 + $0xbc] sm:$0xf]
  %v102 = vld [vmem:[%s0 + $0xc0] sm:$0xf]
  %v103 = vld [vmem:[%s0 + $0xc4] sm:$0xf]
  %v104 = vld [vmem:[%s0 + $0xc8] sm:$0xf]
  %v105 = vld [vmem:[%s0 + $0xcc] sm:$0xf]
  %v106 = vld [vmem:[%s0 + $0xd0] sm:$0xf]
  %v107 = vld [vmem:[%s0 + $0xd4] sm:$0xf]
  %v108 = vld [vmem:[%s0 + $0xd8] sm:$0xf]
  %v109 = vld [vmem:[%s0 + $0xdc] sm:$0xf]
  %v110 = vld [vmem:[%s0 + $0xe0] sm:$0xf]
  %v111 = vld [vmem:[%s0 + $0xe4] sm:$0xf]
  %v112 = vld [vmem:[%s0 + $0xe8] sm:$0xf]
  %v113 = vld [vmem:[%s0 + $0xec] sm:$0xf]
  %v114 = vld [vmem:[%s0 + $0xf0] sm:$0xf]
  %v115 = vld [vmem:[%s0 + $0xf4] sm:$0xf]
  %v116 = vld [vmem:[%s0 + $0xf8] sm:$0xf]
  %v117 = vld [vmem:[%s0 + $0xfc] sm:$0xf]
  %v118 = vld [vmem:[%s0 + $0x100] sm:$0xf]
  %v119 = vld [vmem:[%s0 + $0x104] sm:$0xf]
  %v120 = vld [vmem:[%s0 + $0x108] sm:$0xf]
  %v121 = vld [vmem:[%s0 + $0x10c] sm:$0xf]
  %v122 = vld [vmem:[%s0 + $0x110] sm:$0xf]
  %v123 = vld [vmem:[%s0 + $0x114] sm:$0xf]
  %v124 = vld [vmem:[%s0 + $0x118] sm:$0xf]
  %v125 = vld [vmem:[%s0 + $0x11c] sm:$0xf]
  %v150 = vunpack.c.l.b16 %v30
  %v151 = vunpack.c.h.b16 %v30
  %v152 = vunpack.c.l.b16 %v31
  %v153 = vunpack.c.h.b16 %v31
  %v154 = vunpack.c.l.b16 %v32
  %v155 = vunpack.c.l.b16 %v33
  %v156 = vunpack.c.h.b16 %v33
  %v157 = vunpack.c.l.b16 %v34
  %v158 = vunpack.c.h.b16 %v34
  %v159 = vunpack.c.l.b16 %v35
  %v160 = vunpack.c.l.b16 %v36
  %v161 = vunpack.c.h.b16 %v36
  %v162 = vunpack.c.l.b16 %v37
  %v163 = vunpack.c.h.b16 %v37
  %v164 = vunpack.c.l.b16 %v38
  %v165 = vunpack.c.l.b16 %v39
  %v166 = vunpack.c.h.b16 %v39
  %v167 = vunpack.c.l.b16 %v40
  %v168 = vunpack.c.h.b16 %v40
  %v169 = vunpack.c.l.b16 %v41
  %v170 = vunpack.c.l.b16 %v42
  %v171 = vunpack.c.h.b16 %v42
  %v172 = vunpack.c.l.b16 %v43
  %v173 = vunpack.c.h.b16 %v43
  %v174 = vunpack.c.l.b16 %v44
  %v175 = vunpack.c.l.b16 %v45
  %v176 = vunpack.c.h.b16 %v45
  %v177 = vunpack.c.l.b16 %v46
  %v178 = vunpack.c.h.b16 %v46
  %v179 = vunpack.c.l.b16 %v47
  %v180 = vunpack.c.l.b16 %v48
  %v181 = vunpack.c.h.b16 %v48
  %v182 = vunpack.c.l.b16 %v49
  %v183 = vunpack.c.h.b16 %v49
  %v184 = vunpack.c.l.b16 %v50
  %v185 = vunpack.c.l.b16 %v51
  %v186 = vunpack.c.h.b16 %v51
  %v187 = vunpack.c.l.b16 %v52
  %v188 = vunpack.c.h.b16 %v52
  %v189 = vunpack.c.l.b16 %v53
  %v190 = vpack.c.b16 %v155, %v150
  %v191 = vpack.c.b16 %v156, %v151
  %v192 = vpack.c.b16 %v157, %v152
  %v193 = vpack.c.b16 %v158, %v153
  %v194 = vpack.c.b16 %v159, %v154
  %v195 = vpack.c.b16 %v165, %v160
  %v196 = vpack.c.b16 %v166, %v161
  %v197 = vpack.c.b16 %v167, %v162
  %v198 = vpack.c.b16 %v168, %v163
  %v199 = vpack.c.b16 %v169, %v164
  %v200 = vpack.c.b16 %v175, %v170
  %v201 = vpack.c.b16 %v176, %v171
  %v202 = vpack.c.b16 %v177, %v172
  %v203 = vpack.c.b16 %v178, %v173
  %v204 = vpack.c.b16 %v179, %v174
  %v205 = vpack.c.b16 %v185, %v180
  %v206 = vpack.c.b16 %v186, %v181
  %v207 = vpack.c.b16 %v187, %v182
  %v208 = vpack.c.b16 %v188, %v183
  %v209 = vpack.c.b16 %v189, %v184
  %v298 = vunpack.c.l.b16 %v54
  %v299 = vunpack.c.l.b16 %v55
  %v300 = vunpack.c.l.b16 %v56
  %v301 = vunpack.c.l.b16 %v57
  %v302 = vunpack.c.l.b16 %v58
  %v303 = vunpack.c.l.b16 %v59
  %v304 = vunpack.c.l.b16 %v60
  %v305 = vunpack.c.l.b16 %v61
  %v306 = vunpack.c.l.b16 %v62
  %v307 = vunpack.c.l.b16 %v63
  %v308 = vunpack.c.l.b16 %v64
  %v309 = vunpack.c.l.b16 %v65
  %v310 = vunpack.c.l.b16 %v66
  %v311 = vunpack.c.l.b16 %v67
  %v312 = vunpack.c.l.b16 %v68
  %v313 = vunpack.c.l.b16 %v69
  %v314 = vunpack.c.l.b16 %v70
  %v315 = vunpack.c.l.b16 %v71
  %v316 = vunpack.c.l.b16 %v72
  %v317 = vunpack.c.l.b16 %v73
  %v318 = vunpack.c.l.b16 %v74
  %v319 = vunpack.c.l.b16 %v75
  %v320 = vunpack.c.l.b16 %v76
  %v321 = vunpack.c.l.b16 %v77
  %v322 = vunpack.c.l.b16 %v78
  %v323 = vunpack.c.l.b16 %v79
  %v324 = vunpack.c.l.b16 %v80
  %v325 = vunpack.c.l.b16 %v81
  %v326 = vunpack.c.l.b16 %v82
  %v327 = vunpack.c.l.b16 %v83
  %v328 = vunpack.c.l.b16 %v84
  %v329 = vunpack.c.l.b16 %v85
  %v330 = vunpack.c.l.b16 %v86
  %v331 = vunpack.c.l.b16 %v87
  %v332 = vunpack.c.l.b16 %v88
  %v333 = vunpack.c.l.b16 %v89
  %v334 = vunpack.c.l.b16 %v90
  %v335 = vunpack.c.l.b16 %v91
  %v336 = vunpack.c.l.b16 %v92
  %v337 = vunpack.c.l.b16 %v93
  %v338 = vunpack.c.l.b16 %v94
  %v339 = vunpack.c.l.b16 %v95
  %v340 = vunpack.c.l.b16 %v96
  %v341 = vunpack.c.l.b16 %v97
  %v342 = vunpack.c.l.b16 %v98
  %v343 = vunpack.c.l.b16 %v99
  %v344 = vunpack.c.l.b16 %v100
  %v345 = vunpack.c.l.b16 %v101
  %v346 = vunpack.c.l.b16 %v102
  %v347 = vunpack.c.l.b16 %v103
  %v348 = vunpack.c.l.b16 %v104
  %v349 = vunpack.c.l.b16 %v105
  %v350 = vunpack.c.l.b16 %v106
  %v351 = vunpack.c.l.b16 %v107
  %v352 = vunpack.c.l.b16 %v108
  %v353 = vunpack.c.l.b16 %v109
  %v354 = vunpack.c.l.b16 %v110
  %v355 = vunpack.c.l.b16 %v111
  %v356 = vunpack.c.l.b16 %v112
  %v357 = vunpack.c.l.b16 %v113
  %v358 = vunpack.c.l.b16 %v114
  %v359 = vunpack.c.l.b16 %v115
  %v360 = vunpack.c.l.b16 %v116
  %v361 = vunpack.c.l.b16 %v117
  %v362 = vunpack.c.l.b16 %v118
  %v363 = vunpack.c.l.b16 %v119
  %v364 = vunpack.c.l.b16 %v120
  %v365 = vunpack.c.l.b16 %v121
  %v366 = vunpack.c.l.b16 %v122
  %v367 = vunpack.c.l.b16 %v123
  %v368 = vunpack.c.l.b16 %v124
  %v369 = vunpack.c.l.b16 %v125
  %v370 = vpack.c.b16 %v299, %v298
  %v371 = vpack.c.b16 %v301, %v300
  %v372 = vpack.c.b16 %v303, %v302
  %v373 = vpack.c.b16 %v305, %v304
  %v374 = vpack.c.b16 %v307, %v306
  %v375 = vpack.c.b16 %v309, %v308
  %v376 = vpack.c.b16 %v311, %v310
  %v377 = vpack.c.b16 %v313, %v312
  %v378 = vpack.c.b16 %v315, %v314
  %v379 = vpack.c.b16 %v317, %v316
  %v380 = vpack.c.b16 %v319, %v318
  %v381 = vpack.c.b16 %v321, %v320
  %v382 = vpack.c.b16 %v323, %v322
  %v383 = vpack.c.b16 %v325, %v324
  %v384 = vpack.c.b16 %v327, %v326
  %v385 = vpack.c.b16 %v329, %v328
  %v386 = vpack.c.b16 %v331, %v330
  %v387 = vpack.c.b16 %v333, %v332
  %v388 = vpack.c.b16 %v335, %v334
  %v389 = vpack.c.b16 %v337, %v336
  %v390 = vpack.c.b16 %v339, %v338
  %v391 = vpack.c.b16 %v341, %v340
  %v392 = vpack.c.b16 %v343, %v342
  %v393 = vpack.c.b16 %v345, %v344
  %v394 = vpack.c.b16 %v347, %v346
  %v395 = vpack.c.b16 %v349, %v348
  %v396 = vpack.c.b16 %v351, %v350
  %v397 = vpack.c.b16 %v353, %v352
  %v398 = vpack.c.b16 %v355, %v354
  %v399 = vpack.c.b16 %v357, %v356
  %v400 = vpack.c.b16 %v359, %v358
  %v401 = vpack.c.b16 %v361, %v360
  %v402 = vpack.c.b16 %v363, %v362
  %v403 = vpack.c.b16 %v365, %v364
  %v404 = vpack.c.b16 %v367, %v366
  %v405 = vpack.c.b16 %v369, %v368
  %vm442 = vcmask 523264
  %v444 = vsel %vm442, %v194, 0
  %v447 = vsel %vm442, %v199, 0
  %v450 = vsel %vm442, %v204, 0
  %v453 = vsel %vm442, %v209, 0
  %455 = vmatprep.subr.bf16.mxu0 0
  %456 = vmatpush1.bf16.msra.mxu0 %v370
  %457 = vmatprep.subr.bf16.mxu0 0
  %458 = vmatpush1.bf16.msra.mxu0 %v371
  %459 = vmatprep.subr.bf16.mxu0 0
  %460 = vmatpush1.bf16.msra.mxu0 %v372
  %461 = vmatprep.subr.bf16.mxu0 0
  %462 = vmatpush1.bf16.msra.mxu0 %v373
  %463 = vmatprep.subr.bf16.mxu0 0
  %464 = vmatpush1.bf16.msra.mxu0 %v374
  %465 = vmatprep.subr.bf16.mxu0 0
  %466 = vmatpush1.bf16.msra.mxu0 %v375
  %467 = vmatprep.subr.bf16.mxu0 0
  %468 = vmatpush1.bf16.msra.mxu0 %v376
  %469 = vmatprep.subr.bf16.mxu0 0
  %470 = vmatpush1.bf16.msra.mxu0 %v377
  %471 = vmatprep.subr.bf16.mxu0 0
  %472 = vmatpush1.bf16.msra.mxu0 %v378
  %473 = vmatprep.subr.bf16.mxu0 0
  %474 = vmatpush1.bf16.msra.mxu0 %v379
  %475 = vmatprep.subr.bf16.mxu0 0
  %476 = vmatpush1.bf16.msra.mxu0 %v380
  %477 = vmatprep.subr.bf16.mxu0 0
  %478 = vmatpush1.bf16.msra.mxu0 %v381
  %479 = vmatprep.subr.bf16.mxu0 0
  %480 = vmatpush1.bf16.msra.mxu0 %v382
  %481 = vmatprep.subr.bf16.mxu0 0
  %482 = vmatpush1.bf16.msra.mxu0 %v383
  %483 = vmatprep.subr.bf16.mxu0 0
  %484 = vmatpush1.bf16.msra.mxu0 %v384
  %485 = vmatprep.subr.bf16.mxu0 0
  %486 = vmatpush1.bf16.msra.mxu0 %v385
  %487 = vmatprep.mubr.bf16.mxu0 %v191
  %488 = vmatmul.mubr.bf16.gmra.mrb[0].mxu0 %v190
  %v489 = vpop.f32.mrb[0].mxu0
  %v490 = vadd.f32 0.0, %v489
  %v491 = vpop.f32.mrb[0].mxu0
  %v492 = vpop.f32.mrb[0].mxu0
  %v493 = vadd.f32 0.0, %v492
  %v494 = vpop.f32.mrb[0].mxu0
  %495 = vmatprep.mubr.bf16.mxu0 %v196
  %496 = vmatmul.mubr.bf16.gmra.mrb[0].mxu0 %v195
  %v497 = vpop.f32.mrb[0].mxu0
  %v498 = vadd.f32 0.0, %v497
  %v499 = vpop.f32.mrb[0].mxu0
  %v500 = vpop.f32.mrb[0].mxu0
  %v501 = vadd.f32 0.0, %v500
  %v502 = vpop.f32.mrb[0].mxu0
  %503 = vmatprep.mubr.bf16.mxu0 %v201
  %504 = vmatmul.mubr.bf16.gmra.mrb[0].mxu0 %v200
  %v505 = vpop.f32.mrb[0].mxu0
  %v506 = vadd.f32 0.0, %v505
  %v507 = vpop.f32.mrb[0].mxu0
  %v508 = vpop.f32.mrb[0].mxu0
  %v509 = vadd.f32 0.0, %v508
  %v510 = vpop.f32.mrb[0].mxu0
  %511 = vmatprep.mubr.bf16.mxu0 %v206
  %512 = vmatmul.mubr.bf16.gmra.mrb[0].mxu0 %v205
  %v513 = vpop.f32.mrb[0].mxu0
  %v514 = vadd.f32 0.0, %v513
  %v515 = vpop.f32.mrb[0].mxu0
  %v516 = vpop.f32.mrb[0].mxu0
  %v517 = vadd.f32 0.0, %v516
  %v518 = vpop.f32.mrb[0].mxu0
  %519 = vdwg.mxu0
  %520 = vmatprep.subr.bf16.mxu0 0
  %521 = vmatpush1.bf16.msra.mxu0 %v386
  %522 = vmatprep.subr.bf16.mxu0 0
  %523 = vmatpush1.bf16.msra.mxu0 %v387
  %524 = vmatprep.subr.bf16.mxu0 0
  %525 = vmatpush1.bf16.msra.mxu0 %v388
  %526 = vmatprep.subr.bf16.mxu0 0
  %527 = vmatpush1.bf16.msra.mxu0 %v389
  %528 = vmatprep.subr.bf16.mxu0 0
  %529 = vmatpush1.bf16.msra.mxu0 %v390
  %530 = vmatprep.subr.bf16.mxu0 0
  %531 = vmatpush1.bf16.msra.mxu0 %v391
  %532 = vmatprep.subr.bf16.mxu0 0
  %533 = vmatpush1.bf16.msra.mxu0 %v392
  %534 = vmatprep.subr.bf16.mxu0 0
  %535 = vmatpush1.bf16.msra.mxu0 %v393
  %536 = vmatprep.subr.bf16.mxu0 0
  %537 = vmatpush1.bf16.msra.mxu0 %v394
  %538 = vmatprep.subr.bf16.mxu0 0
  %539 = vmatpush1.bf16.msra.mxu0 %v395
  %540 = vmatprep.subr.bf16.mxu0 0
  %541 = vmatpush1.bf16.msra.mxu0 %v396
  %542 = vmatprep.subr.bf16.mxu0 0
  %543 = vmatpush1.bf16.msra.mxu0 %v397
  %544 = vmatprep.subr.bf16.mxu0 0
  %545 = vmatpush1.bf16.msra.mxu0 %v398
  %546 = vmatprep.subr.bf16.mxu0 0
  %547 = vmatpush1.bf16.msra.mxu0 %v399
  %548 = vmatprep.subr.bf16.mxu0 0
  %549 = vmatpush1.bf16.msra.mxu0 %v400
  %550 = vmatprep.subr.bf16.mxu0 0
  %551 = vmatpush1.bf16.msra.mxu0 %v401
  %552 = vmatprep.mubr.bf16.mxu0 %v193
  %553 = vmatmul.mubr.bf16.gmra.mrb[0].mxu0 %v192
  %v554 = vpop.f32.mrb[0].mxu0
  %v555 = vadd.f32 %v490, %v554
  %v556 = vpop.f32.mrb[0].mxu0
  %v557 = vpop.f32.mrb[0].mxu0
  %v558 = vadd.f32 %v493, %v557
  %v559 = vpop.f32.mrb[0].mxu0
  %560 = vmatprep.mubr.bf16.mxu0 %v198
  %561 = vmatmul.mubr.bf16.gmra.mrb[0].mxu0 %v197
  %v562 = vpop.f32.mrb[0].mxu0
  %v563 = vadd.f32 %v498, %v562
  %v564 = vpop.f32.mrb[0].mxu0
  %v565 = vpop.f32.mrb[0].mxu0
  %v566 = vadd.f32 %v501, %v565
  %v567 = vpop.f32.mrb[0].mxu0
  %568 = vmatprep.mubr.bf16.mxu0 %v203
  %569 = vmatmul.mubr.bf16.gmra.mrb[0].mxu0 %v202
  %v570 = vpop.f32.mrb[0].mxu0
  %v571 = vadd.f32 %v506, %v570
  %v572 = vpop.f32.mrb[0].mxu0
  %v573 = vpop.f32.mrb[0].mxu0
  %v574 = vadd.f32 %v509, %v573
  %v575 = vpop.f32.mrb[0].mxu0
  %576 = vmatprep.mubr.bf16.mxu0 %v208
  %577 = vmatmul.mubr.bf16.gmra.mrb[0].mxu0 %v207
  %v578 = vpop.f32.mrb[0].mxu0
  %v579 = vadd.f32 %v514, %v578
  %v580 = vpop.f32.mrb[0].mxu0
  %v581 = vpop.f32.mrb[0].mxu0
  %v582 = vadd.f32 %v517, %v581
  %v583 = vpop.f32.mrb[0].mxu0
  %584 = vdwg.mxu0
  %585 = vmatprep.subr.bf16.mxu0 0
  %586 = vmatpush1.bf16.msra.mxu0 %v402
  %587 = vmatprep.subr.bf16.mxu0 0
  %588 = vmatpush1.bf16.msra.mxu0 %v403
  %589 = vmatprep.subr.bf16.mxu0 0
  %590 = vmatpush1.bf16.msra.mxu0 %v404
  %591 = vmatprep.subr.bf16.mxu0 0
  %592 = vmatpush1.bf16.msra.mxu0 %v405
  %593 = vmatprep.subr.bf16.mxu0 0
  %594 = vmatpush1.bf16.msra.mxu0 0
  %595 = vmatprep.subr.bf16.mxu0 0
  %596 = vmatpush1.bf16.msra.mxu0 0
  %597 = vmatprep.subr.bf16.mxu0 0
  %598 = vmatpush1.bf16.msra.mxu0 0
  %599 = vmatprep.subr.bf16.mxu0 0
  %600 = vmatpush1.bf16.msra.mxu0 0
  %601 = vmatprep.subr.bf16.mxu0 0
  %602 = vmatpush1.bf16.msra.mxu0 0
  %603 = vmatprep.subr.bf16.mxu0 0
  %604 = vmatpush1.bf16.msra.mxu0 0
  %605 = vmatprep.subr.bf16.mxu0 0
  %606 = vmatpush1.bf16.msra.mxu0 0
  %607 = vmatprep.subr.bf16.mxu0 0
  %608 = vmatpush1.bf16.msra.mxu0 0
  %609 = vmatprep.subr.bf16.mxu0 0
  %610 = vmatpush1.bf16.msra.mxu0 0
  %611 = vmatprep.subr.bf16.mxu0 0
  %612 = vmatpush1.bf16.msra.mxu0 0
  %613 = vmatprep.subr.bf16.mxu0 0
  %614 = vmatpush1.bf16.msra.mxu0 0
  %615 = vmatprep.subr.bf16.mxu0 0
  %616 = vmatpush1.bf16.msra.mxu0 0
  %617 = vmatprep.mubr.bf16.mxu0 0
  %618 = vmatmul.mubr.bf16.gmra.mrb[0].mxu0 %v444
  %v619 = vpop.f32.mrb[0].mxu0
  %v620 = vadd.f32 %v555, %v619
  %v621 = vpop.f32.mrb[0].mxu0
  %v622 = vpop.f32.mrb[0].mxu0
  %v623 = vadd.f32 %v558, %v622
  %v624 = vpop.f32.mrb[0].mxu0
  %625 = vmatprep.mubr.bf16.mxu0 0
  %626 = vmatmul.mubr.bf16.gmra.mrb[0].mxu0 %v447
  %v627 = vpop.f32.mrb[0].mxu0
  %v628 = vadd.f32 %v563, %v627
  %v629 = vpop.f32.mrb[0].mxu0
  %v630 = vpop.f32.mrb[0].mxu0
  %v631 = vadd.f32 %v566, %v630
  %v632 = vpop.f32.mrb[0].mxu0
  %633 = vmatprep.mubr.bf16.mxu0 0
  %634 = vmatmul.mubr.bf16.gmra.mrb[0].mxu0 %v450
  %v635 = vpop.f32.mrb[0].mxu0
  %v636 = vadd.f32 %v571, %v635
  %v637 = vpop.f32.mrb[0].mxu0
  %v638 = vpop.f32.mrb[0].mxu0
  %v639 = vadd.f32 %v574, %v638
  %v640 = vpop.f32.mrb[0].mxu0
  %641 = vmatprep.mubr.bf16.mxu0 0
  %642 = vmatmul.mubr.bf16.gmra.mrb[0].mxu0 %v453
  %v643 = vpop.f32.mrb[0].mxu0
  %v644 = vadd.f32 %v579, %v643
  %v645 = vpop.f32.mrb[0].mxu0
  %v646 = vpop.f32.mrb[0].mxu0
  %v647 = vadd.f32 %v582, %v646
  %v648 = vpop.f32.mrb[0].mxu0
  %649 = vdwg.mxu0
  %v650 = vld [vmem:[%s2] sm:$0xff]
  %v651 = vld [vmem:[%s2 + $0x8] sm:$0xff]
  %v652 = vld [vmem:[%s2 + $0x10] sm:$0xff]
  %v653 = vld [vmem:[%s2 + $0x18] sm:$0xff]
  %v654 = vld [vmem:[%s2 + $0x20] sm:$0xff]
  %v655 = vld [vmem:[%s2 + $0x28] sm:$0xff]
  %v656 = vld [vmem:[%s2 + $0x30] sm:$0xff]
  %v657 = vld [vmem:[%s2 + $0x38] sm:$0xff]
  %v658 = vld [vmem:[%s3] sm:$0xff]
  %v659 = vld [vmem:[%s3 + $0x8] sm:$0xff]
  %v660 = vld [vmem:[%s3 + $0x10] sm:$0xff]
  %v661 = vld [vmem:[%s3 + $0x18] sm:$0xff]
  %v662 = vld [vmem:[%s3 + $0x20] sm:$0xff]
  %v663 = vld [vmem:[%s3 + $0x28] sm:$0xff]
  %v664 = vld [vmem:[%s3 + $0x30] sm:$0xff]
  %v665 = vld [vmem:[%s3 + $0x38] sm:$0xff]
  %666 = vadd.xlane.f32.xlu0 %v620
  %v667 = vpop.xlane.xlu0 %666
  %668 = vadd.xlane.f32.xlu0 %v623
  %v669 = vpop.xlane.xlu0 %668
  %670 = vadd.xlane.f32.xlu0 %v628
  %v671 = vpop.xlane.xlu0 %670
  %672 = vadd.xlane.f32.xlu0 %v631
  %v673 = vpop.xlane.xlu0 %672
  %674 = vadd.xlane.f32.xlu0 %v636
  %v675 = vpop.xlane.xlu0 %674
  %676 = vadd.xlane.f32.xlu0 %v639
  %v677 = vpop.xlane.xlu0 %676
  %678 = vadd.xlane.f32.xlu0 %v644
  %v679 = vpop.xlane.xlu0 %678
  %680 = vadd.xlane.f32.xlu0 %v647
  %v681 = vpop.xlane.xlu0 %680
  %v682 = vrcp.pop 128.0
  %v683 = vmul.f32 %v667, %v682
  %v684 = vmul.f32 %v669, %v682
  %v685 = vmul.f32 %v671, %v682
  %v686 = vmul.f32 %v673, %v682
  %v687 = vmul.f32 %v675, %v682
  %v688 = vmul.f32 %v677, %v682
  %v689 = vmul.f32 %v679, %v682
  %v690 = vmul.f32 %v681, %v682
  %v691 = vsub.f32 %v620, %v683
  %v692 = vsub.f32 %v623, %v684
  %v693 = vsub.f32 %v628, %v685
  %v694 = vsub.f32 %v631, %v686
  %v695 = vsub.f32 %v636, %v687
  %v696 = vsub.f32 %v639, %v688
  %v697 = vsub.f32 %v644, %v689
  %v698 = vsub.f32 %v647, %v690
  %v699 = vmul.f32 %v691, %v691
  %v700 = vmul.f32 %v692, %v692
  %v701 = vmul.f32 %v693, %v693
  %v702 = vmul.f32 %v694, %v694
  %v703 = vmul.f32 %v695, %v695
  %v704 = vmul.f32 %v696, %v696
  %v705 = vmul.f32 %v697, %v697
  %v706 = vmul.f32 %v698, %v698
  %707 = vadd.xlane.f32.xlu0 %v699
  %v708 = vpop.xlane.xlu0 %707
  %709 = vadd.xlane.f32.xlu0 %v700
  %v710 = vpop.xlane.xlu0 %709
  %711 = vadd.xlane.f32.xlu0 %v701
  %v712 = vpop.xlane.xlu0 %711
  %713 = vadd.xlane.f32.xlu0 %v702
  %v714 = vpop.xlane.xlu0 %713
  %715 = vadd.xlane.f32.xlu0 %v703
  %v716 = vpop.xlane.xlu0 %715
  %717 = vadd.xlane.f32.xlu0 %v704
  %v718 = vpop.xlane.xlu0 %717
  %719 = vadd.xlane.f32.xlu0 %v705
  %v720 = vpop.xlane.xlu0 %719
  %721 = vadd.xlane.f32.xlu0 %v706
  %v722 = vpop.xlane.xlu0 %721
  %v723 = vmul.f32 %v708, %v682
  %v724 = vmul.f32 %v710, %v682
  %v725 = vmul.f32 %v712, %v682
  %v726 = vmul.f32 %v714, %v682
  %v727 = vmul.f32 %v716, %v682
  %v728 = vmul.f32 %v718, %v682
  %v729 = vmul.f32 %v720, %v682
  %v730 = vmul.f32 %v722, %v682
  %v731 = vadd.f32 %v723, 1e-05
  %v732 = vadd.f32 %v724, 1e-05
  %v733 = vadd.f32 %v725, 1e-05
  %v734 = vadd.f32 %v726, 1e-05
  %v735 = vadd.f32 %v727, 1e-05
  %v736 = vadd.f32 %v728, 1e-05
  %v737 = vadd.f32 %v729, 1e-05
  %v738 = vadd.f32 %v730, 1e-05
  %v739 = vrsqrt.pop %v731
  %v740 = vrsqrt.pop %v732
  %v741 = vrsqrt.pop %v733
  %v742 = vrsqrt.pop %v734
  %v743 = vrsqrt.pop %v735
  %v744 = vrsqrt.pop %v736
  %v745 = vrsqrt.pop %v737
  %v746 = vrsqrt.pop %v738
  %v747 = vmul.f32 %v691, %v739
  %v748 = vmul.f32 %v692, %v740
  %v749 = vmul.f32 %v693, %v741
  %v750 = vmul.f32 %v694, %v742
  %v751 = vmul.f32 %v695, %v743
  %v752 = vmul.f32 %v696, %v744
  %v753 = vmul.f32 %v697, %v745
  %v754 = vmul.f32 %v698, %v746
  %756 = vset.pattern.permute.xlu0 0
  %757 = vperm.xlu0 %756, %v650
  %v758 = vpop.permute.xlu0 %757
  %761 = vset.pattern.permute.xlu0 0
  %762 = vperm.xlu0 %761, %v651
  %v763 = vpop.permute.xlu0 %762
  %766 = vset.pattern.permute.xlu0 0
  %767 = vperm.xlu0 %766, %v652
  %v768 = vpop.permute.xlu0 %767
  %771 = vset.pattern.permute.xlu0 0
  %772 = vperm.xlu0 %771, %v653
  %v773 = vpop.permute.xlu0 %772
  %776 = vset.pattern.permute.xlu0 0
  %777 = vperm.xlu0 %776, %v654
  %v778 = vpop.permute.xlu0 %777
  %781 = vset.pattern.permute.xlu0 0
  %782 = vperm.xlu0 %781, %v655
  %v783 = vpop.permute.xlu0 %782
  %786 = vset.pattern.permute.xlu0 0
  %787 = vperm.xlu0 %786, %v656
  %v788 = vpop.permute.xlu0 %787
  %791 = vset.pattern.permute.xlu0 0
  %792 = vperm.xlu0 %791, %v657
  %v793 = vpop.permute.xlu0 %792
  %v795 = vmul.f32 %v747, %v758
  %v796 = vmul.f32 %v748, %v763
  %v797 = vmul.f32 %v749, %v768
  %v798 = vmul.f32 %v750, %v773
  %v799 = vmul.f32 %v751, %v778
  %v800 = vmul.f32 %v752, %v783
  %v801 = vmul.f32 %v753, %v788
  %v802 = vmul.f32 %v754, %v793
  %804 = vset.pattern.permute.xlu0 0
  %805 = vperm.xlu0 %804, %v658
  %v806 = vpop.permute.xlu0 %805
  %809 = vset.pattern.permute.xlu0 0
  %810 = vperm.xlu0 %809, %v659
  %v811 = vpop.permute.xlu0 %810
  %814 = vset.pattern.permute.xlu0 0
  %815 = vperm.xlu0 %814, %v660
  %v816 = vpop.permute.xlu0 %815
  %819 = vset.pattern.permute.xlu0 0
  %820 = vperm.xlu0 %819, %v661
  %v821 = vpop.permute.xlu0 %820
  %824 = vset.pattern.permute.xlu0 0
  %825 = vperm.xlu0 %824, %v662
  %v826 = vpop.permute.xlu0 %825
  %829 = vset.pattern.permute.xlu0 0
  %830 = vperm.xlu0 %829, %v663
  %v831 = vpop.permute.xlu0 %830
  %834 = vset.pattern.permute.xlu0 0
  %835 = vperm.xlu0 %834, %v664
  %v836 = vpop.permute.xlu0 %835
  %839 = vset.pattern.permute.xlu0 0
  %840 = vperm.xlu0 %839, %v665
  %v841 = vpop.permute.xlu0 %840
  %v843 = vadd.f32 %v795, %v806
  %v844 = vadd.f32 %v796, %v811
  %v845 = vadd.f32 %v797, %v816
  %v846 = vadd.f32 %v798, %v821
  %v847 = vadd.f32 %v799, %v826
  %v848 = vadd.f32 %v800, %v831
  %v849 = vadd.f32 %v801, %v836
  %v850 = vadd.f32 %v802, %v841
  %v851 = vld [vmem:[%s5] sm:$0xf]
  %v852 = vld [vmem:[%s5 + $0x4] sm:$0xf]
  %v853 = vld [vmem:[%s5 + $0x8] sm:$0xf]
  %v854 = vld [vmem:[%s5 + $0xc] sm:$0xf]
  %v855 = vld [vmem:[%s5 + $0x10] sm:$0xf]
  %v856 = vld [vmem:[%s5 + $0x14] sm:$0xf]
  %v857 = vld [vmem:[%s5 + $0x18] sm:$0xf]
  %v858 = vld [vmem:[%s5 + $0x1c] sm:$0xf]
  %v859 = vld [vmem:[%s4] sm:$0xf]
  %v860 = vld [vmem:[%s4 + $0x4] sm:$0xf]
  %v861 = vld [vmem:[%s4 + $0x8] sm:$0xf]
  %v862 = vld [vmem:[%s4 + $0xc] sm:$0xf]
  %v871 = vunpack.c.l.b16 %v851
  %v872 = vunpack.c.l.b16 %v852
  %v873 = vunpack.c.l.b16 %v853
  %v874 = vunpack.c.l.b16 %v854
  %v875 = vunpack.c.l.b16 %v855
  %v876 = vunpack.c.l.b16 %v856
  %v877 = vunpack.c.l.b16 %v857
  %v878 = vunpack.c.l.b16 %v858
  %v879 = vpack.c.b16 %v872, %v871
  %v880 = vpack.c.b16 %v874, %v873
  %v881 = vpack.c.b16 %v876, %v875
  %v882 = vpack.c.b16 %v878, %v877
  %v887 = vunpack.c.l.b16 %v859
  %v888 = vunpack.c.l.b16 %v860
  %v889 = vunpack.c.l.b16 %v861
  %v890 = vunpack.c.l.b16 %v862
  %v891 = vpack.c.b16 %v888, %v887
  %v892 = vpack.c.b16 %v890, %v889
  %vm895 = vcmask 261120
  %v897 = vsel %vm895, %v879, 0
  %v900 = vsel %vm895, %v880, 0
  %v903 = vsel %vm895, %v881, 0
  %v906 = vsel %vm895, %v882, 0
  %908 = vmatprep.subr.bf16.mxu0 0
  %909 = vmatpush1.bf16.msra.mxu0 %v891
  %910 = vmatprep.subr.bf16.mxu0 0
  %911 = vmatpush1.bf16.msra.mxu0 %v892
  %912 = vmatprep.subr.bf16.mxu0 0
  %913 = vmatpush1.bf16.msra.mxu0 0
  %914 = vmatprep.subr.bf16.mxu0 0
  %915 = vmatpush1.bf16.msra.mxu0 0
  %916 = vmatprep.subr.bf16.mxu0 0
  %917 = vmatpush1.bf16.msra.mxu0 0
  %918 = vmatprep.subr.bf16.mxu0 0
  %919 = vmatpush1.bf16.msra.mxu0 0
  %920 = vmatprep.subr.bf16.mxu0 0
  %921 = vmatpush1.bf16.msra.mxu0 0
  %922 = vmatprep.subr.bf16.mxu0 0
  %923 = vmatpush1.bf16.msra.mxu0 0
  %924 = vmatprep.subr.bf16.mxu0 0
  %925 = vmatpush1.bf16.msra.mxu0 0
  %926 = vmatprep.subr.bf16.mxu0 0
  %927 = vmatpush1.bf16.msra.mxu0 0
  %928 = vmatprep.subr.bf16.mxu0 0
  %929 = vmatpush1.bf16.msra.mxu0 0
  %930 = vmatprep.subr.bf16.mxu0 0
  %931 = vmatpush1.bf16.msra.mxu0 0
  %932 = vmatprep.subr.bf16.mxu0 0
  %933 = vmatpush1.bf16.msra.mxu0 0
  %934 = vmatprep.subr.bf16.mxu0 0
  %935 = vmatpush1.bf16.msra.mxu0 0
  %936 = vmatprep.subr.bf16.mxu0 0
  %937 = vmatpush1.bf16.msra.mxu0 0
  %938 = vmatprep.subr.bf16.mxu0 0
  %939 = vmatpush1.bf16.msra.mxu0 0
  %940 = vmatprep.mubr.bf16.mxu0 0
  %941 = vmatmul.mubr.bf16.gmra.mrb[0].mxu0 %v897
  %v942 = vpop.f32.mrb[0].mxu0
  %v943 = vadd.f32 0.0, %v942
  %v944 = vpop.f32.mrb[0].mxu0
  %v945 = vpop.f32.mrb[0].mxu0
  %v946 = vadd.f32 0.0, %v945
  %v947 = vpop.f32.mrb[0].mxu0
  %948 = vmatprep.mubr.bf16.mxu0 0
  %949 = vmatmul.mubr.bf16.gmra.mrb[0].mxu0 %v900
  %v950 = vpop.f32.mrb[0].mxu0
  %v951 = vadd.f32 0.0, %v950
  %v952 = vpop.f32.mrb[0].mxu0
  %v953 = vpop.f32.mrb[0].mxu0
  %v954 = vadd.f32 0.0, %v953
  %v955 = vpop.f32.mrb[0].mxu0
  %956 = vmatprep.mubr.bf16.mxu0 0
  %957 = vmatmul.mubr.bf16.gmra.mrb[0].mxu0 %v903
  %v958 = vpop.f32.mrb[0].mxu0
  %v959 = vadd.f32 0.0, %v958
  %v960 = vpop.f32.mrb[0].mxu0
  %v961 = vpop.f32.mrb[0].mxu0
  %v962 = vadd.f32 0.0, %v961
  %v963 = vpop.f32.mrb[0].mxu0
  %964 = vmatprep.mubr.bf16.mxu0 0
  %965 = vmatmul.mubr.bf16.gmra.mrb[0].mxu0 %v906
  %v966 = vpop.f32.mrb[0].mxu0
  %v967 = vadd.f32 0.0, %v966
  %v968 = vpop.f32.mrb[0].mxu0
  %v969 = vpop.f32.mrb[0].mxu0
  %v970 = vadd.f32 0.0, %v969
  %v971 = vpop.f32.mrb[0].mxu0
  %972 = vdwg.mxu0
  %v973 = vld [vmem:[%s6] sm:$0xff]
  %v974 = vld [vmem:[%s6 + $0x8] sm:$0xff]
  %v975 = vld [vmem:[%s6 + $0x10] sm:$0xff]
  %v976 = vld [vmem:[%s6 + $0x18] sm:$0xff]
  %v977 = vld [vmem:[%s6 + $0x20] sm:$0xff]
  %v978 = vld [vmem:[%s6 + $0x28] sm:$0xff]
  %v979 = vld [vmem:[%s6 + $0x30] sm:$0xff]
  %v980 = vld [vmem:[%s6 + $0x38] sm:$0xff]
  %v981 = vld [vmem:[%s7] sm:$0xff]
  %v982 = vld [vmem:[%s7 + $0x8] sm:$0xff]
  %v983 = vld [vmem:[%s7 + $0x10] sm:$0xff]
  %v984 = vld [vmem:[%s7 + $0x18] sm:$0xff]
  %v985 = vld [vmem:[%s7 + $0x20] sm:$0xff]
  %v986 = vld [vmem:[%s7 + $0x28] sm:$0xff]
  %v987 = vld [vmem:[%s7 + $0x30] sm:$0xff]
  %v988 = vld [vmem:[%s7 + $0x38] sm:$0xff]
  %989 = vadd.xlane.f32.xlu0 %v943
  %v990 = vpop.xlane.xlu0 %989
  %991 = vadd.xlane.f32.xlu0 %v946
  %v992 = vpop.xlane.xlu0 %991
  %993 = vadd.xlane.f32.xlu0 %v951
  %v994 = vpop.xlane.xlu0 %993
  %995 = vadd.xlane.f32.xlu0 %v954
  %v996 = vpop.xlane.xlu0 %995
  %997 = vadd.xlane.f32.xlu0 %v959
  %v998 = vpop.xlane.xlu0 %997
  %999 = vadd.xlane.f32.xlu0 %v962
  %v1000 = vpop.xlane.xlu0 %999
  %1001 = vadd.xlane.f32.xlu0 %v967
  %v1002 = vpop.xlane.xlu0 %1001
  %1003 = vadd.xlane.f32.xlu0 %v970
  %v1004 = vpop.xlane.xlu0 %1003
  %v1005 = vmul.f32 %v990, %v682
  %v1006 = vmul.f32 %v992, %v682
  %v1007 = vmul.f32 %v994, %v682
  %v1008 = vmul.f32 %v996, %v682
  %v1009 = vmul.f32 %v998, %v682
  %v1010 = vmul.f32 %v1000, %v682
  %v1011 = vmul.f32 %v1002, %v682
  %v1012 = vmul.f32 %v1004, %v682
  %v1013 = vsub.f32 %v943, %v1005
  %v1014 = vsub.f32 %v946, %v1006
  %v1015 = vsub.f32 %v951, %v1007
  %v1016 = vsub.f32 %v954, %v1008
  %v1017 = vsub.f32 %v959, %v1009
  %v1018 = vsub.f32 %v962, %v1010
  %v1019 = vsub.f32 %v967, %v1011
  %v1020 = vsub.f32 %v970, %v1012
  %v1021 = vmul.f32 %v1013, %v1013
  %v1022 = vmul.f32 %v1014, %v1014
  %v1023 = vmul.f32 %v1015, %v1015
  %v1024 = vmul.f32 %v1016, %v1016
  %v1025 = vmul.f32 %v1017, %v1017
  %v1026 = vmul.f32 %v1018, %v1018
  %v1027 = vmul.f32 %v1019, %v1019
  %v1028 = vmul.f32 %v1020, %v1020
  %1029 = vadd.xlane.f32.xlu0 %v1021
  %v1030 = vpop.xlane.xlu0 %1029
  %1031 = vadd.xlane.f32.xlu0 %v1022
  %v1032 = vpop.xlane.xlu0 %1031
  %1033 = vadd.xlane.f32.xlu0 %v1023
  %v1034 = vpop.xlane.xlu0 %1033
  %1035 = vadd.xlane.f32.xlu0 %v1024
  %v1036 = vpop.xlane.xlu0 %1035
  %1037 = vadd.xlane.f32.xlu0 %v1025
  %v1038 = vpop.xlane.xlu0 %1037
  %1039 = vadd.xlane.f32.xlu0 %v1026
  %v1040 = vpop.xlane.xlu0 %1039
  %1041 = vadd.xlane.f32.xlu0 %v1027
  %v1042 = vpop.xlane.xlu0 %1041
  %1043 = vadd.xlane.f32.xlu0 %v1028
  %v1044 = vpop.xlane.xlu0 %1043
  %v1045 = vmul.f32 %v1030, %v682
  %v1046 = vmul.f32 %v1032, %v682
  %v1047 = vmul.f32 %v1034, %v682
  %v1048 = vmul.f32 %v1036, %v682
  %v1049 = vmul.f32 %v1038, %v682
  %v1050 = vmul.f32 %v1040, %v682
  %v1051 = vmul.f32 %v1042, %v682
  %v1052 = vmul.f32 %v1044, %v682
  %v1053 = vadd.f32 %v1045, 1e-05
  %v1054 = vadd.f32 %v1046, 1e-05
  %v1055 = vadd.f32 %v1047, 1e-05
  %v1056 = vadd.f32 %v1048, 1e-05
  %v1057 = vadd.f32 %v1049, 1e-05
  %v1058 = vadd.f32 %v1050, 1e-05
  %v1059 = vadd.f32 %v1051, 1e-05
  %v1060 = vadd.f32 %v1052, 1e-05
  %v1061 = vrsqrt.pop %v1053
  %v1062 = vrsqrt.pop %v1054
  %v1063 = vrsqrt.pop %v1055
  %v1064 = vrsqrt.pop %v1056
  %v1065 = vrsqrt.pop %v1057
  %v1066 = vrsqrt.pop %v1058
  %v1067 = vrsqrt.pop %v1059
  %v1068 = vrsqrt.pop %v1060
  %v1069 = vmul.f32 %v1013, %v1061
  %v1070 = vmul.f32 %v1014, %v1062
  %v1071 = vmul.f32 %v1015, %v1063
  %v1072 = vmul.f32 %v1016, %v1064
  %v1073 = vmul.f32 %v1017, %v1065
  %v1074 = vmul.f32 %v1018, %v1066
  %v1075 = vmul.f32 %v1019, %v1067
  %v1076 = vmul.f32 %v1020, %v1068
  %1078 = vset.pattern.permute.xlu0 0
  %1079 = vperm.xlu0 %1078, %v973
  %v1080 = vpop.permute.xlu0 %1079
  %1083 = vset.pattern.permute.xlu0 0
  %1084 = vperm.xlu0 %1083, %v974
  %v1085 = vpop.permute.xlu0 %1084
  %1088 = vset.pattern.permute.xlu0 0
  %1089 = vperm.xlu0 %1088, %v975
  %v1090 = vpop.permute.xlu0 %1089
  %1093 = vset.pattern.permute.xlu0 0
  %1094 = vperm.xlu0 %1093, %v976
  %v1095 = vpop.permute.xlu0 %1094
  %1098 = vset.pattern.permute.xlu0 0
  %1099 = vperm.xlu0 %1098, %v977
  %v1100 = vpop.permute.xlu0 %1099
  %1103 = vset.pattern.permute.xlu0 0
  %1104 = vperm.xlu0 %1103, %v978
  %v1105 = vpop.permute.xlu0 %1104
  %1108 = vset.pattern.permute.xlu0 0
  %1109 = vperm.xlu0 %1108, %v979
  %v1110 = vpop.permute.xlu0 %1109
  %1113 = vset.pattern.permute.xlu0 0
  %1114 = vperm.xlu0 %1113, %v980
  %v1115 = vpop.permute.xlu0 %1114
  %v1117 = vmul.f32 %v1069, %v1080
  %v1118 = vmul.f32 %v1070, %v1085
  %v1119 = vmul.f32 %v1071, %v1090
  %v1120 = vmul.f32 %v1072, %v1095
  %v1121 = vmul.f32 %v1073, %v1100
  %v1122 = vmul.f32 %v1074, %v1105
  %v1123 = vmul.f32 %v1075, %v1110
  %v1124 = vmul.f32 %v1076, %v1115
  %1126 = vset.pattern.permute.xlu0 0
  %1127 = vperm.xlu0 %1126, %v981
  %v1128 = vpop.permute.xlu0 %1127
  %1131 = vset.pattern.permute.xlu0 0
  %1132 = vperm.xlu0 %1131, %v982
  %v1133 = vpop.permute.xlu0 %1132
  %1136 = vset.pattern.permute.xlu0 0
  %1137 = vperm.xlu0 %1136, %v983
  %v1138 = vpop.permute.xlu0 %1137
  %1141 = vset.pattern.permute.xlu0 0
  %1142 = vperm.xlu0 %1141, %v984
  %v1143 = vpop.permute.xlu0 %1142
  %1146 = vset.pattern.permute.xlu0 0
  %1147 = vperm.xlu0 %1146, %v985
  %v1148 = vpop.permute.xlu0 %1147
  %1151 = vset.pattern.permute.xlu0 0
  %1152 = vperm.xlu0 %1151, %v986
  %v1153 = vpop.permute.xlu0 %1152
  %1156 = vset.pattern.permute.xlu0 0
  %1157 = vperm.xlu0 %1156, %v987
  %v1158 = vpop.permute.xlu0 %1157
  %1161 = vset.pattern.permute.xlu0 0
  %1162 = vperm.xlu0 %1161, %v988
  %v1163 = vpop.permute.xlu0 %1162
  %v1165 = vadd.f32 %v1117, %v1128
  %v1166 = vadd.f32 %v1118, %v1133
  %v1167 = vadd.f32 %v1119, %v1138
  %v1168 = vadd.f32 %v1120, %v1143
  %v1169 = vadd.f32 %v1121, %v1148
  %v1170 = vadd.f32 %v1122, %v1153
  %v1171 = vadd.f32 %v1123, %v1158
  %v1172 = vadd.f32 %v1124, %v1163
  %v1173 = vadd.f32 %v843, %v1165
  %v1174 = vadd.f32 %v844, %v1166
  %v1175 = vadd.f32 %v845, %v1167
  %v1176 = vadd.f32 %v846, %v1168
  %v1177 = vadd.f32 %v847, %v1169
  %v1178 = vadd.f32 %v848, %v1170
  %v1179 = vadd.f32 %v849, %v1171
  %v1180 = vadd.f32 %v850, %v1172
  %v1181 = vmax.f32 %v1173, 0.0
  %v1182 = vmax.f32 %v1174, 0.0
  %v1183 = vmax.f32 %v1175, 0.0
  %v1184 = vmax.f32 %v1176, 0.0
  %v1185 = vmax.f32 %v1177, 0.0
  %v1186 = vmax.f32 %v1178, 0.0
  %v1187 = vmax.f32 %v1179, 0.0
  %v1188 = vmax.f32 %v1180, 0.0
  %1189 = vst [vmem:[%s8] sm:$0xff] %v1181
  %1190 = vst [vmem:[%s8 + $0x8] sm:$0xff] %v1182
  %1191 = vst [vmem:[%s8 + $0x10] sm:$0xff] %v1183
  %1192 = vst [vmem:[%s8 + $0x18] sm:$0xff] %v1184
  %1193 = vst [vmem:[%s8 + $0x20] sm:$0xff] %v1185
  %1194 = vst [vmem:[%s8 + $0x28] sm:$0xff] %v1186
  %1195 = vst [vmem:[%s8 + $0x30] sm:$0xff] %v1187
  %1196 = vst [vmem:[%s8 + $0x38] sm:$0xff] %v1188
  // Predicated region
  $region34: #{resnet_forward.24} parent=0 // pred_check
    _
  $region35: #{resnet_forward.24} parent=0 // pred_check_branch
    %1198 = sbr.rel (0) target = $region37
  $region36: #{resnet_forward.24} parent=0 // pred_region
    _
  $region37: #{resnet_forward.24} parent=0 // pred_fallthru
    _
  // Predicated region
  $region38: #{resnet_forward.24} parent=0 // pred_check
    _
  $region39: #{resnet_forward.24} parent=0 // pred_check_branch
    %1200 = sbr.rel (0) target = $region41
  $region40: #{resnet_forward.24} parent=0 // pred_region
    _
  $region41: #{resnet_forward.24} parent=0 // pred_fallthru
    _

// kernel: resnet_forward.26
$region0: #{resnet_forward.26}
  #allocation0 [shape = 'u32[]', space=smem, size = 0x4, offset = 0x4, fixed_abs, tag = 'smem constant byte address 0x4 - core index']
  #allocation1 [shape = 'u32[144,128]{1,0:T(1,128)}', space=vmem, size = 0x12000, scoped, tag = 'internal scratch']
  %s0 = inlined_call_operand.vmem [shape: bf16[576,128], index: 0, kind: input, shape index: {}]
  %s1 = inlined_call_operand.vmem [shape: bf16[64,576], index: 1, kind: input, shape index: {}]
  %s2 = inlined_call_operand.vmem [shape: f32[64,1], index: 2, kind: input, shape index: {}]
  %s3 = inlined_call_operand.vmem [shape: f32[64,1], index: 3, kind: input, shape index: {}]
  %s4 = inlined_call_operand.vmem [shape: f32[64,128], index: 4, kind: input, shape index: {}]
  %s5 = inlined_call_operand.vmem [shape: f32[64,128], index: 5, kind: output, shape index: {}]
  %s6 = sld [smem:[#allocation0]]
  $region30: #{resnet_forward.26} parent=0
    _
  %s8 = ssub.s32 1, %s6
  %s9 = scalar_select 0, %s8, %s6
  // Predicated region
  $region2: #{resnet_forward.26} parent=0 // pred_check
    _
  $region3: #{resnet_forward.26} parent=0 // pred_check_branch
    %11 = sbr.rel (0) target = $region5
  $region4: #{resnet_forward.26} parent=0 // pred_region
    _
  $region5: #{resnet_forward.26} parent=0 // pred_fallthru
    _
  // Predicated region
  $region6: #{resnet_forward.26} parent=0 // pred_check
    _
  $region7: #{resnet_forward.26} parent=0 // pred_check_branch
    %13 = sbr.rel (0) target = $region9
  $region8: #{resnet_forward.26} parent=0 // pred_region
    _
  $region9: #{resnet_forward.26} parent=0 // pred_fallthru
    _
  // Predicated region
  $region10: #{resnet_forward.26} parent=0 // pred_check
    _
  $region11: #{resnet_forward.26} parent=0 // pred_check_branch
    %15 = sbr.rel (0) target = $region13
  $region12: #{resnet_forward.26} parent=0 // pred_region
    _
  $region13: #{resnet_forward.26} parent=0 // pred_fallthru
    _
  // Predicated region
  $region14: #{resnet_forward.26} parent=0 // pred_check
    _
  $region15: #{resnet_forward.26} parent=0 // pred_check_branch
    %17 = sbr.rel (0) target = $region17
  $region16: #{resnet_forward.26} parent=0 // pred_region
    _
  $region17: #{resnet_forward.26} parent=0 // pred_fallthru
    _
  // Predicated region
  $region18: #{resnet_forward.26} parent=0 // pred_check
    _
  $region19: #{resnet_forward.26} parent=0 // pred_check_branch
    %19 = sbr.rel (0) target = $region21
  $region20: #{resnet_forward.26} parent=0 // pred_region
    _
  $region21: #{resnet_forward.26} parent=0 // pred_fallthru
    _
  %v21 = vld [vmem:[%s1] sm:$0xff]
  %v22 = vld [vmem:[%s1 + $0x8] sm:$0xff]
  %v23 = vld [vmem:[%s1 + $0x10] sm:$0xf]
  %v24 = vld [vmem:[%s1 + $0x14] sm:$0xff]
  %v25 = vld [vmem:[%s1 + $0x1c] sm:$0xff]
  %v26 = vld [vmem:[%s1 + $0x24] sm:$0xf]
  %v27 = vld [vmem:[%s1 + $0x28] sm:$0xff]
  %v28 = vld [vmem:[%s1 + $0x30] sm:$0xff]
  %v29 = vld [vmem:[%s1 + $0x38] sm:$0xf]
  %v30 = vld [vmem:[%s1 + $0x3c] sm:$0xff]
  %v31 = vld [vmem:[%s1 + $0x44] sm:$0xff]
  %v32 = vld [vmem:[%s1 + $0x4c] sm:$0xf]
  %v33 = vld [vmem:[%s1 + $0x50] sm:$0xff]
  %v34 = vld [vmem:[%s1 + $0x58] sm:$0xff]
  %v35 = vld [vmem:[%s1 + $0x60] sm:$0xf]
  %v36 = vld [vmem:[%s1 + $0x64] sm:$0xff]
  %v37 = vld [vmem:[%s1 + $0x6c] sm:$0xff]
  %v38 = vld [vmem:[%s1 + $0x74] sm:$0xf]
  %v39 = vld [vmem:[%s1 + $0x78] sm:$0xff]
  %v40 = vld [vmem:[%s1 + $0x80] sm:$0xff]
  %v41 = vld [vmem:[%s1 + $0x88] sm:$0xf]
  %v42 = vld [vmem:[%s1 + $0x8c] sm:$0xff]
  %v43 = vld [vmem:[%s1 + $0x94] sm:$0xff]
  %v44 = vld [vmem:[%s1 + $0x9c] sm:$0xf]
  %v45 = vld [vmem:[%s0] sm:$0xf]
  %v46 = vld [vmem:[%s0 + $0x4] sm:$0xf]
  %v47 = vld [vmem:[%s0 + $0x8] sm:$0xf]
  %v48 = vld [vmem:[%s0 + $0xc] sm:$0xf]
  %v49 = vld [vmem:[%s0 + $0x10] sm:$0xf]
  %v50 = vld [vmem:[%s0 + $0x14] sm:$0xf]
  %v51 = vld [vmem:[%s0 + $0x18] sm:$0xf]
  %v52 = vld [vmem:[%s0 + $0x1c] sm:$0xf]
  %v53 = vld [vmem:[%s0 + $0x20] sm:$0xf]
  %v54 = vld [vmem:[%s0 + $0x24] sm:$0xf]
  %v55 = vld [vmem:[%s0 + $0x28] sm:$0xf]
  %v56 = vld [vmem:[%s0 + $0x2c] sm:$0xf]
  %v57 = vld [vmem:[%s0 + $0x30] sm:$0xf]
  %v58 = vld [vmem:[%s0 + $0x34] sm:$0xf]
  %v59 = vld [vmem:[%s0 + $0x38] sm:$0xf]
  %v60 = vld [vmem:[%s0 + $0x3c] sm:$0xf]
  %v61 = vld [vmem:[%s0 + $0x40] sm:$0xf]
  %v62 = vld [vmem:[%s0 + $0x44] sm:$0xf]
  %v63 = vld [vmem:[%s0 + $0x48] sm:$0xf]
  %v64 = vld [vmem:[%s0 + $0x4c] sm:$0xf]
  %v65 = vld [vmem:[%s0 + $0x50] sm:$0xf]
  %v66 = vld [vmem:[%s0 + $0x54] sm:$0xf]
  %v67 = vld [vmem:[%s0 + $0x58] sm:$0xf]
  %v68 = vld [vmem:[%s0 + $0x5c] sm:$0xf]
  %v69 = vld [vmem:[%s0 + $0x60] sm:$0xf]
  %v70 = vld [vmem:[%s0 + $0x64] sm:$0xf]
  %v71 = vld [vmem:[%s0 + $0x68] sm:$0xf]
  %v72 = vld [vmem:[%s0 + $0x6c] sm:$0xf]
  %v73 = vld [vmem:[%s0 + $0x70] sm:$0xf]
  %v74 = vld [vmem:[%s0 + $0x74] sm:$0xf]
  %v75 = vld [vmem:[%s0 + $0x78] sm:$0xf]
  %v76 = vld [vmem:[%s0 + $0x7c] sm:$0xf]
  %v77 = vld [vmem:[%s0 + $0x80] sm:$0xf]
  %v78 = vld [vmem:[%s0 + $0x84] sm:$0xf]
  %v79 = vld [vmem:[%s0 + $0x88] sm:$0xf]
  %v80 = vld [vmem:[%s0 + $0x8c] sm:$0xf]
  %v81 = vld [vmem:[%s0 + $0x90] sm:$0xf]
  %v82 = vld [vmem:[%s0 + $0x94] sm:$0xf]
  %v83 = vld [vmem:[%s0 + $0x98] sm:$0xf]
  %v84 = vld [vmem:[%s0 + $0x9c] sm:$0xf]
  %v85 = vld [vmem:[%s0 + $0xa0] sm:$0xf]
  %v86 = vld [vmem:[%s0 + $0xa4] sm:$0xf]
  %v87 = vld [vmem:[%s0 + $0xa8] sm:$0xf]
  %v88 = vld [vmem:[%s0 + $0xac] sm:$0xf]
  %v89 = vld [vmem:[%s0 + $0xb0] sm:$0xf]
  %v90 = vld [vmem:[%s0 + $0xb4] sm:$0xf]
  %v91 = vld [vmem:[%s0 + $0xb8] sm:$0xf]
  %v92 = vld [vmem:[%s0 + $0xbc] sm:$0xf]
  %v93 = vld [vmem:[%s0 + $0xc0] sm:$0xf]
  %v94 = vld [vmem:[%s0 + $0xc4] sm:$0xf]
  %v95 = vld [vmem:[%s0 + $0xc8] sm:$0xf]
  %v96 = vld [vmem:[%s0 + $0xcc] sm:$0xf]
  %v97 = vld [vmem:[%s0 + $0xd0] sm:$0xf]
  %v98 = vld [vmem:[%s0 + $0xd4] sm:$0xf]
  %v99 = vld [vmem:[%s0 + $0xd8] sm:$0xf]
  %v100 = vld [vmem:[%s0 + $0xdc] sm:$0xf]
  %v101 = vld [vmem:[%s0 + $0xe0] sm:$0xf]
  %v102 = vld [vmem:[%s0 + $0xe4] sm:$0xf]
  %v103 = vld [vmem:[%s0 + $0xe8] sm:$0xf]
  %v104 = vld [vmem:[%s0 + $0xec] sm:$0xf]
  %v105 = vld [vmem:[%s0 + $0xf0] sm:$0xf]
  %v106 = vld [vmem:[%s0 + $0xf4] sm:$0xf]
  %v107 = vld [vmem:[%s0 + $0xf8] sm:$0xf]
  %v108 = vld [vmem:[%s0 + $0xfc] sm:$0xf]
  %v109 = vld [vmem:[%s0 + $0x100] sm:$0xf]
  %v110 = vld [vmem:[%s0 + $0x104] sm:$0xf]
  %v111 = vld [vmem:[%s0 + $0x108] sm:$0xf]
  %v112 = vld [vmem:[%s0 + $0x10c] sm:$0xf]
  %v113 = vld [vmem:[%s0 + $0x110] sm:$0xf]
  %v114 = vld [vmem:[%s0 + $0x114] sm:$0xf]
  %v115 = vld [vmem:[%s0 + $0x118] sm:$0xf]
  %v116 = vld [vmem:[%s0 + $0x11c] sm:$0xf]
  %v141 = vunpack.c.l.b16 %v21
  %v142 = vunpack.c.h.b16 %v21
  %v143 = vunpack.c.l.b16 %v22
  %v144 = vunpack.c.h.b16 %v22
  %v145 = vunpack.c.l.b16 %v23
  %v146 = vunpack.c.l.b16 %v24
  %v147 = vunpack.c.h.b16 %v24
  %v148 = vunpack.c.l.b16 %v25
  %v149 = vunpack.c.h.b16 %v25
  %v150 = vunpack.c.l.b16 %v26
  %v151 = vunpack.c.l.b16 %v27
  %v152 = vunpack.c.h.b16 %v27
  %v153 = vunpack.c.l.b16 %v28
  %v154 = vunpack.c.h.b16 %v28
  %v155 = vunpack.c.l.b16 %v29
  %v156 = vunpack.c.l.b16 %v30
  %v157 = vunpack.c.h.b16 %v30
  %v158 = vunpack.c.l.b16 %v31
  %v159 = vunpack.c.h.b16 %v31
  %v160 = vunpack.c.l.b16 %v32
  %v161 = vunpack.c.l.b16 %v33
  %v162 = vunpack.c.h.b16 %v33
  %v163 = vunpack.c.l.b16 %v34
  %v164 = vunpack.c.h.b16 %v34
  %v165 = vunpack.c.l.b16 %v35
  %v166 = vunpack.c.l.b16 %v36
  %v167 = vunpack.c.h.b16 %v36
  %v168 = vunpack.c.l.b16 %v37
  %v169 = vunpack.c.h.b16 %v37
  %v170 = vunpack.c.l.b16 %v38
  %v171 = vunpack.c.l.b16 %v39
  %v172 = vunpack.c.h.b16 %v39
  %v173 = vunpack.c.l.b16 %v40
  %v174 = vunpack.c.h.b16 %v40
  %v175 = vunpack.c.l.b16 %v41
  %v176 = vunpack.c.l.b16 %v42
  %v177 = vunpack.c.h.b16 %v42
  %v178 = vunpack.c.l.b16 %v43
  %v179 = vunpack.c.h.b16 %v43
  %v180 = vunpack.c.l.b16 %v44
  %v181 = vpack.c.b16 %v146, %v141
  %v182 = vpack.c.b16 %v147, %v142
  %v183 = vpack.c.b16 %v148, %v143
  %v184 = vpack.c.b16 %v149, %v144
  %v185 = vpack.c.b16 %v150, %v145
  %v186 = vpack.c.b16 %v156, %v151
  %v187 = vpack.c.b16 %v157, %v152
  %v188 = vpack.c.b16 %v158, %v153
  %v189 = vpack.c.b16 %v159, %v154
  %v190 = vpack.c.b16 %v160, %v155
  %v191 = vpack.c.b16 %v166, %v161
  %v192 = vpack.c.b16 %v167, %v162
  %v193 = vpack.c.b16 %v168, %v163
  %v194 = vpack.c.b16 %v169, %v164
  %v195 = vpack.c.b16 %v170, %v165
  %v196 = vpack.c.b16 %v176, %v171
  %v197 = vpack.c.b16 %v177, %v172
  %v198 = vpack.c.b16 %v178, %v173
  %v199 = vpack.c.b16 %v179, %v174
  %v200 = vpack.c.b16 %v180, %v175
  %v289 = vunpack.c.l.b16 %v45
  %v290 = vunpack.c.l.b16 %v46
  %v291 = vunpack.c.l.b16 %v47
  %v292 = vunpack.c.l.b16 %v48
  %v293 = vunpack.c.l.b16 %v49
  %v294 = vunpack.c.l.b16 %v50
  %v295 = vunpack.c.l.b16 %v51
  %v296 = vunpack.c.l.b16 %v52
  %v297 = vunpack.c.l.b16 %v53
  %v298 = vunpack.c.l.b16 %v54
  %v299 = vunpack.c.l.b16 %v55
  %v300 = vunpack.c.l.b16 %v56
  %v301 = vunpack.c.l.b16 %v57
  %v302 = vunpack.c.l.b16 %v58
  %v303 = vunpack.c.l.b16 %v59
  %v304 = vunpack.c.l.b16 %v60
  %v305 = vunpack.c.l.b16 %v61
  %v306 = vunpack.c.l.b16 %v62
  %v307 = vunpack.c.l.b16 %v63
  %v308 = vunpack.c.l.b16 %v64
  %v309 = vunpack.c.l.b16 %v65
  %v310 = vunpack.c.l.b16 %v66
  %v311 = vunpack.c.l.b16 %v67
  %v312 = vunpack.c.l.b16 %v68
  %v313 = vunpack.c.l.b16 %v69
  %v314 = vunpack.c.l.b16 %v70
  %v315 = vunpack.c.l.b16 %v71
  %v316 = vunpack.c.l.b16 %v72
  %v317 = vunpack.c.l.b16 %v73
  %v318 = vunpack.c.l.b16 %v74
  %v319 = vunpack.c.l.b16 %v75
  %v320 = vunpack.c.l.b16 %v76
  %v321 = vunpack.c.l.b16 %v77
  %v322 = vunpack.c.l.b16 %v78
  %v323 = vunpack.c.l.b16 %v79
  %v324 = vunpack.c.l.b16 %v80
  %v325 = vunpack.c.l.b16 %v81
  %v326 = vunpack.c.l.b16 %v82
  %v327 = vunpack.c.l.b16 %v83
  %v328 = vunpack.c.l.b16 %v84
  %v329 = vunpack.c.l.b16 %v85
  %v330 = vunpack.c.l.b16 %v86
  %v331 = vunpack.c.l.b16 %v87
  %v332 = vunpack.c.l.b16 %v88
  %v333 = vunpack.c.l.b16 %v89
  %v334 = vunpack.c.l.b16 %v90
  %v335 = vunpack.c.l.b16 %v91
  %v336 = vunpack.c.l.b16 %v92
  %v337 = vunpack.c.l.b16 %v93
  %v338 = vunpack.c.l.b16 %v94
  %v339 = vunpack.c.l.b16 %v95
  %v340 = vunpack.c.l.b16 %v96
  %v341 = vunpack.c.l.b16 %v97
  %v342 = vunpack.c.l.b16 %v98
  %v343 = vunpack.c.l.b16 %v99
  %v344 = vunpack.c.l.b16 %v100
  %v345 = vunpack.c.l.b16 %v101
  %v346 = vunpack.c.l.b16 %v102
  %v347 = vunpack.c.l.b16 %v103
  %v348 = vunpack.c.l.b16 %v104
  %v349 = vunpack.c.l.b16 %v105
  %v350 = vunpack.c.l.b16 %v106
  %v351 = vunpack.c.l.b16 %v107
  %v352 = vunpack.c.l.b16 %v108
  %v353 = vunpack.c.l.b16 %v109
  %v354 = vunpack.c.l.b16 %v110
  %v355 = vunpack.c.l.b16 %v111
  %v356 = vunpack.c.l.b16 %v112
  %v357 = vunpack.c.l.b16 %v113
  %v358 = vunpack.c.l.b16 %v114
  %v359 = vunpack.c.l.b16 %v115
  %v360 = vunpack.c.l.b16 %v116
  %v361 = vpack.c.b16 %v290, %v289
  %v362 = vpack.c.b16 %v292, %v291
  %v363 = vpack.c.b16 %v294, %v293
  %v364 = vpack.c.b16 %v296, %v295
  %v365 = vpack.c.b16 %v298, %v297
  %v366 = vpack.c.b16 %v300, %v299
  %v367 = vpack.c.b16 %v302, %v301
  %v368 = vpack.c.b16 %v304, %v303
  %v369 = vpack.c.b16 %v306, %v305
  %v370 = vpack.c.b16 %v308, %v307
  %v371 = vpack.c.b16 %v310, %v309
  %v372 = vpack.c.b16 %v312, %v311
  %v373 = vpack.c.b16 %v314, %v313
  %v374 = vpack.c.b16 %v316, %v315
  %v375 = vpack.c.b16 %v318, %v317
  %v376 = vpack.c.b16 %v320, %v319
  %v377 = vpack.c.b16 %v322, %v321
  %v378 = vpack.c.b16 %v324, %v323
  %v379 = vpack.c.b16 %v326, %v325
  %v380 = vpack.c.b16 %v328, %v327
  %v381 = vpack.c.b16 %v330, %v329
  %v382 = vpack.c.b16 %v332, %v331
  %v383 = vpack.c.b16 %v334, %v333
  %v384 = vpack.c.b16 %v336, %v335
  %v385 = vpack.c.b16 %v338, %v337
  %v386 = vpack.c.b16 %v340, %v339
  %v387 = vpack.c.b16 %v342, %v341
  %v388 = vpack.c.b16 %v344, %v343
  %v389 = vpack.c.b16 %v346, %v345
  %v390 = vpack.c.b16 %v348, %v347
  %v391 = vpack.c.b16 %v350, %v349
  %v392 = vpack.c.b16 %v352, %v351
  %v393 = vpack.c.b16 %v354, %v353
  %v394 = vpack.c.b16 %v356, %v355
  %v395 = vpack.c.b16 %v358, %v357
  %v396 = vpack.c.b16 %v360, %v359
  %vm433 = vcmask 523264
  %v435 = vsel %vm433, %v185, 0
  %v438 = vsel %vm433, %v190, 0
  %v441 = vsel %vm433, %v195, 0
  %v444 = vsel %vm433, %v200, 0
  %446 = vmatprep.subr.bf16.mxu0 0
  %447 = vmatpush1.bf16.msra.mxu0 %v361
  %448 = vmatprep.subr.bf16.mxu0 0
  %449 = vmatpush1.bf16.msra.mxu0 %v362
  %450 = vmatprep.subr.bf16.mxu0 0
  %451 = vmatpush1.bf16.msra.mxu0 %v363
  %452 = vmatprep.subr.bf16.mxu0 0
  %453 = vmatpush1.bf16.msra.mxu0 %v364
  %454 = vmatprep.subr.bf16.mxu0 0
  %455 = vmatpush1.bf16.msra.mxu0 %v365
  %456 = vmatprep.subr.bf16.mxu0 0
  %457 = vmatpush1.bf16.msra.mxu0 %v366
  %458 = vmatprep.subr.bf16.mxu0 0
  %459 = vmatpush1.bf16.msra.mxu0 %v367
  %460 = vmatprep.subr.bf16.mxu0 0
  %461 = vmatpush1.bf16.msra.mxu0 %v368
  %462 = vmatprep.subr.bf16.mxu0 0
  %463 = vmatpush1.bf16.msra.mxu0 %v369
  %464 = vmatprep.subr.bf16.mxu0 0
  %465 = vmatpush1.bf16.msra.mxu0 %v370
  %466 = vmatprep.subr.bf16.mxu0 0
  %467 = vmatpush1.bf16.msra.mxu0 %v371
  %468 = vmatprep.subr.bf16.mxu0 0
  %469 = vmatpush1.bf16.msra.mxu0 %v372
  %470 = vmatprep.subr.bf16.mxu0 0
  %471 = vmatpush1.bf16.msra.mxu0 %v373
  %472 = vmatprep.subr.bf16.mxu0 0
  %473 = vmatpush1.bf16.msra.mxu0 %v374
  %474 = vmatprep.subr.bf16.mxu0 0
  %475 = vmatpush1.bf16.msra.mxu0 %v375
  %476 = vmatprep.subr.bf16.mxu0 0
  %477 = vmatpush1.bf16.msra.mxu0 %v376
  %478 = vmatprep.mubr.bf16.mxu0 %v182
  %479 = vmatmul.mubr.bf16.gmra.mrb[0].mxu0 %v181
  %v480 = vpop.f32.mrb[0].mxu0
  %v481 = vadd.f32 0.0, %v480
  %v482 = vpop.f32.mrb[0].mxu0
  %v483 = vpop.f32.mrb[0].mxu0
  %v484 = vadd.f32 0.0, %v483
  %v485 = vpop.f32.mrb[0].mxu0
  %486 = vmatprep.mubr.bf16.mxu0 %v187
  %487 = vmatmul.mubr.bf16.gmra.mrb[0].mxu0 %v186
  %v488 = vpop.f32.mrb[0].mxu0
  %v489 = vadd.f32 0.0, %v488
  %v490 = vpop.f32.mrb[0].mxu0
  %v491 = vpop.f32.mrb[0].mxu0
  %v492 = vadd.f32 0.0, %v491
  %v493 = vpop.f32.mrb[0].mxu0
  %494 = vmatprep.mubr.bf16.mxu0 %v192
  %495 = vmatmul.mubr.bf16.gmra.mrb[0].mxu0 %v191
  %v496 = vpop.f32.mrb[0].mxu0
  %v497 = vadd.f32 0.0, %v496
  %v498 = vpop.f32.mrb[0].mxu0
  %v499 = vpop.f32.mrb[0].mxu0
  %v500 = vadd.f32 0.0, %v499
  %v501 = vpop.f32.mrb[0].mxu0
  %502 = vmatprep.mubr.bf16.mxu0 %v197
  %503 = vmatmul.mubr.bf16.gmra.mrb[0].mxu0 %v196
  %v504 = vpop.f32.mrb[0].mxu0
  %v505 = vadd.f32 0.0, %v504
  %v506 = vpop.f32.mrb[0].mxu0
  %v507 = vpop.f32.mrb[0].mxu0
  %v508 = vadd.f32 0.0, %v507
  %v509 = vpop.f32.mrb[0].mxu0
  %510 = vdwg.mxu0
  %511 = vmatprep.subr.bf16.mxu0 0
  %512 = vmatpush1.bf16.msra.mxu0 %v377
  %513 = vmatprep.subr.bf16.mxu0 0
  %514 = vmatpush1.bf16.msra.mxu0 %v378
  %515 = vmatprep.subr.bf16.mxu0 0
  %516 = vmatpush1.bf16.msra.mxu0 %v379
  %517 = vmatprep.subr.bf16.mxu0 0
  %518 = vmatpush1.bf16.msra.mxu0 %v380
  %519 = vmatprep.subr.bf16.mxu0 0
  %520 = vmatpush1.bf16.msra.mxu0 %v381
  %521 = vmatprep.subr.bf16.mxu0 0
  %522 = vmatpush1.bf16.msra.mxu0 %v382
  %523 = vmatprep.subr.bf16.mxu0 0
  %524 = vmatpush1.bf16.msra.mxu0 %v383
  %525 = vmatprep.subr.bf16.mxu0 0
  %526 = vmatpush1.bf16.msra.mxu0 %v384
  %527 = vmatprep.subr.bf16.mxu0 0
  %528 = vmatpush1.bf16.msra.mxu0 %v385
  %529 = vmatprep.subr.bf16.mxu0 0
  %530 = vmatpush1.bf16.msra.mxu0 %v386
  %531 = vmatprep.subr.bf16.mxu0 0
  %532 = vmatpush1.bf16.msra.mxu0 %v387
  %533 = vmatprep.subr.bf16.mxu0 0
  %534 = vmatpush1.bf16.msra.mxu0 %v388
  %535 = vmatprep.subr.bf16.mxu0 0
  %536 = vmatpush1.bf16.msra.mxu0 %v389
  %537 = vmatprep.subr.bf16.mxu0 0
  %538 = vmatpush1.bf16.msra.mxu0 %v390
  %539 = vmatprep.subr.bf16.mxu0 0
  %540 = vmatpush1.bf16.msra.mxu0 %v391
  %541 = vmatprep.subr.bf16.mxu0 0
  %542 = vmatpush1.bf16.msra.mxu0 %v392
  %543 = vmatprep.mubr.bf16.mxu0 %v184
  %544 = vmatmul.mubr.bf16.gmra.mrb[0].mxu0 %v183
  %v545 = vpop.f32.mrb[0].mxu0
  %v546 = vadd.f32 %v481, %v545
  %v547 = vpop.f32.mrb[0].mxu0
  %v548 = vpop.f32.mrb[0].mxu0
  %v549 = vadd.f32 %v484, %v548
  %v550 = vpop.f32.mrb[0].mxu0
  %551 = vmatprep.mubr.bf16.mxu0 %v189
  %552 = vmatmul.mubr.bf16.gmra.mrb[0].mxu0 %v188
  %v553 = vpop.f32.mrb[0].mxu0
  %v554 = vadd.f32 %v489, %v553
  %v555 = vpop.f32.mrb[0].mxu0
  %v556 = vpop.f32.mrb[0].mxu0
  %v557 = vadd.f32 %v492, %v556
  %v558 = vpop.f32.mrb[0].mxu0
  %559 = vmatprep.mubr.bf16.mxu0 %v194
  %560 = vmatmul.mubr.bf16.gmra.mrb[0].mxu0 %v193
  %v561 = vpop.f32.mrb[0].mxu0
  %v562 = vadd.f32 %v497, %v561
  %v563 = vpop.f32.mrb[0].mxu0
  %v564 = vpop.f32.mrb[0].mxu0
  %v565 = vadd.f32 %v500, %v564
  %v566 = vpop.f32.mrb[0].mxu0
  %567 = vmatprep.mubr.bf16.mxu0 %v199
  %568 = vmatmul.mubr.bf16.gmra.mrb[0].mxu0 %v198
  %v569 = vpop.f32.mrb[0].mxu0
  %v570 = vadd.f32 %v505, %v569
  %v571 = vpop.f32.mrb[0].mxu0
  %v572 = vpop.f32.mrb[0].mxu0
  %v573 = vadd.f32 %v508, %v572
  %v574 = vpop.f32.mrb[0].mxu0
  %575 = vdwg.mxu0
  %576 = vmatprep.subr.bf16.mxu0 0
  %577 = vmatpush1.bf16.msra.mxu0 %v393
  %578 = vmatprep.subr.bf16.mxu0 0
  %579 = vmatpush1.bf16.msra.mxu0 %v394
  %580 = vmatprep.subr.bf16.mxu0 0
  %581 = vmatpush1.bf16.msra.mxu0 %v395
  %582 = vmatprep.subr.bf16.mxu0 0
  %583 = vmatpush1.bf16.msra.mxu0 %v396
  %584 = vmatprep.subr.bf16.mxu0 0
  %585 = vmatpush1.bf16.msra.mxu0 0
  %586 = vmatprep.subr.bf16.mxu0 0
  %587 = vmatpush1.bf16.msra.mxu0 0
  %588 = vmatprep.subr.bf16.mxu0 0
  %589 = vmatpush1.bf16.msra.mxu0 0
  %590 = vmatprep.subr.bf16.mxu0 0
  %591 = vmatpush1.bf16.msra.mxu0 0
  %592 = vmatprep.subr.bf16.mxu0 0
  %593 = vmatpush1.bf16.msra.mxu0 0
  %594 = vmatprep.subr.bf16.mxu0 0
  %595 = vmatpush1.bf16.msra.mxu0 0
  %596 = vmatprep.subr.bf16.mxu0 0
  %597 = vmatpush1.bf16.msra.mxu0 0
  %598 = vmatprep.subr.bf16.mxu0 0
  %599 = vmatpush1.bf16.msra.mxu0 0
  %600 = vmatprep.subr.bf16.mxu0 0
  %601 = vmatpush1.bf16.msra.mxu0 0
  %602 = vmatprep.subr.bf16.mxu0 0
  %603 = vmatpush1.bf16.msra.mxu0 0
  %604 = vmatprep.subr.bf16.mxu0 0
  %605 = vmatpush1.bf16.msra.mxu0 0
  %606 = vmatprep.subr.bf16.mxu0 0
  %607 = vmatpush1.bf16.msra.mxu0 0
  %608 = vmatprep.mubr.bf16.mxu0 0
  %609 = vmatmul.mubr.bf16.gmra.mrb[0].mxu0 %v435
  %v610 = vpop.f32.mrb[0].mxu0
  %v611 = vadd.f32 %v546, %v610
  %v612 = vpop.f32.mrb[0].mxu0
  %v613 = vpop.f32.mrb[0].mxu0
  %v614 = vadd.f32 %v549, %v613
  %v615 = vpop.f32.mrb[0].mxu0
  %616 = vmatprep.mubr.bf16.mxu0 0
  %617 = vmatmul.mubr.bf16.gmra.mrb[0].mxu0 %v438
  %v618 = vpop.f32.mrb[0].mxu0
  %v619 = vadd.f32 %v554, %v618
  %v620 = vpop.f32.mrb[0].mxu0
  %v621 = vpop.f32.mrb[0].mxu0
  %v622 = vadd.f32 %v557, %v621
  %v623 = vpop.f32.mrb[0].mxu0
  %624 = vmatprep.mubr.bf16.mxu0 0
  %625 = vmatmul.mubr.bf16.gmra.mrb[0].mxu0 %v441
  %v626 = vpop.f32.mrb[0].mxu0
  %v627 = vadd.f32 %v562, %v626
  %v628 = vpop.f32.mrb[0].mxu0
  %v629 = vpop.f32.mrb[0].mxu0
  %v630 = vadd.f32 %v565, %v629
  %v631 = vpop.f32.mrb[0].mxu0
  %632 = vmatprep.mubr.bf16.mxu0 0
  %633 = vmatmul.mubr.bf16.gmra.mrb[0].mxu0 %v444
  %v634 = vpop.f32.mrb[0].mxu0
  %v635 = vadd.f32 %v570, %v634
  %v636 = vpop.f32.mrb[0].mxu0
  %v637 = vpop.f32.mrb[0].mxu0
  %v638 = vadd.f32 %v573, %v637
  %v639 = vpop.f32.mrb[0].mxu0
  %640 = vdwg.mxu0
  %v641 = vld [vmem:[%s2] sm:$0xff]
  %v642 = vld [vmem:[%s2 + $0x8] sm:$0xff]
  %v643 = vld [vmem:[%s2 + $0x10] sm:$0xff]
  %v644 = vld [vmem:[%s2 + $0x18] sm:$0xff]
  %v645 = vld [vmem:[%s2 + $0x20] sm:$0xff]
  %v646 = vld [vmem:[%s2 + $0x28] sm:$0xff]
  %v647 = vld [vmem:[%s2 + $0x30] sm:$0xff]
  %v648 = vld [vmem:[%s2 + $0x38] sm:$0xff]
  %v649 = vld [vmem:[%s3] sm:$0xff]
  %v650 = vld [vmem:[%s3 + $0x8] sm:$0xff]
  %v651 = vld [vmem:[%s3 + $0x10] sm:$0xff]
  %v652 = vld [vmem:[%s3 + $0x18] sm:$0xff]
  %v653 = vld [vmem:[%s3 + $0x20] sm:$0xff]
  %v654 = vld [vmem:[%s3 + $0x28] sm:$0xff]
  %v655 = vld [vmem:[%s3 + $0x30] sm:$0xff]
  %v656 = vld [vmem:[%s3 + $0x38] sm:$0xff]
  %657 = vadd.xlane.f32.xlu0 %v611
  %v658 = vpop.xlane.xlu0 %657
  %659 = vadd.xlane.f32.xlu0 %v614
  %v660 = vpop.xlane.xlu0 %659
  %661 = vadd.xlane.f32.xlu0 %v619
  %v662 = vpop.xlane.xlu0 %661
  %663 = vadd.xlane.f32.xlu0 %v622
  %v664 = vpop.xlane.xlu0 %663
  %665 = vadd.xlane.f32.xlu0 %v627
  %v666 = vpop.xlane.xlu0 %665
  %667 = vadd.xlane.f32.xlu0 %v630
  %v668 = vpop.xlane.xlu0 %667
  %669 = vadd.xlane.f32.xlu0 %v635
  %v670 = vpop.xlane.xlu0 %669
  %671 = vadd.xlane.f32.xlu0 %v638
  %v672 = vpop.xlane.xlu0 %671
  %v673 = vrcp.pop 128.0
  %v674 = vmul.f32 %v658, %v673
  %v675 = vmul.f32 %v660, %v673
  %v676 = vmul.f32 %v662, %v673
  %v677 = vmul.f32 %v664, %v673
  %v678 = vmul.f32 %v666, %v673
  %v679 = vmul.f32 %v668, %v673
  %v680 = vmul.f32 %v670, %v673
  %v681 = vmul.f32 %v672, %v673
  %v682 = vsub.f32 %v611, %v674
  %v683 = vsub.f32 %v614, %v675
  %v684 = vsub.f32 %v619, %v676
  %v685 = vsub.f32 %v622, %v677
  %v686 = vsub.f32 %v627, %v678
  %v687 = vsub.f32 %v630, %v679
  %v688 = vsub.f32 %v635, %v680
  %v689 = vsub.f32 %v638, %v681
  %v690 = vmul.f32 %v682, %v682
  %v691 = vmul.f32 %v683, %v683
  %v692 = vmul.f32 %v684, %v684
  %v693 = vmul.f32 %v685, %v685
  %v694 = vmul.f32 %v686, %v686
  %v695 = vmul.f32 %v687, %v687
  %v696 = vmul.f32 %v688, %v688
  %v697 = vmul.f32 %v689, %v689
  %698 = vadd.xlane.f32.xlu0 %v690
  %v699 = vpop.xlane.xlu0 %698
  %700 = vadd.xlane.f32.xlu0 %v691
  %v701 = vpop.xlane.xlu0 %700
  %702 = vadd.xlane.f32.xlu0 %v692
  %v703 = vpop.xlane.xlu0 %702
  %704 = vadd.xlane.f32.xlu0 %v693
  %v705 = vpop.xlane.xlu0 %704
  %706 = vadd.xlane.f32.xlu0 %v694
  %v707 = vpop.xlane.xlu0 %706
  %708 = vadd.xlane.f32.xlu0 %v695
  %v709 = vpop.xlane.xlu0 %708
  %710 = vadd.xlane.f32.xlu0 %v696
  %v711 = vpop.xlane.xlu0 %710
  %712 = vadd.xlane.f32.xlu0 %v697
  %v713 = vpop.xlane.xlu0 %712
  %v714 = vmul.f32 %v699, %v673
  %v715 = vmul.f32 %v701, %v673
  %v716 = vmul.f32 %v703, %v673
  %v717 = vmul.f32 %v705, %v673
  %v718 = vmul.f32 %v707, %v673
  %v719 = vmul.f32 %v709, %v673
  %v720 = vmul.f32 %v711, %v673
  %v721 = vmul.f32 %v713, %v673
  %v722 = vadd.f32 %v714, 1e-05
  %v723 = vadd.f32 %v715, 1e-05
  %v724 = vadd.f32 %v716, 1e-05
  %v725 = vadd.f32 %v717, 1e-05
  %v726 = vadd.f32 %v718, 1e-05
  %v727 = vadd.f32 %v719, 1e-05
  %v728 = vadd.f32 %v720, 1e-05
  %v729 = vadd.f32 %v721, 1e-05
  %v730 = vrsqrt.pop %v722
  %v731 = vrsqrt.pop %v723
  %v732 = vrsqrt.pop %v724
  %v733 = vrsqrt.pop %v725
  %v734 = vrsqrt.pop %v726
  %v735 = vrsqrt.pop %v727
  %v736 = vrsqrt.pop %v728
  %v737 = vrsqrt.pop %v729
  %v738 = vmul.f32 %v682, %v730
  %v739 = vmul.f32 %v683, %v731
  %v740 = vmul.f32 %v684, %v732
  %v741 = vmul.f32 %v685, %v733
  %v742 = vmul.f32 %v686, %v734
  %v743 = vmul.f32 %v687, %v735
  %v744 = vmul.f32 %v688, %v736
  %v745 = vmul.f32 %v689, %v737
  %747 = vset.pattern.permute.xlu0 0
  %748 = vperm.xlu0 %747, %v641
  %v749 = vpop.permute.xlu0 %748
  %752 = vset.pattern.permute.xlu0 0
  %753 = vperm.xlu0 %752, %v642
  %v754 = vpop.permute.xlu0 %753
  %757 = vset.pattern.permute.xlu0 0
  %758 = vperm.xlu0 %757, %v643
  %v759 = vpop.permute.xlu0 %758
  %762 = vset.pattern.permute.xlu0 0
  %763 = vperm.xlu0 %762, %v644
  %v764 = vpop.permute.xlu0 %763
  %767 = vset.pattern.permute.xlu0 0
  %768 = vperm.xlu0 %767, %v645
  %v769 = vpop.permute.xlu0 %768
  %772 = vset.pattern.permute.xlu0 0
  %773 = vperm.xlu0 %772, %v646
  %v774 = vpop.permute.xlu0 %773
  %777 = vset.pattern.permute.xlu0 0
  %778 = vperm.xlu0 %777, %v647
  %v779 = vpop.permute.xlu0 %778
  %782 = vset.pattern.permute.xlu0 0
  %783 = vperm.xlu0 %782, %v648
  %v784 = vpop.permute.xlu0 %783
  %v786 = vmul.f32 %v738, %v749
  %v787 = vmul.f32 %v739, %v754
  %v788 = vmul.f32 %v740, %v759
  %v789 = vmul.f32 %v741, %v764
  %v790 = vmul.f32 %v742, %v769
  %v791 = vmul.f32 %v743, %v774
  %v792 = vmul.f32 %v744, %v779
  %v793 = vmul.f32 %v745, %v784
  %795 = vset.pattern.permute.xlu0 0
  %796 = vperm.xlu0 %795, %v649
  %v797 = vpop.permute.xlu0 %796
  %800 = vset.pattern.permute.xlu0 0
  %801 = vperm.xlu0 %800, %v650
  %v802 = vpop.permute.xlu0 %801
  %805 = vset.pattern.permute.xlu0 0
  %806 = vperm.xlu0 %805, %v651
  %v807 = vpop.permute.xlu0 %806
  %810 = vset.pattern.permute.xlu0 0
  %811 = vperm.xlu0 %810, %v652
  %v812 = vpop.permute.xlu0 %811
  %815 = vset.pattern.permute.xlu0 0
  %816 = vperm.xlu0 %815, %v653
  %v817 = vpop.permute.xlu0 %816
  %820 = vset.pattern.permute.xlu0 0
  %821 = vperm.xlu0 %820, %v654
  %v822 = vpop.permute.xlu0 %821
  %825 = vset.pattern.permute.xlu0 0
  %826 = vperm.xlu0 %825, %v655
  %v827 = vpop.permute.xlu0 %826
  %830 = vset.pattern.permute.xlu0 0
  %831 = vperm.xlu0 %830, %v656
  %v832 = vpop.permute.xlu0 %831
  %v834 = vadd.f32 %v786, %v797
  %v835 = vadd.f32 %v787, %v802
  %v836 = vadd.f32 %v788, %v807
  %v837 = vadd.f32 %v789, %v812
  %v838 = vadd.f32 %v790, %v817
  %v839 = vadd.f32 %v791, %v822
  %v840 = vadd.f32 %v792, %v827
  %v841 = vadd.f32 %v793, %v832
  %v842 = vld [vmem:[%s4] sm:$0xff]
  %v843 = vld [vmem:[%s4 + $0x8] sm:$0xff]
  %v844 = vld [vmem:[%s4 + $0x10] sm:$0xff]
  %v845 = vld [vmem:[%s4 + $0x18] sm:$0xff]
  %v846 = vld [vmem:[%s4 + $0x20] sm:$0xff]
  %v847 = vld [vmem:[%s4 + $0x28] sm:$0xff]
  %v848 = vld [vmem:[%s4 + $0x30] sm:$0xff]
  %v849 = vld [vmem:[%s4 + $0x38] sm:$0xff]
  %v850 = vadd.f32 %v834, %v842
  %v851 = vadd.f32 %v835, %v843
  %v852 = vadd.f32 %v836, %v844
  %v853 = vadd.f32 %v837, %v845
  %v854 = vadd.f32 %v838, %v846
  %v855 = vadd.f32 %v839, %v847
  %v856 = vadd.f32 %v840, %v848
  %v857 = vadd.f32 %v841, %v849
  %v858 = vmax.f32 %v850, 0.0
  %v859 = vmax.f32 %v851, 0.0
  %v860 = vmax.f32 %v852, 0.0
  %v861 = vmax.f32 %v853, 0.0
  %v862 = vmax.f32 %v854, 0.0
  %v863 = vmax.f32 %v855, 0.0
  %v864 = vmax.f32 %v856, 0.0
  %v865 = vmax.f32 %v857, 0.0
  %866 = vst [vmem:[%s5] sm:$0xff] %v858
  %867 = vst [vmem:[%s5 + $0x8] sm:$0xff] %v859
  %868 = vst [vmem:[%s5 + $0x10] sm:$0xff] %v860
  %869 = vst [vmem:[%s5 + $0x18] sm:$0xff] %v861
  %870 = vst [vmem:[%s5 + $0x20] sm:$0xff] %v862
  %871 = vst [vmem:[%s5 + $0x28] sm:$0xff] %v863
  %872 = vst [vmem:[%s5 + $0x30] sm:$0xff] %v864
  %873 = vst [vmem:[%s5 + $0x38] sm:$0xff] %v865
  // Predicated region
  $region22: #{resnet_forward.26} parent=0 // pred_check
    _
  $region23: #{resnet_forward.26} parent=0 // pred_check_branch
    %875 = sbr.rel (0) target = $region25
  $region24: #{resnet_forward.26} parent=0 // pred_region
    _
  $region25: #{resnet_forward.26} parent=0 // pred_fallthru
    _
  // Predicated region
  $region26: #{resnet_forward.26} parent=0 // pred_check
    _
  $region27: #{resnet_forward.26} parent=0 // pred_check_branch
    %877 = sbr.rel (0) target = $region29
  $region28: #{resnet_forward.26} parent=0 // pred_region
    _
  $region29: #{resnet_forward.26} parent=0 // pred_fallthru
    _

// kernel: resnet_forward.25
$region0: #{resnet_forward.25}
  #allocation0 [shape = 'u32[]', space=smem, size = 0x4, offset = 0x4, fixed_abs, tag = 'smem constant byte address 0x4 - core index']
  #allocation1 [shape = 'u32[144,128]{1,0:T(1,128)}', space=vmem, size = 0x12000, scoped, tag = 'internal scratch']
  %s0 = inlined_call_operand.vmem [shape: bf16[576,128], index: 0, kind: input, shape index: {}]
  %s1 = inlined_call_operand.vmem [shape: bf16[64,576], index: 1, kind: input, shape index: {}]
  %s2 = inlined_call_operand.vmem [shape: f32[64,1], index: 2, kind: input, shape index: {}]
  %s3 = inlined_call_operand.vmem [shape: f32[64,1], index: 3, kind: input, shape index: {}]
  %s4 = inlined_call_operand.vmem [shape: f32[64,128], index: 4, kind: output, shape index: {}]
  %s5 = sld [smem:[#allocation0]]
  $region26: #{resnet_forward.25} parent=0
    _
  %s7 = ssub.s32 1, %s5
  %s8 = scalar_select 0, %s7, %s5
  // Predicated region
  $region2: #{resnet_forward.25} parent=0 // pred_check
    _
  $region3: #{resnet_forward.25} parent=0 // pred_check_branch
    %10 = sbr.rel (0) target = $region5
  $region4: #{resnet_forward.25} parent=0 // pred_region
    _
  $region5: #{resnet_forward.25} parent=0 // pred_fallthru
    _
  // Predicated region
  $region6: #{resnet_forward.25} parent=0 // pred_check
    _
  $region7: #{resnet_forward.25} parent=0 // pred_check_branch
    %12 = sbr.rel (0) target = $region9
  $region8: #{resnet_forward.25} parent=0 // pred_region
    _
  $region9: #{resnet_forward.25} parent=0 // pred_fallthru
    _
  // Predicated region
  $region10: #{resnet_forward.25} parent=0 // pred_check
    _
  $region11: #{resnet_forward.25} parent=0 // pred_check_branch
    %14 = sbr.rel (0) target = $region13
  $region12: #{resnet_forward.25} parent=0 // pred_region
    _
  $region13: #{resnet_forward.25} parent=0 // pred_fallthru
    _
  // Predicated region
  $region14: #{resnet_forward.25} parent=0 // pred_check
    _
  $region15: #{resnet_forward.25} parent=0 // pred_check_branch
    %16 = sbr.rel (0) target = $region17
  $region16: #{resnet_forward.25} parent=0 // pred_region
    _
  $region17: #{resnet_forward.25} parent=0 // pred_fallthru
    _
  %v18 = vld [vmem:[%s1] sm:$0xff]
  %v19 = vld [vmem:[%s1 + $0x8] sm:$0xff]
  %v20 = vld [vmem:[%s1 + $0x10] sm:$0xf]
  %v21 = vld [vmem:[%s1 + $0x14] sm:$0xff]
  %v22 = vld [vmem:[%s1 + $0x1c] sm:$0xff]
  %v23 = vld [vmem:[%s1 + $0x24] sm:$0xf]
  %v24 = vld [vmem:[%s1 + $0x28] sm:$0xff]
  %v25 = vld [vmem:[%s1 + $0x30] sm:$0xff]
  %v26 = vld [vmem:[%s1 + $0x38] sm:$0xf]
  %v27 = vld [vmem:[%s1 + $0x3c] sm:$0xff]
  %v28 = vld [vmem:[%s1 + $0x44] sm:$0xff]
  %v29 = vld [vmem:[%s1 + $0x4c] sm:$0xf]
  %v30 = vld [vmem:[%s1 + $0x50] sm:$0xff]
  %v31 = vld [vmem:[%s1 + $0x58] sm:$0xff]
  %v32 = vld [vmem:[%s1 + $0x60] sm:$0xf]
  %v33 = vld [vmem:[%s1 + $0x64] sm:$0xff]
  %v34 = vld [vmem:[%s1 + $0x6c] sm:$0xff]
  %v35 = vld [vmem:[%s1 + $0x74] sm:$0xf]
  %v36 = vld [vmem:[%s1 + $0x78] sm:$0xff]
  %v37 = vld [vmem:[%s1 + $0x80] sm:$0xff]
  %v38 = vld [vmem:[%s1 + $0x88] sm:$0xf]
  %v39 = vld [vmem:[%s1 + $0x8c] sm:$0xff]
  %v40 = vld [vmem:[%s1 + $0x94] sm:$0xff]
  %v41 = vld [vmem:[%s1 + $0x9c] sm:$0xf]
  %v42 = vld [vmem:[%s0] sm:$0xf]
  %v43 = vld [vmem:[%s0 + $0x4] sm:$0xf]
  %v44 = vld [vmem:[%s0 + $0x8] sm:$0xf]
  %v45 = vld [vmem:[%s0 + $0xc] sm:$0xf]
  %v46 = vld [vmem:[%s0 + $0x10] sm:$0xf]
  %v47 = vld [vmem:[%s0 + $0x14] sm:$0xf]
  %v48 = vld [vmem:[%s0 + $0x18] sm:$0xf]
  %v49 = vld [vmem:[%s0 + $0x1c] sm:$0xf]
  %v50 = vld [vmem:[%s0 + $0x20] sm:$0xf]
  %v51 = vld [vmem:[%s0 + $0x24] sm:$0xf]
  %v52 = vld [vmem:[%s0 + $0x28] sm:$0xf]
  %v53 = vld [vmem:[%s0 + $0x2c] sm:$0xf]
  %v54 = vld [vmem:[%s0 + $0x30] sm:$0xf]
  %v55 = vld [vmem:[%s0 + $0x34] sm:$0xf]
  %v56 = vld [vmem:[%s0 + $0x38] sm:$0xf]
  %v57 = vld [vmem:[%s0 + $0x3c] sm:$0xf]
  %v58 = vld [vmem:[%s0 + $0x40] sm:$0xf]
  %v59 = vld [vmem:[%s0 + $0x44] sm:$0xf]
  %v60 = vld [vmem:[%s0 + $0x48] sm:$0xf]
  %v61 = vld [vmem:[%s0 + $0x4c] sm:$0xf]
  %v62 = vld [vmem:[%s0 + $0x50] sm:$0xf]
  %v63 = vld [vmem:[%s0 + $0x54] sm:$0xf]
  %v64 = vld [vmem:[%s0 + $0x58] sm:$0xf]
  %v65 = vld [vmem:[%s0 + $0x5c] sm:$0xf]
  %v66 = vld [vmem:[%s0 + $0x60] sm:$0xf]
  %v67 = vld [vmem:[%s0 + $0x64] sm:$0xf]
  %v68 = vld [vmem:[%s0 + $0x68] sm:$0xf]
  %v69 = vld [vmem:[%s0 + $0x6c] sm:$0xf]
  %v70 = vld [vmem:[%s0 + $0x70] sm:$0xf]
  %v71 = vld [vmem:[%s0 + $0x74] sm:$0xf]
  %v72 = vld [vmem:[%s0 + $0x78] sm:$0xf]
  %v73 = vld [vmem:[%s0 + $0x7c] sm:$0xf]
  %v74 = vld [vmem:[%s0 + $0x80] sm:$0xf]
  %v75 = vld [vmem:[%s0 + $0x84] sm:$0xf]
  %v76 = vld [vmem:[%s0 + $0x88] sm:$0xf]
  %v77 = vld [vmem:[%s0 + $0x8c] sm:$0xf]
  %v78 = vld [vmem:[%s0 + $0x90] sm:$0xf]
  %v79 = vld [vmem:[%s0 + $0x94] sm:$0xf]
  %v80 = vld [vmem:[%s0 + $0x98] sm:$0xf]
  %v81 = vld [vmem:[%s0 + $0x9c] sm:$0xf]
  %v82 = vld [vmem:[%s0 + $0xa0] sm:$0xf]
  %v83 = vld [vmem:[%s0 + $0xa4] sm:$0xf]
  %v84 = vld [vmem:[%s0 + $0xa8] sm:$0xf]
  %v85 = vld [vmem:[%s0 + $0xac] sm:$0xf]
  %v86 = vld [vmem:[%s0 + $0xb0] sm:$0xf]
  %v87 = vld [vmem:[%s0 + $0xb4] sm:$0xf]
  %v88 = vld [vmem:[%s0 + $0xb8] sm:$0xf]
  %v89 = vld [vmem:[%s0 + $0xbc] sm:$0xf]
  %v90 = vld [vmem:[%s0 + $0xc0] sm:$0xf]
  %v91 = vld [vmem:[%s0 + $0xc4] sm:$0xf]
  %v92 = vld [vmem:[%s0 + $0xc8] sm:$0xf]
  %v93 = vld [vmem:[%s0 + $0xcc] sm:$0xf]
  %v94 = vld [vmem:[%s0 + $0xd0] sm:$0xf]
  %v95 = vld [vmem:[%s0 + $0xd4] sm:$0xf]
  %v96 = vld [vmem:[%s0 + $0xd8] sm:$0xf]
  %v97 = vld [vmem:[%s0 + $0xdc] sm:$0xf]
  %v98 = vld [vmem:[%s0 + $0xe0] sm:$0xf]
  %v99 = vld [vmem:[%s0 + $0xe4] sm:$0xf]
  %v100 = vld [vmem:[%s0 + $0xe8] sm:$0xf]
  %v101 = vld [vmem:[%s0 + $0xec] sm:$0xf]
  %v102 = vld [vmem:[%s0 + $0xf0] sm:$0xf]
  %v103 = vld [vmem:[%s0 + $0xf4] sm:$0xf]
  %v104 = vld [vmem:[%s0 + $0xf8] sm:$0xf]
  %v105 = vld [vmem:[%s0 + $0xfc] sm:$0xf]
  %v106 = vld [vmem:[%s0 + $0x100] sm:$0xf]
  %v107 = vld [vmem:[%s0 + $0x104] sm:$0xf]
  %v108 = vld [vmem:[%s0 + $0x108] sm:$0xf]
  %v109 = vld [vmem:[%s0 + $0x10c] sm:$0xf]
  %v110 = vld [vmem:[%s0 + $0x110] sm:$0xf]
  %v111 = vld [vmem:[%s0 + $0x114] sm:$0xf]
  %v112 = vld [vmem:[%s0 + $0x118] sm:$0xf]
  %v113 = vld [vmem:[%s0 + $0x11c] sm:$0xf]
  %v138 = vunpack.c.l.b16 %v18
  %v139 = vunpack.c.h.b16 %v18
  %v140 = vunpack.c.l.b16 %v19
  %v141 = vunpack.c.h.b16 %v19
  %v142 = vunpack.c.l.b16 %v20
  %v143 = vunpack.c.l.b16 %v21
  %v144 = vunpack.c.h.b16 %v21
  %v145 = vunpack.c.l.b16 %v22
  %v146 = vunpack.c.h.b16 %v22
  %v147 = vunpack.c.l.b16 %v23
  %v148 = vunpack.c.l.b16 %v24
  %v149 = vunpack.c.h.b16 %v24
  %v150 = vunpack.c.l.b16 %v25
  %v151 = vunpack.c.h.b16 %v25
  %v152 = vunpack.c.l.b16 %v26
  %v153 = vunpack.c.l.b16 %v27
  %v154 = vunpack.c.h.b16 %v27
  %v155 = vunpack.c.l.b16 %v28
  %v156 = vunpack.c.h.b16 %v28
  %v157 = vunpack.c.l.b16 %v29
  %v158 = vunpack.c.l.b16 %v30
  %v159 = vunpack.c.h.b16 %v30
  %v160 = vunpack.c.l.b16 %v31
  %v161 = vunpack.c.h.b16 %v31
  %v162 = vunpack.c.l.b16 %v32
  %v163 = vunpack.c.l.b16 %v33
  %v164 = vunpack.c.h.b16 %v33
  %v165 = vunpack.c.l.b16 %v34
  %v166 = vunpack.c.h.b16 %v34
  %v167 = vunpack.c.l.b16 %v35
  %v168 = vunpack.c.l.b16 %v36
  %v169 = vunpack.c.h.b16 %v36
  %v170 = vunpack.c.l.b16 %v37
  %v171 = vunpack.c.h.b16 %v37
  %v172 = vunpack.c.l.b16 %v38
  %v173 = vunpack.c.l.b16 %v39
  %v174 = vunpack.c.h.b16 %v39
  %v175 = vunpack.c.l.b16 %v40
  %v176 = vunpack.c.h.b16 %v40
  %v177 = vunpack.c.l.b16 %v41
  %v178 = vpack.c.b16 %v143, %v138
  %v179 = vpack.c.b16 %v144, %v139
  %v180 = vpack.c.b16 %v145, %v140
  %v181 = vpack.c.b16 %v146, %v141
  %v182 = vpack.c.b16 %v147, %v142
  %v183 = vpack.c.b16 %v153, %v148
  %v184 = vpack.c.b16 %v154, %v149
  %v185 = vpack.c.b16 %v155, %v150
  %v186 = vpack.c.b16 %v156, %v151
  %v187 = vpack.c.b16 %v157, %v152
  %v188 = vpack.c.b16 %v163, %v158
  %v189 = vpack.c.b16 %v164, %v159
  %v190 = vpack.c.b16 %v165, %v160
  %v191 = vpack.c.b16 %v166, %v161
  %v192 = vpack.c.b16 %v167, %v162
  %v193 = vpack.c.b16 %v173, %v168
  %v194 = vpack.c.b16 %v174, %v169
  %v195 = vpack.c.b16 %v175, %v170
  %v196 = vpack.c.b16 %v176, %v171
  %v197 = vpack.c.b16 %v177, %v172
  %v286 = vunpack.c.l.b16 %v42
  %v287 = vunpack.c.l.b16 %v43
  %v288 = vunpack.c.l.b16 %v44
  %v289 = vunpack.c.l.b16 %v45
  %v290 = vunpack.c.l.b16 %v46
  %v291 = vunpack.c.l.b16 %v47
  %v292 = vunpack.c.l.b16 %v48
  %v293 = vunpack.c.l.b16 %v49
  %v294 = vunpack.c.l.b16 %v50
  %v295 = vunpack.c.l.b16 %v51
  %v296 = vunpack.c.l.b16 %v52
  %v297 = vunpack.c.l.b16 %v53
  %v298 = vunpack.c.l.b16 %v54
  %v299 = vunpack.c.l.b16 %v55
  %v300 = vunpack.c.l.b16 %v56
  %v301 = vunpack.c.l.b16 %v57
  %v302 = vunpack.c.l.b16 %v58
  %v303 = vunpack.c.l.b16 %v59
  %v304 = vunpack.c.l.b16 %v60
  %v305 = vunpack.c.l.b16 %v61
  %v306 = vunpack.c.l.b16 %v62
  %v307 = vunpack.c.l.b16 %v63
  %v308 = vunpack.c.l.b16 %v64
  %v309 = vunpack.c.l.b16 %v65
  %v310 = vunpack.c.l.b16 %v66
  %v311 = vunpack.c.l.b16 %v67
  %v312 = vunpack.c.l.b16 %v68
  %v313 = vunpack.c.l.b16 %v69
  %v314 = vunpack.c.l.b16 %v70
  %v315 = vunpack.c.l.b16 %v71
  %v316 = vunpack.c.l.b16 %v72
  %v317 = vunpack.c.l.b16 %v73
  %v318 = vunpack.c.l.b16 %v74
  %v319 = vunpack.c.l.b16 %v75
  %v320 = vunpack.c.l.b16 %v76
  %v321 = vunpack.c.l.b16 %v77
  %v322 = vunpack.c.l.b16 %v78
  %v323 = vunpack.c.l.b16 %v79
  %v324 = vunpack.c.l.b16 %v80
  %v325 = vunpack.c.l.b16 %v81
  %v326 = vunpack.c.l.b16 %v82
  %v327 = vunpack.c.l.b16 %v83
  %v328 = vunpack.c.l.b16 %v84
  %v329 = vunpack.c.l.b16 %v85
  %v330 = vunpack.c.l.b16 %v86
  %v331 = vunpack.c.l.b16 %v87
  %v332 = vunpack.c.l.b16 %v88
  %v333 = vunpack.c.l.b16 %v89
  %v334 = vunpack.c.l.b16 %v90
  %v335 = vunpack.c.l.b16 %v91
  %v336 = vunpack.c.l.b16 %v92
  %v337 = vunpack.c.l.b16 %v93
  %v338 = vunpack.c.l.b16 %v94
  %v339 = vunpack.c.l.b16 %v95
  %v340 = vunpack.c.l.b16 %v96
  %v341 = vunpack.c.l.b16 %v97
  %v342 = vunpack.c.l.b16 %v98
  %v343 = vunpack.c.l.b16 %v99
  %v344 = vunpack.c.l.b16 %v100
  %v345 = vunpack.c.l.b16 %v101
  %v346 = vunpack.c.l.b16 %v102
  %v347 = vunpack.c.l.b16 %v103
  %v348 = vunpack.c.l.b16 %v104
  %v349 = vunpack.c.l.b16 %v105
  %v350 = vunpack.c.l.b16 %v106
  %v351 = vunpack.c.l.b16 %v107
  %v352 = vunpack.c.l.b16 %v108
  %v353 = vunpack.c.l.b16 %v109
  %v354 = vunpack.c.l.b16 %v110
  %v355 = vunpack.c.l.b16 %v111
  %v356 = vunpack.c.l.b16 %v112
  %v357 = vunpack.c.l.b16 %v113
  %v358 = vpack.c.b16 %v287, %v286
  %v359 = vpack.c.b16 %v289, %v288
  %v360 = vpack.c.b16 %v291, %v290
  %v361 = vpack.c.b16 %v293, %v292
  %v362 = vpack.c.b16 %v295, %v294
  %v363 = vpack.c.b16 %v297, %v296
  %v364 = vpack.c.b16 %v299, %v298
  %v365 = vpack.c.b16 %v301, %v300
  %v366 = vpack.c.b16 %v303, %v302
  %v367 = vpack.c.b16 %v305, %v304
  %v368 = vpack.c.b16 %v307, %v306
  %v369 = vpack.c.b16 %v309, %v308
  %v370 = vpack.c.b16 %v311, %v310
  %v371 = vpack.c.b16 %v313, %v312
  %v372 = vpack.c.b16 %v315, %v314
  %v373 = vpack.c.b16 %v317, %v316
  %v374 = vpack.c.b16 %v319, %v318
  %v375 = vpack.c.b16 %v321, %v320
  %v376 = vpack.c.b16 %v323, %v322
  %v377 = vpack.c.b16 %v325, %v324
  %v378 = vpack.c.b16 %v327, %v326
  %v379 = vpack.c.b16 %v329, %v328
  %v380 = vpack.c.b16 %v331, %v330
  %v381 = vpack.c.b16 %v333, %v332
  %v382 = vpack.c.b16 %v335, %v334
  %v383 = vpack.c.b16 %v337, %v336
  %v384 = vpack.c.b16 %v339, %v338
  %v385 = vpack.c.b16 %v341, %v340
  %v386 = vpack.c.b16 %v343, %v342
  %v387 = vpack.c.b16 %v345, %v344
  %v388 = vpack.c.b16 %v347, %v346
  %v389 = vpack.c.b16 %v349, %v348
  %v390 = vpack.c.b16 %v351, %v350
  %v391 = vpack.c.b16 %v353, %v352
  %v392 = vpack.c.b16 %v355, %v354
  %v393 = vpack.c.b16 %v357, %v356
  %vm430 = vcmask 523264
  %v432 = vsel %vm430, %v182, 0
  %v435 = vsel %vm430, %v187, 0
  %v438 = vsel %vm430, %v192, 0
  %v441 = vsel %vm430, %v197, 0
  %443 = vmatprep.subr.bf16.mxu0 0
  %444 = vmatpush1.bf16.msra.mxu0 %v358
  %445 = vmatprep.subr.bf16.mxu0 0
  %446 = vmatpush1.bf16.msra.mxu0 %v359
  %447 = vmatprep.subr.bf16.mxu0 0
  %448 = vmatpush1.bf16.msra.mxu0 %v360
  %449 = vmatprep.subr.bf16.mxu0 0
  %450 = vmatpush1.bf16.msra.mxu0 %v361
  %451 = vmatprep.subr.bf16.mxu0 0
  %452 = vmatpush1.bf16.msra.mxu0 %v362
  %453 = vmatprep.subr.bf16.mxu0 0
  %454 = vmatpush1.bf16.msra.mxu0 %v363
  %455 = vmatprep.subr.bf16.mxu0 0
  %456 = vmatpush1.bf16.msra.mxu0 %v364
  %457 = vmatprep.subr.bf16.mxu0 0
  %458 = vmatpush1.bf16.msra.mxu0 %v365
  %459 = vmatprep.subr.bf16.mxu0 0
  %460 = vmatpush1.bf16.msra.mxu0 %v366
  %461 = vmatprep.subr.bf16.mxu0 0
  %462 = vmatpush1.bf16.msra.mxu0 %v367
  %463 = vmatprep.subr.bf16.mxu0 0
  %464 = vmatpush1.bf16.msra.mxu0 %v368
  %465 = vmatprep.subr.bf16.mxu0 0
  %466 = vmatpush1.bf16.msra.mxu0 %v369
  %467 = vmatprep.subr.bf16.mxu0 0
  %468 = vmatpush1.bf16.msra.mxu0 %v370
  %469 = vmatprep.subr.bf16.mxu0 0
  %470 = vmatpush1.bf16.msra.mxu0 %v371
  %471 = vmatprep.subr.bf16.mxu0 0
  %472 = vmatpush1.bf16.msra.mxu0 %v372
  %473 = vmatprep.subr.bf16.mxu0 0
  %474 = vmatpush1.bf16.msra.mxu0 %v373
  %475 = vmatprep.mubr.bf16.mxu0 %v179
  %476 = vmatmul.mubr.bf16.gmra.mrb[0].mxu0 %v178
  %v477 = vpop.f32.mrb[0].mxu0
  %v478 = vadd.f32 0.0, %v477
  %v479 = vpop.f32.mrb[0].mxu0
  %v480 = vpop.f32.mrb[0].mxu0
  %v481 = vadd.f32 0.0, %v480
  %v482 = vpop.f32.mrb[0].mxu0
  %483 = vmatprep.mubr.bf16.mxu0 %v184
  %484 = vmatmul.mubr.bf16.gmra.mrb[0].mxu0 %v183
  %v485 = vpop.f32.mrb[0].mxu0
  %v486 = vadd.f32 0.0, %v485
  %v487 = vpop.f32.mrb[0].mxu0
  %v488 = vpop.f32.mrb[0].mxu0
  %v489 = vadd.f32 0.0, %v488
  %v490 = vpop.f32.mrb[0].mxu0
  %491 = vmatprep.mubr.bf16.mxu0 %v189
  %492 = vmatmul.mubr.bf16.gmra.mrb[0].mxu0 %v188
  %v493 = vpop.f32.mrb[0].mxu0
  %v494 = vadd.f32 0.0, %v493
  %v495 = vpop.f32.mrb[0].mxu0
  %v496 = vpop.f32.mrb[0].mxu0
  %v497 = vadd.f32 0.0, %v496
  %v498 = vpop.f32.mrb[0].mxu0
  %499 = vmatprep.mubr.bf16.mxu0 %v194
  %500 = vmatmul.mubr.bf16.gmra.mrb[0].mxu0 %v193
  %v501 = vpop.f32.mrb[0].mxu0
  %v502 = vadd.f32 0.0, %v501
  %v503 = vpop.f32.mrb[0].mxu0
  %v504 = vpop.f32.mrb[0].mxu0
  %v505 = vadd.f32 0.0, %v504
  %v506 = vpop.f32.mrb[0].mxu0
  %507 = vdwg.mxu0
  %508 = vmatprep.subr.bf16.mxu0 0
  %509 = vmatpush1.bf16.msra.mxu0 %v374
  %510 = vmatprep.subr.bf16.mxu0 0
  %511 = vmatpush1.bf16.msra.mxu0 %v375
  %512 = vmatprep.subr.bf16.mxu0 0
  %513 = vmatpush1.bf16.msra.mxu0 %v376
  %514 = vmatprep.subr.bf16.mxu0 0
  %515 = vmatpush1.bf16.msra.mxu0 %v377
  %516 = vmatprep.subr.bf16.mxu0 0
  %517 = vmatpush1.bf16.msra.mxu0 %v378
  %518 = vmatprep.subr.bf16.mxu0 0
  %519 = vmatpush1.bf16.msra.mxu0 %v379
  %520 = vmatprep.subr.bf16.mxu0 0
  %521 = vmatpush1.bf16.msra.mxu0 %v380
  %522 = vmatprep.subr.bf16.mxu0 0
  %523 = vmatpush1.bf16.msra.mxu0 %v381
  %524 = vmatprep.subr.bf16.mxu0 0
  %525 = vmatpush1.bf16.msra.mxu0 %v382
  %526 = vmatprep.subr.bf16.mxu0 0
  %527 = vmatpush1.bf16.msra.mxu0 %v383
  %528 = vmatprep.subr.bf16.mxu0 0
  %529 = vmatpush1.bf16.msra.mxu0 %v384
  %530 = vmatprep.subr.bf16.mxu0 0
  %531 = vmatpush1.bf16.msra.mxu0 %v385
  %532 = vmatprep.subr.bf16.mxu0 0
  %533 = vmatpush1.bf16.msra.mxu0 %v386
  %534 = vmatprep.subr.bf16.mxu0 0
  %535 = vmatpush1.bf16.msra.mxu0 %v387
  %536 = vmatprep.subr.bf16.mxu0 0
  %537 = vmatpush1.bf16.msra.mxu0 %v388
  %538 = vmatprep.subr.bf16.mxu0 0
  %539 = vmatpush1.bf16.msra.mxu0 %v389
  %540 = vmatprep.mubr.bf16.mxu0 %v181
  %541 = vmatmul.mubr.bf16.gmra.mrb[0].mxu0 %v180
  %v542 = vpop.f32.mrb[0].mxu0
  %v543 = vadd.f32 %v478, %v542
  %v544 = vpop.f32.mrb[0].mxu0
  %v545 = vpop.f32.mrb[0].mxu0
  %v546 = vadd.f32 %v481, %v545
  %v547 = vpop.f32.mrb[0].mxu0
  %548 = vmatprep.mubr.bf16.mxu0 %v186
  %549 = vmatmul.mubr.bf16.gmra.mrb[0].mxu0 %v185
  %v550 = vpop.f32.mrb[0].mxu0
  %v551 = vadd.f32 %v486, %v550
  %v552 = vpop.f32.mrb[0].mxu0
  %v553 = vpop.f32.mrb[0].mxu0
  %v554 = vadd.f32 %v489, %v553
  %v555 = vpop.f32.mrb[0].mxu0
  %556 = vmatprep.mubr.bf16.mxu0 %v191
  %557 = vmatmul.mubr.bf16.gmra.mrb[0].mxu0 %v190
  %v558 = vpop.f32.mrb[0].mxu0
  %v559 = vadd.f32 %v494, %v558
  %v560 = vpop.f32.mrb[0].mxu0
  %v561 = vpop.f32.mrb[0].mxu0
  %v562 = vadd.f32 %v497, %v561
  %v563 = vpop.f32.mrb[0].mxu0
  %564 = vmatprep.mubr.bf16.mxu0 %v196
  %565 = vmatmul.mubr.bf16.gmra.mrb[0].mxu0 %v195
  %v566 = vpop.f32.mrb[0].mxu0
  %v567 = vadd.f32 %v502, %v566
  %v568 = vpop.f32.mrb[0].mxu0
  %v569 = vpop.f32.mrb[0].mxu0
  %v570 = vadd.f32 %v505, %v569
  %v571 = vpop.f32.mrb[0].mxu0
  %572 = vdwg.mxu0
  %573 = vmatprep.subr.bf16.mxu0 0
  %574 = vmatpush1.bf16.msra.mxu0 %v390
  %575 = vmatprep.subr.bf16.mxu0 0
  %576 = vmatpush1.bf16.msra.mxu0 %v391
  %577 = vmatprep.subr.bf16.mxu0 0
  %578 = vmatpush1.bf16.msra.mxu0 %v392
  %579 = vmatprep.subr.bf16.mxu0 0
  %580 = vmatpush1.bf16.msra.mxu0 %v393
  %581 = vmatprep.subr.bf16.mxu0 0
  %582 = vmatpush1.bf16.msra.mxu0 0
  %583 = vmatprep.subr.bf16.mxu0 0
  %584 = vmatpush1.bf16.msra.mxu0 0
  %585 = vmatprep.subr.bf16.mxu0 0
  %586 = vmatpush1.bf16.msra.mxu0 0
  %587 = vmatprep.subr.bf16.mxu0 0
  %588 = vmatpush1.bf16.msra.mxu0 0
  %589 = vmatprep.subr.bf16.mxu0 0
  %590 = vmatpush1.bf16.msra.mxu0 0
  %591 = vmatprep.subr.bf16.mxu0 0
  %592 = vmatpush1.bf16.msra.mxu0 0
  %593 = vmatprep.subr.bf16.mxu0 0
  %594 = vmatpush1.bf16.msra.mxu0 0
  %595 = vmatprep.subr.bf16.mxu0 0
  %596 = vmatpush1.bf16.msra.mxu0 0
  %597 = vmatprep.subr.bf16.mxu0 0
  %598 = vmatpush1.bf16.msra.mxu0 0
  %599 = vmatprep.subr.bf16.mxu0 0
  %600 = vmatpush1.bf16.msra.mxu0 0
  %601 = vmatprep.subr.bf16.mxu0 0
  %602 = vmatpush1.bf16.msra.mxu0 0
  %603 = vmatprep.subr.bf16.mxu0 0
  %604 = vmatpush1.bf16.msra.mxu0 0
  %605 = vmatprep.mubr.bf16.mxu0 0
  %606 = vmatmul.mubr.bf16.gmra.mrb[0].mxu0 %v432
  %v607 = vpop.f32.mrb[0].mxu0
  %v608 = vadd.f32 %v543, %v607
  %v609 = vpop.f32.mrb[0].mxu0
  %v610 = vpop.f32.mrb[0].mxu0
  %v611 = vadd.f32 %v546, %v610
  %v612 = vpop.f32.mrb[0].mxu0
  %613 = vmatprep.mubr.bf16.mxu0 0
  %614 = vmatmul.mubr.bf16.gmra.mrb[0].mxu0 %v435
  %v615 = vpop.f32.mrb[0].mxu0
  %v616 = vadd.f32 %v551, %v615
  %v617 = vpop.f32.mrb[0].mxu0
  %v618 = vpop.f32.mrb[0].mxu0
  %v619 = vadd.f32 %v554, %v618
  %v620 = vpop.f32.mrb[0].mxu0
  %621 = vmatprep.mubr.bf16.mxu0 0
  %622 = vmatmul.mubr.bf16.gmra.mrb[0].mxu0 %v438
  %v623 = vpop.f32.mrb[0].mxu0
  %v624 = vadd.f32 %v559, %v623
  %v625 = vpop.f32.mrb[0].mxu0
  %v626 = vpop.f32.mrb[0].mxu0
  %v627 = vadd.f32 %v562, %v626
  %v628 = vpop.f32.mrb[0].mxu0
  %629 = vmatprep.mubr.bf16.mxu0 0
  %630 = vmatmul.mubr.bf16.gmra.mrb[0].mxu0 %v441
  %v631 = vpop.f32.mrb[0].mxu0
  %v632 = vadd.f32 %v567, %v631
  %v633 = vpop.f32.mrb[0].mxu0
  %v634 = vpop.f32.mrb[0].mxu0
  %v635 = vadd.f32 %v570, %v634
  %v636 = vpop.f32.mrb[0].mxu0
  %637 = vdwg.mxu0
  %v638 = vld [vmem:[%s2] sm:$0xff]
  %v639 = vld [vmem:[%s2 + $0x8] sm:$0xff]
  %v640 = vld [vmem:[%s2 + $0x10] sm:$0xff]
  %v641 = vld [vmem:[%s2 + $0x18] sm:$0xff]
  %v642 = vld [vmem:[%s2 + $0x20] sm:$0xff]
  %v643 = vld [vmem:[%s2 + $0x28] sm:$0xff]
  %v644 = vld [vmem:[%s2 + $0x30] sm:$0xff]
  %v645 = vld [vmem:[%s2 + $0x38] sm:$0xff]
  %v646 = vld [vmem:[%s3] sm:$0xff]
  %v647 = vld [vmem:[%s3 + $0x8] sm:$0xff]
  %v648 = vld [vmem:[%s3 + $0x10] sm:$0xff]
  %v649 = vld [vmem:[%s3 + $0x18] sm:$0xff]
  %v650 = vld [vmem:[%s3 + $0x20] sm:$0xff]
  %v651 = vld [vmem:[%s3 + $0x28] sm:$0xff]
  %v652 = vld [vmem:[%s3 + $0x30] sm:$0xff]
  %v653 = vld [vmem:[%s3 + $0x38] sm:$0xff]
  %654 = vadd.xlane.f32.xlu0 %v608
  %v655 = vpop.xlane.xlu0 %654
  %656 = vadd.xlane.f32.xlu0 %v611
  %v657 = vpop.xlane.xlu0 %656
  %658 = vadd.xlane.f32.xlu0 %v616
  %v659 = vpop.xlane.xlu0 %658
  %660 = vadd.xlane.f32.xlu0 %v619
  %v661 = vpop.xlane.xlu0 %660
  %662 = vadd.xlane.f32.xlu0 %v624
  %v663 = vpop.xlane.xlu0 %662
  %664 = vadd.xlane.f32.xlu0 %v627
  %v665 = vpop.xlane.xlu0 %664
  %666 = vadd.xlane.f32.xlu0 %v632
  %v667 = vpop.xlane.xlu0 %666
  %668 = vadd.xlane.f32.xlu0 %v635
  %v669 = vpop.xlane.xlu0 %668
  %v670 = vrcp.pop 128.0
  %v671 = vmul.f32 %v655, %v670
  %v672 = vmul.f32 %v657, %v670
  %v673 = vmul.f32 %v659, %v670
  %v674 = vmul.f32 %v661, %v670
  %v675 = vmul.f32 %v663, %v670
  %v676 = vmul.f32 %v665, %v670
  %v677 = vmul.f32 %v667, %v670
  %v678 = vmul.f32 %v669, %v670
  %v679 = vsub.f32 %v608, %v671
  %v680 = vsub.f32 %v611, %v672
  %v681 = vsub.f32 %v616, %v673
  %v682 = vsub.f32 %v619, %v674
  %v683 = vsub.f32 %v624, %v675
  %v684 = vsub.f32 %v627, %v676
  %v685 = vsub.f32 %v632, %v677
  %v686 = vsub.f32 %v635, %v678
  %v687 = vmul.f32 %v679, %v679
  %v688 = vmul.f32 %v680, %v680
  %v689 = vmul.f32 %v681, %v681
  %v690 = vmul.f32 %v682, %v682
  %v691 = vmul.f32 %v683, %v683
  %v692 = vmul.f32 %v684, %v684
  %v693 = vmul.f32 %v685, %v685
  %v694 = vmul.f32 %v686, %v686
  %695 = vadd.xlane.f32.xlu0 %v687
  %v696 = vpop.xlane.xlu0 %695
  %697 = vadd.xlane.f32.xlu0 %v688
  %v698 = vpop.xlane.xlu0 %697
  %699 = vadd.xlane.f32.xlu0 %v689
  %v700 = vpop.xlane.xlu0 %699
  %701 = vadd.xlane.f32.xlu0 %v690
  %v702 = vpop.xlane.xlu0 %701
  %703 = vadd.xlane.f32.xlu0 %v691
  %v704 = vpop.xlane.xlu0 %703
  %705 = vadd.xlane.f32.xlu0 %v692
  %v706 = vpop.xlane.xlu0 %705
  %707 = vadd.xlane.f32.xlu0 %v693
  %v708 = vpop.xlane.xlu0 %707
  %709 = vadd.xlane.f32.xlu0 %v694
  %v710 = vpop.xlane.xlu0 %709
  %v711 = vmul.f32 %v696, %v670
  %v712 = vmul.f32 %v698, %v670
  %v713 = vmul.f32 %v700, %v670
  %v714 = vmul.f32 %v702, %v670
  %v715 = vmul.f32 %v704, %v670
  %v716 = vmul.f32 %v706, %v670
  %v717 = vmul.f32 %v708, %v670
  %v718 = vmul.f32 %v710, %v670
  %v719 = vadd.f32 %v711, 1e-05
  %v720 = vadd.f32 %v712, 1e-05
  %v721 = vadd.f32 %v713, 1e-05
  %v722 = vadd.f32 %v714, 1e-05
  %v723 = vadd.f32 %v715, 1e-05
  %v724 = vadd.f32 %v716, 1e-05
  %v725 = vadd.f32 %v717, 1e-05
  %v726 = vadd.f32 %v718, 1e-05
  %v727 = vrsqrt.pop %v719
  %v728 = vrsqrt.pop %v720
  %v729 = vrsqrt.pop %v721
  %v730 = vrsqrt.pop %v722
  %v731 = vrsqrt.pop %v723
  %v732 = vrsqrt.pop %v724
  %v733 = vrsqrt.pop %v725
  %v734 = vrsqrt.pop %v726
  %v735 = vmul.f32 %v679, %v727
  %v736 = vmul.f32 %v680, %v728
  %v737 = vmul.f32 %v681, %v729
  %v738 = vmul.f32 %v682, %v730
  %v739 = vmul.f32 %v683, %v731
  %v740 = vmul.f32 %v684, %v732
  %v741 = vmul.f32 %v685, %v733
  %v742 = vmul.f32 %v686, %v734
  %744 = vset.pattern.permute.xlu0 0
  %745 = vperm.xlu0 %744, %v638
  %v746 = vpop.permute.xlu0 %745
  %749 = vset.pattern.permute.xlu0 0
  %750 = vperm.xlu0 %749, %v639
  %v751 = vpop.permute.xlu0 %750
  %754 = vset.pattern.permute.xlu0 0
  %755 = vperm.xlu0 %754, %v640
  %v756 = vpop.permute.xlu0 %755
  %759 = vset.pattern.permute.xlu0 0
  %760 = vperm.xlu0 %759, %v641
  %v761 = vpop.permute.xlu0 %760
  %764 = vset.pattern.permute.xlu0 0
  %765 = vperm.xlu0 %764, %v642
  %v766 = vpop.permute.xlu0 %765
  %769 = vset.pattern.permute.xlu0 0
  %770 = vperm.xlu0 %769, %v643
  %v771 = vpop.permute.xlu0 %770
  %774 = vset.pattern.permute.xlu0 0
  %775 = vperm.xlu0 %774, %v644
  %v776 = vpop.permute.xlu0 %775
  %779 = vset.pattern.permute.xlu0 0
  %780 = vperm.xlu0 %779, %v645
  %v781 = vpop.permute.xlu0 %780
  %v783 = vmul.f32 %v735, %v746
  %v784 = vmul.f32 %v736, %v751
  %v785 = vmul.f32 %v737, %v756
  %v786 = vmul.f32 %v738, %v761
  %v787 = vmul.f32 %v739, %v766
  %v788 = vmul.f32 %v740, %v771
  %v789 = vmul.f32 %v741, %v776
  %v790 = vmul.f32 %v742, %v781
  %792 = vset.pattern.permute.xlu0 0
  %793 = vperm.xlu0 %792, %v646
  %v794 = vpop.permute.xlu0 %793
  %797 = vset.pattern.permute.xlu0 0
  %798 = vperm.xlu0 %797, %v647
  %v799 = vpop.permute.xlu0 %798
  %802 = vset.pattern.permute.xlu0 0
  %803 = vperm.xlu0 %802, %v648
  %v804 = vpop.permute.xlu0 %803
  %807 = vset.pattern.permute.xlu0 0
  %808 = vperm.xlu0 %807, %v649
  %v809 = vpop.permute.xlu0 %808
  %812 = vset.pattern.permute.xlu0 0
  %813 = vperm.xlu0 %812, %v650
  %v814 = vpop.permute.xlu0 %813
  %817 = vset.pattern.permute.xlu0 0
  %818 = vperm.xlu0 %817, %v651
  %v819 = vpop.permute.xlu0 %818
  %822 = vset.pattern.permute.xlu0 0
  %823 = vperm.xlu0 %822, %v652
  %v824 = vpop.permute.xlu0 %823
  %827 = vset.pattern.permute.xlu0 0
  %828 = vperm.xlu0 %827, %v653
  %v829 = vpop.permute.xlu0 %828
  %v831 = vadd.f32 %v783, %v794
  %v832 = vadd.f32 %v784, %v799
  %v833 = vadd.f32 %v785, %v804
  %v834 = vadd.f32 %v786, %v809
  %v835 = vadd.f32 %v787, %v814
  %v836 = vadd.f32 %v788, %v819
  %v837 = vadd.f32 %v789, %v824
  %v838 = vadd.f32 %v790, %v829
  %v839 = vmax.f32 %v831, 0.0
  %v840 = vmax.f32 %v832, 0.0
  %v841 = vmax.f32 %v833, 0.0
  %v842 = vmax.f32 %v834, 0.0
  %v843 = vmax.f32 %v835, 0.0
  %v844 = vmax.f32 %v836, 0.0
  %v845 = vmax.f32 %v837, 0.0
  %v846 = vmax.f32 %v838, 0.0
  %847 = vst [vmem:[%s4] sm:$0xff] %v839
  %848 = vst [vmem:[%s4 + $0x8] sm:$0xff] %v840
  %849 = vst [vmem:[%s4 + $0x10] sm:$0xff] %v841
  %850 = vst [vmem:[%s4 + $0x18] sm:$0xff] %v842
  %851 = vst [vmem:[%s4 + $0x20] sm:$0xff] %v843
  %852 = vst [vmem:[%s4 + $0x28] sm:$0xff] %v844
  %853 = vst [vmem:[%s4 + $0x30] sm:$0xff] %v845
  %854 = vst [vmem:[%s4 + $0x38] sm:$0xff] %v846
  // Predicated region
  $region18: #{resnet_forward.25} parent=0 // pred_check
    _
  $region19: #{resnet_forward.25} parent=0 // pred_check_branch
    %856 = sbr.rel (0) target = $region21
  $region20: #{resnet_forward.25} parent=0 // pred_region
    _
  $region21: #{resnet_forward.25} parent=0 // pred_fallthru
    _
  // Predicated region
  $region22: #{resnet_forward.25} parent=0 // pred_check
    _
  $region23: #{resnet_forward.25} parent=0 // pred_check_branch
    %858 = sbr.rel (0) target = $region25
  $region24: #{resnet_forward.25} parent=0 // pred_region
    _
  $region25: #{resnet_forward.25} parent=0 // pred_fallthru
    _

// kernel: resnet_forward.27
$region0: #{resnet_forward.27}
  #allocation0 [shape = 'u32[]', space=smem, size = 0x4, offset = 0x4, fixed_abs, tag = 'smem constant byte address 0x4 - core index']
  #allocation1 [shape = 'u32[144,128]{1,0:T(1,128)}', space=vmem, size = 0x12000, scoped, tag = 'internal scratch']
  %s0 = inlined_call_operand.vmem [shape: f32[64,2,64], index: 0, kind: input, shape index: {}]
  %s1 = inlined_call_operand.vmem [shape: f32[10,64], index: 1, kind: input, shape index: {}]
  %s2 = inlined_call_operand.vmem [shape: f32[10,1], index: 2, kind: input, shape index: {}]
  %s3 = inlined_call_operand.vmem [shape: f32[10,2], index: 3, kind: output, shape index: {}]
  %s4 = sld [smem:[#allocation0]]
  $region22: #{resnet_forward.27} parent=0
    _
  %s6 = ssub.s32 1, %s4
  %s7 = scalar_select 0, %s6, %s4
  // Predicated region
  $region2: #{resnet_forward.27} parent=0 // pred_check
    _
  $region3: #{resnet_forward.27} parent=0 // pred_check_branch
    %9 = sbr.rel (0) target = $region5
  $region4: #{resnet_forward.27} parent=0 // pred_region
    _
  $region5: #{resnet_forward.27} parent=0 // pred_fallthru
    _
  // Predicated region
  $region6: #{resnet_forward.27} parent=0 // pred_check
    _
  $region7: #{resnet_forward.27} parent=0 // pred_check_branch
    %11 = sbr.rel (0) target = $region9
  $region8: #{resnet_forward.27} parent=0 // pred_region
    _
  $region9: #{resnet_forward.27} parent=0 // pred_fallthru
    _
  // Predicated region
  $region10: #{resnet_forward.27} parent=0 // pred_check
    _
  $region11: #{resnet_forward.27} parent=0 // pred_check_branch
    %13 = sbr.rel (0) target = $region13
  $region12: #{resnet_forward.27} parent=0 // pred_region
    _
  $region13: #{resnet_forward.27} parent=0 // pred_fallthru
    _
  %v14 = vld [vmem:[%s0] sm:$0x3]
  %v15 = vld [vmem:[%s0 + $0x2] sm:$0x3]
  %v16 = vld [vmem:[%s0 + $0x4] sm:$0x3]
  %v17 = vld [vmem:[%s0 + $0x6] sm:$0x3]
  %v18 = vld [vmem:[%s0 + $0x8] sm:$0x3]
  %v19 = vld [vmem:[%s0 + $0xa] sm:$0x3]
  %v20 = vld [vmem:[%s0 + $0xc] sm:$0x3]
  %v21 = vld [vmem:[%s0 + $0xe] sm:$0x3]
  %v22 = vld [vmem:[%s0 + $0x10] sm:$0x3]
  %v23 = vld [vmem:[%s0 + $0x12] sm:$0x3]
  %v24 = vld [vmem:[%s0 + $0x14] sm:$0x3]
  %v25 = vld [vmem:[%s0 + $0x16] sm:$0x3]
  %v26 = vld [vmem:[%s0 + $0x18] sm:$0x3]
  %v27 = vld [vmem:[%s0 + $0x1a] sm:$0x3]
  %v28 = vld [vmem:[%s0 + $0x1c] sm:$0x3]
  %v29 = vld [vmem:[%s0 + $0x1e] sm:$0x3]
  %v30 = vld [vmem:[%s0 + $0x20] sm:$0x3]
  %v31 = vld [vmem:[%s0 + $0x22] sm:$0x3]
  %v32 = vld [vmem:[%s0 + $0x24] sm:$0x3]
  %v33 = vld [vmem:[%s0 + $0x26] sm:$0x3]
  %v34 = vld [vmem:[%s0 + $0x28] sm:$0x3]
  %v35 = vld [vmem:[%s0 + $0x2a] sm:$0x3]
  %v36 = vld [vmem:[%s0 + $0x2c] sm:$0x3]
  %v37 = vld [vmem:[%s0 + $0x2e] sm:$0x3]
  %v38 = vld [vmem:[%s0 + $0x30] sm:$0x3]
  %v39 = vld [vmem:[%s0 + $0x32] sm:$0x3]
  %v40 = vld [vmem:[%s0 + $0x34] sm:$0x3]
  %v41 = vld [vmem:[%s0 + $0x36] sm:$0x3]
  %v42 = vld [vmem:[%s0 + $0x38] sm:$0x3]
  %v43 = vld [vmem:[%s0 + $0x3a] sm:$0x3]
  %v44 = vld [vmem:[%s0 + $0x3c] sm:$0x3]
  %v45 = vld [vmem:[%s0 + $0x3e] sm:$0x3]
  %v46 = vld [vmem:[%s0 + $0x40] sm:$0x3]
  %v47 = vld [vmem:[%s0 + $0x42] sm:$0x3]
  %v48 = vld [vmem:[%s0 + $0x44] sm:$0x3]
  %v49 = vld [vmem:[%s0 + $0x46] sm:$0x3]
  %v50 = vld [vmem:[%s0 + $0x48] sm:$0x3]
  %v51 = vld [vmem:[%s0 + $0x4a] sm:$0x3]
  %v52 = vld [vmem:[%s0 + $0x4c] sm:$0x3]
  %v53 = vld [vmem:[%s0 + $0x4e] sm:$0x3]
  %v54 = vld [vmem:[%s0 + $0x50] sm:$0x3]
  %v55 = vld [vmem:[%s0 + $0x52] sm:$0x3]
  %v56 = vld [vmem:[%s0 + $0x54] sm:$0x3]
  %v57 = vld [vmem:[%s0 + $0x56] sm:$0x3]
  %v58 = vld [vmem:[%s0 + $0x58] sm:$0x3]
  %v59 = vld [vmem:[%s0 + $0x5a] sm:$0x3]
  %v60 = vld [vmem:[%s0 + $0x5c] sm:$0x3]
  %v61 = vld [vmem:[%s0 + $0x5e] sm:$0x3]
  %v62 = vld [vmem:[%s0 + $0x60] sm:$0x3]
  %v63 = vld [vmem:[%s0 + $0x62] sm:$0x3]
  %v64 = vld [vmem:[%s0 + $0x64] sm:$0x3]
  %v65 = vld [vmem:[%s0 + $0x66] sm:$0x3]
  %v66 = vld [vmem:[%s0 + $0x68] sm:$0x3]
  %v67 = vld [vmem:[%s0 + $0x6a] sm:$0x3]
  %v68 = vld [vmem:[%s0 + $0x6c] sm:$0x3]
  %v69 = vld [vmem:[%s0 + $0x6e] sm:$0x3]
  %v70 = vld [vmem:[%s0 + $0x70] sm:$0x3]
  %v71 = vld [vmem:[%s0 + $0x72] sm:$0x3]
  %v72 = vld [vmem:[%s0 + $0x74] sm:$0x3]
  %v73 = vld [vmem:[%s0 + $0x76] sm:$0x3]
  %v74 = vld [vmem:[%s0 + $0x78] sm:$0x3]
  %v75 = vld [vmem:[%s0 + $0x7a] sm:$0x3]
  %v76 = vld [vmem:[%s0 + $0x7c] sm:$0x3]
  %v77 = vld [vmem:[%s0 + $0x7e] sm:$0x3]
  %vm78 = vcmask 517120
  %v79 = vsel %vm78, %v14, 0.0
  %80 = vadd.xlane.f32.xlu0 %v79
  %v81 = vpop.xlane.xlu0 %80
  %v82 = vsel %vm78, %v15, 0.0
  %83 = vadd.xlane.f32.xlu0 %v82
  %v84 = vpop.xlane.xlu0 %83
  %v85 = vsel %vm78, %v16, 0.0
  %86 = vadd.xlane.f32.xlu0 %v85
  %v87 = vpop.xlane.xlu0 %86
  %v88 = vsel %vm78, %v17, 0.0
  %89 = vadd.xlane.f32.xlu0 %v88
  %v90 = vpop.xlane.xlu0 %89
  %v91 = vsel %vm78, %v18, 0.0
  %92 = vadd.xlane.f32.xlu0 %v91
  %v93 = vpop.xlane.xlu0 %92
  %v94 = vsel %vm78, %v19, 0.0
  %95 = vadd.xlane.f32.xlu0 %v94
  %v96 = vpop.xlane.xlu0 %95
  %v97 = vsel %vm78, %v20, 0.0
  %98 = vadd.xlane.f32.xlu0 %v97
  %v99 = vpop.xlane.xlu0 %98
  %v100 = vsel %vm78, %v21, 0.0
  %101 = vadd.xlane.f32.xlu0 %v100
  %v102 = vpop.xlane.xlu0 %101
  %v103 = vsel %vm78, %v22, 0.0
  %104 = vadd.xlane.f32.xlu0 %v103
  %v105 = vpop.xlane.xlu0 %104
  %v106 = vsel %vm78, %v23, 0.0
  %107 = vadd.xlane.f32.xlu0 %v106
  %v108 = vpop.xlane.xlu0 %107
  %v109 = vsel %vm78, %v24, 0.0
  %110 = vadd.xlane.f32.xlu0 %v109
  %v111 = vpop.xlane.xlu0 %110
  %v112 = vsel %vm78, %v25, 0.0
  %113 = vadd.xlane.f32.xlu0 %v112
  %v114 = vpop.xlane.xlu0 %113
  %v115 = vsel %vm78, %v26, 0.0
  %116 = vadd.xlane.f32.xlu0 %v115
  %v117 = vpop.xlane.xlu0 %116
  %v118 = vsel %vm78, %v27, 0.0
  %119 = vadd.xlane.f32.xlu0 %v118
  %v120 = vpop.xlane.xlu0 %119
  %v121 = vsel %vm78, %v28, 0.0
  %122 = vadd.xlane.f32.xlu0 %v121
  %v123 = vpop.xlane.xlu0 %122
  %v124 = vsel %vm78, %v29, 0.0
  %125 = vadd.xlane.f32.xlu0 %v124
  %v126 = vpop.xlane.xlu0 %125
  %v127 = vsel %vm78, %v30, 0.0
  %128 = vadd.xlane.f32.xlu0 %v127
  %v129 = vpop.xlane.xlu0 %128
  %v130 = vsel %vm78, %v31, 0.0
  %131 = vadd.xlane.f32.xlu0 %v130
  %v132 = vpop.xlane.xlu0 %131
  %v133 = vsel %vm78, %v32, 0.0
  %134 = vadd.xlane.f32.xlu0 %v133
  %v135 = vpop.xlane.xlu0 %134
  %v136 = vsel %vm78, %v33, 0.0
  %137 = vadd.xlane.f32.xlu0 %v136
  %v138 = vpop.xlane.xlu0 %137
  %v139 = vsel %vm78, %v34, 0.0
  %140 = vadd.xlane.f32.xlu0 %v139
  %v141 = vpop.xlane.xlu0 %140
  %v142 = vsel %vm78, %v35, 0.0
  %143 = vadd.xlane.f32.xlu0 %v142
  %v144 = vpop.xlane.xlu0 %143
  %v145 = vsel %vm78, %v36, 0.0
  %146 = vadd.xlane.f32.xlu0 %v145
  %v147 = vpop.xlane.xlu0 %146
  %v148 = vsel %vm78, %v37, 0.0
  %149 = vadd.xlane.f32.xlu0 %v148
  %v150 = vpop.xlane.xlu0 %149
  %v151 = vsel %vm78, %v38, 0.0
  %152 = vadd.xlane.f32.xlu0 %v151
  %v153 = vpop.xlane.xlu0 %152
  %v154 = vsel %vm78, %v39, 0.0
  %155 = vadd.xlane.f32.xlu0 %v154
  %v156 = vpop.xlane.xlu0 %155
  %v157 = vsel %vm78, %v40, 0.0
  %158 = vadd.xlane.f32.xlu0 %v157
  %v159 = vpop.xlane.xlu0 %158
  %v160 = vsel %vm78, %v41, 0.0
  %161 = vadd.xlane.f32.xlu0 %v160
  %v162 = vpop.xlane.xlu0 %161
  %v163 = vsel %vm78, %v42, 0.0
  %164 = vadd.xlane.f32.xlu0 %v163
  %v165 = vpop.xlane.xlu0 %164
  %v166 = vsel %vm78, %v43, 0.0
  %167 = vadd.xlane.f32.xlu0 %v166
  %v168 = vpop.xlane.xlu0 %167
  %v169 = vsel %vm78, %v44, 0.0
  %170 = vadd.xlane.f32.xlu0 %v169
  %v171 = vpop.xlane.xlu0 %170
  %v172 = vsel %vm78, %v45, 0.0
  %173 = vadd.xlane.f32.xlu0 %v172
  %v174 = vpop.xlane.xlu0 %173
  %v175 = vsel %vm78, %v46, 0.0
  %176 = vadd.xlane.f32.xlu0 %v175
  %v177 = vpop.xlane.xlu0 %176
  %v178 = vsel %vm78, %v47, 0.0
  %179 = vadd.xlane.f32.xlu0 %v178
  %v180 = vpop.xlane.xlu0 %179
  %v181 = vsel %vm78, %v48, 0.0
  %182 = vadd.xlane.f32.xlu0 %v181
  %v183 = vpop.xlane.xlu0 %182
  %v184 = vsel %vm78, %v49, 0.0
  %185 = vadd.xlane.f32.xlu0 %v184
  %v186 = vpop.xlane.xlu0 %185
  %v187 = vsel %vm78, %v50, 0.0
  %188 = vadd.xlane.f32.xlu0 %v187
  %v189 = vpop.xlane.xlu0 %188
  %v190 = vsel %vm78, %v51, 0.0
  %191 = vadd.xlane.f32.xlu0 %v190
  %v192 = vpop.xlane.xlu0 %191
  %v193 = vsel %vm78, %v52, 0.0
  %194 = vadd.xlane.f32.xlu0 %v193
  %v195 = vpop.xlane.xlu0 %194
  %v196 = vsel %vm78, %v53, 0.0
  %197 = vadd.xlane.f32.xlu0 %v196
  %v198 = vpop.xlane.xlu0 %197
  %v199 = vsel %vm78, %v54, 0.0
  %200 = vadd.xlane.f32.xlu0 %v199
  %v201 = vpop.xlane.xlu0 %200
  %v202 = vsel %vm78, %v55, 0.0
  %203 = vadd.xlane.f32.xlu0 %v202
  %v204 = vpop.xlane.xlu0 %203
  %v205 = vsel %vm78, %v56, 0.0
  %206 = vadd.xlane.f32.xlu0 %v205
  %v207 = vpop.xlane.xlu0 %206
  %v208 = vsel %vm78, %v57, 0.0
  %209 = vadd.xlane.f32.xlu0 %v208
  %v210 = vpop.xlane.xlu0 %209
  %v211 = vsel %vm78, %v58, 0.0
  %212 = vadd.xlane.f32.xlu0 %v211
  %v213 = vpop.xlane.xlu0 %212
  %v214 = vsel %vm78, %v59, 0.0
  %215 = vadd.xlane.f32.xlu0 %v214
  %v216 = vpop.xlane.xlu0 %215
  %v217 = vsel %vm78, %v60, 0.0
  %218 = vadd.xlane.f32.xlu0 %v217
  %v219 = vpop.xlane.xlu0 %218
  %v220 = vsel %vm78, %v61, 0.0
  %221 = vadd.xlane.f32.xlu0 %v220
  %v222 = vpop.xlane.xlu0 %221
  %v223 = vsel %vm78, %v62, 0.0
  %224 = vadd.xlane.f32.xlu0 %v223
  %v225 = vpop.xlane.xlu0 %224
  %v226 = vsel %vm78, %v63, 0.0
  %227 = vadd.xlane.f32.xlu0 %v226
  %v228 = vpop.xlane.xlu0 %227
  %v229 = vsel %vm78, %v64, 0.0
  %230 = vadd.xlane.f32.xlu0 %v229
  %v231 = vpop.xlane.xlu0 %230
  %v232 = vsel %vm78, %v65, 0.0
  %233 = vadd.xlane.f32.xlu0 %v232
  %v234 = vpop.xlane.xlu0 %233
  %v235 = vsel %vm78, %v66, 0.0
  %236 = vadd.xlane.f32.xlu0 %v235
  %v237 = vpop.xlane.xlu0 %236
  %v238 = vsel %vm78, %v67, 0.0
  %239 = vadd.xlane.f32.xlu0 %v238
  %v240 = vpop.xlane.xlu0 %239
  %v241 = vsel %vm78, %v68, 0.0
  %242 = vadd.xlane.f32.xlu0 %v241
  %v243 = vpop.xlane.xlu0 %242
  %v244 = vsel %vm78, %v69, 0.0
  %245 = vadd.xlane.f32.xlu0 %v244
  %v246 = vpop.xlane.xlu0 %245
  %v247 = vsel %vm78, %v70, 0.0
  %248 = vadd.xlane.f32.xlu0 %v247
  %v249 = vpop.xlane.xlu0 %248
  %v250 = vsel %vm78, %v71, 0.0
  %251 = vadd.xlane.f32.xlu0 %v250
  %v252 = vpop.xlane.xlu0 %251
  %v253 = vsel %vm78, %v72, 0.0
  %254 = vadd.xlane.f32.xlu0 %v253
  %v255 = vpop.xlane.xlu0 %254
  %v256 = vsel %vm78, %v73, 0.0
  %257 = vadd.xlane.f32.xlu0 %v256
  %v258 = vpop.xlane.xlu0 %257
  %v259 = vsel %vm78, %v74, 0.0
  %260 = vadd.xlane.f32.xlu0 %v259
  %v261 = vpop.xlane.xlu0 %260
  %v262 = vsel %vm78, %v75, 0.0
  %263 = vadd.xlane.f32.xlu0 %v262
  %v264 = vpop.xlane.xlu0 %263
  %v265 = vsel %vm78, %v76, 0.0
  %266 = vadd.xlane.f32.xlu0 %v265
  %v267 = vpop.xlane.xlu0 %266
  %v268 = vsel %vm78, %v77, 0.0
  %269 = vadd.xlane.f32.xlu0 %v268
  %v270 = vpop.xlane.xlu0 %269
  %v271 = vrcp.pop 64.0
  %v272 = vmul.f32 %v81, %v271
  %v273 = vmul.f32 %v84, %v271
  %v274 = vmul.f32 %v87, %v271
  %v275 = vmul.f32 %v90, %v271
  %v276 = vmul.f32 %v93, %v271
  %v277 = vmul.f32 %v96, %v271
  %v278 = vmul.f32 %v99, %v271
  %v279 = vmul.f32 %v102, %v271
  %v280 = vmul.f32 %v105, %v271
  %v281 = vmul.f32 %v108, %v271
  %v282 = vmul.f32 %v111, %v271
  %v283 = vmul.f32 %v114, %v271
  %v284 = vmul.f32 %v117, %v271
  %v285 = vmul.f32 %v120, %v271
  %v286 = vmul.f32 %v123, %v271
  %v287 = vmul.f32 %v126, %v271
  %v288 = vmul.f32 %v129, %v271
  %v289 = vmul.f32 %v132, %v271
  %v290 = vmul.f32 %v135, %v271
  %v291 = vmul.f32 %v138, %v271
  %v292 = vmul.f32 %v141, %v271
  %v293 = vmul.f32 %v144, %v271
  %v294 = vmul.f32 %v147, %v271
  %v295 = vmul.f32 %v150, %v271
  %v296 = vmul.f32 %v153, %v271
  %v297 = vmul.f32 %v156, %v271
  %v298 = vmul.f32 %v159, %v271
  %v299 = vmul.f32 %v162, %v271
  %v300 = vmul.f32 %v165, %v271
  %v301 = vmul.f32 %v168, %v271
  %v302 = vmul.f32 %v171, %v271
  %v303 = vmul.f32 %v174, %v271
  %v304 = vmul.f32 %v177, %v271
  %v305 = vmul.f32 %v180, %v271
  %v306 = vmul.f32 %v183, %v271
  %v307 = vmul.f32 %v186, %v271
  %v308 = vmul.f32 %v189, %v271
  %v309 = vmul.f32 %v192, %v271
  %v310 = vmul.f32 %v195, %v271
  %v311 = vmul.f32 %v198, %v271
  %v312 = vmul.f32 %v201, %v271
  %v313 = vmul.f32 %v204, %v271
  %v314 = vmul.f32 %v207, %v271
  %v315 = vmul.f32 %v210, %v271
  %v316 = vmul.f32 %v213, %v271
  %v317 = vmul.f32 %v216, %v271
  %v318 = vmul.f32 %v219, %v271
  %v319 = vmul.f32 %v222, %v271
  %v320 = vmul.f32 %v225, %v271
  %v321 = vmul.f32 %v228, %v271
  %v322 = vmul.f32 %v231, %v271
  %v323 = vmul.f32 %v234, %v271
  %v324 = vmul.f32 %v237, %v271
  %v325 = vmul.f32 %v240, %v271
  %v326 = vmul.f32 %v243, %v271
  %v327 = vmul.f32 %v246, %v271
  %v328 = vmul.f32 %v249, %v271
  %v329 = vmul.f32 %v252, %v271
  %v330 = vmul.f32 %v255, %v271
  %v331 = vmul.f32 %v258, %v271
  %v332 = vmul.f32 %v261, %v271
  %v333 = vmul.f32 %v264, %v271
  %v334 = vmul.f32 %v267, %v271
  %v335 = vmul.f32 %v270, %v271
  %v336 = vld [vmem:[%s1] sm:$0xff]
  %v337 = vld [vmem:[%s1 + $0x8] sm:$0x3]
  %v338 = vld [vmem:[%s2] sm:$0xff]
  %v339 = vld [vmem:[%s2 + $0x8] sm:$0x3]
  %341 = vset.pattern.permute.xlu0 0
  %342 = vperm.xlu0 %341, %v338
  %v343 = vpop.permute.xlu0 %342
  %346 = vset.pattern.permute.xlu0 0
  %347 = vperm.xlu0 %346, %v339
  %v348 = vpop.permute.xlu0 %347
  %v414 = vlaneseq
  %v415 = vand.u32 %v414, 127
  %v416 = vlaneseq
  %v417 = vshrl.u32 %v416, 7
  %v418 = vsub.s32 %v415, %v417
  %v419 = vrot.slane %v272, %v418
  %v420 = vlaneseq
  %v421 = vshrl.u32 %v420, 7
  %v422 = vsub.s32 %v415, %v421
  %v423 = vrot.slane %v273, %v422
  %v424 = vlaneseq
  %v425 = vshrl.u32 %v424, 7
  %v426 = vsub.s32 %v415, %v425
  %v427 = vrot.slane %v274, %v426
  %v428 = vlaneseq
  %v429 = vshrl.u32 %v428, 7
  %v430 = vsub.s32 %v415, %v429
  %v431 = vrot.slane %v275, %v430
  %v432 = vlaneseq
  %v433 = vshrl.u32 %v432, 7
  %v434 = vsub.s32 %v415, %v433
  %v435 = vrot.slane %v276, %v434
  %v436 = vlaneseq
  %v437 = vshrl.u32 %v436, 7
  %v438 = vsub.s32 %v415, %v437
  %v439 = vrot.slane %v277, %v438
  %v440 = vlaneseq
  %v441 = vshrl.u32 %v440, 7
  %v442 = vsub.s32 %v415, %v441
  %v443 = vrot.slane %v278, %v442
  %v444 = vlaneseq
  %v445 = vshrl.u32 %v444, 7
  %v446 = vsub.s32 %v415, %v445
  %v447 = vrot.slane %v279, %v446
  %v448 = vlaneseq
  %v449 = vshrl.u32 %v448, 7
  %v450 = vsub.s32 %v415, %v449
  %v451 = vrot.slane %v280, %v450
  %v452 = vlaneseq
  %v453 = vshrl.u32 %v452, 7
  %v454 = vsub.s32 %v415, %v453
  %v455 = vrot.slane %v281, %v454
  %v456 = vlaneseq
  %v457 = vshrl.u32 %v456, 7
  %v458 = vsub.s32 %v415, %v457
  %v459 = vrot.slane %v282, %v458
  %v460 = vlaneseq
  %v461 = vshrl.u32 %v460, 7
  %v462 = vsub.s32 %v415, %v461
  %v463 = vrot.slane %v283, %v462
  %v464 = vlaneseq
  %v465 = vshrl.u32 %v464, 7
  %v466 = vsub.s32 %v415, %v465
  %v467 = vrot.slane %v284, %v466
  %v468 = vlaneseq
  %v469 = vshrl.u32 %v468, 7
  %v470 = vsub.s32 %v415, %v469
  %v471 = vrot.slane %v285, %v470
  %v472 = vlaneseq
  %v473 = vshrl.u32 %v472, 7
  %v474 = vsub.s32 %v415, %v473
  %v475 = vrot.slane %v286, %v474
  %v476 = vlaneseq
  %v477 = vshrl.u32 %v476, 7
  %v478 = vsub.s32 %v415, %v477
  %v479 = vrot.slane %v287, %v478
  %v480 = vlaneseq
  %v481 = vshrl.u32 %v480, 7
  %v482 = vsub.s32 %v415, %v481
  %v483 = vrot.slane %v288, %v482
  %v484 = vlaneseq
  %v485 = vshrl.u32 %v484, 7
  %v486 = vsub.s32 %v415, %v485
  %v487 = vrot.slane %v289, %v486
  %v488 = vlaneseq
  %v489 = vshrl.u32 %v488, 7
  %v490 = vsub.s32 %v415, %v489
  %v491 = vrot.slane %v290, %v490
  %v492 = vlaneseq
  %v493 = vshrl.u32 %v492, 7
  %v494 = vsub.s32 %v415, %v493
  %v495 = vrot.slane %v291, %v494
  %v496 = vlaneseq
  %v497 = vshrl.u32 %v496, 7
  %v498 = vsub.s32 %v415, %v497
  %v499 = vrot.slane %v292, %v498
  %v500 = vlaneseq
  %v501 = vshrl.u32 %v500, 7
  %v502 = vsub.s32 %v415, %v501
  %v503 = vrot.slane %v293, %v502
  %v504 = vlaneseq
  %v505 = vshrl.u32 %v504, 7
  %v506 = vsub.s32 %v415, %v505
  %v507 = vrot.slane %v294, %v506
  %v508 = vlaneseq
  %v509 = vshrl.u32 %v508, 7
  %v510 = vsub.s32 %v415, %v509
  %v511 = vrot.slane %v295, %v510
  %v512 = vlaneseq
  %v513 = vshrl.u32 %v512, 7
  %v514 = vsub.s32 %v415, %v513
  %v515 = vrot.slane %v296, %v514
  %v516 = vlaneseq
  %v517 = vshrl.u32 %v516, 7
  %v518 = vsub.s32 %v415, %v517
  %v519 = vrot.slane %v297, %v518
  %v520 = vlaneseq
  %v521 = vshrl.u32 %v520, 7
  %v522 = vsub.s32 %v415, %v521
  %v523 = vrot.slane %v298, %v522
  %v524 = vlaneseq
  %v525 = vshrl.u32 %v524, 7
  %v526 = vsub.s32 %v415, %v525
  %v527 = vrot.slane %v299, %v526
  %v528 = vlaneseq
  %v529 = vshrl.u32 %v528, 7
  %v530 = vsub.s32 %v415, %v529
  %v531 = vrot.slane %v300, %v530
  %v532 = vlaneseq
  %v533 = vshrl.u32 %v532, 7
  %v534 = vsub.s32 %v415, %v533
  %v535 = vrot.slane %v301, %v534
  %v536 = vlaneseq
  %v537 = vshrl.u32 %v536, 7
  %v538 = vsub.s32 %v415, %v537
  %v539 = vrot.slane %v302, %v538
  %v540 = vlaneseq
  %v541 = vshrl.u32 %v540, 7
  %v542 = vsub.s32 %v415, %v541
  %v543 = vrot.slane %v303, %v542
  %v544 = vlaneseq
  %v545 = vshrl.u32 %v544, 7
  %v546 = vsub.s32 %v415, %v545
  %v547 = vrot.slane %v304, %v546
  %v548 = vlaneseq
  %v549 = vshrl.u32 %v548, 7
  %v550 = vsub.s32 %v415, %v549
  %v551 = vrot.slane %v305, %v550
  %v552 = vlaneseq
  %v553 = vshrl.u32 %v552, 7
  %v554 = vsub.s32 %v415, %v553
  %v555 = vrot.slane %v306, %v554
  %v556 = vlaneseq
  %v557 = vshrl.u32 %v556, 7
  %v558 = vsub.s32 %v415, %v557
  %v559 = vrot.slane %v307, %v558
  %v560 = vlaneseq
  %v561 = vshrl.u32 %v560, 7
  %v562 = vsub.s32 %v415, %v561
  %v563 = vrot.slane %v308, %v562
  %v564 = vlaneseq
  %v565 = vshrl.u32 %v564, 7
  %v566 = vsub.s32 %v415, %v565
  %v567 = vrot.slane %v309, %v566
  %v568 = vlaneseq
  %v569 = vshrl.u32 %v568, 7
  %v570 = vsub.s32 %v415, %v569
  %v571 = vrot.slane %v310, %v570
  %v572 = vlaneseq
  %v573 = vshrl.u32 %v572, 7
  %v574 = vsub.s32 %v415, %v573
  %v575 = vrot.slane %v311, %v574
  %v576 = vlaneseq
  %v577 = vshrl.u32 %v576, 7
  %v578 = vsub.s32 %v415, %v577
  %v579 = vrot.slane %v312, %v578
  %v580 = vlaneseq
  %v581 = vshrl.u32 %v580, 7
  %v582 = vsub.s32 %v415, %v581
  %v583 = vrot.slane %v313, %v582
  %v584 = vlaneseq
  %v585 = vshrl.u32 %v584, 7
  %v586 = vsub.s32 %v415, %v585
  %v587 = vrot.slane %v314, %v586
  %v588 = vlaneseq
  %v589 = vshrl.u32 %v588, 7
  %v590 = vsub.s32 %v415, %v589
  %v591 = vrot.slane %v315, %v590
  %v592 = vlaneseq
  %v593 = vshrl.u32 %v592, 7
  %v594 = vsub.s32 %v415, %v593
  %v595 = vrot.slane %v316, %v594
  %v596 = vlaneseq
  %v597 = vshrl.u32 %v596, 7
  %v598 = vsub.s32 %v415, %v597
  %v599 = vrot.slane %v317, %v598
  %v600 = vlaneseq
  %v601 = vshrl.u32 %v600, 7
  %v602 = vsub.s32 %v415, %v601
  %v603 = vrot.slane %v318, %v602
  %v604 = vlaneseq
  %v605 = vshrl.u32 %v604, 7
  %v606 = vsub.s32 %v415, %v605
  %v607 = vrot.slane %v319, %v606
  %v608 = vlaneseq
  %v609 = vshrl.u32 %v608, 7
  %v610 = vsub.s32 %v415, %v609
  %v611 = vrot.slane %v320, %v610
  %v612 = vlaneseq
  %v613 = vshrl.u32 %v612, 7
  %v614 = vsub.s32 %v415, %v613
  %v615 = vrot.slane %v321, %v614
  %v616 = vlaneseq
  %v617 = vshrl.u32 %v616, 7
  %v618 = vsub.s32 %v415, %v617
  %v619 = vrot.slane %v322, %v618
  %v620 = vlaneseq
  %v621 = vshrl.u32 %v620, 7
  %v622 = vsub.s32 %v415, %v621
  %v623 = vrot.slane %v323, %v622
  %v624 = vlaneseq
  %v625 = vshrl.u32 %v624, 7
  %v626 = vsub.s32 %v415, %v625
  %v627 = vrot.slane %v324, %v626
  %v628 = vlaneseq
  %v629 = vshrl.u32 %v628, 7
  %v630 = vsub.s32 %v415, %v629
  %v631 = vrot.slane %v325, %v630
  %v632 = vlaneseq
  %v633 = vshrl.u32 %v632, 7
  %v634 = vsub.s32 %v415, %v633
  %v635 = vrot.slane %v326, %v634
  %v636 = vlaneseq
  %v637 = vshrl.u32 %v636, 7
  %v638 = vsub.s32 %v415, %v637
  %v639 = vrot.slane %v327, %v638
  %v640 = vlaneseq
  %v641 = vshrl.u32 %v640, 7
  %v642 = vsub.s32 %v415, %v641
  %v643 = vrot.slane %v328, %v642
  %v644 = vlaneseq
  %v645 = vshrl.u32 %v644, 7
  %v646 = vsub.s32 %v415, %v645
  %v647 = vrot.slane %v329, %v646
  %v648 = vlaneseq
  %v649 = vshrl.u32 %v648, 7
  %v650 = vsub.s32 %v415, %v649
  %v651 = vrot.slane %v330, %v650
  %v652 = vlaneseq
  %v653 = vshrl.u32 %v652, 7
  %v654 = vsub.s32 %v415, %v653
  %v655 = vrot.slane %v331, %v654
  %v656 = vlaneseq
  %v657 = vshrl.u32 %v656, 7
  %v658 = vsub.s32 %v415, %v657
  %v659 = vrot.slane %v332, %v658
  %v660 = vlaneseq
  %v661 = vshrl.u32 %v660, 7
  %v662 = vsub.s32 %v415, %v661
  %v663 = vrot.slane %v333, %v662
  %v664 = vlaneseq
  %v665 = vshrl.u32 %v664, 7
  %v666 = vsub.s32 %v415, %v665
  %v667 = vrot.slane %v334, %v666
  %v668 = vlaneseq
  %v669 = vshrl.u32 %v668, 7
  %v670 = vsub.s32 %v415, %v669
  %v671 = vrot.slane %v335, %v670
  %vm672 = vcmask 1041409
  %v673 = vsel %vm672, %v423, %v419
  %vm674 = vcmask 1042434
  %v675 = vsel %vm674, %v427, %v673
  %vm676 = vcmask 1043459
  %v677 = vsel %vm676, %v431, %v675
  %vm678 = vcmask 1044484
  %v679 = vsel %vm678, %v435, %v677
  %vm680 = vcmask 1045509
  %v681 = vsel %vm680, %v439, %v679
  %vm682 = vcmask 1046534
  %v683 = vsel %vm682, %v443, %v681
  %vm684 = vcmask 1047559
  %v685 = vsel %vm684, %v447, %v683
  %v686 = vsel %vm672, %v455, %v451
  %v687 = vsel %vm674, %v459, %v686
  %v688 = vsel %vm676, %v463, %v687
  %v689 = vsel %vm678, %v467, %v688
  %v690 = vsel %vm680, %v471, %v689
  %v691 = vsel %vm682, %v475, %v690
  %v692 = vsel %vm684, %v479, %v691
  %v693 = vsel %vm672, %v487, %v483
  %v694 = vsel %vm674, %v491, %v693
  %v695 = vsel %vm676, %v495, %v694
  %v696 = vsel %vm678, %v499, %v695
  %v697 = vsel %vm680, %v503, %v696
  %v698 = vsel %vm682, %v507, %v697
  %v699 = vsel %vm684, %v511, %v698
  %v700 = vsel %vm672, %v519, %v515
  %v701 = vsel %vm674, %v523, %v700
  %v702 = vsel %vm676, %v527, %v701
  %v703 = vsel %vm678, %v531, %v702
  %v704 = vsel %vm680, %v535, %v703
  %v705 = vsel %vm682, %v539, %v704
  %v706 = vsel %vm684, %v543, %v705
  %v707 = vsel %vm672, %v551, %v547
  %v708 = vsel %vm674, %v555, %v707
  %v709 = vsel %vm676, %v559, %v708
  %v710 = vsel %vm678, %v563, %v709
  %v711 = vsel %vm680, %v567, %v710
  %v712 = vsel %vm682, %v571, %v711
  %v713 = vsel %vm684, %v575, %v712
  %v714 = vsel %vm672, %v583, %v579
  %v715 = vsel %vm674, %v587, %v714
  %v716 = vsel %vm676, %v591, %v715
  %v717 = vsel %vm678, %v595, %v716
  %v718 = vsel %vm680, %v599, %v717
  %v719 = vsel %vm682, %v603, %v718
  %v720 = vsel %vm684, %v607, %v719
  %v721 = vsel %vm672, %v615, %v611
  %v722 = vsel %vm674, %v619, %v721
  %v723 = vsel %vm676, %v623, %v722
  %v724 = vsel %vm678, %v627, %v723
  %v725 = vsel %vm680, %v631, %v724
  %v726 = vsel %vm682, %v635, %v725
  %v727 = vsel %vm684, %v639, %v726
  %v728 = vsel %vm672, %v647, %v643
  %v729 = vsel %vm674, %v651, %v728
  %v730 = vsel %vm676, %v655, %v729
  %v731 = vsel %vm678, %v659, %v730
  %v732 = vsel %vm680, %v663, %v731
  %v733 = vsel %vm682, %v667, %v732
  %v734 = vsel %vm684, %v671, %v733
  %vm743 = vcmask 523264
  %v745 = vsel %vm743, %v336, 0
  %v748 = vsel %vm743, %v337, 0
  %750 = vmatprep.subr.mxu0 0.0
  %751 = vmatpush1.msra.mxu0 %v685
  %752 = vmatprep.subr.mxu0 0.0
  %753 = vmatpush1.msra.mxu0 %v692
  %754 = vmatprep.subr.mxu0 0.0
  %755 = vmatpush1.msra.mxu0 %v699
  %756 = vmatprep.subr.mxu0 0.0
  %757 = vmatpush1.msra.mxu0 %v706
  %758 = vmatprep.subr.mxu0 0.0
  %759 = vmatpush1.msra.mxu0 %v713
  %760 = vmatprep.subr.mxu0 0.0
  %761 = vmatpush1.msra.mxu0 %v720
  %762 = vmatprep.subr.mxu0 0.0
  %763 = vmatpush1.msra.mxu0 %v727
  %764 = vmatprep.subr.mxu0 0.0
  %765 = vmatpush1.msra.mxu0 %v734
  %766 = vmatprep.subr.mxu0 0.0
  %767 = vmatpush1.msra.mxu0 0.0
  %768 = vmatprep.subr.mxu0 0.0
  %769 = vmatpush1.msra.mxu0 0.0
  %770 = vmatprep.subr.mxu0 0.0
  %771 = vmatpush1.msra.mxu0 0.0
  %772 = vmatprep.subr.mxu0 0.0
  %773 = vmatpush1.msra.mxu0 0.0
  %774 = vmatprep.subr.mxu0 0.0
  %775 = vmatpush1.msra.mxu0 0.0
  %776 = vmatprep.subr.mxu0 0.0
  %777 = vmatpush1.msra.mxu0 0.0
  %778 = vmatprep.subr.mxu0 0.0
  %779 = vmatpush1.msra.mxu0 0.0
  %780 = vmatprep.subr.mxu0 0.0
  %781 = vmatpush1.msra.mxu0 0.0
  %782 = vmatprep.subr.mxu0 0.0
  %783 = vmatpush1.msra.mxu0 0.0
  %784 = vmatprep.subr.mxu0 0.0
  %785 = vmatpush1.msra.mxu0 0.0
  %786 = vmatprep.subr.mxu0 0.0
  %787 = vmatpush1.msra.mxu0 0.0
  %788 = vmatprep.subr.mxu0 0.0
  %789 = vmatpush1.msra.mxu0 0.0
  %790 = vmatprep.subr.mxu0 0.0
  %791 = vmatpush1.msra.mxu0 0.0
  %792 = vmatprep.subr.mxu0 0.0
  %793 = vmatpush1.msra.mxu0 0.0
  %794 = vmatprep.subr.mxu0 0.0
  %795 = vmatpush1.msra.mxu0 0.0
  %796 = vmatprep.subr.mxu0 0.0
  %797 = vmatpush1.msra.mxu0 0.0
  %798 = vmatprep.subr.mxu0 0.0
  %799 = vmatpush1.msra.mxu0 0.0
  %800 = vmatprep.subr.mxu0 0.0
  %801 = vmatpush1.msra.mxu0 0.0
  %802 = vmatprep.subr.mxu0 0.0
  %803 = vmatpush1.msra.mxu0 0.0
  %804 = vmatprep.subr.mxu0 0.0
  %805 = vmatpush1.msra.mxu0 0.0
  %806 = vmatprep.subr.mxu0 0.0
  %807 = vmatpush1.msra.mxu0 0.0
  %808 = vmatprep.subr.mxu0 0.0
  %809 = vmatpush1.msra.mxu0 0.0
  %810 = vmatprep.subr.mxu0 0.0
  %811 = vmatpush1.msra.mxu0 0.0
  %812 = vmatprep.subr.mxu0 0.0
  %813 = vmatpush1.msra.mxu0 0.0
  %814 = vmatprep.mubr.f32.mxu0 0.0
  %815 = vmatmul.mubr.f32.gmra.mrb[0].mxu0 %v745
  %v816 = vpop.f32.mrb[0].mxu0
  %v817 = vadd.f32 %v343, %v816
  %v818 = vpop.f32.mrb[0].mxu0
  %819 = vmatprep.mubr.f32.mxu0 0.0
  %820 = vmatmul.mubr.f32.gmra.mrb[0].mxu0 %v748
  %v821 = vpop.f32.mrb[0].mxu0
  %v822 = vadd.f32 %v348, %v821
  %v823 = vpop.f32.mrb[0].mxu0
  %824 = vdwg.mxu0
  %vm825 = vcmask 15360
  %826 = vst.msk [vmem:[%s3] sm:$0xff] %vm825, %v817
  %vm827 = vcmask 9216
  %828 = vst.msk [vmem:[%s3 + $0x8] sm:$0x3] %vm827, %v822
  // Predicated region
  $region14: #{resnet_forward.27} parent=0 // pred_check
    _
  $region15: #{resnet_forward.27} parent=0 // pred_check_branch
    %830 = sbr.rel (0) target = $region17
  $region16: #{resnet_forward.27} parent=0 // pred_region
    _
  $region17: #{resnet_forward.27} parent=0 // pred_fallthru
    _
  // Predicated region
  $region18: #{resnet_forward.27} parent=0 // pred_check
    _
  $region19: #{resnet_forward.27} parent=0 // pred_check_branch
    %832 = sbr.rel (0) target = $region21
  $region20: #{resnet_forward.27} parent=0 // pred_region
    _
  $region21: #{resnet_forward.27} parent=0 // pred_fallthru
    _

</llo_original>
